<compile_context>
chip_gen: v7x
topology: tpu7x:2x2x1
jax: 0.10.0
libtpu: 0.0.40
codegen_flags: <defaults>
</compile_context>

<pallas_src>
import functools

import jax
import jax.numpy as jnp
from jax.experimental import pallas as pl
from jax.experimental.pallas import tpu as pltpu


_TAPS = tuple((dy, dx) for dy in (-1, 0, 1) for dx in (-1, 0, 1))
_CENTER = 4  # index of (0, 0) in _TAPS


# ------------------------------ kernel --------------------------------------

def _lpenet_kernel(x_ref, masks_ref, w_in_ref, w_blk_ref, w_out_ref, b_ref,
                   o_ref, patch_ref, h_ref, *, W, n_blocks, neg_slope):
    """Fused LPENet forward, single invocation, batch folded into lanes.

    x_ref     : (Cin_p, L)            input, channels on sublanes, L = N*H*W
    masks_ref : (8, L)                boundary masks for the 8 non-center taps
    w_in_ref  : (F, 9*Cin_p)          conv_in packed weight
    w_blk_ref : (2*n_blocks, F, 9*F)  residual-block packed weights
    w_out_ref : (Cout_p, 9*F)         conv_out packed weight (Cout padded to 8)
    b_ref     : (n_layers, rows, 1)   stacked biases (f32)
    o_ref     : (Cout_p, L)           output
    patch_ref : (9*max(Cin_p,F), L)   im2col scratch (f32 or bf16)
    h_ref     : (F, L) f32            residual activation scratch
    """
    L = x_ref.shape[-1]
    F = w_in_ref.shape[0]
    Cout_p = w_out_ref.shape[0]
    cdt = patch_ref.dtype
    n_layers = 2 + 2 * n_blocks

    def conv3x3(feat_f32, w, b_col):
        """feat_f32: (C, L) f32 -> (Cout, L) f32 via one im2col MXU matmul."""
        C = feat_f32.shape[0]
        feat = feat_f32.astype(cdt)
        for t, (dy, dx) in enumerate(_TAPS):
            if t == _CENTER:
                # Center tap: mask is all-ones -> skip the multiply.
                patch_ref[t * C:(t + 1) * C, :] = feat
            else:
                off = dy * W + dx
                # shifted[:, l] = feat[:, l + off] (circular; the precomputed
                # mask zeroes wrapped / out-of-image positions).
                shifted = pltpu.roll(feat, (-off) % L, axis=1)
                m = t if t < _CENTER else t - 1
                patch_ref[t * C:(t + 1) * C, :] = shifted * masks_ref[m:m + 1, :]
        patch = patch_ref[0:9 * C, :]                          # (9*C, L)
        acc = jnp.dot(w, patch,
                      preferred_element_type=jnp.float32)      # (Cout, L) f32
        return acc + b_col                                     # bias (Cout, 1)

    # conv_in + LeakyReLU(0.01)
    x = x_ref[...].astype(jnp.float32)
    h = conv3x3(x, w_in_ref[...], b_ref[0])
    h_ref[...] = jnp.where(h >= 0.0, h, h * neg_slope)

    # Residual blocks: relu(conv2(relu(conv1(x))) + x)
    for i in range(n_blocks):
        w1 = w_blk_ref[2 * i]
        w2 = w_blk_ref[2 * i + 1]
        mid = jnp.maximum(conv3x3(h_ref[...], w1, b_ref[1 + 2 * i]), 0.0)
        h_ref[...] = jnp.maximum(
            conv3x3(mid, w2, b_ref[2 + 2 * i]) + h_ref[...], 0.0)

    # conv_out (no activation); padded output channels are sliced in wrapper.
    b_last = b_ref[n_layers - 1]
    out = conv3x3(h_ref[...], w_out_ref[...], b_last[0:Cout_p, :])
    o_ref[...] = out.astype(o_ref.dtype)


# ------------------------------ wrapper -------------------------------------

def _pack_w(w_hwio, cin_pad=None, cout_pad=None):
    """HWIO (3,3,Cin,Cout) conv weight -> (Cout, 9*Cin) matmul matrix."""
    _, _, cin, cout = w_hwio.shape
    if cin_pad is not None and cin_pad > cin:
        w_hwio = jnp.pad(w_hwio, ((0, 0), (0, 0), (0, cin_pad - cin), (0, 0)))
        cin = cin_pad
    if cout_pad is not None and cout_pad > cout:
        w_hwio = jnp.pad(w_hwio, ((0, 0), (0, 0), (0, 0), (0, cout_pad - cout)))
        cout = cout_pad
    return jnp.transpose(w_hwio, (3, 0, 1, 2)).reshape(cout, 9 * cin)


def _boundary_masks(H, W, n_imgs):
    """(8, n_imgs*H*W) zero-padding masks for the 8 non-center 3x3 taps."""
    q = jnp.arange(H * W, dtype=jnp.int32)
    yy, xx = q // W, q % W
    rows = []
    for dy, dx in _TAPS:
        if (dy, dx) == (0, 0):
            continue
        ok = ((yy + dy) >= 0) & ((yy + dy) < H) & \
             ((xx + dx) >= 0) & ((xx + dx) < W)
        rows.append(ok)
    m = jnp.stack(rows, axis=0).astype(jnp.float32)   # (8, HW)
    return jnp.tile(m, (1, n_imgs))                   # (8, n_imgs*HW)


def _nbytes(a):
    return int(a.size) * jnp.dtype(a.dtype).itemsize


def lpenet_forward(x_nchw, params, *, neg_slope=0.01, use_bf16=False):
    """LPENet forward. Input / output NCHW like the PyTorch module."""
    N, Cin, H, W = x_nchw.shape
    HW = H * W
    L = N * HW
    cdt = jnp.bfloat16 if use_bf16 else jnp.float32

    # Pad input channels to a multiple of 8 so im2col slabs stay sublane
    # aligned (padded channels have zero weight columns -> results unchanged).
    Cin_p = -(-Cin // 8) * 8

    # (N, Cin, H, W) -> (Cin_p, N*HW): batch folded into the lane axis.
    x = jnp.transpose(x_nchw.reshape(N, Cin, HW), (1, 0, 2)).reshape(Cin, L)
    if Cin_p != Cin:
        x = jnp.pad(x, ((0, Cin_p - Cin), (0, 0)))
    x = x.astype(jnp.float32)

    w_in, b_in = params["conv_in"]
    feat = w_in.shape[-1]
    w_out, b_out = params["conv_out"]
    Cout = w_out.shape[-1]
    Cout_p = -(-Cout // 8) * 8
    n_blocks = len(params["blocks"])
    n_layers = 2 + 2 * n_blocks
    rows = max(feat, Cout_p)

    # Consolidated weights (cast to the matmul compute dtype).
    w_in_mat = _pack_w(w_in, cin_pad=Cin_p).astype(cdt)            # (F, 9Cin_p)
    w_blk = jnp.stack(
        [_pack_w(blk[k]) for blk in params["blocks"] for k in ("w1", "w2")]
    ).astype(cdt)                                                  # (2nb, F, 9F)
    w_out_mat = _pack_w(w_out, cout_pad=Cout_p).astype(cdt)        # (Cout_p, 9F)

    # Stacked biases (f32; added after the f32 accumulation).
    b_all = jnp.zeros((n_layers, rows, 1), jnp.float32)
    b_all = b_all.at[0, :feat, 0].set(b_in)
    for i, blk in enumerate(params["blocks"]):
        b_all = b_all.at[1 + 2 * i, :feat, 0].set(blk["b1"])
        b_all = b_all.at[2 + 2 * i, :feat, 0].set(blk["b2"])
    b_all = b_all.at[n_layers - 1, :Cout, 0].set(b_out)

    masks = _boundary_masks(H, W, N).astype(cdt)                   # (8, L)

    inputs = (x, masks, w_in_mat, w_blk, w_out_mat, b_all)

    def full_spec(a):
        nd = a.ndim
        return pl.BlockSpec(a.shape, lambda i, _nd=nd: (0,) * _nd)

    in_specs = [full_spec(a) for a in inputs]
    out_spec = pl.BlockSpec((Cout_p, L), lambda i: (0, 0))

    patch_rows = 9 * max(Cin_p, feat)
    scratch_shapes = [
        pltpu.VMEM((patch_rows, L), cdt),       # im2col patch buffer
        pltpu.VMEM((feat, L), jnp.float32),     # residual activation h
    ]
    # TODO(synk): strip-tile the spatial axis (row strips + 1-row halo) once
    # H*W grows enough that the patch scratch approaches the VMEM limit.

    # Explicit VMEM budget derived from actual buffer sizes (with headroom).
    est = (2 * (sum(_nbytes(a) for a in inputs) + Cout_p * L * 4)
           + patch_rows * L * jnp.dtype(cdt).itemsize
           + feat * L * 4)
    vmem_limit = int(min(max(6 * est, 32 << 20), 96 << 20))

    flops = 2 * L * 9 * (Cin_p * feat
                         + n_blocks * 2 * feat * feat
                         + feat * Cout_p)
    cost = pl.CostEstimate(
        flops=int(flops), transcendentals=0,
        bytes_accessed=int(sum(_nbytes(a) for a in inputs) + Cout_p * L * 4))

    kernel = functools.partial(_lpenet_kernel, W=W,
                               n_blocks=n_blocks, neg_slope=neg_slope)

    out = pl.pallas_call(
        kernel,
        out_shape=jax.ShapeDtypeStruct((Cout_p, L), x_nchw.dtype),
        grid_spec=pltpu.PrefetchScalarGridSpec(
            num_scalar_prefetch=0,
            grid=(1,),                 # single step: batch lives on lanes
            in_specs=in_specs,
            out_specs=out_spec,
            scratch_shapes=scratch_shapes,
        ),
        compiler_params=pltpu.CompilerParams(
            dimension_semantics=("arbitrary",),
            vmem_limit_bytes=vmem_limit,
        ),
        cost_estimate=cost,
    )(*inputs)

    # (Cout_p, N*HW) -> NCHW, dropping padded output channels.
    out = out.reshape(Cout_p, N, HW).transpose(1, 0, 2)[:, :Cout, :]
    return out.reshape(N, Cout, H, W)


# ----------------------------- parameters -----------------------------------

def init_lpenet_params(key, in_channels, out_channels=3,
                       feature_channels=32, num_residual_blocks=2):
    """Deterministic synthetic weights (HWIO layout) matching nn.Conv2d shapes."""
    def conv_init(k, cin, cout):
        kw, kb = jax.random.split(k)
        scale = 1.0 / jnp.sqrt(9.0 * cin)
        w = jax.random.normal(kw, (3, 3, cin, cout), jnp.float32) * scale
        b = jax.random.normal(kb, (cout,), jnp.float32) * scale
        return w, b

    keys = jax.random.split(key, 2 + 2 * num_residual_blocks)
    params = {}
    params["conv_in"] = conv_init(keys[0], in_channels, feature_channels)
    blocks = []
    for i in range(num_residual_blocks):
        w1, b1 = conv_init(keys[1 + 2 * i], feature_channels, feature_channels)
        w2, b2 = conv_init(keys[2 + 2 * i], feature_channels, feature_channels)
        blocks.append({"w1": w1, "b1": b1, "w2": w2, "b2": b2})
    params["blocks"] = blocks
    params["conv_out"] = conv_init(keys[-1], feature_channels, out_channels)
    return params


# --------------------------- pure-JAX reference -----------------------------

def _conv_ref(x_nhwc, w, b):
    y = jax.lax.conv_general_dilated(
        x_nhwc, w, window_strides=(1, 1), padding="SAME",
        dimension_numbers=("NHWC", "HWIO", "NHWC"))
    return y + b[None, None, None, :]


def lpenet_forward_ref(x_nchw, params):
    x = jnp.transpose(x_nchw, (0, 2, 3, 1))
    w, b = params["conv_in"]
    h = _conv_ref(x, w, b)
    h = jnp.where(h >= 0.0, h, 0.01 * h)
    for blk in params["blocks"]:
        t = jnp.maximum(_conv_ref(h, blk["w1"], blk["b1"]), 0.0)
        h = jnp.maximum(_conv_ref(t, blk["w2"], blk["b2"]) + h, 0.0)
    w, b = params["conv_out"]
    out = _conv_ref(h, w, b)
    return jnp.transpose(out, (0, 3, 1, 2))


# --------------------------------- main -------------------------------------

if __name__ == "__main__":
    key = jax.random.PRNGKey(0)
    k_params, k_x = jax.random.split(key)

    # Small LPENet: in_channels=4, out_channels=3, feature_channels=32, 2 blocks.
    in_channels, out_channels, feat, n_blocks = 4, 3, 32, 2
    params = init_lpenet_params(k_params, in_channels, out_channels, feat,
                                n_blocks)

    x = jax.random.normal(k_x, (2, in_channels, 16, 16), jnp.float32)  # NCHW
    y_ref = lpenet_forward_ref(x, params)

    # f32 path: exact semantics, tight tolerance.
    fwd_f32 = jax.jit(lambda xx: lpenet_forward(xx, params, use_bf16=False))
    y = fwd_f32(x)
    jax.block_until_ready(y)
    assert y.shape == (2, out_channels, 16, 16)
    err = jnp.max(jnp.abs(y - y_ref))
    assert jnp.allclose(y, y_ref, atol=2e-4, rtol=2e-4), \
        f"f32 mismatch: max abs err {err}"

    # bf16-matmul path (native MXU dtype on v6e/v7x): looser sanity check.
    fwd_bf16 = jax.jit(lambda xx: lpenet_forward(xx, params, use_bf16=True))
    y16 = fwd_bf16(x)
    jax.block_until_ready(y16)
    err16 = jnp.max(jnp.abs(y16 - y_ref))
    assert jnp.allclose(y16, y_ref, atol=1e-1, rtol=1e-1), \
        f"bf16 mismatch: max abs err {err16}"

    print("KERNEL_OK")
</pallas_src>

<mosaic_0001>
module attributes {stable_mosaic.version = 11 : i64} {
  func.func @_lpenet_kernel(%arg0: i32, %arg1: memref<8x512xf32, #tpu.memory_space<vmem>>, %arg2: memref<8x512xf32, #tpu.memory_space<vmem>>, %arg3: memref<32x72xf32, #tpu.memory_space<vmem>>, %arg4: memref<4x32x288xf32, #tpu.memory_space<vmem>>, %arg5: memref<8x288xf32, #tpu.memory_space<vmem>>, %arg6: memref<6x32x1xf32, #tpu.memory_space<vmem>>, %arg7: memref<8x512xf32, #tpu.memory_space<vmem>>, %arg8: memref<288x512xf32, #tpu.memory_space<vmem>>, %arg9: memref<32x512xf32, #tpu.memory_space<vmem>>) attributes {dimension_semantics = [#tpu.dimension_semantics<arbitrary>], iteration_bounds = array<i64: 1>, scalar_prefetch = 0 : i64, scratch_operands = 2 : i64, tpu.core_type = #tpu.core_type<tc>, window_params = [{pipeline_mode = #tpu.pipeline_mode<synchronous>, transform_indices = @transform_0, window_bounds = array<i64: 8, 512>}, {pipeline_mode = #tpu.pipeline_mode<synchronous>, transform_indices = @transform_1, window_bounds = array<i64: 8, 512>}, {pipeline_mode = #tpu.pipeline_mode<synchronous>, transform_indices = @transform_2, window_bounds = array<i64: 32, 72>}, {pipeline_mode = #tpu.pipeline_mode<synchronous>, transform_indices = @transform_3, window_bounds = array<i64: 4, 32, 288>}, {pipeline_mode = #tpu.pipeline_mode<synchronous>, transform_indices = @transform_4, window_bounds = array<i64: 8, 288>}, {pipeline_mode = #tpu.pipeline_mode<synchronous>, transform_indices = @transform_5, window_bounds = array<i64: 6, 32, 1>}, {pipeline_mode = #tpu.pipeline_mode<synchronous>, transform_indices = @transform_6, window_bounds = array<i64: 8, 512>}]} {
    %c0 = arith.constant 0 : index
    %c0_0 = arith.constant 0 : index
    %0 = vector.load %arg1[%c0, %c0_0] : memref<8x512xf32, #tpu.memory_space<vmem>>, vector<8x512xf32>
    %c0_1 = arith.constant 0 : index
    %c0_2 = arith.constant 0 : index
    %1 = vector.load %arg3[%c0_1, %c0_2] : memref<32x72xf32, #tpu.memory_space<vmem>>, vector<32x72xf32>
    %c0_3 = arith.constant 0 : index
    %c0_4 = arith.constant 0 : index
    %c0_5 = arith.constant 0 : index
    %2 = vector.load %arg6[%c0_3, %c0_4, %c0_5] : memref<6x32x1xf32, #tpu.memory_space<vmem>>, vector<1x32x1xf32>
    %3 = vector.shape_cast %2 : vector<1x32x1xf32> to vector<32x1xf32>
    %c17_i32 = arith.constant 17 : i32
    %4 = tpu.dynamic_rotate %0 by %c17_i32 dim 1 : vector<8x512xf32>, i32 -> vector<8x512xf32>
    %c0_6 = arith.constant 0 : index
    %c0_7 = arith.constant 0 : index
    %5 = vector.load %arg2[%c0_6, %c0_7] : memref<8x512xf32, #tpu.memory_space<vmem>>, vector<1x512xf32>
    %6 = vector.broadcast %5 : vector<1x512xf32> to vector<8x512xf32>
    %7 = arith.mulf %4, %6 : vector<8x512xf32>
    %c0_8 = arith.constant 0 : index
    %c0_9 = arith.constant 0 : index
    %8 = vector.load %arg8[%c0_8, %c0_9] : memref<288x512xf32, #tpu.memory_space<vmem>>, vector<8x512xf32>
    tpu.vector_store %arg8[%c0_8, %c0_9], %7 {strides = array<i32>} : memref<288x512xf32, #tpu.memory_space<vmem>>, vector<8x512xf32>,
    %c16_i32 = arith.constant 16 : i32
    %9 = tpu.dynamic_rotate %0 by %c16_i32 dim 1 : vector<8x512xf32>, i32 -> vector<8x512xf32>
    %c1 = arith.constant 1 : index
    %c0_10 = arith.constant 0 : index
    %10 = vector.load %arg2[%c1, %c0_10] : memref<8x512xf32, #tpu.memory_space<vmem>>, vector<1x512xf32>
    %11 = vector.broadcast %10 : vector<1x512xf32> to vector<8x512xf32>
    %12 = arith.mulf %9, %11 : vector<8x512xf32>
    %c8 = arith.constant 8 : index
    %c0_11 = arith.constant 0 : index
    %13 = vector.load %arg8[%c8, %c0_11] : memref<288x512xf32, #tpu.memory_space<vmem>>, vector<8x512xf32>
    tpu.vector_store %arg8[%c8, %c0_11], %12 {strides = array<i32>} : memref<288x512xf32, #tpu.memory_space<vmem>>, vector<8x512xf32>,
    %c15_i32 = arith.constant 15 : i32
    %14 = tpu.dynamic_rotate %0 by %c15_i32 dim 1 : vector<8x512xf32>, i32 -> vector<8x512xf32>
    %c2 = arith.constant 2 : index
    %c0_12 = arith.constant 0 : index
    %15 = vector.load %arg2[%c2, %c0_12] : memref<8x512xf32, #tpu.memory_space<vmem>>, vector<1x512xf32>
    %16 = vector.broadcast %15 : vector<1x512xf32> to vector<8x512xf32>
    %17 = arith.mulf %14, %16 : vector<8x512xf32>
    %c16 = arith.constant 16 : index
    %c0_13 = arith.constant 0 : index
    %18 = vector.load %arg8[%c16, %c0_13] : memref<288x512xf32, #tpu.memory_space<vmem>>, vector<8x512xf32>
    tpu.vector_store %arg8[%c16, %c0_13], %17 {strides = array<i32>} : memref<288x512xf32, #tpu.memory_space<vmem>>, vector<8x512xf32>,
    %c1_i32 = arith.constant 1 : i32
    %19 = tpu.dynamic_rotate %0 by %c1_i32 dim 1 : vector<8x512xf32>, i32 -> vector<8x512xf32>
    %c3 = arith.constant 3 : index
    %c0_14 = arith.constant 0 : index
    %20 = vector.load %arg2[%c3, %c0_14] : memref<8x512xf32, #tpu.memory_space<vmem>>, vector<1x512xf32>
    %21 = vector.broadcast %20 : vector<1x512xf32> to vector<8x512xf32>
    %22 = arith.mulf %19, %21 : vector<8x512xf32>
    %c24 = arith.constant 24 : index
    %c0_15 = arith.constant 0 : index
    %23 = vector.load %arg8[%c24, %c0_15] : memref<288x512xf32, #tpu.memory_space<vmem>>, vector<8x512xf32>
    tpu.vector_store %arg8[%c24, %c0_15], %22 {strides = array<i32>} : memref<288x512xf32, #tpu.memory_space<vmem>>, vector<8x512xf32>,
    %c32 = arith.constant 32 : index
    %c0_16 = arith.constant 0 : index
    %24 = vector.load %arg8[%c32, %c0_16] : memref<288x512xf32, #tpu.memory_space<vmem>>, vector<8x512xf32>
    tpu.vector_store %arg8[%c32, %c0_16], %0 {strides = array<i32>} : memref<288x512xf32, #tpu.memory_space<vmem>>, vector<8x512xf32>,
    %c511_i32 = arith.constant 511 : i32
    %25 = tpu.dynamic_rotate %0 by %c511_i32 dim 1 : vector<8x512xf32>, i32 -> vector<8x512xf32>
    %c4 = arith.constant 4 : index
    %c0_17 = arith.constant 0 : index
    %26 = vector.load %arg2[%c4, %c0_17] : memref<8x512xf32, #tpu.memory_space<vmem>>, vector<1x512xf32>
    %27 = vector.broadcast %26 : vector<1x512xf32> to vector<8x512xf32>
    %28 = arith.mulf %25, %27 : vector<8x512xf32>
    %c40 = arith.constant 40 : index
    %c0_18 = arith.constant 0 : index
    %29 = vector.load %arg8[%c40, %c0_18] : memref<288x512xf32, #tpu.memory_space<vmem>>, vector<8x512xf32>
    tpu.vector_store %arg8[%c40, %c0_18], %28 {strides = array<i32>} : memref<288x512xf32, #tpu.memory_space<vmem>>, vector<8x512xf32>,
    %c497_i32 = arith.constant 497 : i32
    %30 = tpu.dynamic_rotate %0 by %c497_i32 dim 1 : vector<8x512xf32>, i32 -> vector<8x512xf32>
    %c5 = arith.constant 5 : index
    %c0_19 = arith.constant 0 : index
    %31 = vector.load %arg2[%c5, %c0_19] : memref<8x512xf32, #tpu.memory_space<vmem>>, vector<1x512xf32>
    %32 = vector.broadcast %31 : vector<1x512xf32> to vector<8x512xf32>
    %33 = arith.mulf %30, %32 : vector<8x512xf32>
    %c48 = arith.constant 48 : index
    %c0_20 = arith.constant 0 : index
    %34 = vector.load %arg8[%c48, %c0_20] : memref<288x512xf32, #tpu.memory_space<vmem>>, vector<8x512xf32>
    tpu.vector_store %arg8[%c48, %c0_20], %33 {strides = array<i32>} : memref<288x512xf32, #tpu.memory_space<vmem>>, vector<8x512xf32>,
    %c496_i32 = arith.constant 496 : i32
    %35 = tpu.dynamic_rotate %0 by %c496_i32 dim 1 : vector<8x512xf32>, i32 -> vector<8x512xf32>
    %c6 = arith.constant 6 : index
    %c0_21 = arith.constant 0 : index
    %36 = vector.load %arg2[%c6, %c0_21] : memref<8x512xf32, #tpu.memory_space<vmem>>, vector<1x512xf32>
    %37 = vector.broadcast %36 : vector<1x512xf32> to vector<8x512xf32>
    %38 = arith.mulf %35, %37 : vector<8x512xf32>
    %c56 = arith.constant 56 : index
    %c0_22 = arith.constant 0 : index
    %39 = vector.load %arg8[%c56, %c0_22] : memref<288x512xf32, #tpu.memory_space<vmem>>, vector<8x512xf32>
    tpu.vector_store %arg8[%c56, %c0_22], %38 {strides = array<i32>} : memref<288x512xf32, #tpu.memory_space<vmem>>, vector<8x512xf32>,
    %c495_i32 = arith.constant 495 : i32
    %40 = tpu.dynamic_rotate %0 by %c495_i32 dim 1 : vector<8x512xf32>, i32 -> vector<8x512xf32>
    %c7 = arith.constant 7 : index
    %c0_23 = arith.constant 0 : index
    %41 = vector.load %arg2[%c7, %c0_23] : memref<8x512xf32, #tpu.memory_space<vmem>>, vector<1x512xf32>
    %42 = vector.broadcast %41 : vector<1x512xf32> to vector<8x512xf32>
    %43 = arith.mulf %40, %42 : vector<8x512xf32>
    %c64 = arith.constant 64 : index
    %c0_24 = arith.constant 0 : index
    %44 = vector.load %arg8[%c64, %c0_24] : memref<288x512xf32, #tpu.memory_space<vmem>>, vector<8x512xf32>
    tpu.vector_store %arg8[%c64, %c0_24], %43 {strides = array<i32>} : memref<288x512xf32, #tpu.memory_space<vmem>>, vector<8x512xf32>,
    %c0_25 = arith.constant 0 : index
    %c0_26 = arith.constant 0 : index
    %45 = vector.load %arg8[%c0_25, %c0_26] : memref<288x512xf32, #tpu.memory_space<vmem>>, vector<72x512xf32>
    %cst = arith.constant dense<0.000000e+00> : vector<32x512xf32>
    %46 = tpu.matmul %1, %45, %cst {dimension_numbers = #tpu.dot_dimension_numbers<[1], [0], [0], [1], [0, 0, 1, 1], [], []>} : vector<32x72xf32>, vector<72x512xf32>, vector<32x512xf32> -> vector<32x512xf32>
    %47 = vector.broadcast %3 : vector<32x1xf32> to vector<32x512xf32>
    %48 = arith.addf %46, %47 : vector<32x512xf32>
    %cst_27 = arith.constant 0.000000e+00 : f32
    %49 = vector.broadcast %cst_27 : f32 to vector<32x512xf32>
    %50 = arith.cmpf oge, %48, %49 : vector<32x512xf32>
    %cst_28 = arith.constant 0.00999999977 : f32
    %51 = vector.broadcast %cst_28 : f32 to vector<32x512xf32>
    %52 = arith.mulf %48, %51 : vector<32x512xf32>
    %53 = arith.select %50, %48, %52 : vector<32x512xi1>, vector<32x512xf32>
    %c0_29 = arith.constant 0 : index
    %c0_30 = arith.constant 0 : index
    %54 = vector.load %arg9[%c0_29, %c0_30] : memref<32x512xf32, #tpu.memory_space<vmem>>, vector<32x512xf32>
    tpu.vector_store %arg9[%c0_29, %c0_30], %53 {strides = array<i32>} : memref<32x512xf32, #tpu.memory_space<vmem>>, vector<32x512xf32>,
    %c0_31 = arith.constant 0 : index
    %c0_32 = arith.constant 0 : index
    %c0_33 = arith.constant 0 : index
    %55 = vector.load %arg4[%c0_31, %c0_32, %c0_33] : memref<4x32x288xf32, #tpu.memory_space<vmem>>, vector<1x32x288xf32>
    %56 = vector.shape_cast %55 : vector<1x32x288xf32> to vector<32x288xf32>
    %c1_34 = arith.constant 1 : index
    %c0_35 = arith.constant 0 : index
    %c0_36 = arith.constant 0 : index
    %57 = vector.load %arg4[%c1_34, %c0_35, %c0_36] : memref<4x32x288xf32, #tpu.memory_space<vmem>>, vector<1x32x288xf32>
    %58 = vector.shape_cast %57 : vector<1x32x288xf32> to vector<32x288xf32>
    %c0_37 = arith.constant 0 : index
    %c0_38 = arith.constant 0 : index
    %59 = vector.load %arg9[%c0_37, %c0_38] : memref<32x512xf32, #tpu.memory_space<vmem>>, vector<32x512xf32>
    %c1_39 = arith.constant 1 : index
    %c0_40 = arith.constant 0 : index
    %c0_41 = arith.constant 0 : index
    %60 = vector.load %arg6[%c1_39, %c0_40, %c0_41] : memref<6x32x1xf32, #tpu.memory_space<vmem>>, vector<1x32x1xf32>
    %61 = vector.shape_cast %60 : vector<1x32x1xf32> to vector<32x1xf32>
    %c17_i32_42 = arith.constant 17 : i32
    %62 = tpu.dynamic_rotate %59 by %c17_i32_42 dim 1 : vector<32x512xf32>, i32 -> vector<32x512xf32>
    %c0_43 = arith.constant 0 : index
    %c0_44 = arith.constant 0 : index
    %63 = vector.load %arg2[%c0_43, %c0_44] : memref<8x512xf32, #tpu.memory_space<vmem>>, vector<1x512xf32>
    %64 = vector.broadcast %63 : vector<1x512xf32> to vector<32x512xf32>
    %65 = arith.mulf %62, %64 : vector<32x512xf32>
    %c0_45 = arith.constant 0 : index
    %c0_46 = arith.constant 0 : index
    %66 = vector.load %arg8[%c0_45, %c0_46] : memref<288x512xf32, #tpu.memory_space<vmem>>, vector<32x512xf32>
    tpu.vector_store %arg8[%c0_45, %c0_46], %65 {strides = array<i32>} : memref<288x512xf32, #tpu.memory_space<vmem>>, vector<32x512xf32>,
    %c16_i32_47 = arith.constant 16 : i32
    %67 = tpu.dynamic_rotate %59 by %c16_i32_47 dim 1 : vector<32x512xf32>, i32 -> vector<32x512xf32>
    %c1_48 = arith.constant 1 : index
    %c0_49 = arith.constant 0 : index
    %68 = vector.load %arg2[%c1_48, %c0_49] : memref<8x512xf32, #tpu.memory_space<vmem>>, vector<1x512xf32>
    %69 = vector.broadcast %68 : vector<1x512xf32> to vector<32x512xf32>
    %70 = arith.mulf %67, %69 : vector<32x512xf32>
    %c32_50 = arith.constant 32 : index
    %c0_51 = arith.constant 0 : index
    %71 = vector.load %arg8[%c32_50, %c0_51] : memref<288x512xf32, #tpu.memory_space<vmem>>, vector<32x512xf32>
    tpu.vector_store %arg8[%c32_50, %c0_51], %70 {strides = array<i32>} : memref<288x512xf32, #tpu.memory_space<vmem>>, vector<32x512xf32>,
    %c15_i32_52 = arith.constant 15 : i32
    %72 = tpu.dynamic_rotate %59 by %c15_i32_52 dim 1 : vector<32x512xf32>, i32 -> vector<32x512xf32>
    %c2_53 = arith.constant 2 : index
    %c0_54 = arith.constant 0 : index
    %73 = vector.load %arg2[%c2_53, %c0_54] : memref<8x512xf32, #tpu.memory_space<vmem>>, vector<1x512xf32>
    %74 = vector.broadcast %73 : vector<1x512xf32> to vector<32x512xf32>
    %75 = arith.mulf %72, %74 : vector<32x512xf32>
    %c64_55 = arith.constant 64 : index
    %c0_56 = arith.constant 0 : index
    %76 = vector.load %arg8[%c64_55, %c0_56] : memref<288x512xf32, #tpu.memory_space<vmem>>, vector<32x512xf32>
    tpu.vector_store %arg8[%c64_55, %c0_56], %75 {strides = array<i32>} : memref<288x512xf32, #tpu.memory_space<vmem>>, vector<32x512xf32>,
    %c1_i32_57 = arith.constant 1 : i32
    %77 = tpu.dynamic_rotate %59 by %c1_i32_57 dim 1 : vector<32x512xf32>, i32 -> vector<32x512xf32>
    %c3_58 = arith.constant 3 : index
    %c0_59 = arith.constant 0 : index
    %78 = vector.load %arg2[%c3_58, %c0_59] : memref<8x512xf32, #tpu.memory_space<vmem>>, vector<1x512xf32>
    %79 = vector.broadcast %78 : vector<1x512xf32> to vector<32x512xf32>
    %80 = arith.mulf %77, %79 : vector<32x512xf32>
    %c96 = arith.constant 96 : index
    %c0_60 = arith.constant 0 : index
    %81 = vector.load %arg8[%c96, %c0_60] : memref<288x512xf32, #tpu.memory_space<vmem>>, vector<32x512xf32>
    tpu.vector_store %arg8[%c96, %c0_60], %80 {strides = array<i32>} : memref<288x512xf32, #tpu.memory_space<vmem>>, vector<32x512xf32>,
    %c128 = arith.constant 128 : index
    %c0_61 = arith.constant 0 : index
    %82 = vector.load %arg8[%c128, %c0_61] : memref<288x512xf32, #tpu.memory_space<vmem>>, vector<32x512xf32>
    tpu.vector_store %arg8[%c128, %c0_61], %59 {strides = array<i32>} : memref<288x512xf32, #tpu.memory_space<vmem>>, vector<32x512xf32>,
    %c511_i32_62 = arith.constant 511 : i32
    %83 = tpu.dynamic_rotate %59 by %c511_i32_62 dim 1 : vector<32x512xf32>, i32 -> vector<32x512xf32>
    %c4_63 = arith.constant 4 : index
    %c0_64 = arith.constant 0 : index
    %84 = vector.load %arg2[%c4_63, %c0_64] : memref<8x512xf32, #tpu.memory_space<vmem>>, vector<1x512xf32>
    %85 = vector.broadcast %84 : vector<1x512xf32> to vector<32x512xf32>
    %86 = arith.mulf %83, %85 : vector<32x512xf32>
    %c160 = arith.constant 160 : index
    %c0_65 = arith.constant 0 : index
    %87 = vector.load %arg8[%c160, %c0_65] : memref<288x512xf32, #tpu.memory_space<vmem>>, vector<32x512xf32>
    tpu.vector_store %arg8[%c160, %c0_65], %86 {strides = array<i32>} : memref<288x512xf32, #tpu.memory_space<vmem>>, vector<32x512xf32>,
    %c497_i32_66 = arith.constant 497 : i32
    %88 = tpu.dynamic_rotate %59 by %c497_i32_66 dim 1 : vector<32x512xf32>, i32 -> vector<32x512xf32>
    %c5_67 = arith.constant 5 : index
    %c0_68 = arith.constant 0 : index
    %89 = vector.load %arg2[%c5_67, %c0_68] : memref<8x512xf32, #tpu.memory_space<vmem>>, vector<1x512xf32>
    %90 = vector.broadcast %89 : vector<1x512xf32> to vector<32x512xf32>
    %91 = arith.mulf %88, %90 : vector<32x512xf32>
    %c192 = arith.constant 192 : index
    %c0_69 = arith.constant 0 : index
    %92 = vector.load %arg8[%c192, %c0_69] : memref<288x512xf32, #tpu.memory_space<vmem>>, vector<32x512xf32>
    tpu.vector_store %arg8[%c192, %c0_69], %91 {strides = array<i32>} : memref<288x512xf32, #tpu.memory_space<vmem>>, vector<32x512xf32>,
    %c496_i32_70 = arith.constant 496 : i32
    %93 = tpu.dynamic_rotate %59 by %c496_i32_70 dim 1 : vector<32x512xf32>, i32 -> vector<32x512xf32>
    %c6_71 = arith.constant 6 : index
    %c0_72 = arith.constant 0 : index
    %94 = vector.load %arg2[%c6_71, %c0_72] : memref<8x512xf32, #tpu.memory_space<vmem>>, vector<1x512xf32>
    %95 = vector.broadcast %94 : vector<1x512xf32> to vector<32x512xf32>
    %96 = arith.mulf %93, %95 : vector<32x512xf32>
    %c224 = arith.constant 224 : index
    %c0_73 = arith.constant 0 : index
    %97 = vector.load %arg8[%c224, %c0_73] : memref<288x512xf32, #tpu.memory_space<vmem>>, vector<32x512xf32>
    tpu.vector_store %arg8[%c224, %c0_73], %96 {strides = array<i32>} : memref<288x512xf32, #tpu.memory_space<vmem>>, vector<32x512xf32>,
    %c495_i32_74 = arith.constant 495 : i32
    %98 = tpu.dynamic_rotate %59 by %c495_i32_74 dim 1 : vector<32x512xf32>, i32 -> vector<32x512xf32>
    %c7_75 = arith.constant 7 : index
    %c0_76 = arith.constant 0 : index
    %99 = vector.load %arg2[%c7_75, %c0_76] : memref<8x512xf32, #tpu.memory_space<vmem>>, vector<1x512xf32>
    %100 = vector.broadcast %99 : vector<1x512xf32> to vector<32x512xf32>
    %101 = arith.mulf %98, %100 : vector<32x512xf32>
    %c256 = arith.constant 256 : index
    %c0_77 = arith.constant 0 : index
    %102 = vector.load %arg8[%c256, %c0_77] : memref<288x512xf32, #tpu.memory_space<vmem>>, vector<32x512xf32>
    tpu.vector_store %arg8[%c256, %c0_77], %101 {strides = array<i32>} : memref<288x512xf32, #tpu.memory_space<vmem>>, vector<32x512xf32>,
    %c0_78 = arith.constant 0 : index
    %c0_79 = arith.constant 0 : index
    %103 = vector.load %arg8[%c0_78, %c0_79] : memref<288x512xf32, #tpu.memory_space<vmem>>, vector<288x512xf32>
    %cst_80 = arith.constant dense<0.000000e+00> : vector<32x512xf32>
    %104 = tpu.matmul %56, %103, %cst_80 {dimension_numbers = #tpu.dot_dimension_numbers<[1], [0], [0], [1], [0, 0, 1, 1], [], []>} : vector<32x288xf32>, vector<288x512xf32>, vector<32x512xf32> -> vector<32x512xf32>
    %105 = vector.broadcast %61 : vector<32x1xf32> to vector<32x512xf32>
    %106 = arith.addf %104, %105 : vector<32x512xf32>
    %cst_81 = arith.constant 0.000000e+00 : f32
    %107 = vector.broadcast %cst_81 : f32 to vector<32x512xf32>
    %108 = arith.maximumf %106, %107 : vector<32x512xf32>
    %c2_82 = arith.constant 2 : index
    %c0_83 = arith.constant 0 : index
    %c0_84 = arith.constant 0 : index
    %109 = vector.load %arg6[%c2_82, %c0_83, %c0_84] : memref<6x32x1xf32, #tpu.memory_space<vmem>>, vector<1x32x1xf32>
    %110 = vector.shape_cast %109 : vector<1x32x1xf32> to vector<32x1xf32>
    %c17_i32_85 = arith.constant 17 : i32
    %111 = tpu.dynamic_rotate %108 by %c17_i32_85 dim 1 : vector<32x512xf32>, i32 -> vector<32x512xf32>
    %c0_86 = arith.constant 0 : index
    %c0_87 = arith.constant 0 : index
    %112 = vector.load %arg2[%c0_86, %c0_87] : memref<8x512xf32, #tpu.memory_space<vmem>>, vector<1x512xf32>
    %113 = vector.broadcast %112 : vector<1x512xf32> to vector<32x512xf32>
    %114 = arith.mulf %111, %113 : vector<32x512xf32>
    %c0_88 = arith.constant 0 : index
    %c0_89 = arith.constant 0 : index
    %115 = vector.load %arg8[%c0_88, %c0_89] : memref<288x512xf32, #tpu.memory_space<vmem>>, vector<32x512xf32>
    tpu.vector_store %arg8[%c0_88, %c0_89], %114 {strides = array<i32>} : memref<288x512xf32, #tpu.memory_space<vmem>>, vector<32x512xf32>,
    %c16_i32_90 = arith.constant 16 : i32
    %116 = tpu.dynamic_rotate %108 by %c16_i32_90 dim 1 : vector<32x512xf32>, i32 -> vector<32x512xf32>
    %c1_91 = arith.constant 1 : index
    %c0_92 = arith.constant 0 : index
    %117 = vector.load %arg2[%c1_91, %c0_92] : memref<8x512xf32, #tpu.memory_space<vmem>>, vector<1x512xf32>
    %118 = vector.broadcast %117 : vector<1x512xf32> to vector<32x512xf32>
    %119 = arith.mulf %116, %118 : vector<32x512xf32>
    %c32_93 = arith.constant 32 : index
    %c0_94 = arith.constant 0 : index
    %120 = vector.load %arg8[%c32_93, %c0_94] : memref<288x512xf32, #tpu.memory_space<vmem>>, vector<32x512xf32>
    tpu.vector_store %arg8[%c32_93, %c0_94], %119 {strides = array<i32>} : memref<288x512xf32, #tpu.memory_space<vmem>>, vector<32x512xf32>,
    %c15_i32_95 = arith.constant 15 : i32
    %121 = tpu.dynamic_rotate %108 by %c15_i32_95 dim 1 : vector<32x512xf32>, i32 -> vector<32x512xf32>
    %c2_96 = arith.constant 2 : index
    %c0_97 = arith.constant 0 : index
    %122 = vector.load %arg2[%c2_96, %c0_97] : memref<8x512xf32, #tpu.memory_space<vmem>>, vector<1x512xf32>
    %123 = vector.broadcast %122 : vector<1x512xf32> to vector<32x512xf32>
    %124 = arith.mulf %121, %123 : vector<32x512xf32>
    %c64_98 = arith.constant 64 : index
    %c0_99 = arith.constant 0 : index
    %125 = vector.load %arg8[%c64_98, %c0_99] : memref<288x512xf32, #tpu.memory_space<vmem>>, vector<32x512xf32>
    tpu.vector_store %arg8[%c64_98, %c0_99], %124 {strides = array<i32>} : memref<288x512xf32, #tpu.memory_space<vmem>>, vector<32x512xf32>,
    %c1_i32_100 = arith.constant 1 : i32
    %126 = tpu.dynamic_rotate %108 by %c1_i32_100 dim 1 : vector<32x512xf32>, i32 -> vector<32x512xf32>
    %c3_101 = arith.constant 3 : index
    %c0_102 = arith.constant 0 : index
    %127 = vector.load %arg2[%c3_101, %c0_102] : memref<8x512xf32, #tpu.memory_space<vmem>>, vector<1x512xf32>
    %128 = vector.broadcast %127 : vector<1x512xf32> to vector<32x512xf32>
    %129 = arith.mulf %126, %128 : vector<32x512xf32>
    %c96_103 = arith.constant 96 : index
    %c0_104 = arith.constant 0 : index
    %130 = vector.load %arg8[%c96_103, %c0_104] : memref<288x512xf32, #tpu.memory_space<vmem>>, vector<32x512xf32>
    tpu.vector_store %arg8[%c96_103, %c0_104], %129 {strides = array<i32>} : memref<288x512xf32, #tpu.memory_space<vmem>>, vector<32x512xf32>,
    %c128_105 = arith.constant 128 : index
    %c0_106 = arith.constant 0 : index
    %131 = vector.load %arg8[%c128_105, %c0_106] : memref<288x512xf32, #tpu.memory_space<vmem>>, vector<32x512xf32>
    tpu.vector_store %arg8[%c128_105, %c0_106], %108 {strides = array<i32>} : memref<288x512xf32, #tpu.memory_space<vmem>>, vector<32x512xf32>,
    %c511_i32_107 = arith.constant 511 : i32
    %132 = tpu.dynamic_rotate %108 by %c511_i32_107 dim 1 : vector<32x512xf32>, i32 -> vector<32x512xf32>
    %c4_108 = arith.constant 4 : index
    %c0_109 = arith.constant 0 : index
    %133 = vector.load %arg2[%c4_108, %c0_109] : memref<8x512xf32, #tpu.memory_space<vmem>>, vector<1x512xf32>
    %134 = vector.broadcast %133 : vector<1x512xf32> to vector<32x512xf32>
    %135 = arith.mulf %132, %134 : vector<32x512xf32>
    %c160_110 = arith.constant 160 : index
    %c0_111 = arith.constant 0 : index
    %136 = vector.load %arg8[%c160_110, %c0_111] : memref<288x512xf32, #tpu.memory_space<vmem>>, vector<32x512xf32>
    tpu.vector_store %arg8[%c160_110, %c0_111], %135 {strides = array<i32>} : memref<288x512xf32, #tpu.memory_space<vmem>>, vector<32x512xf32>,
    %c497_i32_112 = arith.constant 497 : i32
    %137 = tpu.dynamic_rotate %108 by %c497_i32_112 dim 1 : vector<32x512xf32>, i32 -> vector<32x512xf32>
    %c5_113 = arith.constant 5 : index
    %c0_114 = arith.constant 0 : index
    %138 = vector.load %arg2[%c5_113, %c0_114] : memref<8x512xf32, #tpu.memory_space<vmem>>, vector<1x512xf32>
    %139 = vector.broadcast %138 : vector<1x512xf32> to vector<32x512xf32>
    %140 = arith.mulf %137, %139 : vector<32x512xf32>
    %c192_115 = arith.constant 192 : index
    %c0_116 = arith.constant 0 : index
    %141 = vector.load %arg8[%c192_115, %c0_116] : memref<288x512xf32, #tpu.memory_space<vmem>>, vector<32x512xf32>
    tpu.vector_store %arg8[%c192_115, %c0_116], %140 {strides = array<i32>} : memref<288x512xf32, #tpu.memory_space<vmem>>, vector<32x512xf32>,
    %c496_i32_117 = arith.constant 496 : i32
    %142 = tpu.dynamic_rotate %108 by %c496_i32_117 dim 1 : vector<32x512xf32>, i32 -> vector<32x512xf32>
    %c6_118 = arith.constant 6 : index
    %c0_119 = arith.constant 0 : index
    %143 = vector.load %arg2[%c6_118, %c0_119] : memref<8x512xf32, #tpu.memory_space<vmem>>, vector<1x512xf32>
    %144 = vector.broadcast %143 : vector<1x512xf32> to vector<32x512xf32>
    %145 = arith.mulf %142, %144 : vector<32x512xf32>
    %c224_120 = arith.constant 224 : index
    %c0_121 = arith.constant 0 : index
    %146 = vector.load %arg8[%c224_120, %c0_121] : memref<288x512xf32, #tpu.memory_space<vmem>>, vector<32x512xf32>
    tpu.vector_store %arg8[%c224_120, %c0_121], %145 {strides = array<i32>} : memref<288x512xf32, #tpu.memory_space<vmem>>, vector<32x512xf32>,
    %c495_i32_122 = arith.constant 495 : i32
    %147 = tpu.dynamic_rotate %108 by %c495_i32_122 dim 1 : vector<32x512xf32>, i32 -> vector<32x512xf32>
    %c7_123 = arith.constant 7 : index
    %c0_124 = arith.constant 0 : index
    %148 = vector.load %arg2[%c7_123, %c0_124] : memref<8x512xf32, #tpu.memory_space<vmem>>, vector<1x512xf32>
    %149 = vector.broadcast %148 : vector<1x512xf32> to vector<32x512xf32>
    %150 = arith.mulf %147, %149 : vector<32x512xf32>
    %c256_125 = arith.constant 256 : index
    %c0_126 = arith.constant 0 : index
    %151 = vector.load %arg8[%c256_125, %c0_126] : memref<288x512xf32, #tpu.memory_space<vmem>>, vector<32x512xf32>
    tpu.vector_store %arg8[%c256_125, %c0_126], %150 {strides = array<i32>} : memref<288x512xf32, #tpu.memory_space<vmem>>, vector<32x512xf32>,
    %c0_127 = arith.constant 0 : index
    %c0_128 = arith.constant 0 : index
    %152 = vector.load %arg8[%c0_127, %c0_128] : memref<288x512xf32, #tpu.memory_space<vmem>>, vector<288x512xf32>
    %cst_129 = arith.constant dense<0.000000e+00> : vector<32x512xf32>
    %153 = tpu.matmul %58, %152, %cst_129 {dimension_numbers = #tpu.dot_dimension_numbers<[1], [0], [0], [1], [0, 0, 1, 1], [], []>} : vector<32x288xf32>, vector<288x512xf32>, vector<32x512xf32> -> vector<32x512xf32>
    %154 = vector.broadcast %110 : vector<32x1xf32> to vector<32x512xf32>
    %155 = arith.addf %153, %154 : vector<32x512xf32>
    %c0_130 = arith.constant 0 : index
    %c0_131 = arith.constant 0 : index
    %156 = vector.load %arg9[%c0_130, %c0_131] : memref<32x512xf32, #tpu.memory_space<vmem>>, vector<32x512xf32>
    %157 = arith.addf %155, %156 : vector<32x512xf32>
    %cst_132 = arith.constant 0.000000e+00 : f32
    %158 = vector.broadcast %cst_132 : f32 to vector<32x512xf32>
    %159 = arith.maximumf %157, %158 : vector<32x512xf32>
    %c0_133 = arith.constant 0 : index
    %c0_134 = arith.constant 0 : index
    %160 = vector.load %arg9[%c0_133, %c0_134] : memref<32x512xf32, #tpu.memory_space<vmem>>, vector<32x512xf32>
    tpu.vector_store %arg9[%c0_133, %c0_134], %159 {strides = array<i32>} : memref<32x512xf32, #tpu.memory_space<vmem>>, vector<32x512xf32>,
    %c2_135 = arith.constant 2 : index
    %c0_136 = arith.constant 0 : index
    %c0_137 = arith.constant 0 : index
    %161 = vector.load %arg4[%c2_135, %c0_136, %c0_137] : memref<4x32x288xf32, #tpu.memory_space<vmem>>, vector<1x32x288xf32>
    %162 = vector.shape_cast %161 : vector<1x32x288xf32> to vector<32x288xf32>
    %c3_138 = arith.constant 3 : index
    %c0_139 = arith.constant 0 : index
    %c0_140 = arith.constant 0 : index
    %163 = vector.load %arg4[%c3_138, %c0_139, %c0_140] : memref<4x32x288xf32, #tpu.memory_space<vmem>>, vector<1x32x288xf32>
    %164 = vector.shape_cast %163 : vector<1x32x288xf32> to vector<32x288xf32>
    %c0_141 = arith.constant 0 : index
    %c0_142 = arith.constant 0 : index
    %165 = vector.load %arg9[%c0_141, %c0_142] : memref<32x512xf32, #tpu.memory_space<vmem>>, vector<32x512xf32>
    %c3_143 = arith.constant 3 : index
    %c0_144 = arith.constant 0 : index
    %c0_145 = arith.constant 0 : index
    %166 = vector.load %arg6[%c3_143, %c0_144, %c0_145] : memref<6x32x1xf32, #tpu.memory_space<vmem>>, vector<1x32x1xf32>
    %167 = vector.shape_cast %166 : vector<1x32x1xf32> to vector<32x1xf32>
    %c17_i32_146 = arith.constant 17 : i32
    %168 = tpu.dynamic_rotate %165 by %c17_i32_146 dim 1 : vector<32x512xf32>, i32 -> vector<32x512xf32>
    %c0_147 = arith.constant 0 : index
    %c0_148 = arith.constant 0 : index
    %169 = vector.load %arg2[%c0_147, %c0_148] : memref<8x512xf32, #tpu.memory_space<vmem>>, vector<1x512xf32>
    %170 = vector.broadcast %169 : vector<1x512xf32> to vector<32x512xf32>
    %171 = arith.mulf %168, %170 : vector<32x512xf32>
    %c0_149 = arith.constant 0 : index
    %c0_150 = arith.constant 0 : index
    %172 = vector.load %arg8[%c0_149, %c0_150] : memref<288x512xf32, #tpu.memory_space<vmem>>, vector<32x512xf32>
    tpu.vector_store %arg8[%c0_149, %c0_150], %171 {strides = array<i32>} : memref<288x512xf32, #tpu.memory_space<vmem>>, vector<32x512xf32>,
    %c16_i32_151 = arith.constant 16 : i32
    %173 = tpu.dynamic_rotate %165 by %c16_i32_151 dim 1 : vector<32x512xf32>, i32 -> vector<32x512xf32>
    %c1_152 = arith.constant 1 : index
    %c0_153 = arith.constant 0 : index
    %174 = vector.load %arg2[%c1_152, %c0_153] : memref<8x512xf32, #tpu.memory_space<vmem>>, vector<1x512xf32>
    %175 = vector.broadcast %174 : vector<1x512xf32> to vector<32x512xf32>
    %176 = arith.mulf %173, %175 : vector<32x512xf32>
    %c32_154 = arith.constant 32 : index
    %c0_155 = arith.constant 0 : index
    %177 = vector.load %arg8[%c32_154, %c0_155] : memref<288x512xf32, #tpu.memory_space<vmem>>, vector<32x512xf32>
    tpu.vector_store %arg8[%c32_154, %c0_155], %176 {strides = array<i32>} : memref<288x512xf32, #tpu.memory_space<vmem>>, vector<32x512xf32>,
    %c15_i32_156 = arith.constant 15 : i32
    %178 = tpu.dynamic_rotate %165 by %c15_i32_156 dim 1 : vector<32x512xf32>, i32 -> vector<32x512xf32>
    %c2_157 = arith.constant 2 : index
    %c0_158 = arith.constant 0 : index
    %179 = vector.load %arg2[%c2_157, %c0_158] : memref<8x512xf32, #tpu.memory_space<vmem>>, vector<1x512xf32>
    %180 = vector.broadcast %179 : vector<1x512xf32> to vector<32x512xf32>
    %181 = arith.mulf %178, %180 : vector<32x512xf32>
    %c64_159 = arith.constant 64 : index
    %c0_160 = arith.constant 0 : index
    %182 = vector.load %arg8[%c64_159, %c0_160] : memref<288x512xf32, #tpu.memory_space<vmem>>, vector<32x512xf32>
    tpu.vector_store %arg8[%c64_159, %c0_160], %181 {strides = array<i32>} : memref<288x512xf32, #tpu.memory_space<vmem>>, vector<32x512xf32>,
    %c1_i32_161 = arith.constant 1 : i32
    %183 = tpu.dynamic_rotate %165 by %c1_i32_161 dim 1 : vector<32x512xf32>, i32 -> vector<32x512xf32>
    %c3_162 = arith.constant 3 : index
    %c0_163 = arith.constant 0 : index
    %184 = vector.load %arg2[%c3_162, %c0_163] : memref<8x512xf32, #tpu.memory_space<vmem>>, vector<1x512xf32>
    %185 = vector.broadcast %184 : vector<1x512xf32> to vector<32x512xf32>
    %186 = arith.mulf %183, %185 : vector<32x512xf32>
    %c96_164 = arith.constant 96 : index
    %c0_165 = arith.constant 0 : index
    %187 = vector.load %arg8[%c96_164, %c0_165] : memref<288x512xf32, #tpu.memory_space<vmem>>, vector<32x512xf32>
    tpu.vector_store %arg8[%c96_164, %c0_165], %186 {strides = array<i32>} : memref<288x512xf32, #tpu.memory_space<vmem>>, vector<32x512xf32>,
    %c128_166 = arith.constant 128 : index
    %c0_167 = arith.constant 0 : index
    %188 = vector.load %arg8[%c128_166, %c0_167] : memref<288x512xf32, #tpu.memory_space<vmem>>, vector<32x512xf32>
    tpu.vector_store %arg8[%c128_166, %c0_167], %165 {strides = array<i32>} : memref<288x512xf32, #tpu.memory_space<vmem>>, vector<32x512xf32>,
    %c511_i32_168 = arith.constant 511 : i32
    %189 = tpu.dynamic_rotate %165 by %c511_i32_168 dim 1 : vector<32x512xf32>, i32 -> vector<32x512xf32>
    %c4_169 = arith.constant 4 : index
    %c0_170 = arith.constant 0 : index
    %190 = vector.load %arg2[%c4_169, %c0_170] : memref<8x512xf32, #tpu.memory_space<vmem>>, vector<1x512xf32>
    %191 = vector.broadcast %190 : vector<1x512xf32> to vector<32x512xf32>
    %192 = arith.mulf %189, %191 : vector<32x512xf32>
    %c160_171 = arith.constant 160 : index
    %c0_172 = arith.constant 0 : index
    %193 = vector.load %arg8[%c160_171, %c0_172] : memref<288x512xf32, #tpu.memory_space<vmem>>, vector<32x512xf32>
    tpu.vector_store %arg8[%c160_171, %c0_172], %192 {strides = array<i32>} : memref<288x512xf32, #tpu.memory_space<vmem>>, vector<32x512xf32>,
    %c497_i32_173 = arith.constant 497 : i32
    %194 = tpu.dynamic_rotate %165 by %c497_i32_173 dim 1 : vector<32x512xf32>, i32 -> vector<32x512xf32>
    %c5_174 = arith.constant 5 : index
    %c0_175 = arith.constant 0 : index
    %195 = vector.load %arg2[%c5_174, %c0_175] : memref<8x512xf32, #tpu.memory_space<vmem>>, vector<1x512xf32>
    %196 = vector.broadcast %195 : vector<1x512xf32> to vector<32x512xf32>
    %197 = arith.mulf %194, %196 : vector<32x512xf32>
    %c192_176 = arith.constant 192 : index
    %c0_177 = arith.constant 0 : index
    %198 = vector.load %arg8[%c192_176, %c0_177] : memref<288x512xf32, #tpu.memory_space<vmem>>, vector<32x512xf32>
    tpu.vector_store %arg8[%c192_176, %c0_177], %197 {strides = array<i32>} : memref<288x512xf32, #tpu.memory_space<vmem>>, vector<32x512xf32>,
    %c496_i32_178 = arith.constant 496 : i32
    %199 = tpu.dynamic_rotate %165 by %c496_i32_178 dim 1 : vector<32x512xf32>, i32 -> vector<32x512xf32>
    %c6_179 = arith.constant 6 : index
    %c0_180 = arith.constant 0 : index
    %200 = vector.load %arg2[%c6_179, %c0_180] : memref<8x512xf32, #tpu.memory_space<vmem>>, vector<1x512xf32>
    %201 = vector.broadcast %200 : vector<1x512xf32> to vector<32x512xf32>
    %202 = arith.mulf %199, %201 : vector<32x512xf32>
    %c224_181 = arith.constant 224 : index
    %c0_182 = arith.constant 0 : index
    %203 = vector.load %arg8[%c224_181, %c0_182] : memref<288x512xf32, #tpu.memory_space<vmem>>, vector<32x512xf32>
    tpu.vector_store %arg8[%c224_181, %c0_182], %202 {strides = array<i32>} : memref<288x512xf32, #tpu.memory_space<vmem>>, vector<32x512xf32>,
    %c495_i32_183 = arith.constant 495 : i32
    %204 = tpu.dynamic_rotate %165 by %c495_i32_183 dim 1 : vector<32x512xf32>, i32 -> vector<32x512xf32>
    %c7_184 = arith.constant 7 : index
    %c0_185 = arith.constant 0 : index
    %205 = vector.load %arg2[%c7_184, %c0_185] : memref<8x512xf32, #tpu.memory_space<vmem>>, vector<1x512xf32>
    %206 = vector.broadcast %205 : vector<1x512xf32> to vector<32x512xf32>
    %207 = arith.mulf %204, %206 : vector<32x512xf32>
    %c256_186 = arith.constant 256 : index
    %c0_187 = arith.constant 0 : index
    %208 = vector.load %arg8[%c256_186, %c0_187] : memref<288x512xf32, #tpu.memory_space<vmem>>, vector<32x512xf32>
    tpu.vector_store %arg8[%c256_186, %c0_187], %207 {strides = array<i32>} : memref<288x512xf32, #tpu.memory_space<vmem>>, vector<32x512xf32>,
    %c0_188 = arith.constant 0 : index
    %c0_189 = arith.constant 0 : index
    %209 = vector.load %arg8[%c0_188, %c0_189] : memref<288x512xf32, #tpu.memory_space<vmem>>, vector<288x512xf32>
    %cst_190 = arith.constant dense<0.000000e+00> : vector<32x512xf32>
    %210 = tpu.matmul %162, %209, %cst_190 {dimension_numbers = #tpu.dot_dimension_numbers<[1], [0], [0], [1], [0, 0, 1, 1], [], []>} : vector<32x288xf32>, vector<288x512xf32>, vector<32x512xf32> -> vector<32x512xf32>
    %211 = vector.broadcast %167 : vector<32x1xf32> to vector<32x512xf32>
    %212 = arith.addf %210, %211 : vector<32x512xf32>
    %cst_191 = arith.constant 0.000000e+00 : f32
    %213 = vector.broadcast %cst_191 : f32 to vector<32x512xf32>
    %214 = arith.maximumf %212, %213 : vector<32x512xf32>
    %c4_192 = arith.constant 4 : index
    %c0_193 = arith.constant 0 : index
    %c0_194 = arith.constant 0 : index
    %215 = vector.load %arg6[%c4_192, %c0_193, %c0_194] : memref<6x32x1xf32, #tpu.memory_space<vmem>>, vector<1x32x1xf32>
    %216 = vector.shape_cast %215 : vector<1x32x1xf32> to vector<32x1xf32>
    %c17_i32_195 = arith.constant 17 : i32
    %217 = tpu.dynamic_rotate %214 by %c17_i32_195 dim 1 : vector<32x512xf32>, i32 -> vector<32x512xf32>
    %c0_196 = arith.constant 0 : index
    %c0_197 = arith.constant 0 : index
    %218 = vector.load %arg2[%c0_196, %c0_197] : memref<8x512xf32, #tpu.memory_space<vmem>>, vector<1x512xf32>
    %219 = vector.broadcast %218 : vector<1x512xf32> to vector<32x512xf32>
    %220 = arith.mulf %217, %219 : vector<32x512xf32>
    %c0_198 = arith.constant 0 : index
    %c0_199 = arith.constant 0 : index
    %221 = vector.load %arg8[%c0_198, %c0_199] : memref<288x512xf32, #tpu.memory_space<vmem>>, vector<32x512xf32>
    tpu.vector_store %arg8[%c0_198, %c0_199], %220 {strides = array<i32>} : memref<288x512xf32, #tpu.memory_space<vmem>>, vector<32x512xf32>,
    %c16_i32_200 = arith.constant 16 : i32
    %222 = tpu.dynamic_rotate %214 by %c16_i32_200 dim 1 : vector<32x512xf32>, i32 -> vector<32x512xf32>
    %c1_201 = arith.constant 1 : index
    %c0_202 = arith.constant 0 : index
    %223 = vector.load %arg2[%c1_201, %c0_202] : memref<8x512xf32, #tpu.memory_space<vmem>>, vector<1x512xf32>
    %224 = vector.broadcast %223 : vector<1x512xf32> to vector<32x512xf32>
    %225 = arith.mulf %222, %224 : vector<32x512xf32>
    %c32_203 = arith.constant 32 : index
    %c0_204 = arith.constant 0 : index
    %226 = vector.load %arg8[%c32_203, %c0_204] : memref<288x512xf32, #tpu.memory_space<vmem>>, vector<32x512xf32>
    tpu.vector_store %arg8[%c32_203, %c0_204], %225 {strides = array<i32>} : memref<288x512xf32, #tpu.memory_space<vmem>>, vector<32x512xf32>,
    %c15_i32_205 = arith.constant 15 : i32
    %227 = tpu.dynamic_rotate %214 by %c15_i32_205 dim 1 : vector<32x512xf32>, i32 -> vector<32x512xf32>
    %c2_206 = arith.constant 2 : index
    %c0_207 = arith.constant 0 : index
    %228 = vector.load %arg2[%c2_206, %c0_207] : memref<8x512xf32, #tpu.memory_space<vmem>>, vector<1x512xf32>
    %229 = vector.broadcast %228 : vector<1x512xf32> to vector<32x512xf32>
    %230 = arith.mulf %227, %229 : vector<32x512xf32>
    %c64_208 = arith.constant 64 : index
    %c0_209 = arith.constant 0 : index
    %231 = vector.load %arg8[%c64_208, %c0_209] : memref<288x512xf32, #tpu.memory_space<vmem>>, vector<32x512xf32>
    tpu.vector_store %arg8[%c64_208, %c0_209], %230 {strides = array<i32>} : memref<288x512xf32, #tpu.memory_space<vmem>>, vector<32x512xf32>,
    %c1_i32_210 = arith.constant 1 : i32
    %232 = tpu.dynamic_rotate %214 by %c1_i32_210 dim 1 : vector<32x512xf32>, i32 -> vector<32x512xf32>
    %c3_211 = arith.constant 3 : index
    %c0_212 = arith.constant 0 : index
    %233 = vector.load %arg2[%c3_211, %c0_212] : memref<8x512xf32, #tpu.memory_space<vmem>>, vector<1x512xf32>
    %234 = vector.broadcast %233 : vector<1x512xf32> to vector<32x512xf32>
    %235 = arith.mulf %232, %234 : vector<32x512xf32>
    %c96_213 = arith.constant 96 : index
    %c0_214 = arith.constant 0 : index
    %236 = vector.load %arg8[%c96_213, %c0_214] : memref<288x512xf32, #tpu.memory_space<vmem>>, vector<32x512xf32>
    tpu.vector_store %arg8[%c96_213, %c0_214], %235 {strides = array<i32>} : memref<288x512xf32, #tpu.memory_space<vmem>>, vector<32x512xf32>,
    %c128_215 = arith.constant 128 : index
    %c0_216 = arith.constant 0 : index
    %237 = vector.load %arg8[%c128_215, %c0_216] : memref<288x512xf32, #tpu.memory_space<vmem>>, vector<32x512xf32>
    tpu.vector_store %arg8[%c128_215, %c0_216], %214 {strides = array<i32>} : memref<288x512xf32, #tpu.memory_space<vmem>>, vector<32x512xf32>,
    %c511_i32_217 = arith.constant 511 : i32
    %238 = tpu.dynamic_rotate %214 by %c511_i32_217 dim 1 : vector<32x512xf32>, i32 -> vector<32x512xf32>
    %c4_218 = arith.constant 4 : index
    %c0_219 = arith.constant 0 : index
    %239 = vector.load %arg2[%c4_218, %c0_219] : memref<8x512xf32, #tpu.memory_space<vmem>>, vector<1x512xf32>
    %240 = vector.broadcast %239 : vector<1x512xf32> to vector<32x512xf32>
    %241 = arith.mulf %238, %240 : vector<32x512xf32>
    %c160_220 = arith.constant 160 : index
    %c0_221 = arith.constant 0 : index
    %242 = vector.load %arg8[%c160_220, %c0_221] : memref<288x512xf32, #tpu.memory_space<vmem>>, vector<32x512xf32>
    tpu.vector_store %arg8[%c160_220, %c0_221], %241 {strides = array<i32>} : memref<288x512xf32, #tpu.memory_space<vmem>>, vector<32x512xf32>,
    %c497_i32_222 = arith.constant 497 : i32
    %243 = tpu.dynamic_rotate %214 by %c497_i32_222 dim 1 : vector<32x512xf32>, i32 -> vector<32x512xf32>
    %c5_223 = arith.constant 5 : index
    %c0_224 = arith.constant 0 : index
    %244 = vector.load %arg2[%c5_223, %c0_224] : memref<8x512xf32, #tpu.memory_space<vmem>>, vector<1x512xf32>
    %245 = vector.broadcast %244 : vector<1x512xf32> to vector<32x512xf32>
    %246 = arith.mulf %243, %245 : vector<32x512xf32>
    %c192_225 = arith.constant 192 : index
    %c0_226 = arith.constant 0 : index
    %247 = vector.load %arg8[%c192_225, %c0_226] : memref<288x512xf32, #tpu.memory_space<vmem>>, vector<32x512xf32>
    tpu.vector_store %arg8[%c192_225, %c0_226], %246 {strides = array<i32>} : memref<288x512xf32, #tpu.memory_space<vmem>>, vector<32x512xf32>,
    %c496_i32_227 = arith.constant 496 : i32
    %248 = tpu.dynamic_rotate %214 by %c496_i32_227 dim 1 : vector<32x512xf32>, i32 -> vector<32x512xf32>
    %c6_228 = arith.constant 6 : index
    %c0_229 = arith.constant 0 : index
    %249 = vector.load %arg2[%c6_228, %c0_229] : memref<8x512xf32, #tpu.memory_space<vmem>>, vector<1x512xf32>
    %250 = vector.broadcast %249 : vector<1x512xf32> to vector<32x512xf32>
    %251 = arith.mulf %248, %250 : vector<32x512xf32>
    %c224_230 = arith.constant 224 : index
    %c0_231 = arith.constant 0 : index
    %252 = vector.load %arg8[%c224_230, %c0_231] : memref<288x512xf32, #tpu.memory_space<vmem>>, vector<32x512xf32>
    tpu.vector_store %arg8[%c224_230, %c0_231], %251 {strides = array<i32>} : memref<288x512xf32, #tpu.memory_space<vmem>>, vector<32x512xf32>,
    %c495_i32_232 = arith.constant 495 : i32
    %253 = tpu.dynamic_rotate %214 by %c495_i32_232 dim 1 : vector<32x512xf32>, i32 -> vector<32x512xf32>
    %c7_233 = arith.constant 7 : index
    %c0_234 = arith.constant 0 : index
    %254 = vector.load %arg2[%c7_233, %c0_234] : memref<8x512xf32, #tpu.memory_space<vmem>>, vector<1x512xf32>
    %255 = vector.broadcast %254 : vector<1x512xf32> to vector<32x512xf32>
    %256 = arith.mulf %253, %255 : vector<32x512xf32>
    %c256_235 = arith.constant 256 : index
    %c0_236 = arith.constant 0 : index
    %257 = vector.load %arg8[%c256_235, %c0_236] : memref<288x512xf32, #tpu.memory_space<vmem>>, vector<32x512xf32>
    tpu.vector_store %arg8[%c256_235, %c0_236], %256 {strides = array<i32>} : memref<288x512xf32, #tpu.memory_space<vmem>>, vector<32x512xf32>,
    %c0_237 = arith.constant 0 : index
    %c0_238 = arith.constant 0 : index
    %258 = vector.load %arg8[%c0_237, %c0_238] : memref<288x512xf32, #tpu.memory_space<vmem>>, vector<288x512xf32>
    %cst_239 = arith.constant dense<0.000000e+00> : vector<32x512xf32>
    %259 = tpu.matmul %164, %258, %cst_239 {dimension_numbers = #tpu.dot_dimension_numbers<[1], [0], [0], [1], [0, 0, 1, 1], [], []>} : vector<32x288xf32>, vector<288x512xf32>, vector<32x512xf32> -> vector<32x512xf32>
    %260 = vector.broadcast %216 : vector<32x1xf32> to vector<32x512xf32>
    %261 = arith.addf %259, %260 : vector<32x512xf32>
    %c0_240 = arith.constant 0 : index
    %c0_241 = arith.constant 0 : index
    %262 = vector.load %arg9[%c0_240, %c0_241] : memref<32x512xf32, #tpu.memory_space<vmem>>, vector<32x512xf32>
    %263 = arith.addf %261, %262 : vector<32x512xf32>
    %cst_242 = arith.constant 0.000000e+00 : f32
    %264 = vector.broadcast %cst_242 : f32 to vector<32x512xf32>
    %265 = arith.maximumf %263, %264 : vector<32x512xf32>
    %c0_243 = arith.constant 0 : index
    %c0_244 = arith.constant 0 : index
    %266 = vector.load %arg9[%c0_243, %c0_244] : memref<32x512xf32, #tpu.memory_space<vmem>>, vector<32x512xf32>
    tpu.vector_store %arg9[%c0_243, %c0_244], %265 {strides = array<i32>} : memref<32x512xf32, #tpu.memory_space<vmem>>, vector<32x512xf32>,
    %c5_245 = arith.constant 5 : index
    %c0_246 = arith.constant 0 : index
    %c0_247 = arith.constant 0 : index
    %267 = vector.load %arg6[%c5_245, %c0_246, %c0_247] : memref<6x32x1xf32, #tpu.memory_space<vmem>>, vector<1x32x1xf32>
    %268 = vector.shape_cast %267 : vector<1x32x1xf32> to vector<32x1xf32>
    %c0_248 = arith.constant 0 : index
    %c0_249 = arith.constant 0 : index
    %269 = vector.load %arg9[%c0_248, %c0_249] : memref<32x512xf32, #tpu.memory_space<vmem>>, vector<32x512xf32>
    %c0_250 = arith.constant 0 : index
    %c0_251 = arith.constant 0 : index
    %270 = vector.load %arg5[%c0_250, %c0_251] : memref<8x288xf32, #tpu.memory_space<vmem>>, vector<8x288xf32>
    %271 = vector.extract_strided_slice %268 {offsets = [0, 0], sizes = [8, 1], strides = [1, 1]} : vector<32x1xf32> to vector<8x1xf32>
    %c17_i32_252 = arith.constant 17 : i32
    %272 = tpu.dynamic_rotate %269 by %c17_i32_252 dim 1 : vector<32x512xf32>, i32 -> vector<32x512xf32>
    %c0_253 = arith.constant 0 : index
    %c0_254 = arith.constant 0 : index
    %273 = vector.load %arg2[%c0_253, %c0_254] : memref<8x512xf32, #tpu.memory_space<vmem>>, vector<1x512xf32>
    %274 = vector.broadcast %273 : vector<1x512xf32> to vector<32x512xf32>
    %275 = arith.mulf %272, %274 : vector<32x512xf32>
    %c0_255 = arith.constant 0 : index
    %c0_256 = arith.constant 0 : index
    %276 = vector.load %arg8[%c0_255, %c0_256] : memref<288x512xf32, #tpu.memory_space<vmem>>, vector<32x512xf32>
    tpu.vector_store %arg8[%c0_255, %c0_256], %275 {strides = array<i32>} : memref<288x512xf32, #tpu.memory_space<vmem>>, vector<32x512xf32>,
    %c16_i32_257 = arith.constant 16 : i32
    %277 = tpu.dynamic_rotate %269 by %c16_i32_257 dim 1 : vector<32x512xf32>, i32 -> vector<32x512xf32>
    %c1_258 = arith.constant 1 : index
    %c0_259 = arith.constant 0 : index
    %278 = vector.load %arg2[%c1_258, %c0_259] : memref<8x512xf32, #tpu.memory_space<vmem>>, vector<1x512xf32>
    %279 = vector.broadcast %278 : vector<1x512xf32> to vector<32x512xf32>
    %280 = arith.mulf %277, %279 : vector<32x512xf32>
    %c32_260 = arith.constant 32 : index
    %c0_261 = arith.constant 0 : index
    %281 = vector.load %arg8[%c32_260, %c0_261] : memref<288x512xf32, #tpu.memory_space<vmem>>, vector<32x512xf32>
    tpu.vector_store %arg8[%c32_260, %c0_261], %280 {strides = array<i32>} : memref<288x512xf32, #tpu.memory_space<vmem>>, vector<32x512xf32>,
    %c15_i32_262 = arith.constant 15 : i32
    %282 = tpu.dynamic_rotate %269 by %c15_i32_262 dim 1 : vector<32x512xf32>, i32 -> vector<32x512xf32>
    %c2_263 = arith.constant 2 : index
    %c0_264 = arith.constant 0 : index
    %283 = vector.load %arg2[%c2_263, %c0_264] : memref<8x512xf32, #tpu.memory_space<vmem>>, vector<1x512xf32>
    %284 = vector.broadcast %283 : vector<1x512xf32> to vector<32x512xf32>
    %285 = arith.mulf %282, %284 : vector<32x512xf32>
    %c64_265 = arith.constant 64 : index
    %c0_266 = arith.constant 0 : index
    %286 = vector.load %arg8[%c64_265, %c0_266] : memref<288x512xf32, #tpu.memory_space<vmem>>, vector<32x512xf32>
    tpu.vector_store %arg8[%c64_265, %c0_266], %285 {strides = array<i32>} : memref<288x512xf32, #tpu.memory_space<vmem>>, vector<32x512xf32>,
    %c1_i32_267 = arith.constant 1 : i32
    %287 = tpu.dynamic_rotate %269 by %c1_i32_267 dim 1 : vector<32x512xf32>, i32 -> vector<32x512xf32>
    %c3_268 = arith.constant 3 : index
    %c0_269 = arith.constant 0 : index
    %288 = vector.load %arg2[%c3_268, %c0_269] : memref<8x512xf32, #tpu.memory_space<vmem>>, vector<1x512xf32>
    %289 = vector.broadcast %288 : vector<1x512xf32> to vector<32x512xf32>
    %290 = arith.mulf %287, %289 : vector<32x512xf32>
    %c96_270 = arith.constant 96 : index
    %c0_271 = arith.constant 0 : index
    %291 = vector.load %arg8[%c96_270, %c0_271] : memref<288x512xf32, #tpu.memory_space<vmem>>, vector<32x512xf32>
    tpu.vector_store %arg8[%c96_270, %c0_271], %290 {strides = array<i32>} : memref<288x512xf32, #tpu.memory_space<vmem>>, vector<32x512xf32>,
    %c128_272 = arith.constant 128 : index
    %c0_273 = arith.constant 0 : index
    %292 = vector.load %arg8[%c128_272, %c0_273] : memref<288x512xf32, #tpu.memory_space<vmem>>, vector<32x512xf32>
    tpu.vector_store %arg8[%c128_272, %c0_273], %269 {strides = array<i32>} : memref<288x512xf32, #tpu.memory_space<vmem>>, vector<32x512xf32>,
    %c511_i32_274 = arith.constant 511 : i32
    %293 = tpu.dynamic_rotate %269 by %c511_i32_274 dim 1 : vector<32x512xf32>, i32 -> vector<32x512xf32>
    %c4_275 = arith.constant 4 : index
    %c0_276 = arith.constant 0 : index
    %294 = vector.load %arg2[%c4_275, %c0_276] : memref<8x512xf32, #tpu.memory_space<vmem>>, vector<1x512xf32>
    %295 = vector.broadcast %294 : vector<1x512xf32> to vector<32x512xf32>
    %296 = arith.mulf %293, %295 : vector<32x512xf32>
    %c160_277 = arith.constant 160 : index
    %c0_278 = arith.constant 0 : index
    %297 = vector.load %arg8[%c160_277, %c0_278] : memref<288x512xf32, #tpu.memory_space<vmem>>, vector<32x512xf32>
    tpu.vector_store %arg8[%c160_277, %c0_278], %296 {strides = array<i32>} : memref<288x512xf32, #tpu.memory_space<vmem>>, vector<32x512xf32>,
    %c497_i32_279 = arith.constant 497 : i32
    %298 = tpu.dynamic_rotate %269 by %c497_i32_279 dim 1 : vector<32x512xf32>, i32 -> vector<32x512xf32>
    %c5_280 = arith.constant 5 : index
    %c0_281 = arith.constant 0 : index
    %299 = vector.load %arg2[%c5_280, %c0_281] : memref<8x512xf32, #tpu.memory_space<vmem>>, vector<1x512xf32>
    %300 = vector.broadcast %299 : vector<1x512xf32> to vector<32x512xf32>
    %301 = arith.mulf %298, %300 : vector<32x512xf32>
    %c192_282 = arith.constant 192 : index
    %c0_283 = arith.constant 0 : index
    %302 = vector.load %arg8[%c192_282, %c0_283] : memref<288x512xf32, #tpu.memory_space<vmem>>, vector<32x512xf32>
    tpu.vector_store %arg8[%c192_282, %c0_283], %301 {strides = array<i32>} : memref<288x512xf32, #tpu.memory_space<vmem>>, vector<32x512xf32>,
    %c496_i32_284 = arith.constant 496 : i32
    %303 = tpu.dynamic_rotate %269 by %c496_i32_284 dim 1 : vector<32x512xf32>, i32 -> vector<32x512xf32>
    %c6_285 = arith.constant 6 : index
    %c0_286 = arith.constant 0 : index
    %304 = vector.load %arg2[%c6_285, %c0_286] : memref<8x512xf32, #tpu.memory_space<vmem>>, vector<1x512xf32>
    %305 = vector.broadcast %304 : vector<1x512xf32> to vector<32x512xf32>
    %306 = arith.mulf %303, %305 : vector<32x512xf32>
    %c224_287 = arith.constant 224 : index
    %c0_288 = arith.constant 0 : index
    %307 = vector.load %arg8[%c224_287, %c0_288] : memref<288x512xf32, #tpu.memory_space<vmem>>, vector<32x512xf32>
    tpu.vector_store %arg8[%c224_287, %c0_288], %306 {strides = array<i32>} : memref<288x512xf32, #tpu.memory_space<vmem>>, vector<32x512xf32>,
    %c495_i32_289 = arith.constant 495 : i32
    %308 = tpu.dynamic_rotate %269 by %c495_i32_289 dim 1 : vector<32x512xf32>, i32 -> vector<32x512xf32>
    %c7_290 = arith.constant 7 : index
    %c0_291 = arith.constant 0 : index
    %309 = vector.load %arg2[%c7_290, %c0_291] : memref<8x512xf32, #tpu.memory_space<vmem>>, vector<1x512xf32>
    %310 = vector.broadcast %309 : vector<1x512xf32> to vector<32x512xf32>
    %311 = arith.mulf %308, %310 : vector<32x512xf32>
    %c256_292 = arith.constant 256 : index
    %c0_293 = arith.constant 0 : index
    %312 = vector.load %arg8[%c256_292, %c0_293] : memref<288x512xf32, #tpu.memory_space<vmem>>, vector<32x512xf32>
    tpu.vector_store %arg8[%c256_292, %c0_293], %311 {strides = array<i32>} : memref<288x512xf32, #tpu.memory_space<vmem>>, vector<32x512xf32>,
    %c0_294 = arith.constant 0 : index
    %c0_295 = arith.constant 0 : index
    %313 = vector.load %arg8[%c0_294, %c0_295] : memref<288x512xf32, #tpu.memory_space<vmem>>, vector<288x512xf32>
    %cst_296 = arith.constant dense<0.000000e+00> : vector<8x512xf32>
    %314 = tpu.matmul %270, %313, %cst_296 {dimension_numbers = #tpu.dot_dimension_numbers<[1], [0], [0], [1], [0, 0, 1, 1], [], []>} : vector<8x288xf32>, vector<288x512xf32>, vector<8x512xf32> -> vector<8x512xf32>
    %315 = vector.broadcast %271 : vector<8x1xf32> to vector<8x512xf32>
    %316 = arith.addf %314, %315 : vector<8x512xf32>
    %c0_297 = arith.constant 0 : index
    %c0_298 = arith.constant 0 : index
    %317 = vector.load %arg7[%c0_297, %c0_298] : memref<8x512xf32, #tpu.memory_space<vmem>>, vector<8x512xf32>
    tpu.vector_store %arg7[%c0_297, %c0_298], %316 {strides = array<i32>} : memref<8x512xf32, #tpu.memory_space<vmem>>, vector<8x512xf32>,
    return
  }
  func.func @transform_0(%arg0: i32) -> (i32, i32) {
    %c0_i32 = arith.constant 0 : i32
    %c0_i32_0 = arith.constant 0 : i32
    %c0_i32_1 = arith.constant 0 : i32
    return %c0_i32, %c0_i32_0 : i32, i32
  }
  func.func @transform_1(%arg0: i32) -> (i32, i32) {
    %c0_i32 = arith.constant 0 : i32
    %c0_i32_0 = arith.constant 0 : i32
    %c0_i32_1 = arith.constant 0 : i32
    return %c0_i32, %c0_i32_0 : i32, i32
  }
  func.func @transform_2(%arg0: i32) -> (i32, i32) {
    %c0_i32 = arith.constant 0 : i32
    %c0_i32_0 = arith.constant 0 : i32
    %c0_i32_1 = arith.constant 0 : i32
    return %c0_i32, %c0_i32_0 : i32, i32
  }
  func.func @transform_3(%arg0: i32) -> (i32, i32, i32) {
    %c0_i32 = arith.constant 0 : i32
    %c0_i32_0 = arith.constant 0 : i32
    %c0_i32_1 = arith.constant 0 : i32
    %c0_i32_2 = arith.constant 0 : i32
    return %c0_i32, %c0_i32_0, %c0_i32_1 : i32, i32, i32
  }
  func.func @transform_4(%arg0: i32) -> (i32, i32) {
    %c0_i32 = arith.constant 0 : i32
    %c0_i32_0 = arith.constant 0 : i32
    %c0_i32_1 = arith.constant 0 : i32
    return %c0_i32, %c0_i32_0 : i32, i32
  }
  func.func @transform_5(%arg0: i32) -> (i32, i32, i32) {
    %c0_i32 = arith.constant 0 : i32
    %c0_i32_0 = arith.constant 0 : i32
    %c0_i32_1 = arith.constant 0 : i32
    %c0_i32_2 = arith.constant 0 : i32
    return %c0_i32, %c0_i32_0, %c0_i32_1 : i32, i32, i32
  }
  func.func @transform_6(%arg0: i32) -> (i32, i32) {
    %c0_i32 = arith.constant 0 : i32
    %c0_i32_0 = arith.constant 0 : i32
    %c0_i32_1 = arith.constant 0 : i32
    return %c0_i32, %c0_i32_0 : i32, i32
  }
}

</mosaic_0001>

<llo_original>
// kernel: _lambda_.1
$region0: #{_lambda_.1}
  #allocation0 [shape = 'u32[]', space=smem, size = 0x4, offset = 0x4, fixed_abs, tag = 'smem constant byte address 0x4 - core index']
  #allocation1 [shape = 'u32[144,128]{1,0:T(1,128)}', space=vmem, size = 0x12000, scoped, tag = 'internal scratch']
  #allocation2 [shape = 'f32[288,512]{1,0:T(8,128)}', space=vmem, size = 0x90000, scoped, tag = 'scratch operand']
  #allocation3 [shape = 'f32[32,512]{1,0:T(8,128)}', space=vmem, size = 0x10000, scoped, tag = 'scratch operand']
  %s0 = inlined_call_operand.vmem [shape: f32[8,512], index: 0, kind: input, shape index: {}]
  %s1 = inlined_call_operand.vmem [shape: f32[8,512], index: 1, kind: input, shape index: {}]
  %s2 = inlined_call_operand.hbm [shape: f32[32,72], index: 2, kind: input, shape index: {}]
  %s3 = inlined_call_operand.vmem [shape: f32[4,32,288], index: 3, kind: input, shape index: {}]
  %s4 = inlined_call_operand.hbm [shape: f32[8,288], index: 4, kind: input, shape index: {}]
  %s5 = inlined_call_operand.hbm [shape: f32[6,32,1], index: 5, kind: input, shape index: {}]
  %s6 = inlined_call_operand.vmem [shape: f32[8,512], index: 6, kind: output, shape index: {}]
  %s7 = sld [smem:[#allocation0]]
  $region46: #{_lambda_.1} parent=0
    _
  %s9 = ssub.s32 1, %s7
  %s10 = scalar_select 0, %s9, %s7
  $region1: #{_lambda_.1} parent=0
    #allocation4 [shape = 'u8[16384]{0}', space=vmem, size = 0x4000, scoped, tag = 'input window, operand 2, single buffered']
    #allocation5 [shape = 's32[1]{0}', space=sflag, size = 0x4, scoped, tag = 'scoped memory for _lambda_.1']
    #allocation6 [shape = 'u8[12288]{0}', space=vmem, size = 0x3000, scoped, tag = 'input window, operand 4, single buffered']
    #allocation7 [shape = 's32[1]{0}', space=sflag, size = 0x4, scoped, tag = 'scoped memory for _lambda_.1']
    #allocation8 [shape = 'u8[98304]{0}', space=vmem, size = 0x18000, scoped, tag = 'input window, operand 5, single buffered']
    %11 = vsyncpa [#allocation5], 0
    %12 = vsyncpa [#allocation7], 0
    // Predicated region
    $region2: #{_lambda_.1} parent=1 // pred_check
      _
    $region3: #{_lambda_.1} parent=1 // pred_check_branch
      %14 = sbr.rel (0) target = $region5
    $region4: #{_lambda_.1} parent=1 // pred_region
      _
    $region5: #{_lambda_.1} parent=1 // pred_fallthru
      _
    // Predicated region
    $region6: #{_lambda_.1} parent=1 // pred_check
      _
    $region7: #{_lambda_.1} parent=1 // pred_check_branch
      %16 = sbr.rel (0) target = $region9
    $region8: #{_lambda_.1} parent=1 // pred_region
      _
    $region9: #{_lambda_.1} parent=1 // pred_fallthru
      _
    // Predicated region
    $region10: #{_lambda_.1} parent=1 // pred_check
      _
    $region11: #{_lambda_.1} parent=1 // pred_check_branch
      %18 = sbr.rel (0) target = $region13
    $region12: #{_lambda_.1} parent=1 // pred_region
      %s20 = ssub.s32 512, 512
      %21 = vsyncadd [#allocation5], %s20
      %s22 = sshll.u32 [#allocation4], 4
      %s23 = int_to_ptr.vmem [resolvable:$true] %s22
      %28 = dma.hbm_to_vmem [thread:$0]  %s2, 512, %s23, [#allocation5], 128, 128, 8
    $region13: #{_lambda_.1} parent=1 // pred_fallthru
      _
    // Predicated region
    $region14: #{_lambda_.1} parent=1 // pred_check
      _
    $region15: #{_lambda_.1} parent=1 // pred_check_branch
      %30 = sbr.rel (0) target = $region17
    $region16: #{_lambda_.1} parent=1 // pred_region
      _
    $region17: #{_lambda_.1} parent=1 // pred_fallthru
      _
    // Predicated region
    $region18: #{_lambda_.1} parent=1 // pred_check
      _
    $region19: #{_lambda_.1} parent=1 // pred_check_branch
      %32 = sbr.rel (0) target = $region21
    $region20: #{_lambda_.1} parent=1 // pred_region
      %s34 = ssub.s32 384, 384
      %35 = vsyncadd [#allocation7], %s34
      %s37 = sshll.u32 [#allocation6], 4
      %s38 = int_to_ptr.vmem [resolvable:$true] %s37
      %40 = dma.hbm_to_vmem [thread:$0]  %s4, 384, %s38, [#allocation7]
    $region21: #{_lambda_.1} parent=1 // pred_fallthru
      _
    // Predicated region
    $region22: #{_lambda_.1} parent=1 // pred_check
      _
    $region23: #{_lambda_.1} parent=1 // pred_check_branch
      %42 = sbr.rel (0) target = $region25
    $region24: #{_lambda_.1} parent=1 // pred_region
      %s44 = ssub.s32 3072, 3072
      %45 = vsyncadd [#allocation7], %s44
      %s46 = sshll.u32 [#allocation8], 4
      %s47 = int_to_ptr.vmem [resolvable:$true] %s46
      %52 = dma.hbm_to_vmem [thread:$0]  %s5, 3072, %s47, [#allocation7], 128, 128, 8
    $region25: #{_lambda_.1} parent=1 // pred_fallthru
      _
    // Predicated region
    $region26: #{_lambda_.1} parent=1 // pred_check
      _
    $region27: #{_lambda_.1} parent=1 // pred_check_branch
      %54 = sbr.rel (0) target = $region29
    $region28: #{_lambda_.1} parent=1 // pred_region
      %55 = dma.done [#allocation5], 512
    $region29: #{_lambda_.1} parent=1 // pred_fallthru
      _
    // Predicated region
    $region30: #{_lambda_.1} parent=1 // pred_check
      _
    $region31: #{_lambda_.1} parent=1 // pred_check_branch
      %57 = sbr.rel (0) target = $region33
    $region32: #{_lambda_.1} parent=1 // pred_region
      %58 = dma.done [#allocation7], 384
    $region33: #{_lambda_.1} parent=1 // pred_fallthru
      _
    // Predicated region
    $region34: #{_lambda_.1} parent=1 // pred_check
      _
    $region35: #{_lambda_.1} parent=1 // pred_check_branch
      %60 = sbr.rel (0) target = $region37
    $region36: #{_lambda_.1} parent=1 // pred_region
      %61 = dma.done [#allocation7], 3072
    $region37: #{_lambda_.1} parent=1 // pred_fallthru
      _
    %v62 = vld [vmem:[%s0] sm:$0xff]
    %v63 = vld [vmem:[%s0 + $0x8] sm:$0xff]
    %v64 = vld [vmem:[%s0 + $0x10] sm:$0xff]
    %v65 = vld [vmem:[%s0 + $0x18] sm:$0xff]
    %v66 = vld [vmem:[#allocation4] sm:$0xff]
    %v67 = vld [vmem:[#allocation4 + $0x8] sm:$0xff]
    %v68 = vld [vmem:[#allocation4 + $0x10] sm:$0xff]
    %v69 = vld [vmem:[#allocation4 + $0x18] sm:$0xff]
    %v70 = vld [vmem:[#allocation8] sm:$0xff]
    %v71 = vld [vmem:[#allocation8 + $0x8] sm:$0xff]
    %v72 = vld [vmem:[#allocation8 + $0x10] sm:$0xff]
    %v73 = vld [vmem:[#allocation8 + $0x18] sm:$0xff]
    %74 = vrot.lane.b32.xlu0 %v62, 17
    %v75 = vpop.permute.xlu0 %74
    %76 = vrot.lane.b32.xlu0 %v63, 17
    %v77 = vpop.permute.xlu0 %76
    %78 = vrot.lane.b32.xlu0 %v64, 17
    %v79 = vpop.permute.xlu0 %78
    %80 = vrot.lane.b32.xlu0 %v65, 17
    %v81 = vpop.permute.xlu0 %80
    %v82 = vlaneseq
    %v83 = vand.u32 %v82, 127
    %vm84 = vcmp.lt.s32.totalorder %v83, 17
    %v85 = vsel %vm84, %v79, %v81
    %v86 = vsel %vm84, %v77, %v79
    %v87 = vsel %vm84, %v75, %v77
    %v88 = vsel %vm84, %v81, %v75
    %v89 = vld [vmem:[%s1] ss:$8 sm:$0xf]
    %v91 = vlaneseq
    %v92 = vshrl.u32 %v91, 7
    %v93 = vsub.s32 0, %v92
    %v94 = vrot.slane %v89, %v93
    %v95 = vlaneseq
    %v96 = vshrl.u32 %v95, 7
    %v97 = vsub.s32 1, %v96
    %v98 = vrot.slane %v89, %v97
    %v99 = vlaneseq
    %v100 = vshrl.u32 %v99, 7
    %v101 = vsub.s32 2, %v100
    %v102 = vrot.slane %v89, %v101
    %v103 = vlaneseq
    %v104 = vshrl.u32 %v103, 7
    %v105 = vsub.s32 3, %v104
    %v106 = vrot.slane %v89, %v105
    %v111 = vmul.f32 %v88, %v94
    %v112 = vmul.f32 %v87, %v98
    %v113 = vmul.f32 %v86, %v102
    %v114 = vmul.f32 %v85, %v106
    %115 = vst [vmem:[#allocation2] sm:$0xff] %v111
    %116 = vst [vmem:[#allocation2 + $0x8] sm:$0xff] %v112
    %117 = vst [vmem:[#allocation2 + $0x10] sm:$0xff] %v113
    %118 = vst [vmem:[#allocation2 + $0x18] sm:$0xff] %v114
    %119 = vrot.lane.b32.xlu0 %v62, 16
    %v120 = vpop.permute.xlu0 %119
    %121 = vrot.lane.b32.xlu0 %v63, 16
    %v122 = vpop.permute.xlu0 %121
    %123 = vrot.lane.b32.xlu0 %v64, 16
    %v124 = vpop.permute.xlu0 %123
    %125 = vrot.lane.b32.xlu0 %v65, 16
    %v126 = vpop.permute.xlu0 %125
    %vm127 = vcmp.lt.s32.totalorder %v83, 16
    %v128 = vsel %vm127, %v124, %v126
    %v129 = vsel %vm127, %v122, %v124
    %v130 = vsel %vm127, %v120, %v122
    %v131 = vsel %vm127, %v126, %v120
    %s132 = scalar_lea.vmem %s1, 1
    %v133 = vld [vmem:[%s132] ss:$8 sm:$0xf]
    %v135 = vlaneseq
    %v136 = vshrl.u32 %v135, 7
    %v137 = vsub.s32 0, %v136
    %v138 = vrot.slane %v133, %v137
    %v139 = vlaneseq
    %v140 = vshrl.u32 %v139, 7
    %v141 = vsub.s32 1, %v140
    %v142 = vrot.slane %v133, %v141
    %v143 = vlaneseq
    %v144 = vshrl.u32 %v143, 7
    %v145 = vsub.s32 2, %v144
    %v146 = vrot.slane %v133, %v145
    %v147 = vlaneseq
    %v148 = vshrl.u32 %v147, 7
    %v149 = vsub.s32 3, %v148
    %v150 = vrot.slane %v133, %v149
    %v155 = vmul.f32 %v131, %v138
    %v156 = vmul.f32 %v130, %v142
    %v157 = vmul.f32 %v129, %v146
    %v158 = vmul.f32 %v128, %v150
    %159 = vst [vmem:[#allocation2 + $0x20] sm:$0xff] %v155
    %160 = vst [vmem:[#allocation2 + $0x28] sm:$0xff] %v156
    %161 = vst [vmem:[#allocation2 + $0x30] sm:$0xff] %v157
    %162 = vst [vmem:[#allocation2 + $0x38] sm:$0xff] %v158
    %163 = vrot.lane.b32.xlu0 %v62, 15
    %v164 = vpop.permute.xlu0 %163
    %165 = vrot.lane.b32.xlu0 %v63, 15
    %v166 = vpop.permute.xlu0 %165
    %167 = vrot.lane.b32.xlu0 %v64, 15
    %v168 = vpop.permute.xlu0 %167
    %169 = vrot.lane.b32.xlu0 %v65, 15
    %v170 = vpop.permute.xlu0 %169
    %vm171 = vcmp.lt.s32.totalorder %v83, 15
    %v172 = vsel %vm171, %v168, %v170
    %v173 = vsel %vm171, %v166, %v168
    %v174 = vsel %vm171, %v164, %v166
    %v175 = vsel %vm171, %v170, %v164
    %s176 = scalar_lea.vmem %s1, 2
    %v177 = vld [vmem:[%s176] ss:$8 sm:$0xf]
    %v179 = vlaneseq
    %v180 = vshrl.u32 %v179, 7
    %v181 = vsub.s32 0, %v180
    %v182 = vrot.slane %v177, %v181
    %v183 = vlaneseq
    %v184 = vshrl.u32 %v183, 7
    %v185 = vsub.s32 1, %v184
    %v186 = vrot.slane %v177, %v185
    %v187 = vlaneseq
    %v188 = vshrl.u32 %v187, 7
    %v189 = vsub.s32 2, %v188
    %v190 = vrot.slane %v177, %v189
    %v191 = vlaneseq
    %v192 = vshrl.u32 %v191, 7
    %v193 = vsub.s32 3, %v192
    %v194 = vrot.slane %v177, %v193
    %v199 = vmul.f32 %v175, %v182
    %v200 = vmul.f32 %v174, %v186
    %v201 = vmul.f32 %v173, %v190
    %v202 = vmul.f32 %v172, %v194
    %203 = vst [vmem:[#allocation2 + $0x40] sm:$0xff] %v199
    %204 = vst [vmem:[#allocation2 + $0x48] sm:$0xff] %v200
    %205 = vst [vmem:[#allocation2 + $0x50] sm:$0xff] %v201
    %206 = vst [vmem:[#allocation2 + $0x58] sm:$0xff] %v202
    %207 = vrot.lane.b32.xlu0 %v62, 1
    %v208 = vpop.permute.xlu0 %207
    %209 = vrot.lane.b32.xlu0 %v63, 1
    %v210 = vpop.permute.xlu0 %209
    %211 = vrot.lane.b32.xlu0 %v64, 1
    %v212 = vpop.permute.xlu0 %211
    %213 = vrot.lane.b32.xlu0 %v65, 1
    %v214 = vpop.permute.xlu0 %213
    %vm215 = vcmp.lt.s32.totalorder %v83, 1
    %v216 = vsel %vm215, %v212, %v214
    %v217 = vsel %vm215, %v210, %v212
    %v218 = vsel %vm215, %v208, %v210
    %v219 = vsel %vm215, %v214, %v208
    %s220 = scalar_lea.vmem %s1, 3
    %v221 = vld [vmem:[%s220] ss:$8 sm:$0xf]
    %v223 = vlaneseq
    %v224 = vshrl.u32 %v223, 7
    %v225 = vsub.s32 0, %v224
    %v226 = vrot.slane %v221, %v225
    %v227 = vlaneseq
    %v228 = vshrl.u32 %v227, 7
    %v229 = vsub.s32 1, %v228
    %v230 = vrot.slane %v221, %v229
    %v231 = vlaneseq
    %v232 = vshrl.u32 %v231, 7
    %v233 = vsub.s32 2, %v232
    %v234 = vrot.slane %v221, %v233
    %v235 = vlaneseq
    %v236 = vshrl.u32 %v235, 7
    %v237 = vsub.s32 3, %v236
    %v238 = vrot.slane %v221, %v237
    %v243 = vmul.f32 %v219, %v226
    %v244 = vmul.f32 %v218, %v230
    %v245 = vmul.f32 %v217, %v234
    %v246 = vmul.f32 %v216, %v238
    %247 = vst [vmem:[#allocation2 + $0x60] sm:$0xff] %v243
    %248 = vst [vmem:[#allocation2 + $0x68] sm:$0xff] %v244
    %249 = vst [vmem:[#allocation2 + $0x70] sm:$0xff] %v245
    %250 = vst [vmem:[#allocation2 + $0x78] sm:$0xff] %v246
    %251 = vst [vmem:[#allocation2 + $0x80] sm:$0xff] %v62
    %252 = vst [vmem:[#allocation2 + $0x88] sm:$0xff] %v63
    %253 = vst [vmem:[#allocation2 + $0x90] sm:$0xff] %v64
    %254 = vst [vmem:[#allocation2 + $0x98] sm:$0xff] %v65
    %255 = vrot.lane.b32.xlu0 %v62, 127
    %v256 = vpop.permute.xlu0 %255
    %257 = vrot.lane.b32.xlu0 %v63, 127
    %v258 = vpop.permute.xlu0 %257
    %259 = vrot.lane.b32.xlu0 %v64, 127
    %v260 = vpop.permute.xlu0 %259
    %261 = vrot.lane.b32.xlu0 %v65, 127
    %v262 = vpop.permute.xlu0 %261
    %vm263 = vcmp.lt.s32.totalorder %v83, 127
    %v264 = vsel %vm263, %v260, %v262
    %v265 = vsel %vm263, %v258, %v260
    %v266 = vsel %vm263, %v256, %v258
    %v267 = vsel %vm263, %v262, %v256
    %s268 = scalar_lea.vmem %s1, 4
    %v269 = vld [vmem:[%s268] ss:$8 sm:$0xf]
    %v271 = vlaneseq
    %v272 = vshrl.u32 %v271, 7
    %v273 = vsub.s32 0, %v272
    %v274 = vrot.slane %v269, %v273
    %v275 = vlaneseq
    %v276 = vshrl.u32 %v275, 7
    %v277 = vsub.s32 1, %v276
    %v278 = vrot.slane %v269, %v277
    %v279 = vlaneseq
    %v280 = vshrl.u32 %v279, 7
    %v281 = vsub.s32 2, %v280
    %v282 = vrot.slane %v269, %v281
    %v283 = vlaneseq
    %v284 = vshrl.u32 %v283, 7
    %v285 = vsub.s32 3, %v284
    %v286 = vrot.slane %v269, %v285
    %v291 = vmul.f32 %v266, %v274
    %v292 = vmul.f32 %v265, %v278
    %v293 = vmul.f32 %v264, %v282
    %v294 = vmul.f32 %v267, %v286
    %295 = vst [vmem:[#allocation2 + $0xa0] sm:$0xff] %v291
    %296 = vst [vmem:[#allocation2 + $0xa8] sm:$0xff] %v292
    %297 = vst [vmem:[#allocation2 + $0xb0] sm:$0xff] %v293
    %298 = vst [vmem:[#allocation2 + $0xb8] sm:$0xff] %v294
    %299 = vrot.lane.b32.xlu0 %v62, 113
    %v300 = vpop.permute.xlu0 %299
    %301 = vrot.lane.b32.xlu0 %v63, 113
    %v302 = vpop.permute.xlu0 %301
    %303 = vrot.lane.b32.xlu0 %v64, 113
    %v304 = vpop.permute.xlu0 %303
    %305 = vrot.lane.b32.xlu0 %v65, 113
    %v306 = vpop.permute.xlu0 %305
    %vm307 = vcmp.lt.s32.totalorder %v83, 113
    %v308 = vsel %vm307, %v304, %v306
    %v309 = vsel %vm307, %v302, %v304
    %v310 = vsel %vm307, %v300, %v302
    %v311 = vsel %vm307, %v306, %v300
    %s312 = scalar_lea.vmem %s1, 5
    %v313 = vld [vmem:[%s312] ss:$8 sm:$0xf]
    %v315 = vlaneseq
    %v316 = vshrl.u32 %v315, 7
    %v317 = vsub.s32 0, %v316
    %v318 = vrot.slane %v313, %v317
    %v319 = vlaneseq
    %v320 = vshrl.u32 %v319, 7
    %v321 = vsub.s32 1, %v320
    %v322 = vrot.slane %v313, %v321
    %v323 = vlaneseq
    %v324 = vshrl.u32 %v323, 7
    %v325 = vsub.s32 2, %v324
    %v326 = vrot.slane %v313, %v325
    %v327 = vlaneseq
    %v328 = vshrl.u32 %v327, 7
    %v329 = vsub.s32 3, %v328
    %v330 = vrot.slane %v313, %v329
    %v335 = vmul.f32 %v310, %v318
    %v336 = vmul.f32 %v309, %v322
    %v337 = vmul.f32 %v308, %v326
    %v338 = vmul.f32 %v311, %v330
    %339 = vst [vmem:[#allocation2 + $0xc0] sm:$0xff] %v335
    %340 = vst [vmem:[#allocation2 + $0xc8] sm:$0xff] %v336
    %341 = vst [vmem:[#allocation2 + $0xd0] sm:$0xff] %v337
    %342 = vst [vmem:[#allocation2 + $0xd8] sm:$0xff] %v338
    %343 = vrot.lane.b32.xlu0 %v62, 112
    %v344 = vpop.permute.xlu0 %343
    %345 = vrot.lane.b32.xlu0 %v63, 112
    %v346 = vpop.permute.xlu0 %345
    %347 = vrot.lane.b32.xlu0 %v64, 112
    %v348 = vpop.permute.xlu0 %347
    %349 = vrot.lane.b32.xlu0 %v65, 112
    %v350 = vpop.permute.xlu0 %349
    %vm351 = vcmp.lt.s32.totalorder %v83, 112
    %v352 = vsel %vm351, %v348, %v350
    %v353 = vsel %vm351, %v346, %v348
    %v354 = vsel %vm351, %v344, %v346
    %v355 = vsel %vm351, %v350, %v344
    %s356 = scalar_lea.vmem %s1, 6
    %v357 = vld [vmem:[%s356] ss:$8 sm:$0xf]
    %v359 = vlaneseq
    %v360 = vshrl.u32 %v359, 7
    %v361 = vsub.s32 0, %v360
    %v362 = vrot.slane %v357, %v361
    %v363 = vlaneseq
    %v364 = vshrl.u32 %v363, 7
    %v365 = vsub.s32 1, %v364
    %v366 = vrot.slane %v357, %v365
    %v367 = vlaneseq
    %v368 = vshrl.u32 %v367, 7
    %v369 = vsub.s32 2, %v368
    %v370 = vrot.slane %v357, %v369
    %v371 = vlaneseq
    %v372 = vshrl.u32 %v371, 7
    %v373 = vsub.s32 3, %v372
    %v374 = vrot.slane %v357, %v373
    %v379 = vmul.f32 %v354, %v362
    %v380 = vmul.f32 %v353, %v366
    %v381 = vmul.f32 %v352, %v370
    %v382 = vmul.f32 %v355, %v374
    %383 = vst [vmem:[#allocation2 + $0xe0] sm:$0xff] %v379
    %384 = vst [vmem:[#allocation2 + $0xe8] sm:$0xff] %v380
    %385 = vst [vmem:[#allocation2 + $0xf0] sm:$0xff] %v381
    %386 = vst [vmem:[#allocation2 + $0xf8] sm:$0xff] %v382
    %387 = vrot.lane.b32.xlu0 %v62, 111
    %v388 = vpop.permute.xlu0 %387
    %389 = vrot.lane.b32.xlu0 %v63, 111
    %v390 = vpop.permute.xlu0 %389
    %391 = vrot.lane.b32.xlu0 %v64, 111
    %v392 = vpop.permute.xlu0 %391
    %393 = vrot.lane.b32.xlu0 %v65, 111
    %v394 = vpop.permute.xlu0 %393
    %vm395 = vcmp.lt.s32.totalorder %v83, 111
    %v396 = vsel %vm395, %v392, %v394
    %v397 = vsel %vm395, %v390, %v392
    %v398 = vsel %vm395, %v388, %v390
    %v399 = vsel %vm395, %v394, %v388
    %s400 = scalar_lea.vmem %s1, 7
    %v401 = vld [vmem:[%s400] ss:$8 sm:$0xf]
    %v403 = vlaneseq
    %v404 = vshrl.u32 %v403, 7
    %v405 = vsub.s32 0, %v404
    %v406 = vrot.slane %v401, %v405
    %v407 = vlaneseq
    %v408 = vshrl.u32 %v407, 7
    %v409 = vsub.s32 1, %v408
    %v410 = vrot.slane %v401, %v409
    %v411 = vlaneseq
    %v412 = vshrl.u32 %v411, 7
    %v413 = vsub.s32 2, %v412
    %v414 = vrot.slane %v401, %v413
    %v415 = vlaneseq
    %v416 = vshrl.u32 %v415, 7
    %v417 = vsub.s32 3, %v416
    %v418 = vrot.slane %v401, %v417
    %v423 = vmul.f32 %v398, %v406
    %v424 = vmul.f32 %v397, %v410
    %v425 = vmul.f32 %v396, %v414
    %v426 = vmul.f32 %v399, %v418
    %427 = vst [vmem:[#allocation2 + $0x100] sm:$0xff] %v423
    %428 = vst [vmem:[#allocation2 + $0x108] sm:$0xff] %v424
    %429 = vst [vmem:[#allocation2 + $0x110] sm:$0xff] %v425
    %430 = vst [vmem:[#allocation2 + $0x118] sm:$0xff] %v426
    %v431 = vld [vmem:[#allocation2] sm:$0xff]
    %v432 = vld [vmem:[#allocation2 + $0x8] sm:$0xff]
    %v433 = vld [vmem:[#allocation2 + $0x10] sm:$0xff]
    %v434 = vld [vmem:[#allocation2 + $0x18] sm:$0xff]
    %v435 = vld [vmem:[#allocation2 + $0x20] sm:$0xff]
    %v436 = vld [vmem:[#allocation2 + $0x28] sm:$0xff]
    %v437 = vld [vmem:[#allocation2 + $0x30] sm:$0xff]
    %v438 = vld [vmem:[#allocation2 + $0x38] sm:$0xff]
    %v439 = vld [vmem:[#allocation2 + $0x40] sm:$0xff]
    %v440 = vld [vmem:[#allocation2 + $0x48] sm:$0xff]
    %v441 = vld [vmem:[#allocation2 + $0x50] sm:$0xff]
    %v442 = vld [vmem:[#allocation2 + $0x58] sm:$0xff]
    %v443 = vld [vmem:[#allocation2 + $0x60] sm:$0xff]
    %v444 = vld [vmem:[#allocation2 + $0x68] sm:$0xff]
    %v445 = vld [vmem:[#allocation2 + $0x70] sm:$0xff]
    %v446 = vld [vmem:[#allocation2 + $0x78] sm:$0xff]
    %v447 = vld [vmem:[#allocation2 + $0x80] sm:$0xff]
    %v448 = vld [vmem:[#allocation2 + $0x88] sm:$0xff]
    %v449 = vld [vmem:[#allocation2 + $0x90] sm:$0xff]
    %v450 = vld [vmem:[#allocation2 + $0x98] sm:$0xff]
    %v451 = vld [vmem:[#allocation2 + $0xa0] sm:$0xff]
    %v452 = vld [vmem:[#allocation2 + $0xa8] sm:$0xff]
    %v453 = vld [vmem:[#allocation2 + $0xb0] sm:$0xff]
    %v454 = vld [vmem:[#allocation2 + $0xb8] sm:$0xff]
    %v455 = vld [vmem:[#allocation2 + $0xc0] sm:$0xff]
    %v456 = vld [vmem:[#allocation2 + $0xc8] sm:$0xff]
    %v457 = vld [vmem:[#allocation2 + $0xd0] sm:$0xff]
    %v458 = vld [vmem:[#allocation2 + $0xd8] sm:$0xff]
    %v459 = vld [vmem:[#allocation2 + $0xe0] sm:$0xff]
    %v460 = vld [vmem:[#allocation2 + $0xe8] sm:$0xff]
    %v461 = vld [vmem:[#allocation2 + $0xf0] sm:$0xff]
    %v462 = vld [vmem:[#allocation2 + $0xf8] sm:$0xff]
    %v463 = vld [vmem:[#allocation2 + $0x100] sm:$0xff]
    %v464 = vld [vmem:[#allocation2 + $0x108] sm:$0xff]
    %v465 = vld [vmem:[#allocation2 + $0x110] sm:$0xff]
    %v466 = vld [vmem:[#allocation2 + $0x118] sm:$0xff]
    %468 = vset.pattern.permute.xlu0 0
    %469 = vperm.xlu0 %468, %v70
    %v470 = vpop.permute.xlu0 %469
    %473 = vset.pattern.permute.xlu0 0
    %474 = vperm.xlu0 %473, %v71
    %v475 = vpop.permute.xlu0 %474
    %478 = vset.pattern.permute.xlu0 0
    %479 = vperm.xlu0 %478, %v72
    %v480 = vpop.permute.xlu0 %479
    %483 = vset.pattern.permute.xlu0 0
    %484 = vperm.xlu0 %483, %v73
    %v485 = vpop.permute.xlu0 %484
    %vm487 = vcmask 588800
    %v489 = vsel %vm487, %v66, 0
    %v492 = vsel %vm487, %v67, 0
    %v495 = vsel %vm487, %v68, 0
    %v498 = vsel %vm487, %v69, 0
    %500 = vmatprep.subr.mxu0 %v432
    %501 = vmatpush1.msra.mxu0 %v431
    %502 = vmatprep.subr.mxu0 %v436
    %503 = vmatpush1.msra.mxu0 %v435
    %504 = vmatprep.subr.mxu0 %v440
    %505 = vmatpush1.msra.mxu0 %v439
    %506 = vmatprep.subr.mxu0 %v444
    %507 = vmatpush1.msra.mxu0 %v443
    %508 = vmatprep.subr.mxu0 %v448
    %509 = vmatpush1.msra.mxu0 %v447
    %510 = vmatprep.subr.mxu0 %v452
    %511 = vmatpush1.msra.mxu0 %v451
    %512 = vmatprep.subr.mxu0 %v456
    %513 = vmatpush1.msra.mxu0 %v455
    %514 = vmatprep.subr.mxu0 %v460
    %515 = vmatpush1.msra.mxu0 %v459
    %516 = vmatprep.subr.mxu0 %v464
    %517 = vmatpush1.msra.mxu0 %v463
    %518 = vmatprep.subr.mxu0 0.0
    %519 = vmatpush1.msra.mxu0 0.0
    %520 = vmatprep.subr.mxu0 0.0
    %521 = vmatpush1.msra.mxu0 0.0
    %522 = vmatprep.subr.mxu0 0.0
    %523 = vmatpush1.msra.mxu0 0.0
    %524 = vmatprep.subr.mxu0 0.0
    %525 = vmatpush1.msra.mxu0 0.0
    %526 = vmatprep.subr.mxu0 0.0
    %527 = vmatpush1.msra.mxu0 0.0
    %528 = vmatprep.subr.mxu0 0.0
    %529 = vmatpush1.msra.mxu0 0.0
    %530 = vmatprep.subr.mxu0 0.0
    %531 = vmatpush1.msra.mxu0 0.0
    %532 = vmatprep.subr.mxu0 0.0
    %533 = vmatpush1.msra.mxu0 0.0
    %534 = vmatprep.subr.mxu0 0.0
    %535 = vmatpush1.msra.mxu0 0.0
    %536 = vmatprep.subr.mxu0 0.0
    %537 = vmatpush1.msra.mxu0 0.0
    %538 = vmatprep.subr.mxu0 0.0
    %539 = vmatpush1.msra.mxu0 0.0
    %540 = vmatprep.subr.mxu0 0.0
    %541 = vmatpush1.msra.mxu0 0.0
    %542 = vmatprep.subr.mxu0 0.0
    %543 = vmatpush1.msra.mxu0 0.0
    %544 = vmatprep.subr.mxu0 0.0
    %545 = vmatpush1.msra.mxu0 0.0
    %546 = vmatprep.subr.mxu0 0.0
    %547 = vmatpush1.msra.mxu0 0.0
    %548 = vmatprep.subr.mxu0 0.0
    %549 = vmatpush1.msra.mxu0 0.0
    %550 = vmatprep.subr.mxu0 0.0
    %551 = vmatpush1.msra.mxu0 0.0
    %552 = vmatprep.subr.mxu0 0.0
    %553 = vmatpush1.msra.mxu0 0.0
    %554 = vmatprep.subr.mxu0 0.0
    %555 = vmatpush1.msra.mxu0 0.0
    %556 = vmatprep.subr.mxu0 0.0
    %557 = vmatpush1.msra.mxu0 0.0
    %558 = vmatprep.subr.mxu0 0.0
    %559 = vmatpush1.msra.mxu0 0.0
    %560 = vmatprep.subr.mxu0 0.0
    %561 = vmatpush1.msra.mxu0 0.0
    %562 = vmatprep.subr.mxu0 0.0
    %563 = vmatpush1.msra.mxu0 0.0
    %564 = vmatprep.mubr.f32.mxu0 0.0
    %565 = vmatmul.mubr.f32.gmra.mrb[0].mxu0 %v489
    %v566 = vpop.f32.mrb[0].mxu0
    %v567 = vadd.f32 %v470, %v566
    %v568 = vpop.f32.mrb[0].mxu0
    %v569 = vadd.f32 %v470, %v568
    %570 = vmatprep.mubr.f32.mxu0 0.0
    %571 = vmatmul.mubr.f32.gmra.mrb[0].mxu0 %v492
    %v572 = vpop.f32.mrb[0].mxu0
    %v573 = vadd.f32 %v475, %v572
    %v574 = vpop.f32.mrb[0].mxu0
    %v575 = vadd.f32 %v475, %v574
    %576 = vmatprep.mubr.f32.mxu0 0.0
    %577 = vmatmul.mubr.f32.gmra.mrb[0].mxu0 %v495
    %v578 = vpop.f32.mrb[0].mxu0
    %v579 = vadd.f32 %v480, %v578
    %v580 = vpop.f32.mrb[0].mxu0
    %v581 = vadd.f32 %v480, %v580
    %582 = vmatprep.mubr.f32.mxu0 0.0
    %583 = vmatmul.mubr.f32.gmra.mrb[0].mxu0 %v498
    %v584 = vpop.f32.mrb[0].mxu0
    %v585 = vadd.f32 %v485, %v584
    %v586 = vpop.f32.mrb[0].mxu0
    %v587 = vadd.f32 %v485, %v586
    %588 = vdwg.mxu0
    %589 = vmatprep.subr.mxu0 %v434
    %590 = vmatpush1.msra.mxu0 %v433
    %591 = vmatprep.subr.mxu0 %v438
    %592 = vmatpush1.msra.mxu0 %v437
    %593 = vmatprep.subr.mxu0 %v442
    %594 = vmatpush1.msra.mxu0 %v441
    %595 = vmatprep.subr.mxu0 %v446
    %596 = vmatpush1.msra.mxu0 %v445
    %597 = vmatprep.subr.mxu0 %v450
    %598 = vmatpush1.msra.mxu0 %v449
    %599 = vmatprep.subr.mxu0 %v454
    %600 = vmatpush1.msra.mxu0 %v453
    %601 = vmatprep.subr.mxu0 %v458
    %602 = vmatpush1.msra.mxu0 %v457
    %603 = vmatprep.subr.mxu0 %v462
    %604 = vmatpush1.msra.mxu0 %v461
    %605 = vmatprep.subr.mxu0 %v466
    %606 = vmatpush1.msra.mxu0 %v465
    %607 = vmatprep.subr.mxu0 0.0
    %608 = vmatpush1.msra.mxu0 0.0
    %609 = vmatprep.subr.mxu0 0.0
    %610 = vmatpush1.msra.mxu0 0.0
    %611 = vmatprep.subr.mxu0 0.0
    %612 = vmatpush1.msra.mxu0 0.0
    %613 = vmatprep.subr.mxu0 0.0
    %614 = vmatpush1.msra.mxu0 0.0
    %615 = vmatprep.subr.mxu0 0.0
    %616 = vmatpush1.msra.mxu0 0.0
    %617 = vmatprep.subr.mxu0 0.0
    %618 = vmatpush1.msra.mxu0 0.0
    %619 = vmatprep.subr.mxu0 0.0
    %620 = vmatpush1.msra.mxu0 0.0
    %621 = vmatprep.subr.mxu0 0.0
    %622 = vmatpush1.msra.mxu0 0.0
    %623 = vmatprep.subr.mxu0 0.0
    %624 = vmatpush1.msra.mxu0 0.0
    %625 = vmatprep.subr.mxu0 0.0
    %626 = vmatpush1.msra.mxu0 0.0
    %627 = vmatprep.subr.mxu0 0.0
    %628 = vmatpush1.msra.mxu0 0.0
    %629 = vmatprep.subr.mxu0 0.0
    %630 = vmatpush1.msra.mxu0 0.0
    %631 = vmatprep.subr.mxu0 0.0
    %632 = vmatpush1.msra.mxu0 0.0
    %633 = vmatprep.subr.mxu0 0.0
    %634 = vmatpush1.msra.mxu0 0.0
    %635 = vmatprep.subr.mxu0 0.0
    %636 = vmatpush1.msra.mxu0 0.0
    %637 = vmatprep.subr.mxu0 0.0
    %638 = vmatpush1.msra.mxu0 0.0
    %639 = vmatprep.subr.mxu0 0.0
    %640 = vmatpush1.msra.mxu0 0.0
    %641 = vmatprep.subr.mxu0 0.0
    %642 = vmatpush1.msra.mxu0 0.0
    %643 = vmatprep.subr.mxu0 0.0
    %644 = vmatpush1.msra.mxu0 0.0
    %645 = vmatprep.subr.mxu0 0.0
    %646 = vmatpush1.msra.mxu0 0.0
    %647 = vmatprep.subr.mxu0 0.0
    %648 = vmatpush1.msra.mxu0 0.0
    %649 = vmatprep.subr.mxu0 0.0
    %650 = vmatpush1.msra.mxu0 0.0
    %651 = vmatprep.subr.mxu0 0.0
    %652 = vmatpush1.msra.mxu0 0.0
    %653 = vmatprep.mubr.f32.mxu0 0.0
    %654 = vmatmul.mubr.f32.gmra.mrb[0].mxu0 %v489
    %v655 = vpop.f32.mrb[0].mxu0
    %v656 = vadd.f32 %v470, %v655
    %v657 = vpop.f32.mrb[0].mxu0
    %v658 = vadd.f32 %v470, %v657
    %659 = vmatprep.mubr.f32.mxu0 0.0
    %660 = vmatmul.mubr.f32.gmra.mrb[0].mxu0 %v492
    %v661 = vpop.f32.mrb[0].mxu0
    %v662 = vadd.f32 %v475, %v661
    %v663 = vpop.f32.mrb[0].mxu0
    %v664 = vadd.f32 %v475, %v663
    %665 = vmatprep.mubr.f32.mxu0 0.0
    %666 = vmatmul.mubr.f32.gmra.mrb[0].mxu0 %v495
    %v667 = vpop.f32.mrb[0].mxu0
    %v668 = vadd.f32 %v480, %v667
    %v669 = vpop.f32.mrb[0].mxu0
    %v670 = vadd.f32 %v480, %v669
    %671 = vmatprep.mubr.f32.mxu0 0.0
    %672 = vmatmul.mubr.f32.gmra.mrb[0].mxu0 %v498
    %v673 = vpop.f32.mrb[0].mxu0
    %v674 = vadd.f32 %v485, %v673
    %v675 = vpop.f32.mrb[0].mxu0
    %v676 = vadd.f32 %v485, %v675
    %677 = vdwg.mxu0
    %vm678 = vcmp.ge.f32.partialorder %v567, 0.0
    %vm679 = vcmp.ge.f32.partialorder %v569, 0.0
    %vm680 = vcmp.ge.f32.partialorder %v656, 0.0
    %vm681 = vcmp.ge.f32.partialorder %v658, 0.0
    %vm682 = vcmp.ge.f32.partialorder %v573, 0.0
    %vm683 = vcmp.ge.f32.partialorder %v575, 0.0
    %vm684 = vcmp.ge.f32.partialorder %v662, 0.0
    %vm685 = vcmp.ge.f32.partialorder %v664, 0.0
    %vm686 = vcmp.ge.f32.partialorder %v579, 0.0
    %vm687 = vcmp.ge.f32.partialorder %v581, 0.0
    %vm688 = vcmp.ge.f32.partialorder %v668, 0.0
    %vm689 = vcmp.ge.f32.partialorder %v670, 0.0
    %vm690 = vcmp.ge.f32.partialorder %v585, 0.0
    %vm691 = vcmp.ge.f32.partialorder %v587, 0.0
    %vm692 = vcmp.ge.f32.partialorder %v674, 0.0
    %vm693 = vcmp.ge.f32.partialorder %v676, 0.0
    %v694 = vmul.f32 %v567, 0.01
    %v695 = vmul.f32 %v569, 0.01
    %v696 = vmul.f32 %v656, 0.01
    %v697 = vmul.f32 %v658, 0.01
    %v698 = vmul.f32 %v573, 0.01
    %v699 = vmul.f32 %v575, 0.01
    %v700 = vmul.f32 %v662, 0.01
    %v701 = vmul.f32 %v664, 0.01
    %v702 = vmul.f32 %v579, 0.01
    %v703 = vmul.f32 %v581, 0.01
    %v704 = vmul.f32 %v668, 0.01
    %v705 = vmul.f32 %v670, 0.01
    %v706 = vmul.f32 %v585, 0.01
    %v707 = vmul.f32 %v587, 0.01
    %v708 = vmul.f32 %v674, 0.01
    %v709 = vmul.f32 %v676, 0.01
    %v710 = vsel %vm678, %v567, %v694
    %v711 = vsel %vm679, %v569, %v695
    %v712 = vsel %vm680, %v656, %v696
    %v713 = vsel %vm681, %v658, %v697
    %v714 = vsel %vm682, %v573, %v698
    %v715 = vsel %vm683, %v575, %v699
    %v716 = vsel %vm684, %v662, %v700
    %v717 = vsel %vm685, %v664, %v701
    %v718 = vsel %vm686, %v579, %v702
    %v719 = vsel %vm687, %v581, %v703
    %v720 = vsel %vm688, %v668, %v704
    %v721 = vsel %vm689, %v670, %v705
    %v722 = vsel %vm690, %v585, %v706
    %v723 = vsel %vm691, %v587, %v707
    %v724 = vsel %vm692, %v674, %v708
    %v725 = vsel %vm693, %v676, %v709
    %726 = vst [vmem:[#allocation3] sm:$0xff] %v710
    %727 = vst [vmem:[#allocation3 + $0x8] sm:$0xff] %v711
    %728 = vst [vmem:[#allocation3 + $0x10] sm:$0xff] %v712
    %729 = vst [vmem:[#allocation3 + $0x18] sm:$0xff] %v713
    %730 = vst [vmem:[#allocation3 + $0x20] sm:$0xff] %v714
    %731 = vst [vmem:[#allocation3 + $0x28] sm:$0xff] %v715
    %732 = vst [vmem:[#allocation3 + $0x30] sm:$0xff] %v716
    %733 = vst [vmem:[#allocation3 + $0x38] sm:$0xff] %v717
    %734 = vst [vmem:[#allocation3 + $0x40] sm:$0xff] %v718
    %735 = vst [vmem:[#allocation3 + $0x48] sm:$0xff] %v719
    %736 = vst [vmem:[#allocation3 + $0x50] sm:$0xff] %v720
    %737 = vst [vmem:[#allocation3 + $0x58] sm:$0xff] %v721
    %738 = vst [vmem:[#allocation3 + $0x60] sm:$0xff] %v722
    %739 = vst [vmem:[#allocation3 + $0x68] sm:$0xff] %v723
    %740 = vst [vmem:[#allocation3 + $0x70] sm:$0xff] %v724
    %741 = vst [vmem:[#allocation3 + $0x78] sm:$0xff] %v725
    %v742 = vld [vmem:[%s3] sm:$0xff]
    %v743 = vld [vmem:[%s3 + $0x8] sm:$0xff]
    %v744 = vld [vmem:[%s3 + $0x10] sm:$0xff]
    %v745 = vld [vmem:[%s3 + $0x18] sm:$0xff]
    %v746 = vld [vmem:[%s3 + $0x20] sm:$0xff]
    %v747 = vld [vmem:[%s3 + $0x28] sm:$0xff]
    %v748 = vld [vmem:[%s3 + $0x30] sm:$0xff]
    %v749 = vld [vmem:[%s3 + $0x38] sm:$0xff]
    %v750 = vld [vmem:[%s3 + $0x40] sm:$0xff]
    %v751 = vld [vmem:[%s3 + $0x48] sm:$0xff]
    %v752 = vld [vmem:[%s3 + $0x50] sm:$0xff]
    %v753 = vld [vmem:[%s3 + $0x58] sm:$0xff]
    %s754 = scalar_lea.vmem %s3, 96
    %v755 = vld [vmem:[%s754] sm:$0xff]
    %v756 = vld [vmem:[%s754 + $0x8] sm:$0xff]
    %v757 = vld [vmem:[%s754 + $0x10] sm:$0xff]
    %v758 = vld [vmem:[%s754 + $0x18] sm:$0xff]
    %v759 = vld [vmem:[%s754 + $0x20] sm:$0xff]
    %v760 = vld [vmem:[%s754 + $0x28] sm:$0xff]
    %v761 = vld [vmem:[%s754 + $0x30] sm:$0xff]
    %v762 = vld [vmem:[%s754 + $0x38] sm:$0xff]
    %v763 = vld [vmem:[%s754 + $0x40] sm:$0xff]
    %v764 = vld [vmem:[%s754 + $0x48] sm:$0xff]
    %v765 = vld [vmem:[%s754 + $0x50] sm:$0xff]
    %v766 = vld [vmem:[%s754 + $0x58] sm:$0xff]
    %v767 = vld [vmem:[#allocation3] sm:$0xff]
    %v768 = vld [vmem:[#allocation3 + $0x8] sm:$0xff]
    %v769 = vld [vmem:[#allocation3 + $0x10] sm:$0xff]
    %v770 = vld [vmem:[#allocation3 + $0x18] sm:$0xff]
    %v771 = vld [vmem:[#allocation3 + $0x20] sm:$0xff]
    %v772 = vld [vmem:[#allocation3 + $0x28] sm:$0xff]
    %v773 = vld [vmem:[#allocation3 + $0x30] sm:$0xff]
    %v774 = vld [vmem:[#allocation3 + $0x38] sm:$0xff]
    %v775 = vld [vmem:[#allocation3 + $0x40] sm:$0xff]
    %v776 = vld [vmem:[#allocation3 + $0x48] sm:$0xff]
    %v777 = vld [vmem:[#allocation3 + $0x50] sm:$0xff]
    %v778 = vld [vmem:[#allocation3 + $0x58] sm:$0xff]
    %v779 = vld [vmem:[#allocation3 + $0x60] sm:$0xff]
    %v780 = vld [vmem:[#allocation3 + $0x68] sm:$0xff]
    %v781 = vld [vmem:[#allocation3 + $0x70] sm:$0xff]
    %v782 = vld [vmem:[#allocation3 + $0x78] sm:$0xff]
    %s783 = scalar_lea.vmem [#allocation8], 32
    %v784 = vld [vmem:[%s783] sm:$0xff]
    %v785 = vld [vmem:[%s783 + $0x8] sm:$0xff]
    %v786 = vld [vmem:[%s783 + $0x10] sm:$0xff]
    %v787 = vld [vmem:[%s783 + $0x18] sm:$0xff]
    %788 = vrot.lane.b32.xlu0 %v767, 17
    %v789 = vpop.permute.xlu0 %788
    %790 = vrot.lane.b32.xlu0 %v771, 17
    %v791 = vpop.permute.xlu0 %790
    %792 = vrot.lane.b32.xlu0 %v775, 17
    %v793 = vpop.permute.xlu0 %792
    %794 = vrot.lane.b32.xlu0 %v779, 17
    %v795 = vpop.permute.xlu0 %794
    %796 = vrot.lane.b32.xlu0 %v768, 17
    %v797 = vpop.permute.xlu0 %796
    %798 = vrot.lane.b32.xlu0 %v772, 17
    %v799 = vpop.permute.xlu0 %798
    %800 = vrot.lane.b32.xlu0 %v776, 17
    %v801 = vpop.permute.xlu0 %800
    %802 = vrot.lane.b32.xlu0 %v780, 17
    %v803 = vpop.permute.xlu0 %802
    %804 = vrot.lane.b32.xlu0 %v769, 17
    %v805 = vpop.permute.xlu0 %804
    %806 = vrot.lane.b32.xlu0 %v773, 17
    %v807 = vpop.permute.xlu0 %806
    %808 = vrot.lane.b32.xlu0 %v777, 17
    %v809 = vpop.permute.xlu0 %808
    %810 = vrot.lane.b32.xlu0 %v781, 17
    %v811 = vpop.permute.xlu0 %810
    %812 = vrot.lane.b32.xlu0 %v770, 17
    %v813 = vpop.permute.xlu0 %812
    %814 = vrot.lane.b32.xlu0 %v774, 17
    %v815 = vpop.permute.xlu0 %814
    %816 = vrot.lane.b32.xlu0 %v778, 17
    %v817 = vpop.permute.xlu0 %816
    %818 = vrot.lane.b32.xlu0 %v782, 17
    %v819 = vpop.permute.xlu0 %818
    %v820 = vsel %vm84, %v805, %v813
    %v821 = vsel %vm84, %v807, %v815
    %v822 = vsel %vm84, %v809, %v817
    %v823 = vsel %vm84, %v811, %v819
    %v824 = vsel %vm84, %v797, %v805
    %v825 = vsel %vm84, %v799, %v807
    %v826 = vsel %vm84, %v801, %v809
    %v827 = vsel %vm84, %v803, %v811
    %v828 = vsel %vm84, %v789, %v797
    %v829 = vsel %vm84, %v791, %v799
    %v830 = vsel %vm84, %v793, %v801
    %v831 = vsel %vm84, %v795, %v803
    %v832 = vsel %vm84, %v813, %v789
    %v833 = vsel %vm84, %v815, %v791
    %v834 = vsel %vm84, %v817, %v793
    %v835 = vsel %vm84, %v819, %v795
    %v836 = vld [vmem:[%s1] ss:$8 sm:$0xf]
    %v838 = vlaneseq
    %v839 = vshrl.u32 %v838, 7
    %v840 = vsub.s32 0, %v839
    %v841 = vrot.slane %v836, %v840
    %v842 = vlaneseq
    %v843 = vshrl.u32 %v842, 7
    %v844 = vsub.s32 1, %v843
    %v845 = vrot.slane %v836, %v844
    %v846 = vlaneseq
    %v847 = vshrl.u32 %v846, 7
    %v848 = vsub.s32 2, %v847
    %v849 = vrot.slane %v836, %v848
    %v850 = vlaneseq
    %v851 = vshrl.u32 %v850, 7
    %v852 = vsub.s32 3, %v851
    %v853 = vrot.slane %v836, %v852
    %v858 = vmul.f32 %v832, %v841
    %v859 = vmul.f32 %v828, %v845
    %v860 = vmul.f32 %v824, %v849
    %v861 = vmul.f32 %v820, %v853
    %v862 = vmul.f32 %v833, %v841
    %v863 = vmul.f32 %v829, %v845
    %v864 = vmul.f32 %v825, %v849
    %v865 = vmul.f32 %v821, %v853
    %v866 = vmul.f32 %v834, %v841
    %v867 = vmul.f32 %v830, %v845
    %v868 = vmul.f32 %v826, %v849
    %v869 = vmul.f32 %v822, %v853
    %v870 = vmul.f32 %v835, %v841
    %v871 = vmul.f32 %v831, %v845
    %v872 = vmul.f32 %v827, %v849
    %v873 = vmul.f32 %v823, %v853
    %874 = vst [vmem:[#allocation2] sm:$0xff] %v858
    %875 = vst [vmem:[#allocation2 + $0x8] sm:$0xff] %v859
    %876 = vst [vmem:[#allocation2 + $0x10] sm:$0xff] %v860
    %877 = vst [vmem:[#allocation2 + $0x18] sm:$0xff] %v861
    %878 = vst [vmem:[#allocation2 + $0x20] sm:$0xff] %v862
    %879 = vst [vmem:[#allocation2 + $0x28] sm:$0xff] %v863
    %880 = vst [vmem:[#allocation2 + $0x30] sm:$0xff] %v864
    %881 = vst [vmem:[#allocation2 + $0x38] sm:$0xff] %v865
    %882 = vst [vmem:[#allocation2 + $0x40] sm:$0xff] %v866
    %883 = vst [vmem:[#allocation2 + $0x48] sm:$0xff] %v867
    %884 = vst [vmem:[#allocation2 + $0x50] sm:$0xff] %v868
    %885 = vst [vmem:[#allocation2 + $0x58] sm:$0xff] %v869
    %886 = vst [vmem:[#allocation2 + $0x60] sm:$0xff] %v870
    %887 = vst [vmem:[#allocation2 + $0x68] sm:$0xff] %v871
    %888 = vst [vmem:[#allocation2 + $0x70] sm:$0xff] %v872
    %889 = vst [vmem:[#allocation2 + $0x78] sm:$0xff] %v873
    %890 = vrot.lane.b32.xlu0 %v767, 16
    %v891 = vpop.permute.xlu0 %890
    %892 = vrot.lane.b32.xlu0 %v771, 16
    %v893 = vpop.permute.xlu0 %892
    %894 = vrot.lane.b32.xlu0 %v775, 16
    %v895 = vpop.permute.xlu0 %894
    %896 = vrot.lane.b32.xlu0 %v779, 16
    %v897 = vpop.permute.xlu0 %896
    %898 = vrot.lane.b32.xlu0 %v768, 16
    %v899 = vpop.permute.xlu0 %898
    %900 = vrot.lane.b32.xlu0 %v772, 16
    %v901 = vpop.permute.xlu0 %900
    %902 = vrot.lane.b32.xlu0 %v776, 16
    %v903 = vpop.permute.xlu0 %902
    %904 = vrot.lane.b32.xlu0 %v780, 16
    %v905 = vpop.permute.xlu0 %904
    %906 = vrot.lane.b32.xlu0 %v769, 16
    %v907 = vpop.permute.xlu0 %906
    %908 = vrot.lane.b32.xlu0 %v773, 16
    %v909 = vpop.permute.xlu0 %908
    %910 = vrot.lane.b32.xlu0 %v777, 16
    %v911 = vpop.permute.xlu0 %910
    %912 = vrot.lane.b32.xlu0 %v781, 16
    %v913 = vpop.permute.xlu0 %912
    %914 = vrot.lane.b32.xlu0 %v770, 16
    %v915 = vpop.permute.xlu0 %914
    %916 = vrot.lane.b32.xlu0 %v774, 16
    %v917 = vpop.permute.xlu0 %916
    %918 = vrot.lane.b32.xlu0 %v778, 16
    %v919 = vpop.permute.xlu0 %918
    %920 = vrot.lane.b32.xlu0 %v782, 16
    %v921 = vpop.permute.xlu0 %920
    %v922 = vsel %vm127, %v907, %v915
    %v923 = vsel %vm127, %v909, %v917
    %v924 = vsel %vm127, %v911, %v919
    %v925 = vsel %vm127, %v913, %v921
    %v926 = vsel %vm127, %v899, %v907
    %v927 = vsel %vm127, %v901, %v909
    %v928 = vsel %vm127, %v903, %v911
    %v929 = vsel %vm127, %v905, %v913
    %v930 = vsel %vm127, %v891, %v899
    %v931 = vsel %vm127, %v893, %v901
    %v932 = vsel %vm127, %v895, %v903
    %v933 = vsel %vm127, %v897, %v905
    %v934 = vsel %vm127, %v915, %v891
    %v935 = vsel %vm127, %v917, %v893
    %v936 = vsel %vm127, %v919, %v895
    %v937 = vsel %vm127, %v921, %v897
    %v938 = vld [vmem:[%s132] ss:$8 sm:$0xf]
    %v940 = vlaneseq
    %v941 = vshrl.u32 %v940, 7
    %v942 = vsub.s32 0, %v941
    %v943 = vrot.slane %v938, %v942
    %v944 = vlaneseq
    %v945 = vshrl.u32 %v944, 7
    %v946 = vsub.s32 1, %v945
    %v947 = vrot.slane %v938, %v946
    %v948 = vlaneseq
    %v949 = vshrl.u32 %v948, 7
    %v950 = vsub.s32 2, %v949
    %v951 = vrot.slane %v938, %v950
    %v952 = vlaneseq
    %v953 = vshrl.u32 %v952, 7
    %v954 = vsub.s32 3, %v953
    %v955 = vrot.slane %v938, %v954
    %v960 = vmul.f32 %v934, %v943
    %v961 = vmul.f32 %v930, %v947
    %v962 = vmul.f32 %v926, %v951
    %v963 = vmul.f32 %v922, %v955
    %v964 = vmul.f32 %v935, %v943
    %v965 = vmul.f32 %v931, %v947
    %v966 = vmul.f32 %v927, %v951
    %v967 = vmul.f32 %v923, %v955
    %v968 = vmul.f32 %v936, %v943
    %v969 = vmul.f32 %v932, %v947
    %v970 = vmul.f32 %v928, %v951
    %v971 = vmul.f32 %v924, %v955
    %v972 = vmul.f32 %v937, %v943
    %v973 = vmul.f32 %v933, %v947
    %v974 = vmul.f32 %v929, %v951
    %v975 = vmul.f32 %v925, %v955
    %976 = vst [vmem:[#allocation2 + $0x80] sm:$0xff] %v960
    %977 = vst [vmem:[#allocation2 + $0x88] sm:$0xff] %v961
    %978 = vst [vmem:[#allocation2 + $0x90] sm:$0xff] %v962
    %979 = vst [vmem:[#allocation2 + $0x98] sm:$0xff] %v963
    %980 = vst [vmem:[#allocation2 + $0xa0] sm:$0xff] %v964
    %981 = vst [vmem:[#allocation2 + $0xa8] sm:$0xff] %v965
    %982 = vst [vmem:[#allocation2 + $0xb0] sm:$0xff] %v966
    %983 = vst [vmem:[#allocation2 + $0xb8] sm:$0xff] %v967
    %984 = vst [vmem:[#allocation2 + $0xc0] sm:$0xff] %v968
    %985 = vst [vmem:[#allocation2 + $0xc8] sm:$0xff] %v969
    %986 = vst [vmem:[#allocation2 + $0xd0] sm:$0xff] %v970
    %987 = vst [vmem:[#allocation2 + $0xd8] sm:$0xff] %v971
    %988 = vst [vmem:[#allocation2 + $0xe0] sm:$0xff] %v972
    %989 = vst [vmem:[#allocation2 + $0xe8] sm:$0xff] %v973
    %990 = vst [vmem:[#allocation2 + $0xf0] sm:$0xff] %v974
    %991 = vst [vmem:[#allocation2 + $0xf8] sm:$0xff] %v975
    %992 = vrot.lane.b32.xlu0 %v767, 15
    %v993 = vpop.permute.xlu0 %992
    %994 = vrot.lane.b32.xlu0 %v771, 15
    %v995 = vpop.permute.xlu0 %994
    %996 = vrot.lane.b32.xlu0 %v775, 15
    %v997 = vpop.permute.xlu0 %996
    %998 = vrot.lane.b32.xlu0 %v779, 15
    %v999 = vpop.permute.xlu0 %998
    %1000 = vrot.lane.b32.xlu0 %v768, 15
    %v1001 = vpop.permute.xlu0 %1000
    %1002 = vrot.lane.b32.xlu0 %v772, 15
    %v1003 = vpop.permute.xlu0 %1002
    %1004 = vrot.lane.b32.xlu0 %v776, 15
    %v1005 = vpop.permute.xlu0 %1004
    %1006 = vrot.lane.b32.xlu0 %v780, 15
    %v1007 = vpop.permute.xlu0 %1006
    %1008 = vrot.lane.b32.xlu0 %v769, 15
    %v1009 = vpop.permute.xlu0 %1008
    %1010 = vrot.lane.b32.xlu0 %v773, 15
    %v1011 = vpop.permute.xlu0 %1010
    %1012 = vrot.lane.b32.xlu0 %v777, 15
    %v1013 = vpop.permute.xlu0 %1012
    %1014 = vrot.lane.b32.xlu0 %v781, 15
    %v1015 = vpop.permute.xlu0 %1014
    %1016 = vrot.lane.b32.xlu0 %v770, 15
    %v1017 = vpop.permute.xlu0 %1016
    %1018 = vrot.lane.b32.xlu0 %v774, 15
    %v1019 = vpop.permute.xlu0 %1018
    %1020 = vrot.lane.b32.xlu0 %v778, 15
    %v1021 = vpop.permute.xlu0 %1020
    %1022 = vrot.lane.b32.xlu0 %v782, 15
    %v1023 = vpop.permute.xlu0 %1022
    %v1024 = vsel %vm171, %v1009, %v1017
    %v1025 = vsel %vm171, %v1011, %v1019
    %v1026 = vsel %vm171, %v1013, %v1021
    %v1027 = vsel %vm171, %v1015, %v1023
    %v1028 = vsel %vm171, %v1001, %v1009
    %v1029 = vsel %vm171, %v1003, %v1011
    %v1030 = vsel %vm171, %v1005, %v1013
    %v1031 = vsel %vm171, %v1007, %v1015
    %v1032 = vsel %vm171, %v993, %v1001
    %v1033 = vsel %vm171, %v995, %v1003
    %v1034 = vsel %vm171, %v997, %v1005
    %v1035 = vsel %vm171, %v999, %v1007
    %v1036 = vsel %vm171, %v1017, %v993
    %v1037 = vsel %vm171, %v1019, %v995
    %v1038 = vsel %vm171, %v1021, %v997
    %v1039 = vsel %vm171, %v1023, %v999
    %v1040 = vld [vmem:[%s176] ss:$8 sm:$0xf]
    %v1042 = vlaneseq
    %v1043 = vshrl.u32 %v1042, 7
    %v1044 = vsub.s32 0, %v1043
    %v1045 = vrot.slane %v1040, %v1044
    %v1046 = vlaneseq
    %v1047 = vshrl.u32 %v1046, 7
    %v1048 = vsub.s32 1, %v1047
    %v1049 = vrot.slane %v1040, %v1048
    %v1050 = vlaneseq
    %v1051 = vshrl.u32 %v1050, 7
    %v1052 = vsub.s32 2, %v1051
    %v1053 = vrot.slane %v1040, %v1052
    %v1054 = vlaneseq
    %v1055 = vshrl.u32 %v1054, 7
    %v1056 = vsub.s32 3, %v1055
    %v1057 = vrot.slane %v1040, %v1056
    %v1062 = vmul.f32 %v1036, %v1045
    %v1063 = vmul.f32 %v1032, %v1049
    %v1064 = vmul.f32 %v1028, %v1053
    %v1065 = vmul.f32 %v1024, %v1057
    %v1066 = vmul.f32 %v1037, %v1045
    %v1067 = vmul.f32 %v1033, %v1049
    %v1068 = vmul.f32 %v1029, %v1053
    %v1069 = vmul.f32 %v1025, %v1057
    %v1070 = vmul.f32 %v1038, %v1045
    %v1071 = vmul.f32 %v1034, %v1049
    %v1072 = vmul.f32 %v1030, %v1053
    %v1073 = vmul.f32 %v1026, %v1057
    %v1074 = vmul.f32 %v1039, %v1045
    %v1075 = vmul.f32 %v1035, %v1049
    %v1076 = vmul.f32 %v1031, %v1053
    %v1077 = vmul.f32 %v1027, %v1057
    %1078 = vst [vmem:[#allocation2 + $0x100] sm:$0xff] %v1062
    %1079 = vst [vmem:[#allocation2 + $0x108] sm:$0xff] %v1063
    %1080 = vst [vmem:[#allocation2 + $0x110] sm:$0xff] %v1064
    %1081 = vst [vmem:[#allocation2 + $0x118] sm:$0xff] %v1065
    %1082 = vst [vmem:[#allocation2 + $0x120] sm:$0xff] %v1066
    %1083 = vst [vmem:[#allocation2 + $0x128] sm:$0xff] %v1067
    %1084 = vst [vmem:[#allocation2 + $0x130] sm:$0xff] %v1068
    %1085 = vst [vmem:[#allocation2 + $0x138] sm:$0xff] %v1069
    %1086 = vst [vmem:[#allocation2 + $0x140] sm:$0xff] %v1070
    %1087 = vst [vmem:[#allocation2 + $0x148] sm:$0xff] %v1071
    %1088 = vst [vmem:[#allocation2 + $0x150] sm:$0xff] %v1072
    %1089 = vst [vmem:[#allocation2 + $0x158] sm:$0xff] %v1073
    %1090 = vst [vmem:[#allocation2 + $0x160] sm:$0xff] %v1074
    %1091 = vst [vmem:[#allocation2 + $0x168] sm:$0xff] %v1075
    %1092 = vst [vmem:[#allocation2 + $0x170] sm:$0xff] %v1076
    %1093 = vst [vmem:[#allocation2 + $0x178] sm:$0xff] %v1077
    %1094 = vrot.lane.b32.xlu0 %v767, 1
    %v1095 = vpop.permute.xlu0 %1094
    %1096 = vrot.lane.b32.xlu0 %v771, 1
    %v1097 = vpop.permute.xlu0 %1096
    %1098 = vrot.lane.b32.xlu0 %v775, 1
    %v1099 = vpop.permute.xlu0 %1098
    %1100 = vrot.lane.b32.xlu0 %v779, 1
    %v1101 = vpop.permute.xlu0 %1100
    %1102 = vrot.lane.b32.xlu0 %v768, 1
    %v1103 = vpop.permute.xlu0 %1102
    %1104 = vrot.lane.b32.xlu0 %v772, 1
    %v1105 = vpop.permute.xlu0 %1104
    %1106 = vrot.lane.b32.xlu0 %v776, 1
    %v1107 = vpop.permute.xlu0 %1106
    %1108 = vrot.lane.b32.xlu0 %v780, 1
    %v1109 = vpop.permute.xlu0 %1108
    %1110 = vrot.lane.b32.xlu0 %v769, 1
    %v1111 = vpop.permute.xlu0 %1110
    %1112 = vrot.lane.b32.xlu0 %v773, 1
    %v1113 = vpop.permute.xlu0 %1112
    %1114 = vrot.lane.b32.xlu0 %v777, 1
    %v1115 = vpop.permute.xlu0 %1114
    %1116 = vrot.lane.b32.xlu0 %v781, 1
    %v1117 = vpop.permute.xlu0 %1116
    %1118 = vrot.lane.b32.xlu0 %v770, 1
    %v1119 = vpop.permute.xlu0 %1118
    %1120 = vrot.lane.b32.xlu0 %v774, 1
    %v1121 = vpop.permute.xlu0 %1120
    %1122 = vrot.lane.b32.xlu0 %v778, 1
    %v1123 = vpop.permute.xlu0 %1122
    %1124 = vrot.lane.b32.xlu0 %v782, 1
    %v1125 = vpop.permute.xlu0 %1124
    %v1126 = vsel %vm215, %v1111, %v1119
    %v1127 = vsel %vm215, %v1113, %v1121
    %v1128 = vsel %vm215, %v1115, %v1123
    %v1129 = vsel %vm215, %v1117, %v1125
    %v1130 = vsel %vm215, %v1103, %v1111
    %v1131 = vsel %vm215, %v1105, %v1113
    %v1132 = vsel %vm215, %v1107, %v1115
    %v1133 = vsel %vm215, %v1109, %v1117
    %v1134 = vsel %vm215, %v1095, %v1103
    %v1135 = vsel %vm215, %v1097, %v1105
    %v1136 = vsel %vm215, %v1099, %v1107
    %v1137 = vsel %vm215, %v1101, %v1109
    %v1138 = vsel %vm215, %v1119, %v1095
    %v1139 = vsel %vm215, %v1121, %v1097
    %v1140 = vsel %vm215, %v1123, %v1099
    %v1141 = vsel %vm215, %v1125, %v1101
    %v1142 = vld [vmem:[%s220] ss:$8 sm:$0xf]
    %v1144 = vlaneseq
    %v1145 = vshrl.u32 %v1144, 7
    %v1146 = vsub.s32 0, %v1145
    %v1147 = vrot.slane %v1142, %v1146
    %v1148 = vlaneseq
    %v1149 = vshrl.u32 %v1148, 7
    %v1150 = vsub.s32 1, %v1149
    %v1151 = vrot.slane %v1142, %v1150
    %v1152 = vlaneseq
    %v1153 = vshrl.u32 %v1152, 7
    %v1154 = vsub.s32 2, %v1153
    %v1155 = vrot.slane %v1142, %v1154
    %v1156 = vlaneseq
    %v1157 = vshrl.u32 %v1156, 7
    %v1158 = vsub.s32 3, %v1157
    %v1159 = vrot.slane %v1142, %v1158
    %v1164 = vmul.f32 %v1138, %v1147
    %v1165 = vmul.f32 %v1134, %v1151
    %v1166 = vmul.f32 %v1130, %v1155
    %v1167 = vmul.f32 %v1126, %v1159
    %v1168 = vmul.f32 %v1139, %v1147
    %v1169 = vmul.f32 %v1135, %v1151
    %v1170 = vmul.f32 %v1131, %v1155
    %v1171 = vmul.f32 %v1127, %v1159
    %v1172 = vmul.f32 %v1140, %v1147
    %v1173 = vmul.f32 %v1136, %v1151
    %v1174 = vmul.f32 %v1132, %v1155
    %v1175 = vmul.f32 %v1128, %v1159
    %v1176 = vmul.f32 %v1141, %v1147
    %v1177 = vmul.f32 %v1137, %v1151
    %v1178 = vmul.f32 %v1133, %v1155
    %v1179 = vmul.f32 %v1129, %v1159
    %1180 = vst [vmem:[#allocation2 + $0x180] sm:$0xff] %v1164
    %1181 = vst [vmem:[#allocation2 + $0x188] sm:$0xff] %v1165
    %1182 = vst [vmem:[#allocation2 + $0x190] sm:$0xff] %v1166
    %1183 = vst [vmem:[#allocation2 + $0x198] sm:$0xff] %v1167
    %1184 = vst [vmem:[#allocation2 + $0x1a0] sm:$0xff] %v1168
    %1185 = vst [vmem:[#allocation2 + $0x1a8] sm:$0xff] %v1169
    %1186 = vst [vmem:[#allocation2 + $0x1b0] sm:$0xff] %v1170
    %1187 = vst [vmem:[#allocation2 + $0x1b8] sm:$0xff] %v1171
    %1188 = vst [vmem:[#allocation2 + $0x1c0] sm:$0xff] %v1172
    %1189 = vst [vmem:[#allocation2 + $0x1c8] sm:$0xff] %v1173
    %1190 = vst [vmem:[#allocation2 + $0x1d0] sm:$0xff] %v1174
    %1191 = vst [vmem:[#allocation2 + $0x1d8] sm:$0xff] %v1175
    %1192 = vst [vmem:[#allocation2 + $0x1e0] sm:$0xff] %v1176
    %1193 = vst [vmem:[#allocation2 + $0x1e8] sm:$0xff] %v1177
    %1194 = vst [vmem:[#allocation2 + $0x1f0] sm:$0xff] %v1178
    %1195 = vst [vmem:[#allocation2 + $0x1f8] sm:$0xff] %v1179
    %1196 = vst [vmem:[#allocation2 + $0x200] sm:$0xff] %v767
    %1197 = vst [vmem:[#allocation2 + $0x208] sm:$0xff] %v768
    %1198 = vst [vmem:[#allocation2 + $0x210] sm:$0xff] %v769
    %1199 = vst [vmem:[#allocation2 + $0x218] sm:$0xff] %v770
    %1200 = vst [vmem:[#allocation2 + $0x220] sm:$0xff] %v771
    %1201 = vst [vmem:[#allocation2 + $0x228] sm:$0xff] %v772
    %1202 = vst [vmem:[#allocation2 + $0x230] sm:$0xff] %v773
    %1203 = vst [vmem:[#allocation2 + $0x238] sm:$0xff] %v774
    %1204 = vst [vmem:[#allocation2 + $0x240] sm:$0xff] %v775
    %1205 = vst [vmem:[#allocation2 + $0x248] sm:$0xff] %v776
    %1206 = vst [vmem:[#allocation2 + $0x250] sm:$0xff] %v777
    %1207 = vst [vmem:[#allocation2 + $0x258] sm:$0xff] %v778
    %1208 = vst [vmem:[#allocation2 + $0x260] sm:$0xff] %v779
    %1209 = vst [vmem:[#allocation2 + $0x268] sm:$0xff] %v780
    %1210 = vst [vmem:[#allocation2 + $0x270] sm:$0xff] %v781
    %1211 = vst [vmem:[#allocation2 + $0x278] sm:$0xff] %v782
    %1212 = vrot.lane.b32.xlu0 %v767, 127
    %v1213 = vpop.permute.xlu0 %1212
    %1214 = vrot.lane.b32.xlu0 %v771, 127
    %v1215 = vpop.permute.xlu0 %1214
    %1216 = vrot.lane.b32.xlu0 %v775, 127
    %v1217 = vpop.permute.xlu0 %1216
    %1218 = vrot.lane.b32.xlu0 %v779, 127
    %v1219 = vpop.permute.xlu0 %1218
    %1220 = vrot.lane.b32.xlu0 %v768, 127
    %v1221 = vpop.permute.xlu0 %1220
    %1222 = vrot.lane.b32.xlu0 %v772, 127
    %v1223 = vpop.permute.xlu0 %1222
    %1224 = vrot.lane.b32.xlu0 %v776, 127
    %v1225 = vpop.permute.xlu0 %1224
    %1226 = vrot.lane.b32.xlu0 %v780, 127
    %v1227 = vpop.permute.xlu0 %1226
    %1228 = vrot.lane.b32.xlu0 %v769, 127
    %v1229 = vpop.permute.xlu0 %1228
    %1230 = vrot.lane.b32.xlu0 %v773, 127
    %v1231 = vpop.permute.xlu0 %1230
    %1232 = vrot.lane.b32.xlu0 %v777, 127
    %v1233 = vpop.permute.xlu0 %1232
    %1234 = vrot.lane.b32.xlu0 %v781, 127
    %v1235 = vpop.permute.xlu0 %1234
    %1236 = vrot.lane.b32.xlu0 %v770, 127
    %v1237 = vpop.permute.xlu0 %1236
    %1238 = vrot.lane.b32.xlu0 %v774, 127
    %v1239 = vpop.permute.xlu0 %1238
    %1240 = vrot.lane.b32.xlu0 %v778, 127
    %v1241 = vpop.permute.xlu0 %1240
    %1242 = vrot.lane.b32.xlu0 %v782, 127
    %v1243 = vpop.permute.xlu0 %1242
    %v1244 = vsel %vm263, %v1229, %v1237
    %v1245 = vsel %vm263, %v1231, %v1239
    %v1246 = vsel %vm263, %v1233, %v1241
    %v1247 = vsel %vm263, %v1235, %v1243
    %v1248 = vsel %vm263, %v1221, %v1229
    %v1249 = vsel %vm263, %v1223, %v1231
    %v1250 = vsel %vm263, %v1225, %v1233
    %v1251 = vsel %vm263, %v1227, %v1235
    %v1252 = vsel %vm263, %v1213, %v1221
    %v1253 = vsel %vm263, %v1215, %v1223
    %v1254 = vsel %vm263, %v1217, %v1225
    %v1255 = vsel %vm263, %v1219, %v1227
    %v1256 = vsel %vm263, %v1237, %v1213
    %v1257 = vsel %vm263, %v1239, %v1215
    %v1258 = vsel %vm263, %v1241, %v1217
    %v1259 = vsel %vm263, %v1243, %v1219
    %v1260 = vld [vmem:[%s268] ss:$8 sm:$0xf]
    %v1262 = vlaneseq
    %v1263 = vshrl.u32 %v1262, 7
    %v1264 = vsub.s32 0, %v1263
    %v1265 = vrot.slane %v1260, %v1264
    %v1266 = vlaneseq
    %v1267 = vshrl.u32 %v1266, 7
    %v1268 = vsub.s32 1, %v1267
    %v1269 = vrot.slane %v1260, %v1268
    %v1270 = vlaneseq
    %v1271 = vshrl.u32 %v1270, 7
    %v1272 = vsub.s32 2, %v1271
    %v1273 = vrot.slane %v1260, %v1272
    %v1274 = vlaneseq
    %v1275 = vshrl.u32 %v1274, 7
    %v1276 = vsub.s32 3, %v1275
    %v1277 = vrot.slane %v1260, %v1276
    %v1282 = vmul.f32 %v1252, %v1265
    %v1283 = vmul.f32 %v1248, %v1269
    %v1284 = vmul.f32 %v1244, %v1273
    %v1285 = vmul.f32 %v1256, %v1277
    %v1286 = vmul.f32 %v1253, %v1265
    %v1287 = vmul.f32 %v1249, %v1269
    %v1288 = vmul.f32 %v1245, %v1273
    %v1289 = vmul.f32 %v1257, %v1277
    %v1290 = vmul.f32 %v1254, %v1265
    %v1291 = vmul.f32 %v1250, %v1269
    %v1292 = vmul.f32 %v1246, %v1273
    %v1293 = vmul.f32 %v1258, %v1277
    %v1294 = vmul.f32 %v1255, %v1265
    %v1295 = vmul.f32 %v1251, %v1269
    %v1296 = vmul.f32 %v1247, %v1273
    %v1297 = vmul.f32 %v1259, %v1277
    %1298 = vst [vmem:[#allocation2 + $0x280] sm:$0xff] %v1282
    %1299 = vst [vmem:[#allocation2 + $0x288] sm:$0xff] %v1283
    %1300 = vst [vmem:[#allocation2 + $0x290] sm:$0xff] %v1284
    %1301 = vst [vmem:[#allocation2 + $0x298] sm:$0xff] %v1285
    %1302 = vst [vmem:[#allocation2 + $0x2a0] sm:$0xff] %v1286
    %1303 = vst [vmem:[#allocation2 + $0x2a8] sm:$0xff] %v1287
    %1304 = vst [vmem:[#allocation2 + $0x2b0] sm:$0xff] %v1288
    %1305 = vst [vmem:[#allocation2 + $0x2b8] sm:$0xff] %v1289
    %1306 = vst [vmem:[#allocation2 + $0x2c0] sm:$0xff] %v1290
    %1307 = vst [vmem:[#allocation2 + $0x2c8] sm:$0xff] %v1291
    %1308 = vst [vmem:[#allocation2 + $0x2d0] sm:$0xff] %v1292
    %1309 = vst [vmem:[#allocation2 + $0x2d8] sm:$0xff] %v1293
    %1310 = vst [vmem:[#allocation2 + $0x2e0] sm:$0xff] %v1294
    %1311 = vst [vmem:[#allocation2 + $0x2e8] sm:$0xff] %v1295
    %1312 = vst [vmem:[#allocation2 + $0x2f0] sm:$0xff] %v1296
    %1313 = vst [vmem:[#allocation2 + $0x2f8] sm:$0xff] %v1297
    %1314 = vrot.lane.b32.xlu0 %v767, 113
    %v1315 = vpop.permute.xlu0 %1314
    %1316 = vrot.lane.b32.xlu0 %v771, 113
    %v1317 = vpop.permute.xlu0 %1316
    %1318 = vrot.lane.b32.xlu0 %v775, 113
    %v1319 = vpop.permute.xlu0 %1318
    %1320 = vrot.lane.b32.xlu0 %v779, 113
    %v1321 = vpop.permute.xlu0 %1320
    %1322 = vrot.lane.b32.xlu0 %v768, 113
    %v1323 = vpop.permute.xlu0 %1322
    %1324 = vrot.lane.b32.xlu0 %v772, 113
    %v1325 = vpop.permute.xlu0 %1324
    %1326 = vrot.lane.b32.xlu0 %v776, 113
    %v1327 = vpop.permute.xlu0 %1326
    %1328 = vrot.lane.b32.xlu0 %v780, 113
    %v1329 = vpop.permute.xlu0 %1328
    %1330 = vrot.lane.b32.xlu0 %v769, 113
    %v1331 = vpop.permute.xlu0 %1330
    %1332 = vrot.lane.b32.xlu0 %v773, 113
    %v1333 = vpop.permute.xlu0 %1332
    %1334 = vrot.lane.b32.xlu0 %v777, 113
    %v1335 = vpop.permute.xlu0 %1334
    %1336 = vrot.lane.b32.xlu0 %v781, 113
    %v1337 = vpop.permute.xlu0 %1336
    %1338 = vrot.lane.b32.xlu0 %v770, 113
    %v1339 = vpop.permute.xlu0 %1338
    %1340 = vrot.lane.b32.xlu0 %v774, 113
    %v1341 = vpop.permute.xlu0 %1340
    %1342 = vrot.lane.b32.xlu0 %v778, 113
    %v1343 = vpop.permute.xlu0 %1342
    %1344 = vrot.lane.b32.xlu0 %v782, 113
    %v1345 = vpop.permute.xlu0 %1344
    %v1346 = vsel %vm307, %v1331, %v1339
    %v1347 = vsel %vm307, %v1333, %v1341
    %v1348 = vsel %vm307, %v1335, %v1343
    %v1349 = vsel %vm307, %v1337, %v1345
    %v1350 = vsel %vm307, %v1323, %v1331
    %v1351 = vsel %vm307, %v1325, %v1333
    %v1352 = vsel %vm307, %v1327, %v1335
    %v1353 = vsel %vm307, %v1329, %v1337
    %v1354 = vsel %vm307, %v1315, %v1323
    %v1355 = vsel %vm307, %v1317, %v1325
    %v1356 = vsel %vm307, %v1319, %v1327
    %v1357 = vsel %vm307, %v1321, %v1329
    %v1358 = vsel %vm307, %v1339, %v1315
    %v1359 = vsel %vm307, %v1341, %v1317
    %v1360 = vsel %vm307, %v1343, %v1319
    %v1361 = vsel %vm307, %v1345, %v1321
    %v1362 = vld [vmem:[%s312] ss:$8 sm:$0xf]
    %v1364 = vlaneseq
    %v1365 = vshrl.u32 %v1364, 7
    %v1366 = vsub.s32 0, %v1365
    %v1367 = vrot.slane %v1362, %v1366
    %v1368 = vlaneseq
    %v1369 = vshrl.u32 %v1368, 7
    %v1370 = vsub.s32 1, %v1369
    %v1371 = vrot.slane %v1362, %v1370
    %v1372 = vlaneseq
    %v1373 = vshrl.u32 %v1372, 7
    %v1374 = vsub.s32 2, %v1373
    %v1375 = vrot.slane %v1362, %v1374
    %v1376 = vlaneseq
    %v1377 = vshrl.u32 %v1376, 7
    %v1378 = vsub.s32 3, %v1377
    %v1379 = vrot.slane %v1362, %v1378
    %v1384 = vmul.f32 %v1354, %v1367
    %v1385 = vmul.f32 %v1350, %v1371
    %v1386 = vmul.f32 %v1346, %v1375
    %v1387 = vmul.f32 %v1358, %v1379
    %v1388 = vmul.f32 %v1355, %v1367
    %v1389 = vmul.f32 %v1351, %v1371
    %v1390 = vmul.f32 %v1347, %v1375
    %v1391 = vmul.f32 %v1359, %v1379
    %v1392 = vmul.f32 %v1356, %v1367
    %v1393 = vmul.f32 %v1352, %v1371
    %v1394 = vmul.f32 %v1348, %v1375
    %v1395 = vmul.f32 %v1360, %v1379
    %v1396 = vmul.f32 %v1357, %v1367
    %v1397 = vmul.f32 %v1353, %v1371
    %v1398 = vmul.f32 %v1349, %v1375
    %v1399 = vmul.f32 %v1361, %v1379
    %1400 = vst [vmem:[#allocation2 + $0x300] sm:$0xff] %v1384
    %1401 = vst [vmem:[#allocation2 + $0x308] sm:$0xff] %v1385
    %1402 = vst [vmem:[#allocation2 + $0x310] sm:$0xff] %v1386
    %1403 = vst [vmem:[#allocation2 + $0x318] sm:$0xff] %v1387
    %1404 = vst [vmem:[#allocation2 + $0x320] sm:$0xff] %v1388
    %1405 = vst [vmem:[#allocation2 + $0x328] sm:$0xff] %v1389
    %1406 = vst [vmem:[#allocation2 + $0x330] sm:$0xff] %v1390
    %1407 = vst [vmem:[#allocation2 + $0x338] sm:$0xff] %v1391
    %1408 = vst [vmem:[#allocation2 + $0x340] sm:$0xff] %v1392
    %1409 = vst [vmem:[#allocation2 + $0x348] sm:$0xff] %v1393
    %1410 = vst [vmem:[#allocation2 + $0x350] sm:$0xff] %v1394
    %1411 = vst [vmem:[#allocation2 + $0x358] sm:$0xff] %v1395
    %1412 = vst [vmem:[#allocation2 + $0x360] sm:$0xff] %v1396
    %1413 = vst [vmem:[#allocation2 + $0x368] sm:$0xff] %v1397
    %1414 = vst [vmem:[#allocation2 + $0x370] sm:$0xff] %v1398
    %1415 = vst [vmem:[#allocation2 + $0x378] sm:$0xff] %v1399
    %1416 = vrot.lane.b32.xlu0 %v767, 112
    %v1417 = vpop.permute.xlu0 %1416
    %1418 = vrot.lane.b32.xlu0 %v771, 112
    %v1419 = vpop.permute.xlu0 %1418
    %1420 = vrot.lane.b32.xlu0 %v775, 112
    %v1421 = vpop.permute.xlu0 %1420
    %1422 = vrot.lane.b32.xlu0 %v779, 112
    %v1423 = vpop.permute.xlu0 %1422
    %1424 = vrot.lane.b32.xlu0 %v768, 112
    %v1425 = vpop.permute.xlu0 %1424
    %1426 = vrot.lane.b32.xlu0 %v772, 112
    %v1427 = vpop.permute.xlu0 %1426
    %1428 = vrot.lane.b32.xlu0 %v776, 112
    %v1429 = vpop.permute.xlu0 %1428
    %1430 = vrot.lane.b32.xlu0 %v780, 112
    %v1431 = vpop.permute.xlu0 %1430
    %1432 = vrot.lane.b32.xlu0 %v769, 112
    %v1433 = vpop.permute.xlu0 %1432
    %1434 = vrot.lane.b32.xlu0 %v773, 112
    %v1435 = vpop.permute.xlu0 %1434
    %1436 = vrot.lane.b32.xlu0 %v777, 112
    %v1437 = vpop.permute.xlu0 %1436
    %1438 = vrot.lane.b32.xlu0 %v781, 112
    %v1439 = vpop.permute.xlu0 %1438
    %1440 = vrot.lane.b32.xlu0 %v770, 112
    %v1441 = vpop.permute.xlu0 %1440
    %1442 = vrot.lane.b32.xlu0 %v774, 112
    %v1443 = vpop.permute.xlu0 %1442
    %1444 = vrot.lane.b32.xlu0 %v778, 112
    %v1445 = vpop.permute.xlu0 %1444
    %1446 = vrot.lane.b32.xlu0 %v782, 112
    %v1447 = vpop.permute.xlu0 %1446
    %v1448 = vsel %vm351, %v1433, %v1441
    %v1449 = vsel %vm351, %v1435, %v1443
    %v1450 = vsel %vm351, %v1437, %v1445
    %v1451 = vsel %vm351, %v1439, %v1447
    %v1452 = vsel %vm351, %v1425, %v1433
    %v1453 = vsel %vm351, %v1427, %v1435
    %v1454 = vsel %vm351, %v1429, %v1437
    %v1455 = vsel %vm351, %v1431, %v1439
    %v1456 = vsel %vm351, %v1417, %v1425
    %v1457 = vsel %vm351, %v1419, %v1427
    %v1458 = vsel %vm351, %v1421, %v1429
    %v1459 = vsel %vm351, %v1423, %v1431
    %v1460 = vsel %vm351, %v1441, %v1417
    %v1461 = vsel %vm351, %v1443, %v1419
    %v1462 = vsel %vm351, %v1445, %v1421
    %v1463 = vsel %vm351, %v1447, %v1423
    %v1464 = vld [vmem:[%s356] ss:$8 sm:$0xf]
    %v1466 = vlaneseq
    %v1467 = vshrl.u32 %v1466, 7
    %v1468 = vsub.s32 0, %v1467
    %v1469 = vrot.slane %v1464, %v1468
    %v1470 = vlaneseq
    %v1471 = vshrl.u32 %v1470, 7
    %v1472 = vsub.s32 1, %v1471
    %v1473 = vrot.slane %v1464, %v1472
    %v1474 = vlaneseq
    %v1475 = vshrl.u32 %v1474, 7
    %v1476 = vsub.s32 2, %v1475
    %v1477 = vrot.slane %v1464, %v1476
    %v1478 = vlaneseq
    %v1479 = vshrl.u32 %v1478, 7
    %v1480 = vsub.s32 3, %v1479
    %v1481 = vrot.slane %v1464, %v1480
    %v1486 = vmul.f32 %v1456, %v1469
    %v1487 = vmul.f32 %v1452, %v1473
    %v1488 = vmul.f32 %v1448, %v1477
    %v1489 = vmul.f32 %v1460, %v1481
    %v1490 = vmul.f32 %v1457, %v1469
    %v1491 = vmul.f32 %v1453, %v1473
    %v1492 = vmul.f32 %v1449, %v1477
    %v1493 = vmul.f32 %v1461, %v1481
    %v1494 = vmul.f32 %v1458, %v1469
    %v1495 = vmul.f32 %v1454, %v1473
    %v1496 = vmul.f32 %v1450, %v1477
    %v1497 = vmul.f32 %v1462, %v1481
    %v1498 = vmul.f32 %v1459, %v1469
    %v1499 = vmul.f32 %v1455, %v1473
    %v1500 = vmul.f32 %v1451, %v1477
    %v1501 = vmul.f32 %v1463, %v1481
    %1502 = vst [vmem:[#allocation2 + $0x380] sm:$0xff] %v1486
    %1503 = vst [vmem:[#allocation2 + $0x388] sm:$0xff] %v1487
    %1504 = vst [vmem:[#allocation2 + $0x390] sm:$0xff] %v1488
    %1505 = vst [vmem:[#allocation2 + $0x398] sm:$0xff] %v1489
    %1506 = vst [vmem:[#allocation2 + $0x3a0] sm:$0xff] %v1490
    %1507 = vst [vmem:[#allocation2 + $0x3a8] sm:$0xff] %v1491
    %1508 = vst [vmem:[#allocation2 + $0x3b0] sm:$0xff] %v1492
    %1509 = vst [vmem:[#allocation2 + $0x3b8] sm:$0xff] %v1493
    %1510 = vst [vmem:[#allocation2 + $0x3c0] sm:$0xff] %v1494
    %1511 = vst [vmem:[#allocation2 + $0x3c8] sm:$0xff] %v1495
    %1512 = vst [vmem:[#allocation2 + $0x3d0] sm:$0xff] %v1496
    %1513 = vst [vmem:[#allocation2 + $0x3d8] sm:$0xff] %v1497
    %1514 = vst [vmem:[#allocation2 + $0x3e0] sm:$0xff] %v1498
    %1515 = vst [vmem:[#allocation2 + $0x3e8] sm:$0xff] %v1499
    %1516 = vst [vmem:[#allocation2 + $0x3f0] sm:$0xff] %v1500
    %1517 = vst [vmem:[#allocation2 + $0x3f8] sm:$0xff] %v1501
    %1518 = vrot.lane.b32.xlu0 %v767, 111
    %v1519 = vpop.permute.xlu0 %1518
    %1520 = vrot.lane.b32.xlu0 %v771, 111
    %v1521 = vpop.permute.xlu0 %1520
    %1522 = vrot.lane.b32.xlu0 %v775, 111
    %v1523 = vpop.permute.xlu0 %1522
    %1524 = vrot.lane.b32.xlu0 %v779, 111
    %v1525 = vpop.permute.xlu0 %1524
    %1526 = vrot.lane.b32.xlu0 %v768, 111
    %v1527 = vpop.permute.xlu0 %1526
    %1528 = vrot.lane.b32.xlu0 %v772, 111
    %v1529 = vpop.permute.xlu0 %1528
    %1530 = vrot.lane.b32.xlu0 %v776, 111
    %v1531 = vpop.permute.xlu0 %1530
    %1532 = vrot.lane.b32.xlu0 %v780, 111
    %v1533 = vpop.permute.xlu0 %1532
    %1534 = vrot.lane.b32.xlu0 %v769, 111
    %v1535 = vpop.permute.xlu0 %1534
    %1536 = vrot.lane.b32.xlu0 %v773, 111
    %v1537 = vpop.permute.xlu0 %1536
    %1538 = vrot.lane.b32.xlu0 %v777, 111
    %v1539 = vpop.permute.xlu0 %1538
    %1540 = vrot.lane.b32.xlu0 %v781, 111
    %v1541 = vpop.permute.xlu0 %1540
    %1542 = vrot.lane.b32.xlu0 %v770, 111
    %v1543 = vpop.permute.xlu0 %1542
    %1544 = vrot.lane.b32.xlu0 %v774, 111
    %v1545 = vpop.permute.xlu0 %1544
    %1546 = vrot.lane.b32.xlu0 %v778, 111
    %v1547 = vpop.permute.xlu0 %1546
    %1548 = vrot.lane.b32.xlu0 %v782, 111
    %v1549 = vpop.permute.xlu0 %1548
    %v1550 = vsel %vm395, %v1535, %v1543
    %v1551 = vsel %vm395, %v1537, %v1545
    %v1552 = vsel %vm395, %v1539, %v1547
    %v1553 = vsel %vm395, %v1541, %v1549
    %v1554 = vsel %vm395, %v1527, %v1535
    %v1555 = vsel %vm395, %v1529, %v1537
    %v1556 = vsel %vm395, %v1531, %v1539
    %v1557 = vsel %vm395, %v1533, %v1541
    %v1558 = vsel %vm395, %v1519, %v1527
    %v1559 = vsel %vm395, %v1521, %v1529
    %v1560 = vsel %vm395, %v1523, %v1531
    %v1561 = vsel %vm395, %v1525, %v1533
    %v1562 = vsel %vm395, %v1543, %v1519
    %v1563 = vsel %vm395, %v1545, %v1521
    %v1564 = vsel %vm395, %v1547, %v1523
    %v1565 = vsel %vm395, %v1549, %v1525
    %v1566 = vld [vmem:[%s400] ss:$8 sm:$0xf]
    %v1568 = vlaneseq
    %v1569 = vshrl.u32 %v1568, 7
    %v1570 = vsub.s32 0, %v1569
    %v1571 = vrot.slane %v1566, %v1570
    %v1572 = vlaneseq
    %v1573 = vshrl.u32 %v1572, 7
    %v1574 = vsub.s32 1, %v1573
    %v1575 = vrot.slane %v1566, %v1574
    %v1576 = vlaneseq
    %v1577 = vshrl.u32 %v1576, 7
    %v1578 = vsub.s32 2, %v1577
    %v1579 = vrot.slane %v1566, %v1578
    %v1580 = vlaneseq
    %v1581 = vshrl.u32 %v1580, 7
    %v1582 = vsub.s32 3, %v1581
    %v1583 = vrot.slane %v1566, %v1582
    %v1588 = vmul.f32 %v1558, %v1571
    %v1589 = vmul.f32 %v1554, %v1575
    %v1590 = vmul.f32 %v1550, %v1579
    %v1591 = vmul.f32 %v1562, %v1583
    %v1592 = vmul.f32 %v1559, %v1571
    %v1593 = vmul.f32 %v1555, %v1575
    %v1594 = vmul.f32 %v1551, %v1579
    %v1595 = vmul.f32 %v1563, %v1583
    %v1596 = vmul.f32 %v1560, %v1571
    %v1597 = vmul.f32 %v1556, %v1575
    %v1598 = vmul.f32 %v1552, %v1579
    %v1599 = vmul.f32 %v1564, %v1583
    %v1600 = vmul.f32 %v1561, %v1571
    %v1601 = vmul.f32 %v1557, %v1575
    %v1602 = vmul.f32 %v1553, %v1579
    %v1603 = vmul.f32 %v1565, %v1583
    %1604 = vst [vmem:[#allocation2 + $0x400] sm:$0xff] %v1588
    %1605 = vst [vmem:[#allocation2 + $0x408] sm:$0xff] %v1589
    %1606 = vst [vmem:[#allocation2 + $0x410] sm:$0xff] %v1590
    %1607 = vst [vmem:[#allocation2 + $0x418] sm:$0xff] %v1591
    %1608 = vst [vmem:[#allocation2 + $0x420] sm:$0xff] %v1592
    %1609 = vst [vmem:[#allocation2 + $0x428] sm:$0xff] %v1593
    %1610 = vst [vmem:[#allocation2 + $0x430] sm:$0xff] %v1594
    %1611 = vst [vmem:[#allocation2 + $0x438] sm:$0xff] %v1595
    %1612 = vst [vmem:[#allocation2 + $0x440] sm:$0xff] %v1596
    %1613 = vst [vmem:[#allocation2 + $0x448] sm:$0xff] %v1597
    %1614 = vst [vmem:[#allocation2 + $0x450] sm:$0xff] %v1598
    %1615 = vst [vmem:[#allocation2 + $0x458] sm:$0xff] %v1599
    %1616 = vst [vmem:[#allocation2 + $0x460] sm:$0xff] %v1600
    %1617 = vst [vmem:[#allocation2 + $0x468] sm:$0xff] %v1601
    %1618 = vst [vmem:[#allocation2 + $0x470] sm:$0xff] %v1602
    %1619 = vst [vmem:[#allocation2 + $0x478] sm:$0xff] %v1603
    %v1620 = vld [vmem:[#allocation2] sm:$0xff]
    %v1621 = vld [vmem:[#allocation2 + $0x8] sm:$0xff]
    %v1622 = vld [vmem:[#allocation2 + $0x10] sm:$0xff]
    %v1623 = vld [vmem:[#allocation2 + $0x18] sm:$0xff]
    %v1624 = vld [vmem:[#allocation2 + $0x20] sm:$0xff]
    %v1625 = vld [vmem:[#allocation2 + $0x28] sm:$0xff]
    %v1626 = vld [vmem:[#allocation2 + $0x30] sm:$0xff]
    %v1627 = vld [vmem:[#allocation2 + $0x38] sm:$0xff]
    %v1628 = vld [vmem:[#allocation2 + $0x40] sm:$0xff]
    %v1629 = vld [vmem:[#allocation2 + $0x48] sm:$0xff]
    %v1630 = vld [vmem:[#allocation2 + $0x50] sm:$0xff]
    %v1631 = vld [vmem:[#allocation2 + $0x58] sm:$0xff]
    %v1632 = vld [vmem:[#allocation2 + $0x60] sm:$0xff]
    %v1633 = vld [vmem:[#allocation2 + $0x68] sm:$0xff]
    %v1634 = vld [vmem:[#allocation2 + $0x70] sm:$0xff]
    %v1635 = vld [vmem:[#allocation2 + $0x78] sm:$0xff]
    %v1636 = vld [vmem:[#allocation2 + $0x80] sm:$0xff]
    %v1637 = vld [vmem:[#allocation2 + $0x88] sm:$0xff]
    %v1638 = vld [vmem:[#allocation2 + $0x90] sm:$0xff]
    %v1639 = vld [vmem:[#allocation2 + $0x98] sm:$0xff]
    %v1640 = vld [vmem:[#allocation2 + $0xa0] sm:$0xff]
    %v1641 = vld [vmem:[#allocation2 + $0xa8] sm:$0xff]
    %v1642 = vld [vmem:[#allocation2 + $0xb0] sm:$0xff]
    %v1643 = vld [vmem:[#allocation2 + $0xb8] sm:$0xff]
    %v1644 = vld [vmem:[#allocation2 + $0xc0] sm:$0xff]
    %v1645 = vld [vmem:[#allocation2 + $0xc8] sm:$0xff]
    %v1646 = vld [vmem:[#allocation2 + $0xd0] sm:$0xff]
    %v1647 = vld [vmem:[#allocation2 + $0xd8] sm:$0xff]
    %v1648 = vld [vmem:[#allocation2 + $0xe0] sm:$0xff]
    %v1649 = vld [vmem:[#allocation2 + $0xe8] sm:$0xff]
    %v1650 = vld [vmem:[#allocation2 + $0xf0] sm:$0xff]
    %v1651 = vld [vmem:[#allocation2 + $0xf8] sm:$0xff]
    %v1652 = vld [vmem:[#allocation2 + $0x100] sm:$0xff]
    %v1653 = vld [vmem:[#allocation2 + $0x108] sm:$0xff]
    %v1654 = vld [vmem:[#allocation2 + $0x110] sm:$0xff]
    %v1655 = vld [vmem:[#allocation2 + $0x118] sm:$0xff]
    %v1656 = vld [vmem:[#allocation2 + $0x120] sm:$0xff]
    %v1657 = vld [vmem:[#allocation2 + $0x128] sm:$0xff]
    %v1658 = vld [vmem:[#allocation2 + $0x130] sm:$0xff]
    %v1659 = vld [vmem:[#allocation2 + $0x138] sm:$0xff]
    %v1660 = vld [vmem:[#allocation2 + $0x140] sm:$0xff]
    %v1661 = vld [vmem:[#allocation2 + $0x148] sm:$0xff]
    %v1662 = vld [vmem:[#allocation2 + $0x150] sm:$0xff]
    %v1663 = vld [vmem:[#allocation2 + $0x158] sm:$0xff]
    %v1664 = vld [vmem:[#allocation2 + $0x160] sm:$0xff]
    %v1665 = vld [vmem:[#allocation2 + $0x168] sm:$0xff]
    %v1666 = vld [vmem:[#allocation2 + $0x170] sm:$0xff]
    %v1667 = vld [vmem:[#allocation2 + $0x178] sm:$0xff]
    %v1668 = vld [vmem:[#allocation2 + $0x180] sm:$0xff]
    %v1669 = vld [vmem:[#allocation2 + $0x188] sm:$0xff]
    %v1670 = vld [vmem:[#allocation2 + $0x190] sm:$0xff]
    %v1671 = vld [vmem:[#allocation2 + $0x198] sm:$0xff]
    %v1672 = vld [vmem:[#allocation2 + $0x1a0] sm:$0xff]
    %v1673 = vld [vmem:[#allocation2 + $0x1a8] sm:$0xff]
    %v1674 = vld [vmem:[#allocation2 + $0x1b0] sm:$0xff]
    %v1675 = vld [vmem:[#allocation2 + $0x1b8] sm:$0xff]
    %v1676 = vld [vmem:[#allocation2 + $0x1c0] sm:$0xff]
    %v1677 = vld [vmem:[#allocation2 + $0x1c8] sm:$0xff]
    %v1678 = vld [vmem:[#allocation2 + $0x1d0] sm:$0xff]
    %v1679 = vld [vmem:[#allocation2 + $0x1d8] sm:$0xff]
    %v1680 = vld [vmem:[#allocation2 + $0x1e0] sm:$0xff]
    %v1681 = vld [vmem:[#allocation2 + $0x1e8] sm:$0xff]
    %v1682 = vld [vmem:[#allocation2 + $0x1f0] sm:$0xff]
    %v1683 = vld [vmem:[#allocation2 + $0x1f8] sm:$0xff]
    %v1684 = vld [vmem:[#allocation2 + $0x200] sm:$0xff]
    %v1685 = vld [vmem:[#allocation2 + $0x208] sm:$0xff]
    %v1686 = vld [vmem:[#allocation2 + $0x210] sm:$0xff]
    %v1687 = vld [vmem:[#allocation2 + $0x218] sm:$0xff]
    %v1688 = vld [vmem:[#allocation2 + $0x220] sm:$0xff]
    %v1689 = vld [vmem:[#allocation2 + $0x228] sm:$0xff]
    %v1690 = vld [vmem:[#allocation2 + $0x230] sm:$0xff]
    %v1691 = vld [vmem:[#allocation2 + $0x238] sm:$0xff]
    %v1692 = vld [vmem:[#allocation2 + $0x240] sm:$0xff]
    %v1693 = vld [vmem:[#allocation2 + $0x248] sm:$0xff]
    %v1694 = vld [vmem:[#allocation2 + $0x250] sm:$0xff]
    %v1695 = vld [vmem:[#allocation2 + $0x258] sm:$0xff]
    %v1696 = vld [vmem:[#allocation2 + $0x260] sm:$0xff]
    %v1697 = vld [vmem:[#allocation2 + $0x268] sm:$0xff]
    %v1698 = vld [vmem:[#allocation2 + $0x270] sm:$0xff]
    %v1699 = vld [vmem:[#allocation2 + $0x278] sm:$0xff]
    %v1700 = vld [vmem:[#allocation2 + $0x280] sm:$0xff]
    %v1701 = vld [vmem:[#allocation2 + $0x288] sm:$0xff]
    %v1702 = vld [vmem:[#allocation2 + $0x290] sm:$0xff]
    %v1703 = vld [vmem:[#allocation2 + $0x298] sm:$0xff]
    %v1704 = vld [vmem:[#allocation2 + $0x2a0] sm:$0xff]
    %v1705 = vld [vmem:[#allocation2 + $0x2a8] sm:$0xff]
    %v1706 = vld [vmem:[#allocation2 + $0x2b0] sm:$0xff]
    %v1707 = vld [vmem:[#allocation2 + $0x2b8] sm:$0xff]
    %v1708 = vld [vmem:[#allocation2 + $0x2c0] sm:$0xff]
    %v1709 = vld [vmem:[#allocation2 + $0x2c8] sm:$0xff]
    %v1710 = vld [vmem:[#allocation2 + $0x2d0] sm:$0xff]
    %v1711 = vld [vmem:[#allocation2 + $0x2d8] sm:$0xff]
    %v1712 = vld [vmem:[#allocation2 + $0x2e0] sm:$0xff]
    %v1713 = vld [vmem:[#allocation2 + $0x2e8] sm:$0xff]
    %v1714 = vld [vmem:[#allocation2 + $0x2f0] sm:$0xff]
    %v1715 = vld [vmem:[#allocation2 + $0x2f8] sm:$0xff]
    %v1716 = vld [vmem:[#allocation2 + $0x300] sm:$0xff]
    %v1717 = vld [vmem:[#allocation2 + $0x308] sm:$0xff]
    %v1718 = vld [vmem:[#allocation2 + $0x310] sm:$0xff]
    %v1719 = vld [vmem:[#allocation2 + $0x318] sm:$0xff]
    %v1720 = vld [vmem:[#allocation2 + $0x320] sm:$0xff]
    %v1721 = vld [vmem:[#allocation2 + $0x328] sm:$0xff]
    %v1722 = vld [vmem:[#allocation2 + $0x330] sm:$0xff]
    %v1723 = vld [vmem:[#allocation2 + $0x338] sm:$0xff]
    %v1724 = vld [vmem:[#allocation2 + $0x340] sm:$0xff]
    %v1725 = vld [vmem:[#allocation2 + $0x348] sm:$0xff]
    %v1726 = vld [vmem:[#allocation2 + $0x350] sm:$0xff]
    %v1727 = vld [vmem:[#allocation2 + $0x358] sm:$0xff]
    %v1728 = vld [vmem:[#allocation2 + $0x360] sm:$0xff]
    %v1729 = vld [vmem:[#allocation2 + $0x368] sm:$0xff]
    %v1730 = vld [vmem:[#allocation2 + $0x370] sm:$0xff]
    %v1731 = vld [vmem:[#allocation2 + $0x378] sm:$0xff]
    %v1732 = vld [vmem:[#allocation2 + $0x380] sm:$0xff]
    %v1733 = vld [vmem:[#allocation2 + $0x388] sm:$0xff]
    %v1734 = vld [vmem:[#allocation2 + $0x390] sm:$0xff]
    %v1735 = vld [vmem:[#allocation2 + $0x398] sm:$0xff]
    %v1736 = vld [vmem:[#allocation2 + $0x3a0] sm:$0xff]
    %v1737 = vld [vmem:[#allocation2 + $0x3a8] sm:$0xff]
    %v1738 = vld [vmem:[#allocation2 + $0x3b0] sm:$0xff]
    %v1739 = vld [vmem:[#allocation2 + $0x3b8] sm:$0xff]
    %v1740 = vld [vmem:[#allocation2 + $0x3c0] sm:$0xff]
    %v1741 = vld [vmem:[#allocation2 + $0x3c8] sm:$0xff]
    %v1742 = vld [vmem:[#allocation2 + $0x3d0] sm:$0xff]
    %v1743 = vld [vmem:[#allocation2 + $0x3d8] sm:$0xff]
    %v1744 = vld [vmem:[#allocation2 + $0x3e0] sm:$0xff]
    %v1745 = vld [vmem:[#allocation2 + $0x3e8] sm:$0xff]
    %v1746 = vld [vmem:[#allocation2 + $0x3f0] sm:$0xff]
    %v1747 = vld [vmem:[#allocation2 + $0x3f8] sm:$0xff]
    %v1748 = vld [vmem:[#allocation2 + $0x400] sm:$0xff]
    %v1749 = vld [vmem:[#allocation2 + $0x408] sm:$0xff]
    %v1750 = vld [vmem:[#allocation2 + $0x410] sm:$0xff]
    %v1751 = vld [vmem:[#allocation2 + $0x418] sm:$0xff]
    %v1752 = vld [vmem:[#allocation2 + $0x420] sm:$0xff]
    %v1753 = vld [vmem:[#allocation2 + $0x428] sm:$0xff]
    %v1754 = vld [vmem:[#allocation2 + $0x430] sm:$0xff]
    %v1755 = vld [vmem:[#allocation2 + $0x438] sm:$0xff]
    %v1756 = vld [vmem:[#allocation2 + $0x440] sm:$0xff]
    %v1757 = vld [vmem:[#allocation2 + $0x448] sm:$0xff]
    %v1758 = vld [vmem:[#allocation2 + $0x450] sm:$0xff]
    %v1759 = vld [vmem:[#allocation2 + $0x458] sm:$0xff]
    %v1760 = vld [vmem:[#allocation2 + $0x460] sm:$0xff]
    %v1761 = vld [vmem:[#allocation2 + $0x468] sm:$0xff]
    %v1762 = vld [vmem:[#allocation2 + $0x470] sm:$0xff]
    %v1763 = vld [vmem:[#allocation2 + $0x478] sm:$0xff]
    %1765 = vset.pattern.permute.xlu0 0
    %1766 = vperm.xlu0 %1765, %v784
    %v1767 = vpop.permute.xlu0 %1766
    %1770 = vset.pattern.permute.xlu0 0
    %1771 = vperm.xlu0 %1770, %v785
    %v1772 = vpop.permute.xlu0 %1771
    %1775 = vset.pattern.permute.xlu0 0
    %1776 = vperm.xlu0 %1775, %v786
    %v1777 = vpop.permute.xlu0 %1776
    %1780 = vset.pattern.permute.xlu0 0
    %1781 = vperm.xlu0 %1780, %v787
    %v1782 = vpop.permute.xlu0 %1781
    %vm1784 = vcmask 261120
    %v1786 = vsel %vm1784, %v744, 0
    %v1789 = vsel %vm1784, %v747, 0
    %v1792 = vsel %vm1784, %v750, 0
    %v1795 = vsel %vm1784, %v753, 0
    %1797 = vmatprep.subr.mxu0 %v1621
    %1798 = vmatpush1.msra.mxu0 %v1620
    %1799 = vmatprep.subr.mxu0 %v1625
    %1800 = vmatpush1.msra.mxu0 %v1624
    %1801 = vmatprep.subr.mxu0 %v1629
    %1802 = vmatpush1.msra.mxu0 %v1628
    %1803 = vmatprep.subr.mxu0 %v1633
    %1804 = vmatpush1.msra.mxu0 %v1632
    %1805 = vmatprep.subr.mxu0 %v1637
    %1806 = vmatpush1.msra.mxu0 %v1636
    %1807 = vmatprep.subr.mxu0 %v1641
    %1808 = vmatpush1.msra.mxu0 %v1640
    %1809 = vmatprep.subr.mxu0 %v1645
    %1810 = vmatpush1.msra.mxu0 %v1644
    %1811 = vmatprep.subr.mxu0 %v1649
    %1812 = vmatpush1.msra.mxu0 %v1648
    %1813 = vmatprep.subr.mxu0 %v1653
    %1814 = vmatpush1.msra.mxu0 %v1652
    %1815 = vmatprep.subr.mxu0 %v1657
    %1816 = vmatpush1.msra.mxu0 %v1656
    %1817 = vmatprep.subr.mxu0 %v1661
    %1818 = vmatpush1.msra.mxu0 %v1660
    %1819 = vmatprep.subr.mxu0 %v1665
    %1820 = vmatpush1.msra.mxu0 %v1664
    %1821 = vmatprep.subr.mxu0 %v1669
    %1822 = vmatpush1.msra.mxu0 %v1668
    %1823 = vmatprep.subr.mxu0 %v1673
    %1824 = vmatpush1.msra.mxu0 %v1672
    %1825 = vmatprep.subr.mxu0 %v1677
    %1826 = vmatpush1.msra.mxu0 %v1676
    %1827 = vmatprep.subr.mxu0 %v1681
    %1828 = vmatpush1.msra.mxu0 %v1680
    %1829 = vmatprep.subr.mxu0 %v1685
    %1830 = vmatpush1.msra.mxu0 %v1684
    %1831 = vmatprep.subr.mxu0 %v1689
    %1832 = vmatpush1.msra.mxu0 %v1688
    %1833 = vmatprep.subr.mxu0 %v1693
    %1834 = vmatpush1.msra.mxu0 %v1692
    %1835 = vmatprep.subr.mxu0 %v1697
    %1836 = vmatpush1.msra.mxu0 %v1696
    %1837 = vmatprep.subr.mxu0 %v1701
    %1838 = vmatpush1.msra.mxu0 %v1700
    %1839 = vmatprep.subr.mxu0 %v1705
    %1840 = vmatpush1.msra.mxu0 %v1704
    %1841 = vmatprep.subr.mxu0 %v1709
    %1842 = vmatpush1.msra.mxu0 %v1708
    %1843 = vmatprep.subr.mxu0 %v1713
    %1844 = vmatpush1.msra.mxu0 %v1712
    %1845 = vmatprep.subr.mxu0 %v1717
    %1846 = vmatpush1.msra.mxu0 %v1716
    %1847 = vmatprep.subr.mxu0 %v1721
    %1848 = vmatpush1.msra.mxu0 %v1720
    %1849 = vmatprep.subr.mxu0 %v1725
    %1850 = vmatpush1.msra.mxu0 %v1724
    %1851 = vmatprep.subr.mxu0 %v1729
    %1852 = vmatpush1.msra.mxu0 %v1728
    %1853 = vmatprep.subr.mxu0 %v1733
    %1854 = vmatpush1.msra.mxu0 %v1732
    %1855 = vmatprep.subr.mxu0 %v1737
    %1856 = vmatpush1.msra.mxu0 %v1736
    %1857 = vmatprep.subr.mxu0 %v1741
    %1858 = vmatpush1.msra.mxu0 %v1740
    %1859 = vmatprep.subr.mxu0 %v1745
    %1860 = vmatpush1.msra.mxu0 %v1744
    %1861 = vmatprep.mubr.f32.mxu0 %v743
    %1862 = vmatmul.mubr.f32.gmra.mrb[0].mxu0 %v742
    %v1863 = vpop.f32.mrb[0].mxu0
    %v1864 = vadd.f32 %v1767, %v1863
    %v1865 = vpop.f32.mrb[0].mxu0
    %v1866 = vadd.f32 %v1767, %v1865
    %1867 = vmatprep.mubr.f32.mxu0 %v746
    %1868 = vmatmul.mubr.f32.gmra.mrb[0].mxu0 %v745
    %v1869 = vpop.f32.mrb[0].mxu0
    %v1870 = vadd.f32 %v1772, %v1869
    %v1871 = vpop.f32.mrb[0].mxu0
    %v1872 = vadd.f32 %v1772, %v1871
    %1873 = vmatprep.mubr.f32.mxu0 %v749
    %1874 = vmatmul.mubr.f32.gmra.mrb[0].mxu0 %v748
    %v1875 = vpop.f32.mrb[0].mxu0
    %v1876 = vadd.f32 %v1777, %v1875
    %v1877 = vpop.f32.mrb[0].mxu0
    %v1878 = vadd.f32 %v1777, %v1877
    %1879 = vmatprep.mubr.f32.mxu0 %v752
    %1880 = vmatmul.mubr.f32.gmra.mrb[0].mxu0 %v751
    %v1881 = vpop.f32.mrb[0].mxu0
    %v1882 = vadd.f32 %v1782, %v1881
    %v1883 = vpop.f32.mrb[0].mxu0
    %v1884 = vadd.f32 %v1782, %v1883
    %1885 = vdwg.mxu0
    %1886 = vmatprep.subr.mxu0 %v1749
    %1887 = vmatpush1.msra.mxu0 %v1748
    %1888 = vmatprep.subr.mxu0 %v1753
    %1889 = vmatpush1.msra.mxu0 %v1752
    %1890 = vmatprep.subr.mxu0 %v1757
    %1891 = vmatpush1.msra.mxu0 %v1756
    %1892 = vmatprep.subr.mxu0 %v1761
    %1893 = vmatpush1.msra.mxu0 %v1760
    %1894 = vmatprep.subr.mxu0 0.0
    %1895 = vmatpush1.msra.mxu0 0.0
    %1896 = vmatprep.subr.mxu0 0.0
    %1897 = vmatpush1.msra.mxu0 0.0
    %1898 = vmatprep.subr.mxu0 0.0
    %1899 = vmatpush1.msra.mxu0 0.0
    %1900 = vmatprep.subr.mxu0 0.0
    %1901 = vmatpush1.msra.mxu0 0.0
    %1902 = vmatprep.subr.mxu0 0.0
    %1903 = vmatpush1.msra.mxu0 0.0
    %1904 = vmatprep.subr.mxu0 0.0
    %1905 = vmatpush1.msra.mxu0 0.0
    %1906 = vmatprep.subr.mxu0 0.0
    %1907 = vmatpush1.msra.mxu0 0.0
    %1908 = vmatprep.subr.mxu0 0.0
    %1909 = vmatpush1.msra.mxu0 0.0
    %1910 = vmatprep.subr.mxu0 0.0
    %1911 = vmatpush1.msra.mxu0 0.0
    %1912 = vmatprep.subr.mxu0 0.0
    %1913 = vmatpush1.msra.mxu0 0.0
    %1914 = vmatprep.subr.mxu0 0.0
    %1915 = vmatpush1.msra.mxu0 0.0
    %1916 = vmatprep.subr.mxu0 0.0
    %1917 = vmatpush1.msra.mxu0 0.0
    %1918 = vmatprep.subr.mxu0 0.0
    %1919 = vmatpush1.msra.mxu0 0.0
    %1920 = vmatprep.subr.mxu0 0.0
    %1921 = vmatpush1.msra.mxu0 0.0
    %1922 = vmatprep.subr.mxu0 0.0
    %1923 = vmatpush1.msra.mxu0 0.0
    %1924 = vmatprep.subr.mxu0 0.0
    %1925 = vmatpush1.msra.mxu0 0.0
    %1926 = vmatprep.subr.mxu0 0.0
    %1927 = vmatpush1.msra.mxu0 0.0
    %1928 = vmatprep.subr.mxu0 0.0
    %1929 = vmatpush1.msra.mxu0 0.0
    %1930 = vmatprep.subr.mxu0 0.0
    %1931 = vmatpush1.msra.mxu0 0.0
    %1932 = vmatprep.subr.mxu0 0.0
    %1933 = vmatpush1.msra.mxu0 0.0
    %1934 = vmatprep.subr.mxu0 0.0
    %1935 = vmatpush1.msra.mxu0 0.0
    %1936 = vmatprep.subr.mxu0 0.0
    %1937 = vmatpush1.msra.mxu0 0.0
    %1938 = vmatprep.subr.mxu0 0.0
    %1939 = vmatpush1.msra.mxu0 0.0
    %1940 = vmatprep.subr.mxu0 0.0
    %1941 = vmatpush1.msra.mxu0 0.0
    %1942 = vmatprep.subr.mxu0 0.0
    %1943 = vmatpush1.msra.mxu0 0.0
    %1944 = vmatprep.subr.mxu0 0.0
    %1945 = vmatpush1.msra.mxu0 0.0
    %1946 = vmatprep.subr.mxu0 0.0
    %1947 = vmatpush1.msra.mxu0 0.0
    %1948 = vmatprep.subr.mxu0 0.0
    %1949 = vmatpush1.msra.mxu0 0.0
    %1950 = vmatprep.mubr.f32.mxu0 0.0
    %1951 = vmatmul.mubr.f32.gmra.mrb[0].mxu0 %v1786
    %v1952 = vpop.f32.mrb[0].mxu0
    %v1953 = vadd.f32 %v1864, %v1952
    %v1954 = vpop.f32.mrb[0].mxu0
    %v1955 = vadd.f32 %v1866, %v1954
    %1956 = vmatprep.mubr.f32.mxu0 0.0
    %1957 = vmatmul.mubr.f32.gmra.mrb[0].mxu0 %v1789
    %v1958 = vpop.f32.mrb[0].mxu0
    %v1959 = vadd.f32 %v1870, %v1958
    %v1960 = vpop.f32.mrb[0].mxu0
    %v1961 = vadd.f32 %v1872, %v1960
    %1962 = vmatprep.mubr.f32.mxu0 0.0
    %1963 = vmatmul.mubr.f32.gmra.mrb[0].mxu0 %v1792
    %v1964 = vpop.f32.mrb[0].mxu0
    %v1965 = vadd.f32 %v1876, %v1964
    %v1966 = vpop.f32.mrb[0].mxu0
    %v1967 = vadd.f32 %v1878, %v1966
    %1968 = vmatprep.mubr.f32.mxu0 0.0
    %1969 = vmatmul.mubr.f32.gmra.mrb[0].mxu0 %v1795
    %v1970 = vpop.f32.mrb[0].mxu0
    %v1971 = vadd.f32 %v1882, %v1970
    %v1972 = vpop.f32.mrb[0].mxu0
    %v1973 = vadd.f32 %v1884, %v1972
    %1974 = vdwg.mxu0
    %1975 = vmatprep.subr.mxu0 %v1623
    %1976 = vmatpush1.msra.mxu0 %v1622
    %1977 = vmatprep.subr.mxu0 %v1627
    %1978 = vmatpush1.msra.mxu0 %v1626
    %1979 = vmatprep.subr.mxu0 %v1631
    %1980 = vmatpush1.msra.mxu0 %v1630
    %1981 = vmatprep.subr.mxu0 %v1635
    %1982 = vmatpush1.msra.mxu0 %v1634
    %1983 = vmatprep.subr.mxu0 %v1639
    %1984 = vmatpush1.msra.mxu0 %v1638
    %1985 = vmatprep.subr.mxu0 %v1643
    %1986 = vmatpush1.msra.mxu0 %v1642
    %1987 = vmatprep.subr.mxu0 %v1647
    %1988 = vmatpush1.msra.mxu0 %v1646
    %1989 = vmatprep.subr.mxu0 %v1651
    %1990 = vmatpush1.msra.mxu0 %v1650
    %1991 = vmatprep.subr.mxu0 %v1655
    %1992 = vmatpush1.msra.mxu0 %v1654
    %1993 = vmatprep.subr.mxu0 %v1659
    %1994 = vmatpush1.msra.mxu0 %v1658
    %1995 = vmatprep.subr.mxu0 %v1663
    %1996 = vmatpush1.msra.mxu0 %v1662
    %1997 = vmatprep.subr.mxu0 %v1667
    %1998 = vmatpush1.msra.mxu0 %v1666
    %1999 = vmatprep.subr.mxu0 %v1671
    %2000 = vmatpush1.msra.mxu0 %v1670
    %2001 = vmatprep.subr.mxu0 %v1675
    %2002 = vmatpush1.msra.mxu0 %v1674
    %2003 = vmatprep.subr.mxu0 %v1679
    %2004 = vmatpush1.msra.mxu0 %v1678
    %2005 = vmatprep.subr.mxu0 %v1683
    %2006 = vmatpush1.msra.mxu0 %v1682
    %2007 = vmatprep.subr.mxu0 %v1687
    %2008 = vmatpush1.msra.mxu0 %v1686
    %2009 = vmatprep.subr.mxu0 %v1691
    %2010 = vmatpush1.msra.mxu0 %v1690
    %2011 = vmatprep.subr.mxu0 %v1695
    %2012 = vmatpush1.msra.mxu0 %v1694
    %2013 = vmatprep.subr.mxu0 %v1699
    %2014 = vmatpush1.msra.mxu0 %v1698
    %2015 = vmatprep.subr.mxu0 %v1703
    %2016 = vmatpush1.msra.mxu0 %v1702
    %2017 = vmatprep.subr.mxu0 %v1707
    %2018 = vmatpush1.msra.mxu0 %v1706
    %2019 = vmatprep.subr.mxu0 %v1711
    %2020 = vmatpush1.msra.mxu0 %v1710
    %2021 = vmatprep.subr.mxu0 %v1715
    %2022 = vmatpush1.msra.mxu0 %v1714
    %2023 = vmatprep.subr.mxu0 %v1719
    %2024 = vmatpush1.msra.mxu0 %v1718
    %2025 = vmatprep.subr.mxu0 %v1723
    %2026 = vmatpush1.msra.mxu0 %v1722
    %2027 = vmatprep.subr.mxu0 %v1727
    %2028 = vmatpush1.msra.mxu0 %v1726
    %2029 = vmatprep.subr.mxu0 %v1731
    %2030 = vmatpush1.msra.mxu0 %v1730
    %2031 = vmatprep.subr.mxu0 %v1735
    %2032 = vmatpush1.msra.mxu0 %v1734
    %2033 = vmatprep.subr.mxu0 %v1739
    %2034 = vmatpush1.msra.mxu0 %v1738
    %2035 = vmatprep.subr.mxu0 %v1743
    %2036 = vmatpush1.msra.mxu0 %v1742
    %2037 = vmatprep.subr.mxu0 %v1747
    %2038 = vmatpush1.msra.mxu0 %v1746
    %2039 = vmatprep.mubr.f32.mxu0 %v743
    %2040 = vmatmul.mubr.f32.gmra.mrb[0].mxu0 %v742
    %v2041 = vpop.f32.mrb[0].mxu0
    %v2042 = vadd.f32 %v1767, %v2041
    %v2043 = vpop.f32.mrb[0].mxu0
    %v2044 = vadd.f32 %v1767, %v2043
    %2045 = vmatprep.mubr.f32.mxu0 %v746
    %2046 = vmatmul.mubr.f32.gmra.mrb[0].mxu0 %v745
    %v2047 = vpop.f32.mrb[0].mxu0
    %v2048 = vadd.f32 %v1772, %v2047
    %v2049 = vpop.f32.mrb[0].mxu0
    %v2050 = vadd.f32 %v1772, %v2049
    %2051 = vmatprep.mubr.f32.mxu0 %v749
    %2052 = vmatmul.mubr.f32.gmra.mrb[0].mxu0 %v748
    %v2053 = vpop.f32.mrb[0].mxu0
    %v2054 = vadd.f32 %v1777, %v2053
    %v2055 = vpop.f32.mrb[0].mxu0
    %v2056 = vadd.f32 %v1777, %v2055
    %2057 = vmatprep.mubr.f32.mxu0 %v752
    %2058 = vmatmul.mubr.f32.gmra.mrb[0].mxu0 %v751
    %v2059 = vpop.f32.mrb[0].mxu0
    %v2060 = vadd.f32 %v1782, %v2059
    %v2061 = vpop.f32.mrb[0].mxu0
    %v2062 = vadd.f32 %v1782, %v2061
    %2063 = vdwg.mxu0
    %2064 = vmatprep.subr.mxu0 %v1751
    %2065 = vmatpush1.msra.mxu0 %v1750
    %2066 = vmatprep.subr.mxu0 %v1755
    %2067 = vmatpush1.msra.mxu0 %v1754
    %2068 = vmatprep.subr.mxu0 %v1759
    %2069 = vmatpush1.msra.mxu0 %v1758
    %2070 = vmatprep.subr.mxu0 %v1763
    %2071 = vmatpush1.msra.mxu0 %v1762
    %2072 = vmatprep.subr.mxu0 0.0
    %2073 = vmatpush1.msra.mxu0 0.0
    %2074 = vmatprep.subr.mxu0 0.0
    %2075 = vmatpush1.msra.mxu0 0.0
    %2076 = vmatprep.subr.mxu0 0.0
    %2077 = vmatpush1.msra.mxu0 0.0
    %2078 = vmatprep.subr.mxu0 0.0
    %2079 = vmatpush1.msra.mxu0 0.0
    %2080 = vmatprep.subr.mxu0 0.0
    %2081 = vmatpush1.msra.mxu0 0.0
    %2082 = vmatprep.subr.mxu0 0.0
    %2083 = vmatpush1.msra.mxu0 0.0
    %2084 = vmatprep.subr.mxu0 0.0
    %2085 = vmatpush1.msra.mxu0 0.0
    %2086 = vmatprep.subr.mxu0 0.0
    %2087 = vmatpush1.msra.mxu0 0.0
    %2088 = vmatprep.subr.mxu0 0.0
    %2089 = vmatpush1.msra.mxu0 0.0
    %2090 = vmatprep.subr.mxu0 0.0
    %2091 = vmatpush1.msra.mxu0 0.0
    %2092 = vmatprep.subr.mxu0 0.0
    %2093 = vmatpush1.msra.mxu0 0.0
    %2094 = vmatprep.subr.mxu0 0.0
    %2095 = vmatpush1.msra.mxu0 0.0
    %2096 = vmatprep.subr.mxu0 0.0
    %2097 = vmatpush1.msra.mxu0 0.0
    %2098 = vmatprep.subr.mxu0 0.0
    %2099 = vmatpush1.msra.mxu0 0.0
    %2100 = vmatprep.subr.mxu0 0.0
    %2101 = vmatpush1.msra.mxu0 0.0
    %2102 = vmatprep.subr.mxu0 0.0
    %2103 = vmatpush1.msra.mxu0 0.0
    %2104 = vmatprep.subr.mxu0 0.0
    %2105 = vmatpush1.msra.mxu0 0.0
    %2106 = vmatprep.subr.mxu0 0.0
    %2107 = vmatpush1.msra.mxu0 0.0
    %2108 = vmatprep.subr.mxu0 0.0
    %2109 = vmatpush1.msra.mxu0 0.0
    %2110 = vmatprep.subr.mxu0 0.0
    %2111 = vmatpush1.msra.mxu0 0.0
    %2112 = vmatprep.subr.mxu0 0.0
    %2113 = vmatpush1.msra.mxu0 0.0
    %2114 = vmatprep.subr.mxu0 0.0
    %2115 = vmatpush1.msra.mxu0 0.0
    %2116 = vmatprep.subr.mxu0 0.0
    %2117 = vmatpush1.msra.mxu0 0.0
    %2118 = vmatprep.subr.mxu0 0.0
    %2119 = vmatpush1.msra.mxu0 0.0
    %2120 = vmatprep.subr.mxu0 0.0
    %2121 = vmatpush1.msra.mxu0 0.0
    %2122 = vmatprep.subr.mxu0 0.0
    %2123 = vmatpush1.msra.mxu0 0.0
    %2124 = vmatprep.subr.mxu0 0.0
    %2125 = vmatpush1.msra.mxu0 0.0
    %2126 = vmatprep.subr.mxu0 0.0
    %2127 = vmatpush1.msra.mxu0 0.0
    %2128 = vmatprep.mubr.f32.mxu0 0.0
    %2129 = vmatmul.mubr.f32.gmra.mrb[0].mxu0 %v1786
    %v2130 = vpop.f32.mrb[0].mxu0
    %v2131 = vadd.f32 %v2042, %v2130
    %v2132 = vpop.f32.mrb[0].mxu0
    %v2133 = vadd.f32 %v2044, %v2132
    %2134 = vmatprep.mubr.f32.mxu0 0.0
    %2135 = vmatmul.mubr.f32.gmra.mrb[0].mxu0 %v1789
    %v2136 = vpop.f32.mrb[0].mxu0
    %v2137 = vadd.f32 %v2048, %v2136
    %v2138 = vpop.f32.mrb[0].mxu0
    %v2139 = vadd.f32 %v2050, %v2138
    %2140 = vmatprep.mubr.f32.mxu0 0.0
    %2141 = vmatmul.mubr.f32.gmra.mrb[0].mxu0 %v1792
    %v2142 = vpop.f32.mrb[0].mxu0
    %v2143 = vadd.f32 %v2054, %v2142
    %v2144 = vpop.f32.mrb[0].mxu0
    %v2145 = vadd.f32 %v2056, %v2144
    %2146 = vmatprep.mubr.f32.mxu0 0.0
    %2147 = vmatmul.mubr.f32.gmra.mrb[0].mxu0 %v1795
    %v2148 = vpop.f32.mrb[0].mxu0
    %v2149 = vadd.f32 %v2060, %v2148
    %v2150 = vpop.f32.mrb[0].mxu0
    %v2151 = vadd.f32 %v2062, %v2150
    %2152 = vdwg.mxu0
    %v2153 = vmax.f32 %v1953, 0.0
    %v2154 = vmax.f32 %v1955, 0.0
    %v2155 = vmax.f32 %v2131, 0.0
    %v2156 = vmax.f32 %v2133, 0.0
    %v2157 = vmax.f32 %v1959, 0.0
    %v2158 = vmax.f32 %v1961, 0.0
    %v2159 = vmax.f32 %v2137, 0.0
    %v2160 = vmax.f32 %v2139, 0.0
    %v2161 = vmax.f32 %v1965, 0.0
    %v2162 = vmax.f32 %v1967, 0.0
    %v2163 = vmax.f32 %v2143, 0.0
    %v2164 = vmax.f32 %v2145, 0.0
    %v2165 = vmax.f32 %v1971, 0.0
    %v2166 = vmax.f32 %v1973, 0.0
    %v2167 = vmax.f32 %v2149, 0.0
    %v2168 = vmax.f32 %v2151, 0.0
    %s2169 = scalar_lea.vmem [#allocation8], 64
    %v2170 = vld [vmem:[%s2169] sm:$0xff]
    %v2171 = vld [vmem:[%s2169 + $0x8] sm:$0xff]
    %v2172 = vld [vmem:[%s2169 + $0x10] sm:$0xff]
    %v2173 = vld [vmem:[%s2169 + $0x18] sm:$0xff]
    %2174 = vrot.lane.b32.xlu0 %v2153, 17
    %v2175 = vpop.permute.xlu0 %2174
    %2176 = vrot.lane.b32.xlu0 %v2157, 17
    %v2177 = vpop.permute.xlu0 %2176
    %2178 = vrot.lane.b32.xlu0 %v2161, 17
    %v2179 = vpop.permute.xlu0 %2178
    %2180 = vrot.lane.b32.xlu0 %v2165, 17
    %v2181 = vpop.permute.xlu0 %2180
    %2182 = vrot.lane.b32.xlu0 %v2154, 17
    %v2183 = vpop.permute.xlu0 %2182
    %2184 = vrot.lane.b32.xlu0 %v2158, 17
    %v2185 = vpop.permute.xlu0 %2184
    %2186 = vrot.lane.b32.xlu0 %v2162, 17
    %v2187 = vpop.permute.xlu0 %2186
    %2188 = vrot.lane.b32.xlu0 %v2166, 17
    %v2189 = vpop.permute.xlu0 %2188
    %2190 = vrot.lane.b32.xlu0 %v2155, 17
    %v2191 = vpop.permute.xlu0 %2190
    %2192 = vrot.lane.b32.xlu0 %v2159, 17
    %v2193 = vpop.permute.xlu0 %2192
    %2194 = vrot.lane.b32.xlu0 %v2163, 17
    %v2195 = vpop.permute.xlu0 %2194
    %2196 = vrot.lane.b32.xlu0 %v2167, 17
    %v2197 = vpop.permute.xlu0 %2196
    %2198 = vrot.lane.b32.xlu0 %v2156, 17
    %v2199 = vpop.permute.xlu0 %2198
    %2200 = vrot.lane.b32.xlu0 %v2160, 17
    %v2201 = vpop.permute.xlu0 %2200
    %2202 = vrot.lane.b32.xlu0 %v2164, 17
    %v2203 = vpop.permute.xlu0 %2202
    %2204 = vrot.lane.b32.xlu0 %v2168, 17
    %v2205 = vpop.permute.xlu0 %2204
    %v2206 = vsel %vm84, %v2191, %v2199
    %v2207 = vsel %vm84, %v2193, %v2201
    %v2208 = vsel %vm84, %v2195, %v2203
    %v2209 = vsel %vm84, %v2197, %v2205
    %v2210 = vsel %vm84, %v2183, %v2191
    %v2211 = vsel %vm84, %v2185, %v2193
    %v2212 = vsel %vm84, %v2187, %v2195
    %v2213 = vsel %vm84, %v2189, %v2197
    %v2214 = vsel %vm84, %v2175, %v2183
    %v2215 = vsel %vm84, %v2177, %v2185
    %v2216 = vsel %vm84, %v2179, %v2187
    %v2217 = vsel %vm84, %v2181, %v2189
    %v2218 = vsel %vm84, %v2199, %v2175
    %v2219 = vsel %vm84, %v2201, %v2177
    %v2220 = vsel %vm84, %v2203, %v2179
    %v2221 = vsel %vm84, %v2205, %v2181
    %v2222 = vld [vmem:[%s1] ss:$8 sm:$0xf]
    %v2224 = vlaneseq
    %v2225 = vshrl.u32 %v2224, 7
    %v2226 = vsub.s32 0, %v2225
    %v2227 = vrot.slane %v2222, %v2226
    %v2228 = vlaneseq
    %v2229 = vshrl.u32 %v2228, 7
    %v2230 = vsub.s32 1, %v2229
    %v2231 = vrot.slane %v2222, %v2230
    %v2232 = vlaneseq
    %v2233 = vshrl.u32 %v2232, 7
    %v2234 = vsub.s32 2, %v2233
    %v2235 = vrot.slane %v2222, %v2234
    %v2236 = vlaneseq
    %v2237 = vshrl.u32 %v2236, 7
    %v2238 = vsub.s32 3, %v2237
    %v2239 = vrot.slane %v2222, %v2238
    %v2244 = vmul.f32 %v2218, %v2227
    %v2245 = vmul.f32 %v2214, %v2231
    %v2246 = vmul.f32 %v2210, %v2235
    %v2247 = vmul.f32 %v2206, %v2239
    %v2248 = vmul.f32 %v2219, %v2227
    %v2249 = vmul.f32 %v2215, %v2231
    %v2250 = vmul.f32 %v2211, %v2235
    %v2251 = vmul.f32 %v2207, %v2239
    %v2252 = vmul.f32 %v2220, %v2227
    %v2253 = vmul.f32 %v2216, %v2231
    %v2254 = vmul.f32 %v2212, %v2235
    %v2255 = vmul.f32 %v2208, %v2239
    %v2256 = vmul.f32 %v2221, %v2227
    %v2257 = vmul.f32 %v2217, %v2231
    %v2258 = vmul.f32 %v2213, %v2235
    %v2259 = vmul.f32 %v2209, %v2239
    %2260 = vst [vmem:[#allocation2] sm:$0xff] %v2244
    %2261 = vst [vmem:[#allocation2 + $0x8] sm:$0xff] %v2245
    %2262 = vst [vmem:[#allocation2 + $0x10] sm:$0xff] %v2246
    %2263 = vst [vmem:[#allocation2 + $0x18] sm:$0xff] %v2247
    %2264 = vst [vmem:[#allocation2 + $0x20] sm:$0xff] %v2248
    %2265 = vst [vmem:[#allocation2 + $0x28] sm:$0xff] %v2249
    %2266 = vst [vmem:[#allocation2 + $0x30] sm:$0xff] %v2250
    %2267 = vst [vmem:[#allocation2 + $0x38] sm:$0xff] %v2251
    %2268 = vst [vmem:[#allocation2 + $0x40] sm:$0xff] %v2252
    %2269 = vst [vmem:[#allocation2 + $0x48] sm:$0xff] %v2253
    %2270 = vst [vmem:[#allocation2 + $0x50] sm:$0xff] %v2254
    %2271 = vst [vmem:[#allocation2 + $0x58] sm:$0xff] %v2255
    %2272 = vst [vmem:[#allocation2 + $0x60] sm:$0xff] %v2256
    %2273 = vst [vmem:[#allocation2 + $0x68] sm:$0xff] %v2257
    %2274 = vst [vmem:[#allocation2 + $0x70] sm:$0xff] %v2258
    %2275 = vst [vmem:[#allocation2 + $0x78] sm:$0xff] %v2259
    %2276 = vrot.lane.b32.xlu0 %v2153, 16
    %v2277 = vpop.permute.xlu0 %2276
    %2278 = vrot.lane.b32.xlu0 %v2157, 16
    %v2279 = vpop.permute.xlu0 %2278
    %2280 = vrot.lane.b32.xlu0 %v2161, 16
    %v2281 = vpop.permute.xlu0 %2280
    %2282 = vrot.lane.b32.xlu0 %v2165, 16
    %v2283 = vpop.permute.xlu0 %2282
    %2284 = vrot.lane.b32.xlu0 %v2154, 16
    %v2285 = vpop.permute.xlu0 %2284
    %2286 = vrot.lane.b32.xlu0 %v2158, 16
    %v2287 = vpop.permute.xlu0 %2286
    %2288 = vrot.lane.b32.xlu0 %v2162, 16
    %v2289 = vpop.permute.xlu0 %2288
    %2290 = vrot.lane.b32.xlu0 %v2166, 16
    %v2291 = vpop.permute.xlu0 %2290
    %2292 = vrot.lane.b32.xlu0 %v2155, 16
    %v2293 = vpop.permute.xlu0 %2292
    %2294 = vrot.lane.b32.xlu0 %v2159, 16
    %v2295 = vpop.permute.xlu0 %2294
    %2296 = vrot.lane.b32.xlu0 %v2163, 16
    %v2297 = vpop.permute.xlu0 %2296
    %2298 = vrot.lane.b32.xlu0 %v2167, 16
    %v2299 = vpop.permute.xlu0 %2298
    %2300 = vrot.lane.b32.xlu0 %v2156, 16
    %v2301 = vpop.permute.xlu0 %2300
    %2302 = vrot.lane.b32.xlu0 %v2160, 16
    %v2303 = vpop.permute.xlu0 %2302
    %2304 = vrot.lane.b32.xlu0 %v2164, 16
    %v2305 = vpop.permute.xlu0 %2304
    %2306 = vrot.lane.b32.xlu0 %v2168, 16
    %v2307 = vpop.permute.xlu0 %2306
    %v2308 = vsel %vm127, %v2293, %v2301
    %v2309 = vsel %vm127, %v2295, %v2303
    %v2310 = vsel %vm127, %v2297, %v2305
    %v2311 = vsel %vm127, %v2299, %v2307
    %v2312 = vsel %vm127, %v2285, %v2293
    %v2313 = vsel %vm127, %v2287, %v2295
    %v2314 = vsel %vm127, %v2289, %v2297
    %v2315 = vsel %vm127, %v2291, %v2299
    %v2316 = vsel %vm127, %v2277, %v2285
    %v2317 = vsel %vm127, %v2279, %v2287
    %v2318 = vsel %vm127, %v2281, %v2289
    %v2319 = vsel %vm127, %v2283, %v2291
    %v2320 = vsel %vm127, %v2301, %v2277
    %v2321 = vsel %vm127, %v2303, %v2279
    %v2322 = vsel %vm127, %v2305, %v2281
    %v2323 = vsel %vm127, %v2307, %v2283
    %v2324 = vld [vmem:[%s132] ss:$8 sm:$0xf]
    %v2326 = vlaneseq
    %v2327 = vshrl.u32 %v2326, 7
    %v2328 = vsub.s32 0, %v2327
    %v2329 = vrot.slane %v2324, %v2328
    %v2330 = vlaneseq
    %v2331 = vshrl.u32 %v2330, 7
    %v2332 = vsub.s32 1, %v2331
    %v2333 = vrot.slane %v2324, %v2332
    %v2334 = vlaneseq
    %v2335 = vshrl.u32 %v2334, 7
    %v2336 = vsub.s32 2, %v2335
    %v2337 = vrot.slane %v2324, %v2336
    %v2338 = vlaneseq
    %v2339 = vshrl.u32 %v2338, 7
    %v2340 = vsub.s32 3, %v2339
    %v2341 = vrot.slane %v2324, %v2340
    %v2346 = vmul.f32 %v2320, %v2329
    %v2347 = vmul.f32 %v2316, %v2333
    %v2348 = vmul.f32 %v2312, %v2337
    %v2349 = vmul.f32 %v2308, %v2341
    %v2350 = vmul.f32 %v2321, %v2329
    %v2351 = vmul.f32 %v2317, %v2333
    %v2352 = vmul.f32 %v2313, %v2337
    %v2353 = vmul.f32 %v2309, %v2341
    %v2354 = vmul.f32 %v2322, %v2329
    %v2355 = vmul.f32 %v2318, %v2333
    %v2356 = vmul.f32 %v2314, %v2337
    %v2357 = vmul.f32 %v2310, %v2341
    %v2358 = vmul.f32 %v2323, %v2329
    %v2359 = vmul.f32 %v2319, %v2333
    %v2360 = vmul.f32 %v2315, %v2337
    %v2361 = vmul.f32 %v2311, %v2341
    %2362 = vst [vmem:[#allocation2 + $0x80] sm:$0xff] %v2346
    %2363 = vst [vmem:[#allocation2 + $0x88] sm:$0xff] %v2347
    %2364 = vst [vmem:[#allocation2 + $0x90] sm:$0xff] %v2348
    %2365 = vst [vmem:[#allocation2 + $0x98] sm:$0xff] %v2349
    %2366 = vst [vmem:[#allocation2 + $0xa0] sm:$0xff] %v2350
    %2367 = vst [vmem:[#allocation2 + $0xa8] sm:$0xff] %v2351
    %2368 = vst [vmem:[#allocation2 + $0xb0] sm:$0xff] %v2352
    %2369 = vst [vmem:[#allocation2 + $0xb8] sm:$0xff] %v2353
    %2370 = vst [vmem:[#allocation2 + $0xc0] sm:$0xff] %v2354
    %2371 = vst [vmem:[#allocation2 + $0xc8] sm:$0xff] %v2355
    %2372 = vst [vmem:[#allocation2 + $0xd0] sm:$0xff] %v2356
    %2373 = vst [vmem:[#allocation2 + $0xd8] sm:$0xff] %v2357
    %2374 = vst [vmem:[#allocation2 + $0xe0] sm:$0xff] %v2358
    %2375 = vst [vmem:[#allocation2 + $0xe8] sm:$0xff] %v2359
    %2376 = vst [vmem:[#allocation2 + $0xf0] sm:$0xff] %v2360
    %2377 = vst [vmem:[#allocation2 + $0xf8] sm:$0xff] %v2361
    %2378 = vrot.lane.b32.xlu0 %v2153, 15
    %v2379 = vpop.permute.xlu0 %2378
    %2380 = vrot.lane.b32.xlu0 %v2157, 15
    %v2381 = vpop.permute.xlu0 %2380
    %2382 = vrot.lane.b32.xlu0 %v2161, 15
    %v2383 = vpop.permute.xlu0 %2382
    %2384 = vrot.lane.b32.xlu0 %v2165, 15
    %v2385 = vpop.permute.xlu0 %2384
    %2386 = vrot.lane.b32.xlu0 %v2154, 15
    %v2387 = vpop.permute.xlu0 %2386
    %2388 = vrot.lane.b32.xlu0 %v2158, 15
    %v2389 = vpop.permute.xlu0 %2388
    %2390 = vrot.lane.b32.xlu0 %v2162, 15
    %v2391 = vpop.permute.xlu0 %2390
    %2392 = vrot.lane.b32.xlu0 %v2166, 15
    %v2393 = vpop.permute.xlu0 %2392
    %2394 = vrot.lane.b32.xlu0 %v2155, 15
    %v2395 = vpop.permute.xlu0 %2394
    %2396 = vrot.lane.b32.xlu0 %v2159, 15
    %v2397 = vpop.permute.xlu0 %2396
    %2398 = vrot.lane.b32.xlu0 %v2163, 15
    %v2399 = vpop.permute.xlu0 %2398
    %2400 = vrot.lane.b32.xlu0 %v2167, 15
    %v2401 = vpop.permute.xlu0 %2400
    %2402 = vrot.lane.b32.xlu0 %v2156, 15
    %v2403 = vpop.permute.xlu0 %2402
    %2404 = vrot.lane.b32.xlu0 %v2160, 15
    %v2405 = vpop.permute.xlu0 %2404
    %2406 = vrot.lane.b32.xlu0 %v2164, 15
    %v2407 = vpop.permute.xlu0 %2406
    %2408 = vrot.lane.b32.xlu0 %v2168, 15
    %v2409 = vpop.permute.xlu0 %2408
    %v2410 = vsel %vm171, %v2395, %v2403
    %v2411 = vsel %vm171, %v2397, %v2405
    %v2412 = vsel %vm171, %v2399, %v2407
    %v2413 = vsel %vm171, %v2401, %v2409
    %v2414 = vsel %vm171, %v2387, %v2395
    %v2415 = vsel %vm171, %v2389, %v2397
    %v2416 = vsel %vm171, %v2391, %v2399
    %v2417 = vsel %vm171, %v2393, %v2401
    %v2418 = vsel %vm171, %v2379, %v2387
    %v2419 = vsel %vm171, %v2381, %v2389
    %v2420 = vsel %vm171, %v2383, %v2391
    %v2421 = vsel %vm171, %v2385, %v2393
    %v2422 = vsel %vm171, %v2403, %v2379
    %v2423 = vsel %vm171, %v2405, %v2381
    %v2424 = vsel %vm171, %v2407, %v2383
    %v2425 = vsel %vm171, %v2409, %v2385
    %v2426 = vld [vmem:[%s176] ss:$8 sm:$0xf]
    %v2428 = vlaneseq
    %v2429 = vshrl.u32 %v2428, 7
    %v2430 = vsub.s32 0, %v2429
    %v2431 = vrot.slane %v2426, %v2430
    %v2432 = vlaneseq
    %v2433 = vshrl.u32 %v2432, 7
    %v2434 = vsub.s32 1, %v2433
    %v2435 = vrot.slane %v2426, %v2434
    %v2436 = vlaneseq
    %v2437 = vshrl.u32 %v2436, 7
    %v2438 = vsub.s32 2, %v2437
    %v2439 = vrot.slane %v2426, %v2438
    %v2440 = vlaneseq
    %v2441 = vshrl.u32 %v2440, 7
    %v2442 = vsub.s32 3, %v2441
    %v2443 = vrot.slane %v2426, %v2442
    %v2448 = vmul.f32 %v2422, %v2431
    %v2449 = vmul.f32 %v2418, %v2435
    %v2450 = vmul.f32 %v2414, %v2439
    %v2451 = vmul.f32 %v2410, %v2443
    %v2452 = vmul.f32 %v2423, %v2431
    %v2453 = vmul.f32 %v2419, %v2435
    %v2454 = vmul.f32 %v2415, %v2439
    %v2455 = vmul.f32 %v2411, %v2443
    %v2456 = vmul.f32 %v2424, %v2431
    %v2457 = vmul.f32 %v2420, %v2435
    %v2458 = vmul.f32 %v2416, %v2439
    %v2459 = vmul.f32 %v2412, %v2443
    %v2460 = vmul.f32 %v2425, %v2431
    %v2461 = vmul.f32 %v2421, %v2435
    %v2462 = vmul.f32 %v2417, %v2439
    %v2463 = vmul.f32 %v2413, %v2443
    %2464 = vst [vmem:[#allocation2 + $0x100] sm:$0xff] %v2448
    %2465 = vst [vmem:[#allocation2 + $0x108] sm:$0xff] %v2449
    %2466 = vst [vmem:[#allocation2 + $0x110] sm:$0xff] %v2450
    %2467 = vst [vmem:[#allocation2 + $0x118] sm:$0xff] %v2451
    %2468 = vst [vmem:[#allocation2 + $0x120] sm:$0xff] %v2452
    %2469 = vst [vmem:[#allocation2 + $0x128] sm:$0xff] %v2453
    %2470 = vst [vmem:[#allocation2 + $0x130] sm:$0xff] %v2454
    %2471 = vst [vmem:[#allocation2 + $0x138] sm:$0xff] %v2455
    %2472 = vst [vmem:[#allocation2 + $0x140] sm:$0xff] %v2456
    %2473 = vst [vmem:[#allocation2 + $0x148] sm:$0xff] %v2457
    %2474 = vst [vmem:[#allocation2 + $0x150] sm:$0xff] %v2458
    %2475 = vst [vmem:[#allocation2 + $0x158] sm:$0xff] %v2459
    %2476 = vst [vmem:[#allocation2 + $0x160] sm:$0xff] %v2460
    %2477 = vst [vmem:[#allocation2 + $0x168] sm:$0xff] %v2461
    %2478 = vst [vmem:[#allocation2 + $0x170] sm:$0xff] %v2462
    %2479 = vst [vmem:[#allocation2 + $0x178] sm:$0xff] %v2463
    %2480 = vrot.lane.b32.xlu0 %v2153, 1
    %v2481 = vpop.permute.xlu0 %2480
    %2482 = vrot.lane.b32.xlu0 %v2157, 1
    %v2483 = vpop.permute.xlu0 %2482
    %2484 = vrot.lane.b32.xlu0 %v2161, 1
    %v2485 = vpop.permute.xlu0 %2484
    %2486 = vrot.lane.b32.xlu0 %v2165, 1
    %v2487 = vpop.permute.xlu0 %2486
    %2488 = vrot.lane.b32.xlu0 %v2154, 1
    %v2489 = vpop.permute.xlu0 %2488
    %2490 = vrot.lane.b32.xlu0 %v2158, 1
    %v2491 = vpop.permute.xlu0 %2490
    %2492 = vrot.lane.b32.xlu0 %v2162, 1
    %v2493 = vpop.permute.xlu0 %2492
    %2494 = vrot.lane.b32.xlu0 %v2166, 1
    %v2495 = vpop.permute.xlu0 %2494
    %2496 = vrot.lane.b32.xlu0 %v2155, 1
    %v2497 = vpop.permute.xlu0 %2496
    %2498 = vrot.lane.b32.xlu0 %v2159, 1
    %v2499 = vpop.permute.xlu0 %2498
    %2500 = vrot.lane.b32.xlu0 %v2163, 1
    %v2501 = vpop.permute.xlu0 %2500
    %2502 = vrot.lane.b32.xlu0 %v2167, 1
    %v2503 = vpop.permute.xlu0 %2502
    %2504 = vrot.lane.b32.xlu0 %v2156, 1
    %v2505 = vpop.permute.xlu0 %2504
    %2506 = vrot.lane.b32.xlu0 %v2160, 1
    %v2507 = vpop.permute.xlu0 %2506
    %2508 = vrot.lane.b32.xlu0 %v2164, 1
    %v2509 = vpop.permute.xlu0 %2508
    %2510 = vrot.lane.b32.xlu0 %v2168, 1
    %v2511 = vpop.permute.xlu0 %2510
    %v2512 = vsel %vm215, %v2497, %v2505
    %v2513 = vsel %vm215, %v2499, %v2507
    %v2514 = vsel %vm215, %v2501, %v2509
    %v2515 = vsel %vm215, %v2503, %v2511
    %v2516 = vsel %vm215, %v2489, %v2497
    %v2517 = vsel %vm215, %v2491, %v2499
    %v2518 = vsel %vm215, %v2493, %v2501
    %v2519 = vsel %vm215, %v2495, %v2503
    %v2520 = vsel %vm215, %v2481, %v2489
    %v2521 = vsel %vm215, %v2483, %v2491
    %v2522 = vsel %vm215, %v2485, %v2493
    %v2523 = vsel %vm215, %v2487, %v2495
    %v2524 = vsel %vm215, %v2505, %v2481
    %v2525 = vsel %vm215, %v2507, %v2483
    %v2526 = vsel %vm215, %v2509, %v2485
    %v2527 = vsel %vm215, %v2511, %v2487
    %v2528 = vld [vmem:[%s220] ss:$8 sm:$0xf]
    %v2530 = vlaneseq
    %v2531 = vshrl.u32 %v2530, 7
    %v2532 = vsub.s32 0, %v2531
    %v2533 = vrot.slane %v2528, %v2532
    %v2534 = vlaneseq
    %v2535 = vshrl.u32 %v2534, 7
    %v2536 = vsub.s32 1, %v2535
    %v2537 = vrot.slane %v2528, %v2536
    %v2538 = vlaneseq
    %v2539 = vshrl.u32 %v2538, 7
    %v2540 = vsub.s32 2, %v2539
    %v2541 = vrot.slane %v2528, %v2540
    %v2542 = vlaneseq
    %v2543 = vshrl.u32 %v2542, 7
    %v2544 = vsub.s32 3, %v2543
    %v2545 = vrot.slane %v2528, %v2544
    %v2550 = vmul.f32 %v2524, %v2533
    %v2551 = vmul.f32 %v2520, %v2537
    %v2552 = vmul.f32 %v2516, %v2541
    %v2553 = vmul.f32 %v2512, %v2545
    %v2554 = vmul.f32 %v2525, %v2533
    %v2555 = vmul.f32 %v2521, %v2537
    %v2556 = vmul.f32 %v2517, %v2541
    %v2557 = vmul.f32 %v2513, %v2545
    %v2558 = vmul.f32 %v2526, %v2533
    %v2559 = vmul.f32 %v2522, %v2537
    %v2560 = vmul.f32 %v2518, %v2541
    %v2561 = vmul.f32 %v2514, %v2545
    %v2562 = vmul.f32 %v2527, %v2533
    %v2563 = vmul.f32 %v2523, %v2537
    %v2564 = vmul.f32 %v2519, %v2541
    %v2565 = vmul.f32 %v2515, %v2545
    %2566 = vst [vmem:[#allocation2 + $0x180] sm:$0xff] %v2550
    %2567 = vst [vmem:[#allocation2 + $0x188] sm:$0xff] %v2551
    %2568 = vst [vmem:[#allocation2 + $0x190] sm:$0xff] %v2552
    %2569 = vst [vmem:[#allocation2 + $0x198] sm:$0xff] %v2553
    %2570 = vst [vmem:[#allocation2 + $0x1a0] sm:$0xff] %v2554
    %2571 = vst [vmem:[#allocation2 + $0x1a8] sm:$0xff] %v2555
    %2572 = vst [vmem:[#allocation2 + $0x1b0] sm:$0xff] %v2556
    %2573 = vst [vmem:[#allocation2 + $0x1b8] sm:$0xff] %v2557
    %2574 = vst [vmem:[#allocation2 + $0x1c0] sm:$0xff] %v2558
    %2575 = vst [vmem:[#allocation2 + $0x1c8] sm:$0xff] %v2559
    %2576 = vst [vmem:[#allocation2 + $0x1d0] sm:$0xff] %v2560
    %2577 = vst [vmem:[#allocation2 + $0x1d8] sm:$0xff] %v2561
    %2578 = vst [vmem:[#allocation2 + $0x1e0] sm:$0xff] %v2562
    %2579 = vst [vmem:[#allocation2 + $0x1e8] sm:$0xff] %v2563
    %2580 = vst [vmem:[#allocation2 + $0x1f0] sm:$0xff] %v2564
    %2581 = vst [vmem:[#allocation2 + $0x1f8] sm:$0xff] %v2565
    %2582 = vst [vmem:[#allocation2 + $0x200] sm:$0xff] %v2153
    %2583 = vst [vmem:[#allocation2 + $0x208] sm:$0xff] %v2154
    %2584 = vst [vmem:[#allocation2 + $0x210] sm:$0xff] %v2155
    %2585 = vst [vmem:[#allocation2 + $0x218] sm:$0xff] %v2156
    %2586 = vst [vmem:[#allocation2 + $0x220] sm:$0xff] %v2157
    %2587 = vst [vmem:[#allocation2 + $0x228] sm:$0xff] %v2158
    %2588 = vst [vmem:[#allocation2 + $0x230] sm:$0xff] %v2159
    %2589 = vst [vmem:[#allocation2 + $0x238] sm:$0xff] %v2160
    %2590 = vst [vmem:[#allocation2 + $0x240] sm:$0xff] %v2161
    %2591 = vst [vmem:[#allocation2 + $0x248] sm:$0xff] %v2162
    %2592 = vst [vmem:[#allocation2 + $0x250] sm:$0xff] %v2163
    %2593 = vst [vmem:[#allocation2 + $0x258] sm:$0xff] %v2164
    %2594 = vst [vmem:[#allocation2 + $0x260] sm:$0xff] %v2165
    %2595 = vst [vmem:[#allocation2 + $0x268] sm:$0xff] %v2166
    %2596 = vst [vmem:[#allocation2 + $0x270] sm:$0xff] %v2167
    %2597 = vst [vmem:[#allocation2 + $0x278] sm:$0xff] %v2168
    %2598 = vrot.lane.b32.xlu0 %v2153, 127
    %v2599 = vpop.permute.xlu0 %2598
    %2600 = vrot.lane.b32.xlu0 %v2157, 127
    %v2601 = vpop.permute.xlu0 %2600
    %2602 = vrot.lane.b32.xlu0 %v2161, 127
    %v2603 = vpop.permute.xlu0 %2602
    %2604 = vrot.lane.b32.xlu0 %v2165, 127
    %v2605 = vpop.permute.xlu0 %2604
    %2606 = vrot.lane.b32.xlu0 %v2154, 127
    %v2607 = vpop.permute.xlu0 %2606
    %2608 = vrot.lane.b32.xlu0 %v2158, 127
    %v2609 = vpop.permute.xlu0 %2608
    %2610 = vrot.lane.b32.xlu0 %v2162, 127
    %v2611 = vpop.permute.xlu0 %2610
    %2612 = vrot.lane.b32.xlu0 %v2166, 127
    %v2613 = vpop.permute.xlu0 %2612
    %2614 = vrot.lane.b32.xlu0 %v2155, 127
    %v2615 = vpop.permute.xlu0 %2614
    %2616 = vrot.lane.b32.xlu0 %v2159, 127
    %v2617 = vpop.permute.xlu0 %2616
    %2618 = vrot.lane.b32.xlu0 %v2163, 127
    %v2619 = vpop.permute.xlu0 %2618
    %2620 = vrot.lane.b32.xlu0 %v2167, 127
    %v2621 = vpop.permute.xlu0 %2620
    %2622 = vrot.lane.b32.xlu0 %v2156, 127
    %v2623 = vpop.permute.xlu0 %2622
    %2624 = vrot.lane.b32.xlu0 %v2160, 127
    %v2625 = vpop.permute.xlu0 %2624
    %2626 = vrot.lane.b32.xlu0 %v2164, 127
    %v2627 = vpop.permute.xlu0 %2626
    %2628 = vrot.lane.b32.xlu0 %v2168, 127
    %v2629 = vpop.permute.xlu0 %2628
    %v2630 = vsel %vm263, %v2615, %v2623
    %v2631 = vsel %vm263, %v2617, %v2625
    %v2632 = vsel %vm263, %v2619, %v2627
    %v2633 = vsel %vm263, %v2621, %v2629
    %v2634 = vsel %vm263, %v2607, %v2615
    %v2635 = vsel %vm263, %v2609, %v2617
    %v2636 = vsel %vm263, %v2611, %v2619
    %v2637 = vsel %vm263, %v2613, %v2621
    %v2638 = vsel %vm263, %v2599, %v2607
    %v2639 = vsel %vm263, %v2601, %v2609
    %v2640 = vsel %vm263, %v2603, %v2611
    %v2641 = vsel %vm263, %v2605, %v2613
    %v2642 = vsel %vm263, %v2623, %v2599
    %v2643 = vsel %vm263, %v2625, %v2601
    %v2644 = vsel %vm263, %v2627, %v2603
    %v2645 = vsel %vm263, %v2629, %v2605
    %v2646 = vld [vmem:[%s268] ss:$8 sm:$0xf]
    %v2648 = vlaneseq
    %v2649 = vshrl.u32 %v2648, 7
    %v2650 = vsub.s32 0, %v2649
    %v2651 = vrot.slane %v2646, %v2650
    %v2652 = vlaneseq
    %v2653 = vshrl.u32 %v2652, 7
    %v2654 = vsub.s32 1, %v2653
    %v2655 = vrot.slane %v2646, %v2654
    %v2656 = vlaneseq
    %v2657 = vshrl.u32 %v2656, 7
    %v2658 = vsub.s32 2, %v2657
    %v2659 = vrot.slane %v2646, %v2658
    %v2660 = vlaneseq
    %v2661 = vshrl.u32 %v2660, 7
    %v2662 = vsub.s32 3, %v2661
    %v2663 = vrot.slane %v2646, %v2662
    %v2668 = vmul.f32 %v2638, %v2651
    %v2669 = vmul.f32 %v2634, %v2655
    %v2670 = vmul.f32 %v2630, %v2659
    %v2671 = vmul.f32 %v2642, %v2663
    %v2672 = vmul.f32 %v2639, %v2651
    %v2673 = vmul.f32 %v2635, %v2655
    %v2674 = vmul.f32 %v2631, %v2659
    %v2675 = vmul.f32 %v2643, %v2663
    %v2676 = vmul.f32 %v2640, %v2651
    %v2677 = vmul.f32 %v2636, %v2655
    %v2678 = vmul.f32 %v2632, %v2659
    %v2679 = vmul.f32 %v2644, %v2663
    %v2680 = vmul.f32 %v2641, %v2651
    %v2681 = vmul.f32 %v2637, %v2655
    %v2682 = vmul.f32 %v2633, %v2659
    %v2683 = vmul.f32 %v2645, %v2663
    %2684 = vst [vmem:[#allocation2 + $0x280] sm:$0xff] %v2668
    %2685 = vst [vmem:[#allocation2 + $0x288] sm:$0xff] %v2669
    %2686 = vst [vmem:[#allocation2 + $0x290] sm:$0xff] %v2670
    %2687 = vst [vmem:[#allocation2 + $0x298] sm:$0xff] %v2671
    %2688 = vst [vmem:[#allocation2 + $0x2a0] sm:$0xff] %v2672
    %2689 = vst [vmem:[#allocation2 + $0x2a8] sm:$0xff] %v2673
    %2690 = vst [vmem:[#allocation2 + $0x2b0] sm:$0xff] %v2674
    %2691 = vst [vmem:[#allocation2 + $0x2b8] sm:$0xff] %v2675
    %2692 = vst [vmem:[#allocation2 + $0x2c0] sm:$0xff] %v2676
    %2693 = vst [vmem:[#allocation2 + $0x2c8] sm:$0xff] %v2677
    %2694 = vst [vmem:[#allocation2 + $0x2d0] sm:$0xff] %v2678
    %2695 = vst [vmem:[#allocation2 + $0x2d8] sm:$0xff] %v2679
    %2696 = vst [vmem:[#allocation2 + $0x2e0] sm:$0xff] %v2680
    %2697 = vst [vmem:[#allocation2 + $0x2e8] sm:$0xff] %v2681
    %2698 = vst [vmem:[#allocation2 + $0x2f0] sm:$0xff] %v2682
    %2699 = vst [vmem:[#allocation2 + $0x2f8] sm:$0xff] %v2683
    %2700 = vrot.lane.b32.xlu0 %v2153, 113
    %v2701 = vpop.permute.xlu0 %2700
    %2702 = vrot.lane.b32.xlu0 %v2157, 113
    %v2703 = vpop.permute.xlu0 %2702
    %2704 = vrot.lane.b32.xlu0 %v2161, 113
    %v2705 = vpop.permute.xlu0 %2704
    %2706 = vrot.lane.b32.xlu0 %v2165, 113
    %v2707 = vpop.permute.xlu0 %2706
    %2708 = vrot.lane.b32.xlu0 %v2154, 113
    %v2709 = vpop.permute.xlu0 %2708
    %2710 = vrot.lane.b32.xlu0 %v2158, 113
    %v2711 = vpop.permute.xlu0 %2710
    %2712 = vrot.lane.b32.xlu0 %v2162, 113
    %v2713 = vpop.permute.xlu0 %2712
    %2714 = vrot.lane.b32.xlu0 %v2166, 113
    %v2715 = vpop.permute.xlu0 %2714
    %2716 = vrot.lane.b32.xlu0 %v2155, 113
    %v2717 = vpop.permute.xlu0 %2716
    %2718 = vrot.lane.b32.xlu0 %v2159, 113
    %v2719 = vpop.permute.xlu0 %2718
    %2720 = vrot.lane.b32.xlu0 %v2163, 113
    %v2721 = vpop.permute.xlu0 %2720
    %2722 = vrot.lane.b32.xlu0 %v2167, 113
    %v2723 = vpop.permute.xlu0 %2722
    %2724 = vrot.lane.b32.xlu0 %v2156, 113
    %v2725 = vpop.permute.xlu0 %2724
    %2726 = vrot.lane.b32.xlu0 %v2160, 113
    %v2727 = vpop.permute.xlu0 %2726
    %2728 = vrot.lane.b32.xlu0 %v2164, 113
    %v2729 = vpop.permute.xlu0 %2728
    %2730 = vrot.lane.b32.xlu0 %v2168, 113
    %v2731 = vpop.permute.xlu0 %2730
    %v2732 = vsel %vm307, %v2717, %v2725
    %v2733 = vsel %vm307, %v2719, %v2727
    %v2734 = vsel %vm307, %v2721, %v2729
    %v2735 = vsel %vm307, %v2723, %v2731
    %v2736 = vsel %vm307, %v2709, %v2717
    %v2737 = vsel %vm307, %v2711, %v2719
    %v2738 = vsel %vm307, %v2713, %v2721
    %v2739 = vsel %vm307, %v2715, %v2723
    %v2740 = vsel %vm307, %v2701, %v2709
    %v2741 = vsel %vm307, %v2703, %v2711
    %v2742 = vsel %vm307, %v2705, %v2713
    %v2743 = vsel %vm307, %v2707, %v2715
    %v2744 = vsel %vm307, %v2725, %v2701
    %v2745 = vsel %vm307, %v2727, %v2703
    %v2746 = vsel %vm307, %v2729, %v2705
    %v2747 = vsel %vm307, %v2731, %v2707
    %v2748 = vld [vmem:[%s312] ss:$8 sm:$0xf]
    %v2750 = vlaneseq
    %v2751 = vshrl.u32 %v2750, 7
    %v2752 = vsub.s32 0, %v2751
    %v2753 = vrot.slane %v2748, %v2752
    %v2754 = vlaneseq
    %v2755 = vshrl.u32 %v2754, 7
    %v2756 = vsub.s32 1, %v2755
    %v2757 = vrot.slane %v2748, %v2756
    %v2758 = vlaneseq
    %v2759 = vshrl.u32 %v2758, 7
    %v2760 = vsub.s32 2, %v2759
    %v2761 = vrot.slane %v2748, %v2760
    %v2762 = vlaneseq
    %v2763 = vshrl.u32 %v2762, 7
    %v2764 = vsub.s32 3, %v2763
    %v2765 = vrot.slane %v2748, %v2764
    %v2770 = vmul.f32 %v2740, %v2753
    %v2771 = vmul.f32 %v2736, %v2757
    %v2772 = vmul.f32 %v2732, %v2761
    %v2773 = vmul.f32 %v2744, %v2765
    %v2774 = vmul.f32 %v2741, %v2753
    %v2775 = vmul.f32 %v2737, %v2757
    %v2776 = vmul.f32 %v2733, %v2761
    %v2777 = vmul.f32 %v2745, %v2765
    %v2778 = vmul.f32 %v2742, %v2753
    %v2779 = vmul.f32 %v2738, %v2757
    %v2780 = vmul.f32 %v2734, %v2761
    %v2781 = vmul.f32 %v2746, %v2765
    %v2782 = vmul.f32 %v2743, %v2753
    %v2783 = vmul.f32 %v2739, %v2757
    %v2784 = vmul.f32 %v2735, %v2761
    %v2785 = vmul.f32 %v2747, %v2765
    %2786 = vst [vmem:[#allocation2 + $0x300] sm:$0xff] %v2770
    %2787 = vst [vmem:[#allocation2 + $0x308] sm:$0xff] %v2771
    %2788 = vst [vmem:[#allocation2 + $0x310] sm:$0xff] %v2772
    %2789 = vst [vmem:[#allocation2 + $0x318] sm:$0xff] %v2773
    %2790 = vst [vmem:[#allocation2 + $0x320] sm:$0xff] %v2774
    %2791 = vst [vmem:[#allocation2 + $0x328] sm:$0xff] %v2775
    %2792 = vst [vmem:[#allocation2 + $0x330] sm:$0xff] %v2776
    %2793 = vst [vmem:[#allocation2 + $0x338] sm:$0xff] %v2777
    %2794 = vst [vmem:[#allocation2 + $0x340] sm:$0xff] %v2778
    %2795 = vst [vmem:[#allocation2 + $0x348] sm:$0xff] %v2779
    %2796 = vst [vmem:[#allocation2 + $0x350] sm:$0xff] %v2780
    %2797 = vst [vmem:[#allocation2 + $0x358] sm:$0xff] %v2781
    %2798 = vst [vmem:[#allocation2 + $0x360] sm:$0xff] %v2782
    %2799 = vst [vmem:[#allocation2 + $0x368] sm:$0xff] %v2783
    %2800 = vst [vmem:[#allocation2 + $0x370] sm:$0xff] %v2784
    %2801 = vst [vmem:[#allocation2 + $0x378] sm:$0xff] %v2785
    %2802 = vrot.lane.b32.xlu0 %v2153, 112
    %v2803 = vpop.permute.xlu0 %2802
    %2804 = vrot.lane.b32.xlu0 %v2157, 112
    %v2805 = vpop.permute.xlu0 %2804
    %2806 = vrot.lane.b32.xlu0 %v2161, 112
    %v2807 = vpop.permute.xlu0 %2806
    %2808 = vrot.lane.b32.xlu0 %v2165, 112
    %v2809 = vpop.permute.xlu0 %2808
    %2810 = vrot.lane.b32.xlu0 %v2154, 112
    %v2811 = vpop.permute.xlu0 %2810
    %2812 = vrot.lane.b32.xlu0 %v2158, 112
    %v2813 = vpop.permute.xlu0 %2812
    %2814 = vrot.lane.b32.xlu0 %v2162, 112
    %v2815 = vpop.permute.xlu0 %2814
    %2816 = vrot.lane.b32.xlu0 %v2166, 112
    %v2817 = vpop.permute.xlu0 %2816
    %2818 = vrot.lane.b32.xlu0 %v2155, 112
    %v2819 = vpop.permute.xlu0 %2818
    %2820 = vrot.lane.b32.xlu0 %v2159, 112
    %v2821 = vpop.permute.xlu0 %2820
    %2822 = vrot.lane.b32.xlu0 %v2163, 112
    %v2823 = vpop.permute.xlu0 %2822
    %2824 = vrot.lane.b32.xlu0 %v2167, 112
    %v2825 = vpop.permute.xlu0 %2824
    %2826 = vrot.lane.b32.xlu0 %v2156, 112
    %v2827 = vpop.permute.xlu0 %2826
    %2828 = vrot.lane.b32.xlu0 %v2160, 112
    %v2829 = vpop.permute.xlu0 %2828
    %2830 = vrot.lane.b32.xlu0 %v2164, 112
    %v2831 = vpop.permute.xlu0 %2830
    %2832 = vrot.lane.b32.xlu0 %v2168, 112
    %v2833 = vpop.permute.xlu0 %2832
    %v2834 = vsel %vm351, %v2819, %v2827
    %v2835 = vsel %vm351, %v2821, %v2829
    %v2836 = vsel %vm351, %v2823, %v2831
    %v2837 = vsel %vm351, %v2825, %v2833
    %v2838 = vsel %vm351, %v2811, %v2819
    %v2839 = vsel %vm351, %v2813, %v2821
    %v2840 = vsel %vm351, %v2815, %v2823
    %v2841 = vsel %vm351, %v2817, %v2825
    %v2842 = vsel %vm351, %v2803, %v2811
    %v2843 = vsel %vm351, %v2805, %v2813
    %v2844 = vsel %vm351, %v2807, %v2815
    %v2845 = vsel %vm351, %v2809, %v2817
    %v2846 = vsel %vm351, %v2827, %v2803
    %v2847 = vsel %vm351, %v2829, %v2805
    %v2848 = vsel %vm351, %v2831, %v2807
    %v2849 = vsel %vm351, %v2833, %v2809
    %v2850 = vld [vmem:[%s356] ss:$8 sm:$0xf]
    %v2852 = vlaneseq
    %v2853 = vshrl.u32 %v2852, 7
    %v2854 = vsub.s32 0, %v2853
    %v2855 = vrot.slane %v2850, %v2854
    %v2856 = vlaneseq
    %v2857 = vshrl.u32 %v2856, 7
    %v2858 = vsub.s32 1, %v2857
    %v2859 = vrot.slane %v2850, %v2858
    %v2860 = vlaneseq
    %v2861 = vshrl.u32 %v2860, 7
    %v2862 = vsub.s32 2, %v2861
    %v2863 = vrot.slane %v2850, %v2862
    %v2864 = vlaneseq
    %v2865 = vshrl.u32 %v2864, 7
    %v2866 = vsub.s32 3, %v2865
    %v2867 = vrot.slane %v2850, %v2866
    %v2872 = vmul.f32 %v2842, %v2855
    %v2873 = vmul.f32 %v2838, %v2859
    %v2874 = vmul.f32 %v2834, %v2863
    %v2875 = vmul.f32 %v2846, %v2867
    %v2876 = vmul.f32 %v2843, %v2855
    %v2877 = vmul.f32 %v2839, %v2859
    %v2878 = vmul.f32 %v2835, %v2863
    %v2879 = vmul.f32 %v2847, %v2867
    %v2880 = vmul.f32 %v2844, %v2855
    %v2881 = vmul.f32 %v2840, %v2859
    %v2882 = vmul.f32 %v2836, %v2863
    %v2883 = vmul.f32 %v2848, %v2867
    %v2884 = vmul.f32 %v2845, %v2855
    %v2885 = vmul.f32 %v2841, %v2859
    %v2886 = vmul.f32 %v2837, %v2863
    %v2887 = vmul.f32 %v2849, %v2867
    %2888 = vst [vmem:[#allocation2 + $0x380] sm:$0xff] %v2872
    %2889 = vst [vmem:[#allocation2 + $0x388] sm:$0xff] %v2873
    %2890 = vst [vmem:[#allocation2 + $0x390] sm:$0xff] %v2874
    %2891 = vst [vmem:[#allocation2 + $0x398] sm:$0xff] %v2875
    %2892 = vst [vmem:[#allocation2 + $0x3a0] sm:$0xff] %v2876
    %2893 = vst [vmem:[#allocation2 + $0x3a8] sm:$0xff] %v2877
    %2894 = vst [vmem:[#allocation2 + $0x3b0] sm:$0xff] %v2878
    %2895 = vst [vmem:[#allocation2 + $0x3b8] sm:$0xff] %v2879
    %2896 = vst [vmem:[#allocation2 + $0x3c0] sm:$0xff] %v2880
    %2897 = vst [vmem:[#allocation2 + $0x3c8] sm:$0xff] %v2881
    %2898 = vst [vmem:[#allocation2 + $0x3d0] sm:$0xff] %v2882
    %2899 = vst [vmem:[#allocation2 + $0x3d8] sm:$0xff] %v2883
    %2900 = vst [vmem:[#allocation2 + $0x3e0] sm:$0xff] %v2884
    %2901 = vst [vmem:[#allocation2 + $0x3e8] sm:$0xff] %v2885
    %2902 = vst [vmem:[#allocation2 + $0x3f0] sm:$0xff] %v2886
    %2903 = vst [vmem:[#allocation2 + $0x3f8] sm:$0xff] %v2887
    %2904 = vrot.lane.b32.xlu0 %v2153, 111
    %v2905 = vpop.permute.xlu0 %2904
    %2906 = vrot.lane.b32.xlu0 %v2157, 111
    %v2907 = vpop.permute.xlu0 %2906
    %2908 = vrot.lane.b32.xlu0 %v2161, 111
    %v2909 = vpop.permute.xlu0 %2908
    %2910 = vrot.lane.b32.xlu0 %v2165, 111
    %v2911 = vpop.permute.xlu0 %2910
    %2912 = vrot.lane.b32.xlu0 %v2154, 111
    %v2913 = vpop.permute.xlu0 %2912
    %2914 = vrot.lane.b32.xlu0 %v2158, 111
    %v2915 = vpop.permute.xlu0 %2914
    %2916 = vrot.lane.b32.xlu0 %v2162, 111
    %v2917 = vpop.permute.xlu0 %2916
    %2918 = vrot.lane.b32.xlu0 %v2166, 111
    %v2919 = vpop.permute.xlu0 %2918
    %2920 = vrot.lane.b32.xlu0 %v2155, 111
    %v2921 = vpop.permute.xlu0 %2920
    %2922 = vrot.lane.b32.xlu0 %v2159, 111
    %v2923 = vpop.permute.xlu0 %2922
    %2924 = vrot.lane.b32.xlu0 %v2163, 111
    %v2925 = vpop.permute.xlu0 %2924
    %2926 = vrot.lane.b32.xlu0 %v2167, 111
    %v2927 = vpop.permute.xlu0 %2926
    %2928 = vrot.lane.b32.xlu0 %v2156, 111
    %v2929 = vpop.permute.xlu0 %2928
    %2930 = vrot.lane.b32.xlu0 %v2160, 111
    %v2931 = vpop.permute.xlu0 %2930
    %2932 = vrot.lane.b32.xlu0 %v2164, 111
    %v2933 = vpop.permute.xlu0 %2932
    %2934 = vrot.lane.b32.xlu0 %v2168, 111
    %v2935 = vpop.permute.xlu0 %2934
    %v2936 = vsel %vm395, %v2921, %v2929
    %v2937 = vsel %vm395, %v2923, %v2931
    %v2938 = vsel %vm395, %v2925, %v2933
    %v2939 = vsel %vm395, %v2927, %v2935
    %v2940 = vsel %vm395, %v2913, %v2921
    %v2941 = vsel %vm395, %v2915, %v2923
    %v2942 = vsel %vm395, %v2917, %v2925
    %v2943 = vsel %vm395, %v2919, %v2927
    %v2944 = vsel %vm395, %v2905, %v2913
    %v2945 = vsel %vm395, %v2907, %v2915
    %v2946 = vsel %vm395, %v2909, %v2917
    %v2947 = vsel %vm395, %v2911, %v2919
    %v2948 = vsel %vm395, %v2929, %v2905
    %v2949 = vsel %vm395, %v2931, %v2907
    %v2950 = vsel %vm395, %v2933, %v2909
    %v2951 = vsel %vm395, %v2935, %v2911
    %v2952 = vld [vmem:[%s400] ss:$8 sm:$0xf]
    %v2954 = vlaneseq
    %v2955 = vshrl.u32 %v2954, 7
    %v2956 = vsub.s32 0, %v2955
    %v2957 = vrot.slane %v2952, %v2956
    %v2958 = vlaneseq
    %v2959 = vshrl.u32 %v2958, 7
    %v2960 = vsub.s32 1, %v2959
    %v2961 = vrot.slane %v2952, %v2960
    %v2962 = vlaneseq
    %v2963 = vshrl.u32 %v2962, 7
    %v2964 = vsub.s32 2, %v2963
    %v2965 = vrot.slane %v2952, %v2964
    %v2966 = vlaneseq
    %v2967 = vshrl.u32 %v2966, 7
    %v2968 = vsub.s32 3, %v2967
    %v2969 = vrot.slane %v2952, %v2968
    %v2974 = vmul.f32 %v2944, %v2957
    %v2975 = vmul.f32 %v2940, %v2961
    %v2976 = vmul.f32 %v2936, %v2965
    %v2977 = vmul.f32 %v2948, %v2969
    %v2978 = vmul.f32 %v2945, %v2957
    %v2979 = vmul.f32 %v2941, %v2961
    %v2980 = vmul.f32 %v2937, %v2965
    %v2981 = vmul.f32 %v2949, %v2969
    %v2982 = vmul.f32 %v2946, %v2957
    %v2983 = vmul.f32 %v2942, %v2961
    %v2984 = vmul.f32 %v2938, %v2965
    %v2985 = vmul.f32 %v2950, %v2969
    %v2986 = vmul.f32 %v2947, %v2957
    %v2987 = vmul.f32 %v2943, %v2961
    %v2988 = vmul.f32 %v2939, %v2965
    %v2989 = vmul.f32 %v2951, %v2969
    %2990 = vst [vmem:[#allocation2 + $0x400] sm:$0xff] %v2974
    %2991 = vst [vmem:[#allocation2 + $0x408] sm:$0xff] %v2975
    %2992 = vst [vmem:[#allocation2 + $0x410] sm:$0xff] %v2976
    %2993 = vst [vmem:[#allocation2 + $0x418] sm:$0xff] %v2977
    %2994 = vst [vmem:[#allocation2 + $0x420] sm:$0xff] %v2978
    %2995 = vst [vmem:[#allocation2 + $0x428] sm:$0xff] %v2979
    %2996 = vst [vmem:[#allocation2 + $0x430] sm:$0xff] %v2980
    %2997 = vst [vmem:[#allocation2 + $0x438] sm:$0xff] %v2981
    %2998 = vst [vmem:[#allocation2 + $0x440] sm:$0xff] %v2982
    %2999 = vst [vmem:[#allocation2 + $0x448] sm:$0xff] %v2983
    %3000 = vst [vmem:[#allocation2 + $0x450] sm:$0xff] %v2984
    %3001 = vst [vmem:[#allocation2 + $0x458] sm:$0xff] %v2985
    %3002 = vst [vmem:[#allocation2 + $0x460] sm:$0xff] %v2986
    %3003 = vst [vmem:[#allocation2 + $0x468] sm:$0xff] %v2987
    %3004 = vst [vmem:[#allocation2 + $0x470] sm:$0xff] %v2988
    %3005 = vst [vmem:[#allocation2 + $0x478] sm:$0xff] %v2989
    %v3006 = vld [vmem:[#allocation2] sm:$0xff]
    %v3007 = vld [vmem:[#allocation2 + $0x8] sm:$0xff]
    %v3008 = vld [vmem:[#allocation2 + $0x10] sm:$0xff]
    %v3009 = vld [vmem:[#allocation2 + $0x18] sm:$0xff]
    %v3010 = vld [vmem:[#allocation2 + $0x20] sm:$0xff]
    %v3011 = vld [vmem:[#allocation2 + $0x28] sm:$0xff]
    %v3012 = vld [vmem:[#allocation2 + $0x30] sm:$0xff]
    %v3013 = vld [vmem:[#allocation2 + $0x38] sm:$0xff]
    %v3014 = vld [vmem:[#allocation2 + $0x40] sm:$0xff]
    %v3015 = vld [vmem:[#allocation2 + $0x48] sm:$0xff]
    %v3016 = vld [vmem:[#allocation2 + $0x50] sm:$0xff]
    %v3017 = vld [vmem:[#allocation2 + $0x58] sm:$0xff]
    %v3018 = vld [vmem:[#allocation2 + $0x60] sm:$0xff]
    %v3019 = vld [vmem:[#allocation2 + $0x68] sm:$0xff]
    %v3020 = vld [vmem:[#allocation2 + $0x70] sm:$0xff]
    %v3021 = vld [vmem:[#allocation2 + $0x78] sm:$0xff]
    %v3022 = vld [vmem:[#allocation2 + $0x80] sm:$0xff]
    %v3023 = vld [vmem:[#allocation2 + $0x88] sm:$0xff]
    %v3024 = vld [vmem:[#allocation2 + $0x90] sm:$0xff]
    %v3025 = vld [vmem:[#allocation2 + $0x98] sm:$0xff]
    %v3026 = vld [vmem:[#allocation2 + $0xa0] sm:$0xff]
    %v3027 = vld [vmem:[#allocation2 + $0xa8] sm:$0xff]
    %v3028 = vld [vmem:[#allocation2 + $0xb0] sm:$0xff]
    %v3029 = vld [vmem:[#allocation2 + $0xb8] sm:$0xff]
    %v3030 = vld [vmem:[#allocation2 + $0xc0] sm:$0xff]
    %v3031 = vld [vmem:[#allocation2 + $0xc8] sm:$0xff]
    %v3032 = vld [vmem:[#allocation2 + $0xd0] sm:$0xff]
    %v3033 = vld [vmem:[#allocation2 + $0xd8] sm:$0xff]
    %v3034 = vld [vmem:[#allocation2 + $0xe0] sm:$0xff]
    %v3035 = vld [vmem:[#allocation2 + $0xe8] sm:$0xff]
    %v3036 = vld [vmem:[#allocation2 + $0xf0] sm:$0xff]
    %v3037 = vld [vmem:[#allocation2 + $0xf8] sm:$0xff]
    %v3038 = vld [vmem:[#allocation2 + $0x100] sm:$0xff]
    %v3039 = vld [vmem:[#allocation2 + $0x108] sm:$0xff]
    %v3040 = vld [vmem:[#allocation2 + $0x110] sm:$0xff]
    %v3041 = vld [vmem:[#allocation2 + $0x118] sm:$0xff]
    %v3042 = vld [vmem:[#allocation2 + $0x120] sm:$0xff]
    %v3043 = vld [vmem:[#allocation2 + $0x128] sm:$0xff]
    %v3044 = vld [vmem:[#allocation2 + $0x130] sm:$0xff]
    %v3045 = vld [vmem:[#allocation2 + $0x138] sm:$0xff]
    %v3046 = vld [vmem:[#allocation2 + $0x140] sm:$0xff]
    %v3047 = vld [vmem:[#allocation2 + $0x148] sm:$0xff]
    %v3048 = vld [vmem:[#allocation2 + $0x150] sm:$0xff]
    %v3049 = vld [vmem:[#allocation2 + $0x158] sm:$0xff]
    %v3050 = vld [vmem:[#allocation2 + $0x160] sm:$0xff]
    %v3051 = vld [vmem:[#allocation2 + $0x168] sm:$0xff]
    %v3052 = vld [vmem:[#allocation2 + $0x170] sm:$0xff]
    %v3053 = vld [vmem:[#allocation2 + $0x178] sm:$0xff]
    %v3054 = vld [vmem:[#allocation2 + $0x180] sm:$0xff]
    %v3055 = vld [vmem:[#allocation2 + $0x188] sm:$0xff]
    %v3056 = vld [vmem:[#allocation2 + $0x190] sm:$0xff]
    %v3057 = vld [vmem:[#allocation2 + $0x198] sm:$0xff]
    %v3058 = vld [vmem:[#allocation2 + $0x1a0] sm:$0xff]
    %v3059 = vld [vmem:[#allocation2 + $0x1a8] sm:$0xff]
    %v3060 = vld [vmem:[#allocation2 + $0x1b0] sm:$0xff]
    %v3061 = vld [vmem:[#allocation2 + $0x1b8] sm:$0xff]
    %v3062 = vld [vmem:[#allocation2 + $0x1c0] sm:$0xff]
    %v3063 = vld [vmem:[#allocation2 + $0x1c8] sm:$0xff]
    %v3064 = vld [vmem:[#allocation2 + $0x1d0] sm:$0xff]
    %v3065 = vld [vmem:[#allocation2 + $0x1d8] sm:$0xff]
    %v3066 = vld [vmem:[#allocation2 + $0x1e0] sm:$0xff]
    %v3067 = vld [vmem:[#allocation2 + $0x1e8] sm:$0xff]
    %v3068 = vld [vmem:[#allocation2 + $0x1f0] sm:$0xff]
    %v3069 = vld [vmem:[#allocation2 + $0x1f8] sm:$0xff]
    %v3070 = vld [vmem:[#allocation2 + $0x200] sm:$0xff]
    %v3071 = vld [vmem:[#allocation2 + $0x208] sm:$0xff]
    %v3072 = vld [vmem:[#allocation2 + $0x210] sm:$0xff]
    %v3073 = vld [vmem:[#allocation2 + $0x218] sm:$0xff]
    %v3074 = vld [vmem:[#allocation2 + $0x220] sm:$0xff]
    %v3075 = vld [vmem:[#allocation2 + $0x228] sm:$0xff]
    %v3076 = vld [vmem:[#allocation2 + $0x230] sm:$0xff]
    %v3077 = vld [vmem:[#allocation2 + $0x238] sm:$0xff]
    %v3078 = vld [vmem:[#allocation2 + $0x240] sm:$0xff]
    %v3079 = vld [vmem:[#allocation2 + $0x248] sm:$0xff]
    %v3080 = vld [vmem:[#allocation2 + $0x250] sm:$0xff]
    %v3081 = vld [vmem:[#allocation2 + $0x258] sm:$0xff]
    %v3082 = vld [vmem:[#allocation2 + $0x260] sm:$0xff]
    %v3083 = vld [vmem:[#allocation2 + $0x268] sm:$0xff]
    %v3084 = vld [vmem:[#allocation2 + $0x270] sm:$0xff]
    %v3085 = vld [vmem:[#allocation2 + $0x278] sm:$0xff]
    %v3086 = vld [vmem:[#allocation2 + $0x280] sm:$0xff]
    %v3087 = vld [vmem:[#allocation2 + $0x288] sm:$0xff]
    %v3088 = vld [vmem:[#allocation2 + $0x290] sm:$0xff]
    %v3089 = vld [vmem:[#allocation2 + $0x298] sm:$0xff]
    %v3090 = vld [vmem:[#allocation2 + $0x2a0] sm:$0xff]
    %v3091 = vld [vmem:[#allocation2 + $0x2a8] sm:$0xff]
    %v3092 = vld [vmem:[#allocation2 + $0x2b0] sm:$0xff]
    %v3093 = vld [vmem:[#allocation2 + $0x2b8] sm:$0xff]
    %v3094 = vld [vmem:[#allocation2 + $0x2c0] sm:$0xff]
    %v3095 = vld [vmem:[#allocation2 + $0x2c8] sm:$0xff]
    %v3096 = vld [vmem:[#allocation2 + $0x2d0] sm:$0xff]
    %v3097 = vld [vmem:[#allocation2 + $0x2d8] sm:$0xff]
    %v3098 = vld [vmem:[#allocation2 + $0x2e0] sm:$0xff]
    %v3099 = vld [vmem:[#allocation2 + $0x2e8] sm:$0xff]
    %v3100 = vld [vmem:[#allocation2 + $0x2f0] sm:$0xff]
    %v3101 = vld [vmem:[#allocation2 + $0x2f8] sm:$0xff]
    %v3102 = vld [vmem:[#allocation2 + $0x300] sm:$0xff]
    %v3103 = vld [vmem:[#allocation2 + $0x308] sm:$0xff]
    %v3104 = vld [vmem:[#allocation2 + $0x310] sm:$0xff]
    %v3105 = vld [vmem:[#allocation2 + $0x318] sm:$0xff]
    %v3106 = vld [vmem:[#allocation2 + $0x320] sm:$0xff]
    %v3107 = vld [vmem:[#allocation2 + $0x328] sm:$0xff]
    %v3108 = vld [vmem:[#allocation2 + $0x330] sm:$0xff]
    %v3109 = vld [vmem:[#allocation2 + $0x338] sm:$0xff]
    %v3110 = vld [vmem:[#allocation2 + $0x340] sm:$0xff]
    %v3111 = vld [vmem:[#allocation2 + $0x348] sm:$0xff]
    %v3112 = vld [vmem:[#allocation2 + $0x350] sm:$0xff]
    %v3113 = vld [vmem:[#allocation2 + $0x358] sm:$0xff]
    %v3114 = vld [vmem:[#allocation2 + $0x360] sm:$0xff]
    %v3115 = vld [vmem:[#allocation2 + $0x368] sm:$0xff]
    %v3116 = vld [vmem:[#allocation2 + $0x370] sm:$0xff]
    %v3117 = vld [vmem:[#allocation2 + $0x378] sm:$0xff]
    %v3118 = vld [vmem:[#allocation2 + $0x380] sm:$0xff]
    %v3119 = vld [vmem:[#allocation2 + $0x388] sm:$0xff]
    %v3120 = vld [vmem:[#allocation2 + $0x390] sm:$0xff]
    %v3121 = vld [vmem:[#allocation2 + $0x398] sm:$0xff]
    %v3122 = vld [vmem:[#allocation2 + $0x3a0] sm:$0xff]
    %v3123 = vld [vmem:[#allocation2 + $0x3a8] sm:$0xff]
    %v3124 = vld [vmem:[#allocation2 + $0x3b0] sm:$0xff]
    %v3125 = vld [vmem:[#allocation2 + $0x3b8] sm:$0xff]
    %v3126 = vld [vmem:[#allocation2 + $0x3c0] sm:$0xff]
    %v3127 = vld [vmem:[#allocation2 + $0x3c8] sm:$0xff]
    %v3128 = vld [vmem:[#allocation2 + $0x3d0] sm:$0xff]
    %v3129 = vld [vmem:[#allocation2 + $0x3d8] sm:$0xff]
    %v3130 = vld [vmem:[#allocation2 + $0x3e0] sm:$0xff]
    %v3131 = vld [vmem:[#allocation2 + $0x3e8] sm:$0xff]
    %v3132 = vld [vmem:[#allocation2 + $0x3f0] sm:$0xff]
    %v3133 = vld [vmem:[#allocation2 + $0x3f8] sm:$0xff]
    %v3134 = vld [vmem:[#allocation2 + $0x400] sm:$0xff]
    %v3135 = vld [vmem:[#allocation2 + $0x408] sm:$0xff]
    %v3136 = vld [vmem:[#allocation2 + $0x410] sm:$0xff]
    %v3137 = vld [vmem:[#allocation2 + $0x418] sm:$0xff]
    %v3138 = vld [vmem:[#allocation2 + $0x420] sm:$0xff]
    %v3139 = vld [vmem:[#allocation2 + $0x428] sm:$0xff]
    %v3140 = vld [vmem:[#allocation2 + $0x430] sm:$0xff]
    %v3141 = vld [vmem:[#allocation2 + $0x438] sm:$0xff]
    %v3142 = vld [vmem:[#allocation2 + $0x440] sm:$0xff]
    %v3143 = vld [vmem:[#allocation2 + $0x448] sm:$0xff]
    %v3144 = vld [vmem:[#allocation2 + $0x450] sm:$0xff]
    %v3145 = vld [vmem:[#allocation2 + $0x458] sm:$0xff]
    %v3146 = vld [vmem:[#allocation2 + $0x460] sm:$0xff]
    %v3147 = vld [vmem:[#allocation2 + $0x468] sm:$0xff]
    %v3148 = vld [vmem:[#allocation2 + $0x470] sm:$0xff]
    %v3149 = vld [vmem:[#allocation2 + $0x478] sm:$0xff]
    %3151 = vset.pattern.permute.xlu0 0
    %3152 = vperm.xlu0 %3151, %v2170
    %v3153 = vpop.permute.xlu0 %3152
    %3156 = vset.pattern.permute.xlu0 0
    %3157 = vperm.xlu0 %3156, %v2171
    %v3158 = vpop.permute.xlu0 %3157
    %3161 = vset.pattern.permute.xlu0 0
    %3162 = vperm.xlu0 %3161, %v2172
    %v3163 = vpop.permute.xlu0 %3162
    %3166 = vset.pattern.permute.xlu0 0
    %3167 = vperm.xlu0 %3166, %v2173
    %v3168 = vpop.permute.xlu0 %3167
    %v3171 = vsel %vm1784, %v757, 0
    %v3174 = vsel %vm1784, %v760, 0
    %v3177 = vsel %vm1784, %v763, 0
    %v3180 = vsel %vm1784, %v766, 0
    %3182 = vmatprep.subr.mxu0 %v3007
    %3183 = vmatpush1.msra.mxu0 %v3006
    %3184 = vmatprep.subr.mxu0 %v3011
    %3185 = vmatpush1.msra.mxu0 %v3010
    %3186 = vmatprep.subr.mxu0 %v3015
    %3187 = vmatpush1.msra.mxu0 %v3014
    %3188 = vmatprep.subr.mxu0 %v3019
    %3189 = vmatpush1.msra.mxu0 %v3018
    %3190 = vmatprep.subr.mxu0 %v3023
    %3191 = vmatpush1.msra.mxu0 %v3022
    %3192 = vmatprep.subr.mxu0 %v3027
    %3193 = vmatpush1.msra.mxu0 %v3026
    %3194 = vmatprep.subr.mxu0 %v3031
    %3195 = vmatpush1.msra.mxu0 %v3030
    %3196 = vmatprep.subr.mxu0 %v3035
    %3197 = vmatpush1.msra.mxu0 %v3034
    %3198 = vmatprep.subr.mxu0 %v3039
    %3199 = vmatpush1.msra.mxu0 %v3038
    %3200 = vmatprep.subr.mxu0 %v3043
    %3201 = vmatpush1.msra.mxu0 %v3042
    %3202 = vmatprep.subr.mxu0 %v3047
    %3203 = vmatpush1.msra.mxu0 %v3046
    %3204 = vmatprep.subr.mxu0 %v3051
    %3205 = vmatpush1.msra.mxu0 %v3050
    %3206 = vmatprep.subr.mxu0 %v3055
    %3207 = vmatpush1.msra.mxu0 %v3054
    %3208 = vmatprep.subr.mxu0 %v3059
    %3209 = vmatpush1.msra.mxu0 %v3058
    %3210 = vmatprep.subr.mxu0 %v3063
    %3211 = vmatpush1.msra.mxu0 %v3062
    %3212 = vmatprep.subr.mxu0 %v3067
    %3213 = vmatpush1.msra.mxu0 %v3066
    %3214 = vmatprep.subr.mxu0 %v3071
    %3215 = vmatpush1.msra.mxu0 %v3070
    %3216 = vmatprep.subr.mxu0 %v3075
    %3217 = vmatpush1.msra.mxu0 %v3074
    %3218 = vmatprep.subr.mxu0 %v3079
    %3219 = vmatpush1.msra.mxu0 %v3078
    %3220 = vmatprep.subr.mxu0 %v3083
    %3221 = vmatpush1.msra.mxu0 %v3082
    %3222 = vmatprep.subr.mxu0 %v3087
    %3223 = vmatpush1.msra.mxu0 %v3086
    %3224 = vmatprep.subr.mxu0 %v3091
    %3225 = vmatpush1.msra.mxu0 %v3090
    %3226 = vmatprep.subr.mxu0 %v3095
    %3227 = vmatpush1.msra.mxu0 %v3094
    %3228 = vmatprep.subr.mxu0 %v3099
    %3229 = vmatpush1.msra.mxu0 %v3098
    %3230 = vmatprep.subr.mxu0 %v3103
    %3231 = vmatpush1.msra.mxu0 %v3102
    %3232 = vmatprep.subr.mxu0 %v3107
    %3233 = vmatpush1.msra.mxu0 %v3106
    %3234 = vmatprep.subr.mxu0 %v3111
    %3235 = vmatpush1.msra.mxu0 %v3110
    %3236 = vmatprep.subr.mxu0 %v3115
    %3237 = vmatpush1.msra.mxu0 %v3114
    %3238 = vmatprep.subr.mxu0 %v3119
    %3239 = vmatpush1.msra.mxu0 %v3118
    %3240 = vmatprep.subr.mxu0 %v3123
    %3241 = vmatpush1.msra.mxu0 %v3122
    %3242 = vmatprep.subr.mxu0 %v3127
    %3243 = vmatpush1.msra.mxu0 %v3126
    %3244 = vmatprep.subr.mxu0 %v3131
    %3245 = vmatpush1.msra.mxu0 %v3130
    %3246 = vmatprep.mubr.f32.mxu0 %v756
    %3247 = vmatmul.mubr.f32.gmra.mrb[0].mxu0 %v755
    %v3248 = vpop.f32.mrb[0].mxu0
    %v3249 = vadd.f32 %v3153, %v3248
    %v3250 = vpop.f32.mrb[0].mxu0
    %v3251 = vadd.f32 %v3153, %v3250
    %3252 = vmatprep.mubr.f32.mxu0 %v759
    %3253 = vmatmul.mubr.f32.gmra.mrb[0].mxu0 %v758
    %v3254 = vpop.f32.mrb[0].mxu0
    %v3255 = vadd.f32 %v3158, %v3254
    %v3256 = vpop.f32.mrb[0].mxu0
    %v3257 = vadd.f32 %v3158, %v3256
    %3258 = vmatprep.mubr.f32.mxu0 %v762
    %3259 = vmatmul.mubr.f32.gmra.mrb[0].mxu0 %v761
    %v3260 = vpop.f32.mrb[0].mxu0
    %v3261 = vadd.f32 %v3163, %v3260
    %v3262 = vpop.f32.mrb[0].mxu0
    %v3263 = vadd.f32 %v3163, %v3262
    %3264 = vmatprep.mubr.f32.mxu0 %v765
    %3265 = vmatmul.mubr.f32.gmra.mrb[0].mxu0 %v764
    %v3266 = vpop.f32.mrb[0].mxu0
    %v3267 = vadd.f32 %v3168, %v3266
    %v3268 = vpop.f32.mrb[0].mxu0
    %v3269 = vadd.f32 %v3168, %v3268
    %3270 = vdwg.mxu0
    %3271 = vmatprep.subr.mxu0 %v3135
    %3272 = vmatpush1.msra.mxu0 %v3134
    %3273 = vmatprep.subr.mxu0 %v3139
    %3274 = vmatpush1.msra.mxu0 %v3138
    %3275 = vmatprep.subr.mxu0 %v3143
    %3276 = vmatpush1.msra.mxu0 %v3142
    %3277 = vmatprep.subr.mxu0 %v3147
    %3278 = vmatpush1.msra.mxu0 %v3146
    %3279 = vmatprep.subr.mxu0 0.0
    %3280 = vmatpush1.msra.mxu0 0.0
    %3281 = vmatprep.subr.mxu0 0.0
    %3282 = vmatpush1.msra.mxu0 0.0
    %3283 = vmatprep.subr.mxu0 0.0
    %3284 = vmatpush1.msra.mxu0 0.0
    %3285 = vmatprep.subr.mxu0 0.0
    %3286 = vmatpush1.msra.mxu0 0.0
    %3287 = vmatprep.subr.mxu0 0.0
    %3288 = vmatpush1.msra.mxu0 0.0
    %3289 = vmatprep.subr.mxu0 0.0
    %3290 = vmatpush1.msra.mxu0 0.0
    %3291 = vmatprep.subr.mxu0 0.0
    %3292 = vmatpush1.msra.mxu0 0.0
    %3293 = vmatprep.subr.mxu0 0.0
    %3294 = vmatpush1.msra.mxu0 0.0
    %3295 = vmatprep.subr.mxu0 0.0
    %3296 = vmatpush1.msra.mxu0 0.0
    %3297 = vmatprep.subr.mxu0 0.0
    %3298 = vmatpush1.msra.mxu0 0.0
    %3299 = vmatprep.subr.mxu0 0.0
    %3300 = vmatpush1.msra.mxu0 0.0
    %3301 = vmatprep.subr.mxu0 0.0
    %3302 = vmatpush1.msra.mxu0 0.0
    %3303 = vmatprep.subr.mxu0 0.0
    %3304 = vmatpush1.msra.mxu0 0.0
    %3305 = vmatprep.subr.mxu0 0.0
    %3306 = vmatpush1.msra.mxu0 0.0
    %3307 = vmatprep.subr.mxu0 0.0
    %3308 = vmatpush1.msra.mxu0 0.0
    %3309 = vmatprep.subr.mxu0 0.0
    %3310 = vmatpush1.msra.mxu0 0.0
    %3311 = vmatprep.subr.mxu0 0.0
    %3312 = vmatpush1.msra.mxu0 0.0
    %3313 = vmatprep.subr.mxu0 0.0
    %3314 = vmatpush1.msra.mxu0 0.0
    %3315 = vmatprep.subr.mxu0 0.0
    %3316 = vmatpush1.msra.mxu0 0.0
    %3317 = vmatprep.subr.mxu0 0.0
    %3318 = vmatpush1.msra.mxu0 0.0
    %3319 = vmatprep.subr.mxu0 0.0
    %3320 = vmatpush1.msra.mxu0 0.0
    %3321 = vmatprep.subr.mxu0 0.0
    %3322 = vmatpush1.msra.mxu0 0.0
    %3323 = vmatprep.subr.mxu0 0.0
    %3324 = vmatpush1.msra.mxu0 0.0
    %3325 = vmatprep.subr.mxu0 0.0
    %3326 = vmatpush1.msra.mxu0 0.0
    %3327 = vmatprep.subr.mxu0 0.0
    %3328 = vmatpush1.msra.mxu0 0.0
    %3329 = vmatprep.subr.mxu0 0.0
    %3330 = vmatpush1.msra.mxu0 0.0
    %3331 = vmatprep.subr.mxu0 0.0
    %3332 = vmatpush1.msra.mxu0 0.0
    %3333 = vmatprep.subr.mxu0 0.0
    %3334 = vmatpush1.msra.mxu0 0.0
    %3335 = vmatprep.mubr.f32.mxu0 0.0
    %3336 = vmatmul.mubr.f32.gmra.mrb[0].mxu0 %v3171
    %v3337 = vpop.f32.mrb[0].mxu0
    %v3338 = vadd.f32 %v3249, %v3337
    %v3339 = vpop.f32.mrb[0].mxu0
    %v3340 = vadd.f32 %v3251, %v3339
    %3341 = vmatprep.mubr.f32.mxu0 0.0
    %3342 = vmatmul.mubr.f32.gmra.mrb[0].mxu0 %v3174
    %v3343 = vpop.f32.mrb[0].mxu0
    %v3344 = vadd.f32 %v3255, %v3343
    %v3345 = vpop.f32.mrb[0].mxu0
    %v3346 = vadd.f32 %v3257, %v3345
    %3347 = vmatprep.mubr.f32.mxu0 0.0
    %3348 = vmatmul.mubr.f32.gmra.mrb[0].mxu0 %v3177
    %v3349 = vpop.f32.mrb[0].mxu0
    %v3350 = vadd.f32 %v3261, %v3349
    %v3351 = vpop.f32.mrb[0].mxu0
    %v3352 = vadd.f32 %v3263, %v3351
    %3353 = vmatprep.mubr.f32.mxu0 0.0
    %3354 = vmatmul.mubr.f32.gmra.mrb[0].mxu0 %v3180
    %v3355 = vpop.f32.mrb[0].mxu0
    %v3356 = vadd.f32 %v3267, %v3355
    %v3357 = vpop.f32.mrb[0].mxu0
    %v3358 = vadd.f32 %v3269, %v3357
    %3359 = vdwg.mxu0
    %3360 = vmatprep.subr.mxu0 %v3009
    %3361 = vmatpush1.msra.mxu0 %v3008
    %3362 = vmatprep.subr.mxu0 %v3013
    %3363 = vmatpush1.msra.mxu0 %v3012
    %3364 = vmatprep.subr.mxu0 %v3017
    %3365 = vmatpush1.msra.mxu0 %v3016
    %3366 = vmatprep.subr.mxu0 %v3021
    %3367 = vmatpush1.msra.mxu0 %v3020
    %3368 = vmatprep.subr.mxu0 %v3025
    %3369 = vmatpush1.msra.mxu0 %v3024
    %3370 = vmatprep.subr.mxu0 %v3029
    %3371 = vmatpush1.msra.mxu0 %v3028
    %3372 = vmatprep.subr.mxu0 %v3033
    %3373 = vmatpush1.msra.mxu0 %v3032
    %3374 = vmatprep.subr.mxu0 %v3037
    %3375 = vmatpush1.msra.mxu0 %v3036
    %3376 = vmatprep.subr.mxu0 %v3041
    %3377 = vmatpush1.msra.mxu0 %v3040
    %3378 = vmatprep.subr.mxu0 %v3045
    %3379 = vmatpush1.msra.mxu0 %v3044
    %3380 = vmatprep.subr.mxu0 %v3049
    %3381 = vmatpush1.msra.mxu0 %v3048
    %3382 = vmatprep.subr.mxu0 %v3053
    %3383 = vmatpush1.msra.mxu0 %v3052
    %3384 = vmatprep.subr.mxu0 %v3057
    %3385 = vmatpush1.msra.mxu0 %v3056
    %3386 = vmatprep.subr.mxu0 %v3061
    %3387 = vmatpush1.msra.mxu0 %v3060
    %3388 = vmatprep.subr.mxu0 %v3065
    %3389 = vmatpush1.msra.mxu0 %v3064
    %3390 = vmatprep.subr.mxu0 %v3069
    %3391 = vmatpush1.msra.mxu0 %v3068
    %3392 = vmatprep.subr.mxu0 %v3073
    %3393 = vmatpush1.msra.mxu0 %v3072
    %3394 = vmatprep.subr.mxu0 %v3077
    %3395 = vmatpush1.msra.mxu0 %v3076
    %3396 = vmatprep.subr.mxu0 %v3081
    %3397 = vmatpush1.msra.mxu0 %v3080
    %3398 = vmatprep.subr.mxu0 %v3085
    %3399 = vmatpush1.msra.mxu0 %v3084
    %3400 = vmatprep.subr.mxu0 %v3089
    %3401 = vmatpush1.msra.mxu0 %v3088
    %3402 = vmatprep.subr.mxu0 %v3093
    %3403 = vmatpush1.msra.mxu0 %v3092
    %3404 = vmatprep.subr.mxu0 %v3097
    %3405 = vmatpush1.msra.mxu0 %v3096
    %3406 = vmatprep.subr.mxu0 %v3101
    %3407 = vmatpush1.msra.mxu0 %v3100
    %3408 = vmatprep.subr.mxu0 %v3105
    %3409 = vmatpush1.msra.mxu0 %v3104
    %3410 = vmatprep.subr.mxu0 %v3109
    %3411 = vmatpush1.msra.mxu0 %v3108
    %3412 = vmatprep.subr.mxu0 %v3113
    %3413 = vmatpush1.msra.mxu0 %v3112
    %3414 = vmatprep.subr.mxu0 %v3117
    %3415 = vmatpush1.msra.mxu0 %v3116
    %3416 = vmatprep.subr.mxu0 %v3121
    %3417 = vmatpush1.msra.mxu0 %v3120
    %3418 = vmatprep.subr.mxu0 %v3125
    %3419 = vmatpush1.msra.mxu0 %v3124
    %3420 = vmatprep.subr.mxu0 %v3129
    %3421 = vmatpush1.msra.mxu0 %v3128
    %3422 = vmatprep.subr.mxu0 %v3133
    %3423 = vmatpush1.msra.mxu0 %v3132
    %3424 = vmatprep.mubr.f32.mxu0 %v756
    %3425 = vmatmul.mubr.f32.gmra.mrb[0].mxu0 %v755
    %v3426 = vpop.f32.mrb[0].mxu0
    %v3427 = vadd.f32 %v3153, %v3426
    %v3428 = vpop.f32.mrb[0].mxu0
    %v3429 = vadd.f32 %v3153, %v3428
    %3430 = vmatprep.mubr.f32.mxu0 %v759
    %3431 = vmatmul.mubr.f32.gmra.mrb[0].mxu0 %v758
    %v3432 = vpop.f32.mrb[0].mxu0
    %v3433 = vadd.f32 %v3158, %v3432
    %v3434 = vpop.f32.mrb[0].mxu0
    %v3435 = vadd.f32 %v3158, %v3434
    %3436 = vmatprep.mubr.f32.mxu0 %v762
    %3437 = vmatmul.mubr.f32.gmra.mrb[0].mxu0 %v761
    %v3438 = vpop.f32.mrb[0].mxu0
    %v3439 = vadd.f32 %v3163, %v3438
    %v3440 = vpop.f32.mrb[0].mxu0
    %v3441 = vadd.f32 %v3163, %v3440
    %3442 = vmatprep.mubr.f32.mxu0 %v765
    %3443 = vmatmul.mubr.f32.gmra.mrb[0].mxu0 %v764
    %v3444 = vpop.f32.mrb[0].mxu0
    %v3445 = vadd.f32 %v3168, %v3444
    %v3446 = vpop.f32.mrb[0].mxu0
    %v3447 = vadd.f32 %v3168, %v3446
    %3448 = vdwg.mxu0
    %3449 = vmatprep.subr.mxu0 %v3137
    %3450 = vmatpush1.msra.mxu0 %v3136
    %3451 = vmatprep.subr.mxu0 %v3141
    %3452 = vmatpush1.msra.mxu0 %v3140
    %3453 = vmatprep.subr.mxu0 %v3145
    %3454 = vmatpush1.msra.mxu0 %v3144
    %3455 = vmatprep.subr.mxu0 %v3149
    %3456 = vmatpush1.msra.mxu0 %v3148
    %3457 = vmatprep.subr.mxu0 0.0
    %3458 = vmatpush1.msra.mxu0 0.0
    %3459 = vmatprep.subr.mxu0 0.0
    %3460 = vmatpush1.msra.mxu0 0.0
    %3461 = vmatprep.subr.mxu0 0.0
    %3462 = vmatpush1.msra.mxu0 0.0
    %3463 = vmatprep.subr.mxu0 0.0
    %3464 = vmatpush1.msra.mxu0 0.0
    %3465 = vmatprep.subr.mxu0 0.0
    %3466 = vmatpush1.msra.mxu0 0.0
    %3467 = vmatprep.subr.mxu0 0.0
    %3468 = vmatpush1.msra.mxu0 0.0
    %3469 = vmatprep.subr.mxu0 0.0
    %3470 = vmatpush1.msra.mxu0 0.0
    %3471 = vmatprep.subr.mxu0 0.0
    %3472 = vmatpush1.msra.mxu0 0.0
    %3473 = vmatprep.subr.mxu0 0.0
    %3474 = vmatpush1.msra.mxu0 0.0
    %3475 = vmatprep.subr.mxu0 0.0
    %3476 = vmatpush1.msra.mxu0 0.0
    %3477 = vmatprep.subr.mxu0 0.0
    %3478 = vmatpush1.msra.mxu0 0.0
    %3479 = vmatprep.subr.mxu0 0.0
    %3480 = vmatpush1.msra.mxu0 0.0
    %3481 = vmatprep.subr.mxu0 0.0
    %3482 = vmatpush1.msra.mxu0 0.0
    %3483 = vmatprep.subr.mxu0 0.0
    %3484 = vmatpush1.msra.mxu0 0.0
    %3485 = vmatprep.subr.mxu0 0.0
    %3486 = vmatpush1.msra.mxu0 0.0
    %3487 = vmatprep.subr.mxu0 0.0
    %3488 = vmatpush1.msra.mxu0 0.0
    %3489 = vmatprep.subr.mxu0 0.0
    %3490 = vmatpush1.msra.mxu0 0.0
    %3491 = vmatprep.subr.mxu0 0.0
    %3492 = vmatpush1.msra.mxu0 0.0
    %3493 = vmatprep.subr.mxu0 0.0
    %3494 = vmatpush1.msra.mxu0 0.0
    %3495 = vmatprep.subr.mxu0 0.0
    %3496 = vmatpush1.msra.mxu0 0.0
    %3497 = vmatprep.subr.mxu0 0.0
    %3498 = vmatpush1.msra.mxu0 0.0
    %3499 = vmatprep.subr.mxu0 0.0
    %3500 = vmatpush1.msra.mxu0 0.0
    %3501 = vmatprep.subr.mxu0 0.0
    %3502 = vmatpush1.msra.mxu0 0.0
    %3503 = vmatprep.subr.mxu0 0.0
    %3504 = vmatpush1.msra.mxu0 0.0
    %3505 = vmatprep.subr.mxu0 0.0
    %3506 = vmatpush1.msra.mxu0 0.0
    %3507 = vmatprep.subr.mxu0 0.0
    %3508 = vmatpush1.msra.mxu0 0.0
    %3509 = vmatprep.subr.mxu0 0.0
    %3510 = vmatpush1.msra.mxu0 0.0
    %3511 = vmatprep.subr.mxu0 0.0
    %3512 = vmatpush1.msra.mxu0 0.0
    %3513 = vmatprep.mubr.f32.mxu0 0.0
    %3514 = vmatmul.mubr.f32.gmra.mrb[0].mxu0 %v3171
    %v3515 = vpop.f32.mrb[0].mxu0
    %v3516 = vadd.f32 %v3427, %v3515
    %v3517 = vpop.f32.mrb[0].mxu0
    %v3518 = vadd.f32 %v3429, %v3517
    %3519 = vmatprep.mubr.f32.mxu0 0.0
    %3520 = vmatmul.mubr.f32.gmra.mrb[0].mxu0 %v3174
    %v3521 = vpop.f32.mrb[0].mxu0
    %v3522 = vadd.f32 %v3433, %v3521
    %v3523 = vpop.f32.mrb[0].mxu0
    %v3524 = vadd.f32 %v3435, %v3523
    %3525 = vmatprep.mubr.f32.mxu0 0.0
    %3526 = vmatmul.mubr.f32.gmra.mrb[0].mxu0 %v3177
    %v3527 = vpop.f32.mrb[0].mxu0
    %v3528 = vadd.f32 %v3439, %v3527
    %v3529 = vpop.f32.mrb[0].mxu0
    %v3530 = vadd.f32 %v3441, %v3529
    %3531 = vmatprep.mubr.f32.mxu0 0.0
    %3532 = vmatmul.mubr.f32.gmra.mrb[0].mxu0 %v3180
    %v3533 = vpop.f32.mrb[0].mxu0
    %v3534 = vadd.f32 %v3445, %v3533
    %v3535 = vpop.f32.mrb[0].mxu0
    %v3536 = vadd.f32 %v3447, %v3535
    %3537 = vdwg.mxu0
    %v3538 = vld [vmem:[#allocation3] sm:$0xff]
    %v3539 = vld [vmem:[#allocation3 + $0x8] sm:$0xff]
    %v3540 = vld [vmem:[#allocation3 + $0x10] sm:$0xff]
    %v3541 = vld [vmem:[#allocation3 + $0x18] sm:$0xff]
    %v3542 = vld [vmem:[#allocation3 + $0x20] sm:$0xff]
    %v3543 = vld [vmem:[#allocation3 + $0x28] sm:$0xff]
    %v3544 = vld [vmem:[#allocation3 + $0x30] sm:$0xff]
    %v3545 = vld [vmem:[#allocation3 + $0x38] sm:$0xff]
    %v3546 = vld [vmem:[#allocation3 + $0x40] sm:$0xff]
    %v3547 = vld [vmem:[#allocation3 + $0x48] sm:$0xff]
    %v3548 = vld [vmem:[#allocation3 + $0x50] sm:$0xff]
    %v3549 = vld [vmem:[#allocation3 + $0x58] sm:$0xff]
    %v3550 = vld [vmem:[#allocation3 + $0x60] sm:$0xff]
    %v3551 = vld [vmem:[#allocation3 + $0x68] sm:$0xff]
    %v3552 = vld [vmem:[#allocation3 + $0x70] sm:$0xff]
    %v3553 = vld [vmem:[#allocation3 + $0x78] sm:$0xff]
    %v3554 = vadd.f32 %v3338, %v3538
    %v3555 = vadd.f32 %v3340, %v3539
    %v3556 = vadd.f32 %v3516, %v3540
    %v3557 = vadd.f32 %v3518, %v3541
    %v3558 = vadd.f32 %v3344, %v3542
    %v3559 = vadd.f32 %v3346, %v3543
    %v3560 = vadd.f32 %v3522, %v3544
    %v3561 = vadd.f32 %v3524, %v3545
    %v3562 = vadd.f32 %v3350, %v3546
    %v3563 = vadd.f32 %v3352, %v3547
    %v3564 = vadd.f32 %v3528, %v3548
    %v3565 = vadd.f32 %v3530, %v3549
    %v3566 = vadd.f32 %v3356, %v3550
    %v3567 = vadd.f32 %v3358, %v3551
    %v3568 = vadd.f32 %v3534, %v3552
    %v3569 = vadd.f32 %v3536, %v3553
    %v3570 = vmax.f32 %v3554, 0.0
    %v3571 = vmax.f32 %v3555, 0.0
    %v3572 = vmax.f32 %v3556, 0.0
    %v3573 = vmax.f32 %v3557, 0.0
    %v3574 = vmax.f32 %v3558, 0.0
    %v3575 = vmax.f32 %v3559, 0.0
    %v3576 = vmax.f32 %v3560, 0.0
    %v3577 = vmax.f32 %v3561, 0.0
    %v3578 = vmax.f32 %v3562, 0.0
    %v3579 = vmax.f32 %v3563, 0.0
    %v3580 = vmax.f32 %v3564, 0.0
    %v3581 = vmax.f32 %v3565, 0.0
    %v3582 = vmax.f32 %v3566, 0.0
    %v3583 = vmax.f32 %v3567, 0.0
    %v3584 = vmax.f32 %v3568, 0.0
    %v3585 = vmax.f32 %v3569, 0.0
    %3586 = vst [vmem:[#allocation3] sm:$0xff] %v3570
    %3587 = vst [vmem:[#allocation3 + $0x8] sm:$0xff] %v3571
    %3588 = vst [vmem:[#allocation3 + $0x10] sm:$0xff] %v3572
    %3589 = vst [vmem:[#allocation3 + $0x18] sm:$0xff] %v3573
    %3590 = vst [vmem:[#allocation3 + $0x20] sm:$0xff] %v3574
    %3591 = vst [vmem:[#allocation3 + $0x28] sm:$0xff] %v3575
    %3592 = vst [vmem:[#allocation3 + $0x30] sm:$0xff] %v3576
    %3593 = vst [vmem:[#allocation3 + $0x38] sm:$0xff] %v3577
    %3594 = vst [vmem:[#allocation3 + $0x40] sm:$0xff] %v3578
    %3595 = vst [vmem:[#allocation3 + $0x48] sm:$0xff] %v3579
    %3596 = vst [vmem:[#allocation3 + $0x50] sm:$0xff] %v3580
    %3597 = vst [vmem:[#allocation3 + $0x58] sm:$0xff] %v3581
    %3598 = vst [vmem:[#allocation3 + $0x60] sm:$0xff] %v3582
    %3599 = vst [vmem:[#allocation3 + $0x68] sm:$0xff] %v3583
    %3600 = vst [vmem:[#allocation3 + $0x70] sm:$0xff] %v3584
    %3601 = vst [vmem:[#allocation3 + $0x78] sm:$0xff] %v3585
    %s3602 = scalar_lea.vmem %s3, 192
    %v3603 = vld [vmem:[%s3602] sm:$0xff]
    %v3604 = vld [vmem:[%s3602 + $0x8] sm:$0xff]
    %v3605 = vld [vmem:[%s3602 + $0x10] sm:$0xff]
    %v3606 = vld [vmem:[%s3602 + $0x18] sm:$0xff]
    %v3607 = vld [vmem:[%s3602 + $0x20] sm:$0xff]
    %v3608 = vld [vmem:[%s3602 + $0x28] sm:$0xff]
    %v3609 = vld [vmem:[%s3602 + $0x30] sm:$0xff]
    %v3610 = vld [vmem:[%s3602 + $0x38] sm:$0xff]
    %v3611 = vld [vmem:[%s3602 + $0x40] sm:$0xff]
    %v3612 = vld [vmem:[%s3602 + $0x48] sm:$0xff]
    %v3613 = vld [vmem:[%s3602 + $0x50] sm:$0xff]
    %v3614 = vld [vmem:[%s3602 + $0x58] sm:$0xff]
    %s3615 = scalar_lea.vmem %s3, 288
    %v3616 = vld [vmem:[%s3615] sm:$0xff]
    %v3617 = vld [vmem:[%s3615 + $0x8] sm:$0xff]
    %v3618 = vld [vmem:[%s3615 + $0x10] sm:$0xff]
    %v3619 = vld [vmem:[%s3615 + $0x18] sm:$0xff]
    %v3620 = vld [vmem:[%s3615 + $0x20] sm:$0xff]
    %v3621 = vld [vmem:[%s3615 + $0x28] sm:$0xff]
    %v3622 = vld [vmem:[%s3615 + $0x30] sm:$0xff]
    %v3623 = vld [vmem:[%s3615 + $0x38] sm:$0xff]
    %v3624 = vld [vmem:[%s3615 + $0x40] sm:$0xff]
    %v3625 = vld [vmem:[%s3615 + $0x48] sm:$0xff]
    %v3626 = vld [vmem:[%s3615 + $0x50] sm:$0xff]
    %v3627 = vld [vmem:[%s3615 + $0x58] sm:$0xff]
    %v3628 = vld [vmem:[#allocation3] sm:$0xff]
    %v3629 = vld [vmem:[#allocation3 + $0x8] sm:$0xff]
    %v3630 = vld [vmem:[#allocation3 + $0x10] sm:$0xff]
    %v3631 = vld [vmem:[#allocation3 + $0x18] sm:$0xff]
    %v3632 = vld [vmem:[#allocation3 + $0x20] sm:$0xff]
    %v3633 = vld [vmem:[#allocation3 + $0x28] sm:$0xff]
    %v3634 = vld [vmem:[#allocation3 + $0x30] sm:$0xff]
    %v3635 = vld [vmem:[#allocation3 + $0x38] sm:$0xff]
    %v3636 = vld [vmem:[#allocation3 + $0x40] sm:$0xff]
    %v3637 = vld [vmem:[#allocation3 + $0x48] sm:$0xff]
    %v3638 = vld [vmem:[#allocation3 + $0x50] sm:$0xff]
    %v3639 = vld [vmem:[#allocation3 + $0x58] sm:$0xff]
    %v3640 = vld [vmem:[#allocation3 + $0x60] sm:$0xff]
    %v3641 = vld [vmem:[#allocation3 + $0x68] sm:$0xff]
    %v3642 = vld [vmem:[#allocation3 + $0x70] sm:$0xff]
    %v3643 = vld [vmem:[#allocation3 + $0x78] sm:$0xff]
    %s3644 = scalar_lea.vmem [#allocation8], 96
    %v3645 = vld [vmem:[%s3644] sm:$0xff]
    %v3646 = vld [vmem:[%s3644 + $0x8] sm:$0xff]
    %v3647 = vld [vmem:[%s3644 + $0x10] sm:$0xff]
    %v3648 = vld [vmem:[%s3644 + $0x18] sm:$0xff]
    %3649 = vrot.lane.b32.xlu0 %v3628, 17
    %v3650 = vpop.permute.xlu0 %3649
    %3651 = vrot.lane.b32.xlu0 %v3632, 17
    %v3652 = vpop.permute.xlu0 %3651
    %3653 = vrot.lane.b32.xlu0 %v3636, 17
    %v3654 = vpop.permute.xlu0 %3653
    %3655 = vrot.lane.b32.xlu0 %v3640, 17
    %v3656 = vpop.permute.xlu0 %3655
    %3657 = vrot.lane.b32.xlu0 %v3629, 17
    %v3658 = vpop.permute.xlu0 %3657
    %3659 = vrot.lane.b32.xlu0 %v3633, 17
    %v3660 = vpop.permute.xlu0 %3659
    %3661 = vrot.lane.b32.xlu0 %v3637, 17
    %v3662 = vpop.permute.xlu0 %3661
    %3663 = vrot.lane.b32.xlu0 %v3641, 17
    %v3664 = vpop.permute.xlu0 %3663
    %3665 = vrot.lane.b32.xlu0 %v3630, 17
    %v3666 = vpop.permute.xlu0 %3665
    %3667 = vrot.lane.b32.xlu0 %v3634, 17
    %v3668 = vpop.permute.xlu0 %3667
    %3669 = vrot.lane.b32.xlu0 %v3638, 17
    %v3670 = vpop.permute.xlu0 %3669
    %3671 = vrot.lane.b32.xlu0 %v3642, 17
    %v3672 = vpop.permute.xlu0 %3671
    %3673 = vrot.lane.b32.xlu0 %v3631, 17
    %v3674 = vpop.permute.xlu0 %3673
    %3675 = vrot.lane.b32.xlu0 %v3635, 17
    %v3676 = vpop.permute.xlu0 %3675
    %3677 = vrot.lane.b32.xlu0 %v3639, 17
    %v3678 = vpop.permute.xlu0 %3677
    %3679 = vrot.lane.b32.xlu0 %v3643, 17
    %v3680 = vpop.permute.xlu0 %3679
    %v3681 = vsel %vm84, %v3666, %v3674
    %v3682 = vsel %vm84, %v3668, %v3676
    %v3683 = vsel %vm84, %v3670, %v3678
    %v3684 = vsel %vm84, %v3672, %v3680
    %v3685 = vsel %vm84, %v3658, %v3666
    %v3686 = vsel %vm84, %v3660, %v3668
    %v3687 = vsel %vm84, %v3662, %v3670
    %v3688 = vsel %vm84, %v3664, %v3672
    %v3689 = vsel %vm84, %v3650, %v3658
    %v3690 = vsel %vm84, %v3652, %v3660
    %v3691 = vsel %vm84, %v3654, %v3662
    %v3692 = vsel %vm84, %v3656, %v3664
    %v3693 = vsel %vm84, %v3674, %v3650
    %v3694 = vsel %vm84, %v3676, %v3652
    %v3695 = vsel %vm84, %v3678, %v3654
    %v3696 = vsel %vm84, %v3680, %v3656
    %v3697 = vld [vmem:[%s1] ss:$8 sm:$0xf]
    %v3699 = vlaneseq
    %v3700 = vshrl.u32 %v3699, 7
    %v3701 = vsub.s32 0, %v3700
    %v3702 = vrot.slane %v3697, %v3701
    %v3703 = vlaneseq
    %v3704 = vshrl.u32 %v3703, 7
    %v3705 = vsub.s32 1, %v3704
    %v3706 = vrot.slane %v3697, %v3705
    %v3707 = vlaneseq
    %v3708 = vshrl.u32 %v3707, 7
    %v3709 = vsub.s32 2, %v3708
    %v3710 = vrot.slane %v3697, %v3709
    %v3711 = vlaneseq
    %v3712 = vshrl.u32 %v3711, 7
    %v3713 = vsub.s32 3, %v3712
    %v3714 = vrot.slane %v3697, %v3713
    %v3719 = vmul.f32 %v3693, %v3702
    %v3720 = vmul.f32 %v3689, %v3706
    %v3721 = vmul.f32 %v3685, %v3710
    %v3722 = vmul.f32 %v3681, %v3714
    %v3723 = vmul.f32 %v3694, %v3702
    %v3724 = vmul.f32 %v3690, %v3706
    %v3725 = vmul.f32 %v3686, %v3710
    %v3726 = vmul.f32 %v3682, %v3714
    %v3727 = vmul.f32 %v3695, %v3702
    %v3728 = vmul.f32 %v3691, %v3706
    %v3729 = vmul.f32 %v3687, %v3710
    %v3730 = vmul.f32 %v3683, %v3714
    %v3731 = vmul.f32 %v3696, %v3702
    %v3732 = vmul.f32 %v3692, %v3706
    %v3733 = vmul.f32 %v3688, %v3710
    %v3734 = vmul.f32 %v3684, %v3714
    %3735 = vst [vmem:[#allocation2] sm:$0xff] %v3719
    %3736 = vst [vmem:[#allocation2 + $0x8] sm:$0xff] %v3720
    %3737 = vst [vmem:[#allocation2 + $0x10] sm:$0xff] %v3721
    %3738 = vst [vmem:[#allocation2 + $0x18] sm:$0xff] %v3722
    %3739 = vst [vmem:[#allocation2 + $0x20] sm:$0xff] %v3723
    %3740 = vst [vmem:[#allocation2 + $0x28] sm:$0xff] %v3724
    %3741 = vst [vmem:[#allocation2 + $0x30] sm:$0xff] %v3725
    %3742 = vst [vmem:[#allocation2 + $0x38] sm:$0xff] %v3726
    %3743 = vst [vmem:[#allocation2 + $0x40] sm:$0xff] %v3727
    %3744 = vst [vmem:[#allocation2 + $0x48] sm:$0xff] %v3728
    %3745 = vst [vmem:[#allocation2 + $0x50] sm:$0xff] %v3729
    %3746 = vst [vmem:[#allocation2 + $0x58] sm:$0xff] %v3730
    %3747 = vst [vmem:[#allocation2 + $0x60] sm:$0xff] %v3731
    %3748 = vst [vmem:[#allocation2 + $0x68] sm:$0xff] %v3732
    %3749 = vst [vmem:[#allocation2 + $0x70] sm:$0xff] %v3733
    %3750 = vst [vmem:[#allocation2 + $0x78] sm:$0xff] %v3734
    %3751 = vrot.lane.b32.xlu0 %v3628, 16
    %v3752 = vpop.permute.xlu0 %3751
    %3753 = vrot.lane.b32.xlu0 %v3632, 16
    %v3754 = vpop.permute.xlu0 %3753
    %3755 = vrot.lane.b32.xlu0 %v3636, 16
    %v3756 = vpop.permute.xlu0 %3755
    %3757 = vrot.lane.b32.xlu0 %v3640, 16
    %v3758 = vpop.permute.xlu0 %3757
    %3759 = vrot.lane.b32.xlu0 %v3629, 16
    %v3760 = vpop.permute.xlu0 %3759
    %3761 = vrot.lane.b32.xlu0 %v3633, 16
    %v3762 = vpop.permute.xlu0 %3761
    %3763 = vrot.lane.b32.xlu0 %v3637, 16
    %v3764 = vpop.permute.xlu0 %3763
    %3765 = vrot.lane.b32.xlu0 %v3641, 16
    %v3766 = vpop.permute.xlu0 %3765
    %3767 = vrot.lane.b32.xlu0 %v3630, 16
    %v3768 = vpop.permute.xlu0 %3767
    %3769 = vrot.lane.b32.xlu0 %v3634, 16
    %v3770 = vpop.permute.xlu0 %3769
    %3771 = vrot.lane.b32.xlu0 %v3638, 16
    %v3772 = vpop.permute.xlu0 %3771
    %3773 = vrot.lane.b32.xlu0 %v3642, 16
    %v3774 = vpop.permute.xlu0 %3773
    %3775 = vrot.lane.b32.xlu0 %v3631, 16
    %v3776 = vpop.permute.xlu0 %3775
    %3777 = vrot.lane.b32.xlu0 %v3635, 16
    %v3778 = vpop.permute.xlu0 %3777
    %3779 = vrot.lane.b32.xlu0 %v3639, 16
    %v3780 = vpop.permute.xlu0 %3779
    %3781 = vrot.lane.b32.xlu0 %v3643, 16
    %v3782 = vpop.permute.xlu0 %3781
    %v3783 = vsel %vm127, %v3768, %v3776
    %v3784 = vsel %vm127, %v3770, %v3778
    %v3785 = vsel %vm127, %v3772, %v3780
    %v3786 = vsel %vm127, %v3774, %v3782
    %v3787 = vsel %vm127, %v3760, %v3768
    %v3788 = vsel %vm127, %v3762, %v3770
    %v3789 = vsel %vm127, %v3764, %v3772
    %v3790 = vsel %vm127, %v3766, %v3774
    %v3791 = vsel %vm127, %v3752, %v3760
    %v3792 = vsel %vm127, %v3754, %v3762
    %v3793 = vsel %vm127, %v3756, %v3764
    %v3794 = vsel %vm127, %v3758, %v3766
    %v3795 = vsel %vm127, %v3776, %v3752
    %v3796 = vsel %vm127, %v3778, %v3754
    %v3797 = vsel %vm127, %v3780, %v3756
    %v3798 = vsel %vm127, %v3782, %v3758
    %v3799 = vld [vmem:[%s132] ss:$8 sm:$0xf]
    %v3801 = vlaneseq
    %v3802 = vshrl.u32 %v3801, 7
    %v3803 = vsub.s32 0, %v3802
    %v3804 = vrot.slane %v3799, %v3803
    %v3805 = vlaneseq
    %v3806 = vshrl.u32 %v3805, 7
    %v3807 = vsub.s32 1, %v3806
    %v3808 = vrot.slane %v3799, %v3807
    %v3809 = vlaneseq
    %v3810 = vshrl.u32 %v3809, 7
    %v3811 = vsub.s32 2, %v3810
    %v3812 = vrot.slane %v3799, %v3811
    %v3813 = vlaneseq
    %v3814 = vshrl.u32 %v3813, 7
    %v3815 = vsub.s32 3, %v3814
    %v3816 = vrot.slane %v3799, %v3815
    %v3821 = vmul.f32 %v3795, %v3804
    %v3822 = vmul.f32 %v3791, %v3808
    %v3823 = vmul.f32 %v3787, %v3812
    %v3824 = vmul.f32 %v3783, %v3816
    %v3825 = vmul.f32 %v3796, %v3804
    %v3826 = vmul.f32 %v3792, %v3808
    %v3827 = vmul.f32 %v3788, %v3812
    %v3828 = vmul.f32 %v3784, %v3816
    %v3829 = vmul.f32 %v3797, %v3804
    %v3830 = vmul.f32 %v3793, %v3808
    %v3831 = vmul.f32 %v3789, %v3812
    %v3832 = vmul.f32 %v3785, %v3816
    %v3833 = vmul.f32 %v3798, %v3804
    %v3834 = vmul.f32 %v3794, %v3808
    %v3835 = vmul.f32 %v3790, %v3812
    %v3836 = vmul.f32 %v3786, %v3816
    %3837 = vst [vmem:[#allocation2 + $0x80] sm:$0xff] %v3821
    %3838 = vst [vmem:[#allocation2 + $0x88] sm:$0xff] %v3822
    %3839 = vst [vmem:[#allocation2 + $0x90] sm:$0xff] %v3823
    %3840 = vst [vmem:[#allocation2 + $0x98] sm:$0xff] %v3824
    %3841 = vst [vmem:[#allocation2 + $0xa0] sm:$0xff] %v3825
    %3842 = vst [vmem:[#allocation2 + $0xa8] sm:$0xff] %v3826
    %3843 = vst [vmem:[#allocation2 + $0xb0] sm:$0xff] %v3827
    %3844 = vst [vmem:[#allocation2 + $0xb8] sm:$0xff] %v3828
    %3845 = vst [vmem:[#allocation2 + $0xc0] sm:$0xff] %v3829
    %3846 = vst [vmem:[#allocation2 + $0xc8] sm:$0xff] %v3830
    %3847 = vst [vmem:[#allocation2 + $0xd0] sm:$0xff] %v3831
    %3848 = vst [vmem:[#allocation2 + $0xd8] sm:$0xff] %v3832
    %3849 = vst [vmem:[#allocation2 + $0xe0] sm:$0xff] %v3833
    %3850 = vst [vmem:[#allocation2 + $0xe8] sm:$0xff] %v3834
    %3851 = vst [vmem:[#allocation2 + $0xf0] sm:$0xff] %v3835
    %3852 = vst [vmem:[#allocation2 + $0xf8] sm:$0xff] %v3836
    %3853 = vrot.lane.b32.xlu0 %v3628, 15
    %v3854 = vpop.permute.xlu0 %3853
    %3855 = vrot.lane.b32.xlu0 %v3632, 15
    %v3856 = vpop.permute.xlu0 %3855
    %3857 = vrot.lane.b32.xlu0 %v3636, 15
    %v3858 = vpop.permute.xlu0 %3857
    %3859 = vrot.lane.b32.xlu0 %v3640, 15
    %v3860 = vpop.permute.xlu0 %3859
    %3861 = vrot.lane.b32.xlu0 %v3629, 15
    %v3862 = vpop.permute.xlu0 %3861
    %3863 = vrot.lane.b32.xlu0 %v3633, 15
    %v3864 = vpop.permute.xlu0 %3863
    %3865 = vrot.lane.b32.xlu0 %v3637, 15
    %v3866 = vpop.permute.xlu0 %3865
    %3867 = vrot.lane.b32.xlu0 %v3641, 15
    %v3868 = vpop.permute.xlu0 %3867
    %3869 = vrot.lane.b32.xlu0 %v3630, 15
    %v3870 = vpop.permute.xlu0 %3869
    %3871 = vrot.lane.b32.xlu0 %v3634, 15
    %v3872 = vpop.permute.xlu0 %3871
    %3873 = vrot.lane.b32.xlu0 %v3638, 15
    %v3874 = vpop.permute.xlu0 %3873
    %3875 = vrot.lane.b32.xlu0 %v3642, 15
    %v3876 = vpop.permute.xlu0 %3875
    %3877 = vrot.lane.b32.xlu0 %v3631, 15
    %v3878 = vpop.permute.xlu0 %3877
    %3879 = vrot.lane.b32.xlu0 %v3635, 15
    %v3880 = vpop.permute.xlu0 %3879
    %3881 = vrot.lane.b32.xlu0 %v3639, 15
    %v3882 = vpop.permute.xlu0 %3881
    %3883 = vrot.lane.b32.xlu0 %v3643, 15
    %v3884 = vpop.permute.xlu0 %3883
    %v3885 = vsel %vm171, %v3870, %v3878
    %v3886 = vsel %vm171, %v3872, %v3880
    %v3887 = vsel %vm171, %v3874, %v3882
    %v3888 = vsel %vm171, %v3876, %v3884
    %v3889 = vsel %vm171, %v3862, %v3870
    %v3890 = vsel %vm171, %v3864, %v3872
    %v3891 = vsel %vm171, %v3866, %v3874
    %v3892 = vsel %vm171, %v3868, %v3876
    %v3893 = vsel %vm171, %v3854, %v3862
    %v3894 = vsel %vm171, %v3856, %v3864
    %v3895 = vsel %vm171, %v3858, %v3866
    %v3896 = vsel %vm171, %v3860, %v3868
    %v3897 = vsel %vm171, %v3878, %v3854
    %v3898 = vsel %vm171, %v3880, %v3856
    %v3899 = vsel %vm171, %v3882, %v3858
    %v3900 = vsel %vm171, %v3884, %v3860
    %v3901 = vld [vmem:[%s176] ss:$8 sm:$0xf]
    %v3903 = vlaneseq
    %v3904 = vshrl.u32 %v3903, 7
    %v3905 = vsub.s32 0, %v3904
    %v3906 = vrot.slane %v3901, %v3905
    %v3907 = vlaneseq
    %v3908 = vshrl.u32 %v3907, 7
    %v3909 = vsub.s32 1, %v3908
    %v3910 = vrot.slane %v3901, %v3909
    %v3911 = vlaneseq
    %v3912 = vshrl.u32 %v3911, 7
    %v3913 = vsub.s32 2, %v3912
    %v3914 = vrot.slane %v3901, %v3913
    %v3915 = vlaneseq
    %v3916 = vshrl.u32 %v3915, 7
    %v3917 = vsub.s32 3, %v3916
    %v3918 = vrot.slane %v3901, %v3917
    %v3923 = vmul.f32 %v3897, %v3906
    %v3924 = vmul.f32 %v3893, %v3910
    %v3925 = vmul.f32 %v3889, %v3914
    %v3926 = vmul.f32 %v3885, %v3918
    %v3927 = vmul.f32 %v3898, %v3906
    %v3928 = vmul.f32 %v3894, %v3910
    %v3929 = vmul.f32 %v3890, %v3914
    %v3930 = vmul.f32 %v3886, %v3918
    %v3931 = vmul.f32 %v3899, %v3906
    %v3932 = vmul.f32 %v3895, %v3910
    %v3933 = vmul.f32 %v3891, %v3914
    %v3934 = vmul.f32 %v3887, %v3918
    %v3935 = vmul.f32 %v3900, %v3906
    %v3936 = vmul.f32 %v3896, %v3910
    %v3937 = vmul.f32 %v3892, %v3914
    %v3938 = vmul.f32 %v3888, %v3918
    %3939 = vst [vmem:[#allocation2 + $0x100] sm:$0xff] %v3923
    %3940 = vst [vmem:[#allocation2 + $0x108] sm:$0xff] %v3924
    %3941 = vst [vmem:[#allocation2 + $0x110] sm:$0xff] %v3925
    %3942 = vst [vmem:[#allocation2 + $0x118] sm:$0xff] %v3926
    %3943 = vst [vmem:[#allocation2 + $0x120] sm:$0xff] %v3927
    %3944 = vst [vmem:[#allocation2 + $0x128] sm:$0xff] %v3928
    %3945 = vst [vmem:[#allocation2 + $0x130] sm:$0xff] %v3929
    %3946 = vst [vmem:[#allocation2 + $0x138] sm:$0xff] %v3930
    %3947 = vst [vmem:[#allocation2 + $0x140] sm:$0xff] %v3931
    %3948 = vst [vmem:[#allocation2 + $0x148] sm:$0xff] %v3932
    %3949 = vst [vmem:[#allocation2 + $0x150] sm:$0xff] %v3933
    %3950 = vst [vmem:[#allocation2 + $0x158] sm:$0xff] %v3934
    %3951 = vst [vmem:[#allocation2 + $0x160] sm:$0xff] %v3935
    %3952 = vst [vmem:[#allocation2 + $0x168] sm:$0xff] %v3936
    %3953 = vst [vmem:[#allocation2 + $0x170] sm:$0xff] %v3937
    %3954 = vst [vmem:[#allocation2 + $0x178] sm:$0xff] %v3938
    %3955 = vrot.lane.b32.xlu0 %v3628, 1
    %v3956 = vpop.permute.xlu0 %3955
    %3957 = vrot.lane.b32.xlu0 %v3632, 1
    %v3958 = vpop.permute.xlu0 %3957
    %3959 = vrot.lane.b32.xlu0 %v3636, 1
    %v3960 = vpop.permute.xlu0 %3959
    %3961 = vrot.lane.b32.xlu0 %v3640, 1
    %v3962 = vpop.permute.xlu0 %3961
    %3963 = vrot.lane.b32.xlu0 %v3629, 1
    %v3964 = vpop.permute.xlu0 %3963
    %3965 = vrot.lane.b32.xlu0 %v3633, 1
    %v3966 = vpop.permute.xlu0 %3965
    %3967 = vrot.lane.b32.xlu0 %v3637, 1
    %v3968 = vpop.permute.xlu0 %3967
    %3969 = vrot.lane.b32.xlu0 %v3641, 1
    %v3970 = vpop.permute.xlu0 %3969
    %3971 = vrot.lane.b32.xlu0 %v3630, 1
    %v3972 = vpop.permute.xlu0 %3971
    %3973 = vrot.lane.b32.xlu0 %v3634, 1
    %v3974 = vpop.permute.xlu0 %3973
    %3975 = vrot.lane.b32.xlu0 %v3638, 1
    %v3976 = vpop.permute.xlu0 %3975
    %3977 = vrot.lane.b32.xlu0 %v3642, 1
    %v3978 = vpop.permute.xlu0 %3977
    %3979 = vrot.lane.b32.xlu0 %v3631, 1
    %v3980 = vpop.permute.xlu0 %3979
    %3981 = vrot.lane.b32.xlu0 %v3635, 1
    %v3982 = vpop.permute.xlu0 %3981
    %3983 = vrot.lane.b32.xlu0 %v3639, 1
    %v3984 = vpop.permute.xlu0 %3983
    %3985 = vrot.lane.b32.xlu0 %v3643, 1
    %v3986 = vpop.permute.xlu0 %3985
    %v3987 = vsel %vm215, %v3972, %v3980
    %v3988 = vsel %vm215, %v3974, %v3982
    %v3989 = vsel %vm215, %v3976, %v3984
    %v3990 = vsel %vm215, %v3978, %v3986
    %v3991 = vsel %vm215, %v3964, %v3972
    %v3992 = vsel %vm215, %v3966, %v3974
    %v3993 = vsel %vm215, %v3968, %v3976
    %v3994 = vsel %vm215, %v3970, %v3978
    %v3995 = vsel %vm215, %v3956, %v3964
    %v3996 = vsel %vm215, %v3958, %v3966
    %v3997 = vsel %vm215, %v3960, %v3968
    %v3998 = vsel %vm215, %v3962, %v3970
    %v3999 = vsel %vm215, %v3980, %v3956
    %v4000 = vsel %vm215, %v3982, %v3958
    %v4001 = vsel %vm215, %v3984, %v3960
    %v4002 = vsel %vm215, %v3986, %v3962
    %v4003 = vld [vmem:[%s220] ss:$8 sm:$0xf]
    %v4005 = vlaneseq
    %v4006 = vshrl.u32 %v4005, 7
    %v4007 = vsub.s32 0, %v4006
    %v4008 = vrot.slane %v4003, %v4007
    %v4009 = vlaneseq
    %v4010 = vshrl.u32 %v4009, 7
    %v4011 = vsub.s32 1, %v4010
    %v4012 = vrot.slane %v4003, %v4011
    %v4013 = vlaneseq
    %v4014 = vshrl.u32 %v4013, 7
    %v4015 = vsub.s32 2, %v4014
    %v4016 = vrot.slane %v4003, %v4015
    %v4017 = vlaneseq
    %v4018 = vshrl.u32 %v4017, 7
    %v4019 = vsub.s32 3, %v4018
    %v4020 = vrot.slane %v4003, %v4019
    %v4025 = vmul.f32 %v3999, %v4008
    %v4026 = vmul.f32 %v3995, %v4012
    %v4027 = vmul.f32 %v3991, %v4016
    %v4028 = vmul.f32 %v3987, %v4020
    %v4029 = vmul.f32 %v4000, %v4008
    %v4030 = vmul.f32 %v3996, %v4012
    %v4031 = vmul.f32 %v3992, %v4016
    %v4032 = vmul.f32 %v3988, %v4020
    %v4033 = vmul.f32 %v4001, %v4008
    %v4034 = vmul.f32 %v3997, %v4012
    %v4035 = vmul.f32 %v3993, %v4016
    %v4036 = vmul.f32 %v3989, %v4020
    %v4037 = vmul.f32 %v4002, %v4008
    %v4038 = vmul.f32 %v3998, %v4012
    %v4039 = vmul.f32 %v3994, %v4016
    %v4040 = vmul.f32 %v3990, %v4020
    %4041 = vst [vmem:[#allocation2 + $0x180] sm:$0xff] %v4025
    %4042 = vst [vmem:[#allocation2 + $0x188] sm:$0xff] %v4026
    %4043 = vst [vmem:[#allocation2 + $0x190] sm:$0xff] %v4027
    %4044 = vst [vmem:[#allocation2 + $0x198] sm:$0xff] %v4028
    %4045 = vst [vmem:[#allocation2 + $0x1a0] sm:$0xff] %v4029
    %4046 = vst [vmem:[#allocation2 + $0x1a8] sm:$0xff] %v4030
    %4047 = vst [vmem:[#allocation2 + $0x1b0] sm:$0xff] %v4031
    %4048 = vst [vmem:[#allocation2 + $0x1b8] sm:$0xff] %v4032
    %4049 = vst [vmem:[#allocation2 + $0x1c0] sm:$0xff] %v4033
    %4050 = vst [vmem:[#allocation2 + $0x1c8] sm:$0xff] %v4034
    %4051 = vst [vmem:[#allocation2 + $0x1d0] sm:$0xff] %v4035
    %4052 = vst [vmem:[#allocation2 + $0x1d8] sm:$0xff] %v4036
    %4053 = vst [vmem:[#allocation2 + $0x1e0] sm:$0xff] %v4037
    %4054 = vst [vmem:[#allocation2 + $0x1e8] sm:$0xff] %v4038
    %4055 = vst [vmem:[#allocation2 + $0x1f0] sm:$0xff] %v4039
    %4056 = vst [vmem:[#allocation2 + $0x1f8] sm:$0xff] %v4040
    %4057 = vst [vmem:[#allocation2 + $0x200] sm:$0xff] %v3628
    %4058 = vst [vmem:[#allocation2 + $0x208] sm:$0xff] %v3629
    %4059 = vst [vmem:[#allocation2 + $0x210] sm:$0xff] %v3630
    %4060 = vst [vmem:[#allocation2 + $0x218] sm:$0xff] %v3631
    %4061 = vst [vmem:[#allocation2 + $0x220] sm:$0xff] %v3632
    %4062 = vst [vmem:[#allocation2 + $0x228] sm:$0xff] %v3633
    %4063 = vst [vmem:[#allocation2 + $0x230] sm:$0xff] %v3634
    %4064 = vst [vmem:[#allocation2 + $0x238] sm:$0xff] %v3635
    %4065 = vst [vmem:[#allocation2 + $0x240] sm:$0xff] %v3636
    %4066 = vst [vmem:[#allocation2 + $0x248] sm:$0xff] %v3637
    %4067 = vst [vmem:[#allocation2 + $0x250] sm:$0xff] %v3638
    %4068 = vst [vmem:[#allocation2 + $0x258] sm:$0xff] %v3639
    %4069 = vst [vmem:[#allocation2 + $0x260] sm:$0xff] %v3640
    %4070 = vst [vmem:[#allocation2 + $0x268] sm:$0xff] %v3641
    %4071 = vst [vmem:[#allocation2 + $0x270] sm:$0xff] %v3642
    %4072 = vst [vmem:[#allocation2 + $0x278] sm:$0xff] %v3643
    %4073 = vrot.lane.b32.xlu0 %v3628, 127
    %v4074 = vpop.permute.xlu0 %4073
    %4075 = vrot.lane.b32.xlu0 %v3632, 127
    %v4076 = vpop.permute.xlu0 %4075
    %4077 = vrot.lane.b32.xlu0 %v3636, 127
    %v4078 = vpop.permute.xlu0 %4077
    %4079 = vrot.lane.b32.xlu0 %v3640, 127
    %v4080 = vpop.permute.xlu0 %4079
    %4081 = vrot.lane.b32.xlu0 %v3629, 127
    %v4082 = vpop.permute.xlu0 %4081
    %4083 = vrot.lane.b32.xlu0 %v3633, 127
    %v4084 = vpop.permute.xlu0 %4083
    %4085 = vrot.lane.b32.xlu0 %v3637, 127
    %v4086 = vpop.permute.xlu0 %4085
    %4087 = vrot.lane.b32.xlu0 %v3641, 127
    %v4088 = vpop.permute.xlu0 %4087
    %4089 = vrot.lane.b32.xlu0 %v3630, 127
    %v4090 = vpop.permute.xlu0 %4089
    %4091 = vrot.lane.b32.xlu0 %v3634, 127
    %v4092 = vpop.permute.xlu0 %4091
    %4093 = vrot.lane.b32.xlu0 %v3638, 127
    %v4094 = vpop.permute.xlu0 %4093
    %4095 = vrot.lane.b32.xlu0 %v3642, 127
    %v4096 = vpop.permute.xlu0 %4095
    %4097 = vrot.lane.b32.xlu0 %v3631, 127
    %v4098 = vpop.permute.xlu0 %4097
    %4099 = vrot.lane.b32.xlu0 %v3635, 127
    %v4100 = vpop.permute.xlu0 %4099
    %4101 = vrot.lane.b32.xlu0 %v3639, 127
    %v4102 = vpop.permute.xlu0 %4101
    %4103 = vrot.lane.b32.xlu0 %v3643, 127
    %v4104 = vpop.permute.xlu0 %4103
    %v4105 = vsel %vm263, %v4090, %v4098
    %v4106 = vsel %vm263, %v4092, %v4100
    %v4107 = vsel %vm263, %v4094, %v4102
    %v4108 = vsel %vm263, %v4096, %v4104
    %v4109 = vsel %vm263, %v4082, %v4090
    %v4110 = vsel %vm263, %v4084, %v4092
    %v4111 = vsel %vm263, %v4086, %v4094
    %v4112 = vsel %vm263, %v4088, %v4096
    %v4113 = vsel %vm263, %v4074, %v4082
    %v4114 = vsel %vm263, %v4076, %v4084
    %v4115 = vsel %vm263, %v4078, %v4086
    %v4116 = vsel %vm263, %v4080, %v4088
    %v4117 = vsel %vm263, %v4098, %v4074
    %v4118 = vsel %vm263, %v4100, %v4076
    %v4119 = vsel %vm263, %v4102, %v4078
    %v4120 = vsel %vm263, %v4104, %v4080
    %v4121 = vld [vmem:[%s268] ss:$8 sm:$0xf]
    %v4123 = vlaneseq
    %v4124 = vshrl.u32 %v4123, 7
    %v4125 = vsub.s32 0, %v4124
    %v4126 = vrot.slane %v4121, %v4125
    %v4127 = vlaneseq
    %v4128 = vshrl.u32 %v4127, 7
    %v4129 = vsub.s32 1, %v4128
    %v4130 = vrot.slane %v4121, %v4129
    %v4131 = vlaneseq
    %v4132 = vshrl.u32 %v4131, 7
    %v4133 = vsub.s32 2, %v4132
    %v4134 = vrot.slane %v4121, %v4133
    %v4135 = vlaneseq
    %v4136 = vshrl.u32 %v4135, 7
    %v4137 = vsub.s32 3, %v4136
    %v4138 = vrot.slane %v4121, %v4137
    %v4143 = vmul.f32 %v4113, %v4126
    %v4144 = vmul.f32 %v4109, %v4130
    %v4145 = vmul.f32 %v4105, %v4134
    %v4146 = vmul.f32 %v4117, %v4138
    %v4147 = vmul.f32 %v4114, %v4126
    %v4148 = vmul.f32 %v4110, %v4130
    %v4149 = vmul.f32 %v4106, %v4134
    %v4150 = vmul.f32 %v4118, %v4138
    %v4151 = vmul.f32 %v4115, %v4126
    %v4152 = vmul.f32 %v4111, %v4130
    %v4153 = vmul.f32 %v4107, %v4134
    %v4154 = vmul.f32 %v4119, %v4138
    %v4155 = vmul.f32 %v4116, %v4126
    %v4156 = vmul.f32 %v4112, %v4130
    %v4157 = vmul.f32 %v4108, %v4134
    %v4158 = vmul.f32 %v4120, %v4138
    %4159 = vst [vmem:[#allocation2 + $0x280] sm:$0xff] %v4143
    %4160 = vst [vmem:[#allocation2 + $0x288] sm:$0xff] %v4144
    %4161 = vst [vmem:[#allocation2 + $0x290] sm:$0xff] %v4145
    %4162 = vst [vmem:[#allocation2 + $0x298] sm:$0xff] %v4146
    %4163 = vst [vmem:[#allocation2 + $0x2a0] sm:$0xff] %v4147
    %4164 = vst [vmem:[#allocation2 + $0x2a8] sm:$0xff] %v4148
    %4165 = vst [vmem:[#allocation2 + $0x2b0] sm:$0xff] %v4149
    %4166 = vst [vmem:[#allocation2 + $0x2b8] sm:$0xff] %v4150
    %4167 = vst [vmem:[#allocation2 + $0x2c0] sm:$0xff] %v4151
    %4168 = vst [vmem:[#allocation2 + $0x2c8] sm:$0xff] %v4152
    %4169 = vst [vmem:[#allocation2 + $0x2d0] sm:$0xff] %v4153
    %4170 = vst [vmem:[#allocation2 + $0x2d8] sm:$0xff] %v4154
    %4171 = vst [vmem:[#allocation2 + $0x2e0] sm:$0xff] %v4155
    %4172 = vst [vmem:[#allocation2 + $0x2e8] sm:$0xff] %v4156
    %4173 = vst [vmem:[#allocation2 + $0x2f0] sm:$0xff] %v4157
    %4174 = vst [vmem:[#allocation2 + $0x2f8] sm:$0xff] %v4158
    %4175 = vrot.lane.b32.xlu0 %v3628, 113
    %v4176 = vpop.permute.xlu0 %4175
    %4177 = vrot.lane.b32.xlu0 %v3632, 113
    %v4178 = vpop.permute.xlu0 %4177
    %4179 = vrot.lane.b32.xlu0 %v3636, 113
    %v4180 = vpop.permute.xlu0 %4179
    %4181 = vrot.lane.b32.xlu0 %v3640, 113
    %v4182 = vpop.permute.xlu0 %4181
    %4183 = vrot.lane.b32.xlu0 %v3629, 113
    %v4184 = vpop.permute.xlu0 %4183
    %4185 = vrot.lane.b32.xlu0 %v3633, 113
    %v4186 = vpop.permute.xlu0 %4185
    %4187 = vrot.lane.b32.xlu0 %v3637, 113
    %v4188 = vpop.permute.xlu0 %4187
    %4189 = vrot.lane.b32.xlu0 %v3641, 113
    %v4190 = vpop.permute.xlu0 %4189
    %4191 = vrot.lane.b32.xlu0 %v3630, 113
    %v4192 = vpop.permute.xlu0 %4191
    %4193 = vrot.lane.b32.xlu0 %v3634, 113
    %v4194 = vpop.permute.xlu0 %4193
    %4195 = vrot.lane.b32.xlu0 %v3638, 113
    %v4196 = vpop.permute.xlu0 %4195
    %4197 = vrot.lane.b32.xlu0 %v3642, 113
    %v4198 = vpop.permute.xlu0 %4197
    %4199 = vrot.lane.b32.xlu0 %v3631, 113
    %v4200 = vpop.permute.xlu0 %4199
    %4201 = vrot.lane.b32.xlu0 %v3635, 113
    %v4202 = vpop.permute.xlu0 %4201
    %4203 = vrot.lane.b32.xlu0 %v3639, 113
    %v4204 = vpop.permute.xlu0 %4203
    %4205 = vrot.lane.b32.xlu0 %v3643, 113
    %v4206 = vpop.permute.xlu0 %4205
    %v4207 = vsel %vm307, %v4192, %v4200
    %v4208 = vsel %vm307, %v4194, %v4202
    %v4209 = vsel %vm307, %v4196, %v4204
    %v4210 = vsel %vm307, %v4198, %v4206
    %v4211 = vsel %vm307, %v4184, %v4192
    %v4212 = vsel %vm307, %v4186, %v4194
    %v4213 = vsel %vm307, %v4188, %v4196
    %v4214 = vsel %vm307, %v4190, %v4198
    %v4215 = vsel %vm307, %v4176, %v4184
    %v4216 = vsel %vm307, %v4178, %v4186
    %v4217 = vsel %vm307, %v4180, %v4188
    %v4218 = vsel %vm307, %v4182, %v4190
    %v4219 = vsel %vm307, %v4200, %v4176
    %v4220 = vsel %vm307, %v4202, %v4178
    %v4221 = vsel %vm307, %v4204, %v4180
    %v4222 = vsel %vm307, %v4206, %v4182
    %v4223 = vld [vmem:[%s312] ss:$8 sm:$0xf]
    %v4225 = vlaneseq
    %v4226 = vshrl.u32 %v4225, 7
    %v4227 = vsub.s32 0, %v4226
    %v4228 = vrot.slane %v4223, %v4227
    %v4229 = vlaneseq
    %v4230 = vshrl.u32 %v4229, 7
    %v4231 = vsub.s32 1, %v4230
    %v4232 = vrot.slane %v4223, %v4231
    %v4233 = vlaneseq
    %v4234 = vshrl.u32 %v4233, 7
    %v4235 = vsub.s32 2, %v4234
    %v4236 = vrot.slane %v4223, %v4235
    %v4237 = vlaneseq
    %v4238 = vshrl.u32 %v4237, 7
    %v4239 = vsub.s32 3, %v4238
    %v4240 = vrot.slane %v4223, %v4239
    %v4245 = vmul.f32 %v4215, %v4228
    %v4246 = vmul.f32 %v4211, %v4232
    %v4247 = vmul.f32 %v4207, %v4236
    %v4248 = vmul.f32 %v4219, %v4240
    %v4249 = vmul.f32 %v4216, %v4228
    %v4250 = vmul.f32 %v4212, %v4232
    %v4251 = vmul.f32 %v4208, %v4236
    %v4252 = vmul.f32 %v4220, %v4240
    %v4253 = vmul.f32 %v4217, %v4228
    %v4254 = vmul.f32 %v4213, %v4232
    %v4255 = vmul.f32 %v4209, %v4236
    %v4256 = vmul.f32 %v4221, %v4240
    %v4257 = vmul.f32 %v4218, %v4228
    %v4258 = vmul.f32 %v4214, %v4232
    %v4259 = vmul.f32 %v4210, %v4236
    %v4260 = vmul.f32 %v4222, %v4240
    %4261 = vst [vmem:[#allocation2 + $0x300] sm:$0xff] %v4245
    %4262 = vst [vmem:[#allocation2 + $0x308] sm:$0xff] %v4246
    %4263 = vst [vmem:[#allocation2 + $0x310] sm:$0xff] %v4247
    %4264 = vst [vmem:[#allocation2 + $0x318] sm:$0xff] %v4248
    %4265 = vst [vmem:[#allocation2 + $0x320] sm:$0xff] %v4249
    %4266 = vst [vmem:[#allocation2 + $0x328] sm:$0xff] %v4250
    %4267 = vst [vmem:[#allocation2 + $0x330] sm:$0xff] %v4251
    %4268 = vst [vmem:[#allocation2 + $0x338] sm:$0xff] %v4252
    %4269 = vst [vmem:[#allocation2 + $0x340] sm:$0xff] %v4253
    %4270 = vst [vmem:[#allocation2 + $0x348] sm:$0xff] %v4254
    %4271 = vst [vmem:[#allocation2 + $0x350] sm:$0xff] %v4255
    %4272 = vst [vmem:[#allocation2 + $0x358] sm:$0xff] %v4256
    %4273 = vst [vmem:[#allocation2 + $0x360] sm:$0xff] %v4257
    %4274 = vst [vmem:[#allocation2 + $0x368] sm:$0xff] %v4258
    %4275 = vst [vmem:[#allocation2 + $0x370] sm:$0xff] %v4259
    %4276 = vst [vmem:[#allocation2 + $0x378] sm:$0xff] %v4260
    %4277 = vrot.lane.b32.xlu0 %v3628, 112
    %v4278 = vpop.permute.xlu0 %4277
    %4279 = vrot.lane.b32.xlu0 %v3632, 112
    %v4280 = vpop.permute.xlu0 %4279
    %4281 = vrot.lane.b32.xlu0 %v3636, 112
    %v4282 = vpop.permute.xlu0 %4281
    %4283 = vrot.lane.b32.xlu0 %v3640, 112
    %v4284 = vpop.permute.xlu0 %4283
    %4285 = vrot.lane.b32.xlu0 %v3629, 112
    %v4286 = vpop.permute.xlu0 %4285
    %4287 = vrot.lane.b32.xlu0 %v3633, 112
    %v4288 = vpop.permute.xlu0 %4287
    %4289 = vrot.lane.b32.xlu0 %v3637, 112
    %v4290 = vpop.permute.xlu0 %4289
    %4291 = vrot.lane.b32.xlu0 %v3641, 112
    %v4292 = vpop.permute.xlu0 %4291
    %4293 = vrot.lane.b32.xlu0 %v3630, 112
    %v4294 = vpop.permute.xlu0 %4293
    %4295 = vrot.lane.b32.xlu0 %v3634, 112
    %v4296 = vpop.permute.xlu0 %4295
    %4297 = vrot.lane.b32.xlu0 %v3638, 112
    %v4298 = vpop.permute.xlu0 %4297
    %4299 = vrot.lane.b32.xlu0 %v3642, 112
    %v4300 = vpop.permute.xlu0 %4299
    %4301 = vrot.lane.b32.xlu0 %v3631, 112
    %v4302 = vpop.permute.xlu0 %4301
    %4303 = vrot.lane.b32.xlu0 %v3635, 112
    %v4304 = vpop.permute.xlu0 %4303
    %4305 = vrot.lane.b32.xlu0 %v3639, 112
    %v4306 = vpop.permute.xlu0 %4305
    %4307 = vrot.lane.b32.xlu0 %v3643, 112
    %v4308 = vpop.permute.xlu0 %4307
    %v4309 = vsel %vm351, %v4294, %v4302
    %v4310 = vsel %vm351, %v4296, %v4304
    %v4311 = vsel %vm351, %v4298, %v4306
    %v4312 = vsel %vm351, %v4300, %v4308
    %v4313 = vsel %vm351, %v4286, %v4294
    %v4314 = vsel %vm351, %v4288, %v4296
    %v4315 = vsel %vm351, %v4290, %v4298
    %v4316 = vsel %vm351, %v4292, %v4300
    %v4317 = vsel %vm351, %v4278, %v4286
    %v4318 = vsel %vm351, %v4280, %v4288
    %v4319 = vsel %vm351, %v4282, %v4290
    %v4320 = vsel %vm351, %v4284, %v4292
    %v4321 = vsel %vm351, %v4302, %v4278
    %v4322 = vsel %vm351, %v4304, %v4280
    %v4323 = vsel %vm351, %v4306, %v4282
    %v4324 = vsel %vm351, %v4308, %v4284
    %v4325 = vld [vmem:[%s356] ss:$8 sm:$0xf]
    %v4327 = vlaneseq
    %v4328 = vshrl.u32 %v4327, 7
    %v4329 = vsub.s32 0, %v4328
    %v4330 = vrot.slane %v4325, %v4329
    %v4331 = vlaneseq
    %v4332 = vshrl.u32 %v4331, 7
    %v4333 = vsub.s32 1, %v4332
    %v4334 = vrot.slane %v4325, %v4333
    %v4335 = vlaneseq
    %v4336 = vshrl.u32 %v4335, 7
    %v4337 = vsub.s32 2, %v4336
    %v4338 = vrot.slane %v4325, %v4337
    %v4339 = vlaneseq
    %v4340 = vshrl.u32 %v4339, 7
    %v4341 = vsub.s32 3, %v4340
    %v4342 = vrot.slane %v4325, %v4341
    %v4347 = vmul.f32 %v4317, %v4330
    %v4348 = vmul.f32 %v4313, %v4334
    %v4349 = vmul.f32 %v4309, %v4338
    %v4350 = vmul.f32 %v4321, %v4342
    %v4351 = vmul.f32 %v4318, %v4330
    %v4352 = vmul.f32 %v4314, %v4334
    %v4353 = vmul.f32 %v4310, %v4338
    %v4354 = vmul.f32 %v4322, %v4342
    %v4355 = vmul.f32 %v4319, %v4330
    %v4356 = vmul.f32 %v4315, %v4334
    %v4357 = vmul.f32 %v4311, %v4338
    %v4358 = vmul.f32 %v4323, %v4342
    %v4359 = vmul.f32 %v4320, %v4330
    %v4360 = vmul.f32 %v4316, %v4334
    %v4361 = vmul.f32 %v4312, %v4338
    %v4362 = vmul.f32 %v4324, %v4342
    %4363 = vst [vmem:[#allocation2 + $0x380] sm:$0xff] %v4347
    %4364 = vst [vmem:[#allocation2 + $0x388] sm:$0xff] %v4348
    %4365 = vst [vmem:[#allocation2 + $0x390] sm:$0xff] %v4349
    %4366 = vst [vmem:[#allocation2 + $0x398] sm:$0xff] %v4350
    %4367 = vst [vmem:[#allocation2 + $0x3a0] sm:$0xff] %v4351
    %4368 = vst [vmem:[#allocation2 + $0x3a8] sm:$0xff] %v4352
    %4369 = vst [vmem:[#allocation2 + $0x3b0] sm:$0xff] %v4353
    %4370 = vst [vmem:[#allocation2 + $0x3b8] sm:$0xff] %v4354
    %4371 = vst [vmem:[#allocation2 + $0x3c0] sm:$0xff] %v4355
    %4372 = vst [vmem:[#allocation2 + $0x3c8] sm:$0xff] %v4356
    %4373 = vst [vmem:[#allocation2 + $0x3d0] sm:$0xff] %v4357
    %4374 = vst [vmem:[#allocation2 + $0x3d8] sm:$0xff] %v4358
    %4375 = vst [vmem:[#allocation2 + $0x3e0] sm:$0xff] %v4359
    %4376 = vst [vmem:[#allocation2 + $0x3e8] sm:$0xff] %v4360
    %4377 = vst [vmem:[#allocation2 + $0x3f0] sm:$0xff] %v4361
    %4378 = vst [vmem:[#allocation2 + $0x3f8] sm:$0xff] %v4362
    %4379 = vrot.lane.b32.xlu0 %v3628, 111
    %v4380 = vpop.permute.xlu0 %4379
    %4381 = vrot.lane.b32.xlu0 %v3632, 111
    %v4382 = vpop.permute.xlu0 %4381
    %4383 = vrot.lane.b32.xlu0 %v3636, 111
    %v4384 = vpop.permute.xlu0 %4383
    %4385 = vrot.lane.b32.xlu0 %v3640, 111
    %v4386 = vpop.permute.xlu0 %4385
    %4387 = vrot.lane.b32.xlu0 %v3629, 111
    %v4388 = vpop.permute.xlu0 %4387
    %4389 = vrot.lane.b32.xlu0 %v3633, 111
    %v4390 = vpop.permute.xlu0 %4389
    %4391 = vrot.lane.b32.xlu0 %v3637, 111
    %v4392 = vpop.permute.xlu0 %4391
    %4393 = vrot.lane.b32.xlu0 %v3641, 111
    %v4394 = vpop.permute.xlu0 %4393
    %4395 = vrot.lane.b32.xlu0 %v3630, 111
    %v4396 = vpop.permute.xlu0 %4395
    %4397 = vrot.lane.b32.xlu0 %v3634, 111
    %v4398 = vpop.permute.xlu0 %4397
    %4399 = vrot.lane.b32.xlu0 %v3638, 111
    %v4400 = vpop.permute.xlu0 %4399
    %4401 = vrot.lane.b32.xlu0 %v3642, 111
    %v4402 = vpop.permute.xlu0 %4401
    %4403 = vrot.lane.b32.xlu0 %v3631, 111
    %v4404 = vpop.permute.xlu0 %4403
    %4405 = vrot.lane.b32.xlu0 %v3635, 111
    %v4406 = vpop.permute.xlu0 %4405
    %4407 = vrot.lane.b32.xlu0 %v3639, 111
    %v4408 = vpop.permute.xlu0 %4407
    %4409 = vrot.lane.b32.xlu0 %v3643, 111
    %v4410 = vpop.permute.xlu0 %4409
    %v4411 = vsel %vm395, %v4396, %v4404
    %v4412 = vsel %vm395, %v4398, %v4406
    %v4413 = vsel %vm395, %v4400, %v4408
    %v4414 = vsel %vm395, %v4402, %v4410
    %v4415 = vsel %vm395, %v4388, %v4396
    %v4416 = vsel %vm395, %v4390, %v4398
    %v4417 = vsel %vm395, %v4392, %v4400
    %v4418 = vsel %vm395, %v4394, %v4402
    %v4419 = vsel %vm395, %v4380, %v4388
    %v4420 = vsel %vm395, %v4382, %v4390
    %v4421 = vsel %vm395, %v4384, %v4392
    %v4422 = vsel %vm395, %v4386, %v4394
    %v4423 = vsel %vm395, %v4404, %v4380
    %v4424 = vsel %vm395, %v4406, %v4382
    %v4425 = vsel %vm395, %v4408, %v4384
    %v4426 = vsel %vm395, %v4410, %v4386
    %v4427 = vld [vmem:[%s400] ss:$8 sm:$0xf]
    %v4429 = vlaneseq
    %v4430 = vshrl.u32 %v4429, 7
    %v4431 = vsub.s32 0, %v4430
    %v4432 = vrot.slane %v4427, %v4431
    %v4433 = vlaneseq
    %v4434 = vshrl.u32 %v4433, 7
    %v4435 = vsub.s32 1, %v4434
    %v4436 = vrot.slane %v4427, %v4435
    %v4437 = vlaneseq
    %v4438 = vshrl.u32 %v4437, 7
    %v4439 = vsub.s32 2, %v4438
    %v4440 = vrot.slane %v4427, %v4439
    %v4441 = vlaneseq
    %v4442 = vshrl.u32 %v4441, 7
    %v4443 = vsub.s32 3, %v4442
    %v4444 = vrot.slane %v4427, %v4443
    %v4449 = vmul.f32 %v4419, %v4432
    %v4450 = vmul.f32 %v4415, %v4436
    %v4451 = vmul.f32 %v4411, %v4440
    %v4452 = vmul.f32 %v4423, %v4444
    %v4453 = vmul.f32 %v4420, %v4432
    %v4454 = vmul.f32 %v4416, %v4436
    %v4455 = vmul.f32 %v4412, %v4440
    %v4456 = vmul.f32 %v4424, %v4444
    %v4457 = vmul.f32 %v4421, %v4432
    %v4458 = vmul.f32 %v4417, %v4436
    %v4459 = vmul.f32 %v4413, %v4440
    %v4460 = vmul.f32 %v4425, %v4444
    %v4461 = vmul.f32 %v4422, %v4432
    %v4462 = vmul.f32 %v4418, %v4436
    %v4463 = vmul.f32 %v4414, %v4440
    %v4464 = vmul.f32 %v4426, %v4444
    %4465 = vst [vmem:[#allocation2 + $0x400] sm:$0xff] %v4449
    %4466 = vst [vmem:[#allocation2 + $0x408] sm:$0xff] %v4450
    %4467 = vst [vmem:[#allocation2 + $0x410] sm:$0xff] %v4451
    %4468 = vst [vmem:[#allocation2 + $0x418] sm:$0xff] %v4452
    %4469 = vst [vmem:[#allocation2 + $0x420] sm:$0xff] %v4453
    %4470 = vst [vmem:[#allocation2 + $0x428] sm:$0xff] %v4454
    %4471 = vst [vmem:[#allocation2 + $0x430] sm:$0xff] %v4455
    %4472 = vst [vmem:[#allocation2 + $0x438] sm:$0xff] %v4456
    %4473 = vst [vmem:[#allocation2 + $0x440] sm:$0xff] %v4457
    %4474 = vst [vmem:[#allocation2 + $0x448] sm:$0xff] %v4458
    %4475 = vst [vmem:[#allocation2 + $0x450] sm:$0xff] %v4459
    %4476 = vst [vmem:[#allocation2 + $0x458] sm:$0xff] %v4460
    %4477 = vst [vmem:[#allocation2 + $0x460] sm:$0xff] %v4461
    %4478 = vst [vmem:[#allocation2 + $0x468] sm:$0xff] %v4462
    %4479 = vst [vmem:[#allocation2 + $0x470] sm:$0xff] %v4463
    %4480 = vst [vmem:[#allocation2 + $0x478] sm:$0xff] %v4464
    %v4481 = vld [vmem:[#allocation2] sm:$0xff]
    %v4482 = vld [vmem:[#allocation2 + $0x8] sm:$0xff]
    %v4483 = vld [vmem:[#allocation2 + $0x10] sm:$0xff]
    %v4484 = vld [vmem:[#allocation2 + $0x18] sm:$0xff]
    %v4485 = vld [vmem:[#allocation2 + $0x20] sm:$0xff]
    %v4486 = vld [vmem:[#allocation2 + $0x28] sm:$0xff]
    %v4487 = vld [vmem:[#allocation2 + $0x30] sm:$0xff]
    %v4488 = vld [vmem:[#allocation2 + $0x38] sm:$0xff]
    %v4489 = vld [vmem:[#allocation2 + $0x40] sm:$0xff]
    %v4490 = vld [vmem:[#allocation2 + $0x48] sm:$0xff]
    %v4491 = vld [vmem:[#allocation2 + $0x50] sm:$0xff]
    %v4492 = vld [vmem:[#allocation2 + $0x58] sm:$0xff]
    %v4493 = vld [vmem:[#allocation2 + $0x60] sm:$0xff]
    %v4494 = vld [vmem:[#allocation2 + $0x68] sm:$0xff]
    %v4495 = vld [vmem:[#allocation2 + $0x70] sm:$0xff]
    %v4496 = vld [vmem:[#allocation2 + $0x78] sm:$0xff]
    %v4497 = vld [vmem:[#allocation2 + $0x80] sm:$0xff]
    %v4498 = vld [vmem:[#allocation2 + $0x88] sm:$0xff]
    %v4499 = vld [vmem:[#allocation2 + $0x90] sm:$0xff]
    %v4500 = vld [vmem:[#allocation2 + $0x98] sm:$0xff]
    %v4501 = vld [vmem:[#allocation2 + $0xa0] sm:$0xff]
    %v4502 = vld [vmem:[#allocation2 + $0xa8] sm:$0xff]
    %v4503 = vld [vmem:[#allocation2 + $0xb0] sm:$0xff]
    %v4504 = vld [vmem:[#allocation2 + $0xb8] sm:$0xff]
    %v4505 = vld [vmem:[#allocation2 + $0xc0] sm:$0xff]
    %v4506 = vld [vmem:[#allocation2 + $0xc8] sm:$0xff]
    %v4507 = vld [vmem:[#allocation2 + $0xd0] sm:$0xff]
    %v4508 = vld [vmem:[#allocation2 + $0xd8] sm:$0xff]
    %v4509 = vld [vmem:[#allocation2 + $0xe0] sm:$0xff]
    %v4510 = vld [vmem:[#allocation2 + $0xe8] sm:$0xff]
    %v4511 = vld [vmem:[#allocation2 + $0xf0] sm:$0xff]
    %v4512 = vld [vmem:[#allocation2 + $0xf8] sm:$0xff]
    %v4513 = vld [vmem:[#allocation2 + $0x100] sm:$0xff]
    %v4514 = vld [vmem:[#allocation2 + $0x108] sm:$0xff]
    %v4515 = vld [vmem:[#allocation2 + $0x110] sm:$0xff]
    %v4516 = vld [vmem:[#allocation2 + $0x118] sm:$0xff]
    %v4517 = vld [vmem:[#allocation2 + $0x120] sm:$0xff]
    %v4518 = vld [vmem:[#allocation2 + $0x128] sm:$0xff]
    %v4519 = vld [vmem:[#allocation2 + $0x130] sm:$0xff]
    %v4520 = vld [vmem:[#allocation2 + $0x138] sm:$0xff]
    %v4521 = vld [vmem:[#allocation2 + $0x140] sm:$0xff]
    %v4522 = vld [vmem:[#allocation2 + $0x148] sm:$0xff]
    %v4523 = vld [vmem:[#allocation2 + $0x150] sm:$0xff]
    %v4524 = vld [vmem:[#allocation2 + $0x158] sm:$0xff]
    %v4525 = vld [vmem:[#allocation2 + $0x160] sm:$0xff]
    %v4526 = vld [vmem:[#allocation2 + $0x168] sm:$0xff]
    %v4527 = vld [vmem:[#allocation2 + $0x170] sm:$0xff]
    %v4528 = vld [vmem:[#allocation2 + $0x178] sm:$0xff]
    %v4529 = vld [vmem:[#allocation2 + $0x180] sm:$0xff]
    %v4530 = vld [vmem:[#allocation2 + $0x188] sm:$0xff]
    %v4531 = vld [vmem:[#allocation2 + $0x190] sm:$0xff]
    %v4532 = vld [vmem:[#allocation2 + $0x198] sm:$0xff]
    %v4533 = vld [vmem:[#allocation2 + $0x1a0] sm:$0xff]
    %v4534 = vld [vmem:[#allocation2 + $0x1a8] sm:$0xff]
    %v4535 = vld [vmem:[#allocation2 + $0x1b0] sm:$0xff]
    %v4536 = vld [vmem:[#allocation2 + $0x1b8] sm:$0xff]
    %v4537 = vld [vmem:[#allocation2 + $0x1c0] sm:$0xff]
    %v4538 = vld [vmem:[#allocation2 + $0x1c8] sm:$0xff]
    %v4539 = vld [vmem:[#allocation2 + $0x1d0] sm:$0xff]
    %v4540 = vld [vmem:[#allocation2 + $0x1d8] sm:$0xff]
    %v4541 = vld [vmem:[#allocation2 + $0x1e0] sm:$0xff]
    %v4542 = vld [vmem:[#allocation2 + $0x1e8] sm:$0xff]
    %v4543 = vld [vmem:[#allocation2 + $0x1f0] sm:$0xff]
    %v4544 = vld [vmem:[#allocation2 + $0x1f8] sm:$0xff]
    %v4545 = vld [vmem:[#allocation2 + $0x200] sm:$0xff]
    %v4546 = vld [vmem:[#allocation2 + $0x208] sm:$0xff]
    %v4547 = vld [vmem:[#allocation2 + $0x210] sm:$0xff]
    %v4548 = vld [vmem:[#allocation2 + $0x218] sm:$0xff]
    %v4549 = vld [vmem:[#allocation2 + $0x220] sm:$0xff]
    %v4550 = vld [vmem:[#allocation2 + $0x228] sm:$0xff]
    %v4551 = vld [vmem:[#allocation2 + $0x230] sm:$0xff]
    %v4552 = vld [vmem:[#allocation2 + $0x238] sm:$0xff]
    %v4553 = vld [vmem:[#allocation2 + $0x240] sm:$0xff]
    %v4554 = vld [vmem:[#allocation2 + $0x248] sm:$0xff]
    %v4555 = vld [vmem:[#allocation2 + $0x250] sm:$0xff]
    %v4556 = vld [vmem:[#allocation2 + $0x258] sm:$0xff]
    %v4557 = vld [vmem:[#allocation2 + $0x260] sm:$0xff]
    %v4558 = vld [vmem:[#allocation2 + $0x268] sm:$0xff]
    %v4559 = vld [vmem:[#allocation2 + $0x270] sm:$0xff]
    %v4560 = vld [vmem:[#allocation2 + $0x278] sm:$0xff]
    %v4561 = vld [vmem:[#allocation2 + $0x280] sm:$0xff]
    %v4562 = vld [vmem:[#allocation2 + $0x288] sm:$0xff]
    %v4563 = vld [vmem:[#allocation2 + $0x290] sm:$0xff]
    %v4564 = vld [vmem:[#allocation2 + $0x298] sm:$0xff]
    %v4565 = vld [vmem:[#allocation2 + $0x2a0] sm:$0xff]
    %v4566 = vld [vmem:[#allocation2 + $0x2a8] sm:$0xff]
    %v4567 = vld [vmem:[#allocation2 + $0x2b0] sm:$0xff]
    %v4568 = vld [vmem:[#allocation2 + $0x2b8] sm:$0xff]
    %v4569 = vld [vmem:[#allocation2 + $0x2c0] sm:$0xff]
    %v4570 = vld [vmem:[#allocation2 + $0x2c8] sm:$0xff]
    %v4571 = vld [vmem:[#allocation2 + $0x2d0] sm:$0xff]
    %v4572 = vld [vmem:[#allocation2 + $0x2d8] sm:$0xff]
    %v4573 = vld [vmem:[#allocation2 + $0x2e0] sm:$0xff]
    %v4574 = vld [vmem:[#allocation2 + $0x2e8] sm:$0xff]
    %v4575 = vld [vmem:[#allocation2 + $0x2f0] sm:$0xff]
    %v4576 = vld [vmem:[#allocation2 + $0x2f8] sm:$0xff]
    %v4577 = vld [vmem:[#allocation2 + $0x300] sm:$0xff]
    %v4578 = vld [vmem:[#allocation2 + $0x308] sm:$0xff]
    %v4579 = vld [vmem:[#allocation2 + $0x310] sm:$0xff]
    %v4580 = vld [vmem:[#allocation2 + $0x318] sm:$0xff]
    %v4581 = vld [vmem:[#allocation2 + $0x320] sm:$0xff]
    %v4582 = vld [vmem:[#allocation2 + $0x328] sm:$0xff]
    %v4583 = vld [vmem:[#allocation2 + $0x330] sm:$0xff]
    %v4584 = vld [vmem:[#allocation2 + $0x338] sm:$0xff]
    %v4585 = vld [vmem:[#allocation2 + $0x340] sm:$0xff]
    %v4586 = vld [vmem:[#allocation2 + $0x348] sm:$0xff]
    %v4587 = vld [vmem:[#allocation2 + $0x350] sm:$0xff]
    %v4588 = vld [vmem:[#allocation2 + $0x358] sm:$0xff]
    %v4589 = vld [vmem:[#allocation2 + $0x360] sm:$0xff]
    %v4590 = vld [vmem:[#allocation2 + $0x368] sm:$0xff]
    %v4591 = vld [vmem:[#allocation2 + $0x370] sm:$0xff]
    %v4592 = vld [vmem:[#allocation2 + $0x378] sm:$0xff]
    %v4593 = vld [vmem:[#allocation2 + $0x380] sm:$0xff]
    %v4594 = vld [vmem:[#allocation2 + $0x388] sm:$0xff]
    %v4595 = vld [vmem:[#allocation2 + $0x390] sm:$0xff]
    %v4596 = vld [vmem:[#allocation2 + $0x398] sm:$0xff]
    %v4597 = vld [vmem:[#allocation2 + $0x3a0] sm:$0xff]
    %v4598 = vld [vmem:[#allocation2 + $0x3a8] sm:$0xff]
    %v4599 = vld [vmem:[#allocation2 + $0x3b0] sm:$0xff]
    %v4600 = vld [vmem:[#allocation2 + $0x3b8] sm:$0xff]
    %v4601 = vld [vmem:[#allocation2 + $0x3c0] sm:$0xff]
    %v4602 = vld [vmem:[#allocation2 + $0x3c8] sm:$0xff]
    %v4603 = vld [vmem:[#allocation2 + $0x3d0] sm:$0xff]
    %v4604 = vld [vmem:[#allocation2 + $0x3d8] sm:$0xff]
    %v4605 = vld [vmem:[#allocation2 + $0x3e0] sm:$0xff]
    %v4606 = vld [vmem:[#allocation2 + $0x3e8] sm:$0xff]
    %v4607 = vld [vmem:[#allocation2 + $0x3f0] sm:$0xff]
    %v4608 = vld [vmem:[#allocation2 + $0x3f8] sm:$0xff]
    %v4609 = vld [vmem:[#allocation2 + $0x400] sm:$0xff]
    %v4610 = vld [vmem:[#allocation2 + $0x408] sm:$0xff]
    %v4611 = vld [vmem:[#allocation2 + $0x410] sm:$0xff]
    %v4612 = vld [vmem:[#allocation2 + $0x418] sm:$0xff]
    %v4613 = vld [vmem:[#allocation2 + $0x420] sm:$0xff]
    %v4614 = vld [vmem:[#allocation2 + $0x428] sm:$0xff]
    %v4615 = vld [vmem:[#allocation2 + $0x430] sm:$0xff]
    %v4616 = vld [vmem:[#allocation2 + $0x438] sm:$0xff]
    %v4617 = vld [vmem:[#allocation2 + $0x440] sm:$0xff]
    %v4618 = vld [vmem:[#allocation2 + $0x448] sm:$0xff]
    %v4619 = vld [vmem:[#allocation2 + $0x450] sm:$0xff]
    %v4620 = vld [vmem:[#allocation2 + $0x458] sm:$0xff]
    %v4621 = vld [vmem:[#allocation2 + $0x460] sm:$0xff]
    %v4622 = vld [vmem:[#allocation2 + $0x468] sm:$0xff]
    %v4623 = vld [vmem:[#allocation2 + $0x470] sm:$0xff]
    %v4624 = vld [vmem:[#allocation2 + $0x478] sm:$0xff]
    %4626 = vset.pattern.permute.xlu0 0
    %4627 = vperm.xlu0 %4626, %v3645
    %v4628 = vpop.permute.xlu0 %4627
    %4631 = vset.pattern.permute.xlu0 0
    %4632 = vperm.xlu0 %4631, %v3646
    %v4633 = vpop.permute.xlu0 %4632
    %4636 = vset.pattern.permute.xlu0 0
    %4637 = vperm.xlu0 %4636, %v3647
    %v4638 = vpop.permute.xlu0 %4637
    %4641 = vset.pattern.permute.xlu0 0
    %4642 = vperm.xlu0 %4641, %v3648
    %v4643 = vpop.permute.xlu0 %4642
    %v4646 = vsel %vm1784, %v3605, 0
    %v4649 = vsel %vm1784, %v3608, 0
    %v4652 = vsel %vm1784, %v3611, 0
    %v4655 = vsel %vm1784, %v3614, 0
    %4657 = vmatprep.subr.mxu0 %v4482
    %4658 = vmatpush1.msra.mxu0 %v4481
    %4659 = vmatprep.subr.mxu0 %v4486
    %4660 = vmatpush1.msra.mxu0 %v4485
    %4661 = vmatprep.subr.mxu0 %v4490
    %4662 = vmatpush1.msra.mxu0 %v4489
    %4663 = vmatprep.subr.mxu0 %v4494
    %4664 = vmatpush1.msra.mxu0 %v4493
    %4665 = vmatprep.subr.mxu0 %v4498
    %4666 = vmatpush1.msra.mxu0 %v4497
    %4667 = vmatprep.subr.mxu0 %v4502
    %4668 = vmatpush1.msra.mxu0 %v4501
    %4669 = vmatprep.subr.mxu0 %v4506
    %4670 = vmatpush1.msra.mxu0 %v4505
    %4671 = vmatprep.subr.mxu0 %v4510
    %4672 = vmatpush1.msra.mxu0 %v4509
    %4673 = vmatprep.subr.mxu0 %v4514
    %4674 = vmatpush1.msra.mxu0 %v4513
    %4675 = vmatprep.subr.mxu0 %v4518
    %4676 = vmatpush1.msra.mxu0 %v4517
    %4677 = vmatprep.subr.mxu0 %v4522
    %4678 = vmatpush1.msra.mxu0 %v4521
    %4679 = vmatprep.subr.mxu0 %v4526
    %4680 = vmatpush1.msra.mxu0 %v4525
    %4681 = vmatprep.subr.mxu0 %v4530
    %4682 = vmatpush1.msra.mxu0 %v4529
    %4683 = vmatprep.subr.mxu0 %v4534
    %4684 = vmatpush1.msra.mxu0 %v4533
    %4685 = vmatprep.subr.mxu0 %v4538
    %4686 = vmatpush1.msra.mxu0 %v4537
    %4687 = vmatprep.subr.mxu0 %v4542
    %4688 = vmatpush1.msra.mxu0 %v4541
    %4689 = vmatprep.subr.mxu0 %v4546
    %4690 = vmatpush1.msra.mxu0 %v4545
    %4691 = vmatprep.subr.mxu0 %v4550
    %4692 = vmatpush1.msra.mxu0 %v4549
    %4693 = vmatprep.subr.mxu0 %v4554
    %4694 = vmatpush1.msra.mxu0 %v4553
    %4695 = vmatprep.subr.mxu0 %v4558
    %4696 = vmatpush1.msra.mxu0 %v4557
    %4697 = vmatprep.subr.mxu0 %v4562
    %4698 = vmatpush1.msra.mxu0 %v4561
    %4699 = vmatprep.subr.mxu0 %v4566
    %4700 = vmatpush1.msra.mxu0 %v4565
    %4701 = vmatprep.subr.mxu0 %v4570
    %4702 = vmatpush1.msra.mxu0 %v4569
    %4703 = vmatprep.subr.mxu0 %v4574
    %4704 = vmatpush1.msra.mxu0 %v4573
    %4705 = vmatprep.subr.mxu0 %v4578
    %4706 = vmatpush1.msra.mxu0 %v4577
    %4707 = vmatprep.subr.mxu0 %v4582
    %4708 = vmatpush1.msra.mxu0 %v4581
    %4709 = vmatprep.subr.mxu0 %v4586
    %4710 = vmatpush1.msra.mxu0 %v4585
    %4711 = vmatprep.subr.mxu0 %v4590
    %4712 = vmatpush1.msra.mxu0 %v4589
    %4713 = vmatprep.subr.mxu0 %v4594
    %4714 = vmatpush1.msra.mxu0 %v4593
    %4715 = vmatprep.subr.mxu0 %v4598
    %4716 = vmatpush1.msra.mxu0 %v4597
    %4717 = vmatprep.subr.mxu0 %v4602
    %4718 = vmatpush1.msra.mxu0 %v4601
    %4719 = vmatprep.subr.mxu0 %v4606
    %4720 = vmatpush1.msra.mxu0 %v4605
    %4721 = vmatprep.mubr.f32.mxu0 %v3604
    %4722 = vmatmul.mubr.f32.gmra.mrb[0].mxu0 %v3603
    %v4723 = vpop.f32.mrb[0].mxu0
    %v4724 = vadd.f32 %v4628, %v4723
    %v4725 = vpop.f32.mrb[0].mxu0
    %v4726 = vadd.f32 %v4628, %v4725
    %4727 = vmatprep.mubr.f32.mxu0 %v3607
    %4728 = vmatmul.mubr.f32.gmra.mrb[0].mxu0 %v3606
    %v4729 = vpop.f32.mrb[0].mxu0
    %v4730 = vadd.f32 %v4633, %v4729
    %v4731 = vpop.f32.mrb[0].mxu0
    %v4732 = vadd.f32 %v4633, %v4731
    %4733 = vmatprep.mubr.f32.mxu0 %v3610
    %4734 = vmatmul.mubr.f32.gmra.mrb[0].mxu0 %v3609
    %v4735 = vpop.f32.mrb[0].mxu0
    %v4736 = vadd.f32 %v4638, %v4735
    %v4737 = vpop.f32.mrb[0].mxu0
    %v4738 = vadd.f32 %v4638, %v4737
    %4739 = vmatprep.mubr.f32.mxu0 %v3613
    %4740 = vmatmul.mubr.f32.gmra.mrb[0].mxu0 %v3612
    %v4741 = vpop.f32.mrb[0].mxu0
    %v4742 = vadd.f32 %v4643, %v4741
    %v4743 = vpop.f32.mrb[0].mxu0
    %v4744 = vadd.f32 %v4643, %v4743
    %4745 = vdwg.mxu0
    %4746 = vmatprep.subr.mxu0 %v4610
    %4747 = vmatpush1.msra.mxu0 %v4609
    %4748 = vmatprep.subr.mxu0 %v4614
    %4749 = vmatpush1.msra.mxu0 %v4613
    %4750 = vmatprep.subr.mxu0 %v4618
    %4751 = vmatpush1.msra.mxu0 %v4617
    %4752 = vmatprep.subr.mxu0 %v4622
    %4753 = vmatpush1.msra.mxu0 %v4621
    %4754 = vmatprep.subr.mxu0 0.0
    %4755 = vmatpush1.msra.mxu0 0.0
    %4756 = vmatprep.subr.mxu0 0.0
    %4757 = vmatpush1.msra.mxu0 0.0
    %4758 = vmatprep.subr.mxu0 0.0
    %4759 = vmatpush1.msra.mxu0 0.0
    %4760 = vmatprep.subr.mxu0 0.0
    %4761 = vmatpush1.msra.mxu0 0.0
    %4762 = vmatprep.subr.mxu0 0.0
    %4763 = vmatpush1.msra.mxu0 0.0
    %4764 = vmatprep.subr.mxu0 0.0
    %4765 = vmatpush1.msra.mxu0 0.0
    %4766 = vmatprep.subr.mxu0 0.0
    %4767 = vmatpush1.msra.mxu0 0.0
    %4768 = vmatprep.subr.mxu0 0.0
    %4769 = vmatpush1.msra.mxu0 0.0
    %4770 = vmatprep.subr.mxu0 0.0
    %4771 = vmatpush1.msra.mxu0 0.0
    %4772 = vmatprep.subr.mxu0 0.0
    %4773 = vmatpush1.msra.mxu0 0.0
    %4774 = vmatprep.subr.mxu0 0.0
    %4775 = vmatpush1.msra.mxu0 0.0
    %4776 = vmatprep.subr.mxu0 0.0
    %4777 = vmatpush1.msra.mxu0 0.0
    %4778 = vmatprep.subr.mxu0 0.0
    %4779 = vmatpush1.msra.mxu0 0.0
    %4780 = vmatprep.subr.mxu0 0.0
    %4781 = vmatpush1.msra.mxu0 0.0
    %4782 = vmatprep.subr.mxu0 0.0
    %4783 = vmatpush1.msra.mxu0 0.0
    %4784 = vmatprep.subr.mxu0 0.0
    %4785 = vmatpush1.msra.mxu0 0.0
    %4786 = vmatprep.subr.mxu0 0.0
    %4787 = vmatpush1.msra.mxu0 0.0
    %4788 = vmatprep.subr.mxu0 0.0
    %4789 = vmatpush1.msra.mxu0 0.0
    %4790 = vmatprep.subr.mxu0 0.0
    %4791 = vmatpush1.msra.mxu0 0.0
    %4792 = vmatprep.subr.mxu0 0.0
    %4793 = vmatpush1.msra.mxu0 0.0
    %4794 = vmatprep.subr.mxu0 0.0
    %4795 = vmatpush1.msra.mxu0 0.0
    %4796 = vmatprep.subr.mxu0 0.0
    %4797 = vmatpush1.msra.mxu0 0.0
    %4798 = vmatprep.subr.mxu0 0.0
    %4799 = vmatpush1.msra.mxu0 0.0
    %4800 = vmatprep.subr.mxu0 0.0
    %4801 = vmatpush1.msra.mxu0 0.0
    %4802 = vmatprep.subr.mxu0 0.0
    %4803 = vmatpush1.msra.mxu0 0.0
    %4804 = vmatprep.subr.mxu0 0.0
    %4805 = vmatpush1.msra.mxu0 0.0
    %4806 = vmatprep.subr.mxu0 0.0
    %4807 = vmatpush1.msra.mxu0 0.0
    %4808 = vmatprep.subr.mxu0 0.0
    %4809 = vmatpush1.msra.mxu0 0.0
    %4810 = vmatprep.mubr.f32.mxu0 0.0
    %4811 = vmatmul.mubr.f32.gmra.mrb[0].mxu0 %v4646
    %v4812 = vpop.f32.mrb[0].mxu0
    %v4813 = vadd.f32 %v4724, %v4812
    %v4814 = vpop.f32.mrb[0].mxu0
    %v4815 = vadd.f32 %v4726, %v4814
    %4816 = vmatprep.mubr.f32.mxu0 0.0
    %4817 = vmatmul.mubr.f32.gmra.mrb[0].mxu0 %v4649
    %v4818 = vpop.f32.mrb[0].mxu0
    %v4819 = vadd.f32 %v4730, %v4818
    %v4820 = vpop.f32.mrb[0].mxu0
    %v4821 = vadd.f32 %v4732, %v4820
    %4822 = vmatprep.mubr.f32.mxu0 0.0
    %4823 = vmatmul.mubr.f32.gmra.mrb[0].mxu0 %v4652
    %v4824 = vpop.f32.mrb[0].mxu0
    %v4825 = vadd.f32 %v4736, %v4824
    %v4826 = vpop.f32.mrb[0].mxu0
    %v4827 = vadd.f32 %v4738, %v4826
    %4828 = vmatprep.mubr.f32.mxu0 0.0
    %4829 = vmatmul.mubr.f32.gmra.mrb[0].mxu0 %v4655
    %v4830 = vpop.f32.mrb[0].mxu0
    %v4831 = vadd.f32 %v4742, %v4830
    %v4832 = vpop.f32.mrb[0].mxu0
    %v4833 = vadd.f32 %v4744, %v4832
    %4834 = vdwg.mxu0
    %4835 = vmatprep.subr.mxu0 %v4484
    %4836 = vmatpush1.msra.mxu0 %v4483
    %4837 = vmatprep.subr.mxu0 %v4488
    %4838 = vmatpush1.msra.mxu0 %v4487
    %4839 = vmatprep.subr.mxu0 %v4492
    %4840 = vmatpush1.msra.mxu0 %v4491
    %4841 = vmatprep.subr.mxu0 %v4496
    %4842 = vmatpush1.msra.mxu0 %v4495
    %4843 = vmatprep.subr.mxu0 %v4500
    %4844 = vmatpush1.msra.mxu0 %v4499
    %4845 = vmatprep.subr.mxu0 %v4504
    %4846 = vmatpush1.msra.mxu0 %v4503
    %4847 = vmatprep.subr.mxu0 %v4508
    %4848 = vmatpush1.msra.mxu0 %v4507
    %4849 = vmatprep.subr.mxu0 %v4512
    %4850 = vmatpush1.msra.mxu0 %v4511
    %4851 = vmatprep.subr.mxu0 %v4516
    %4852 = vmatpush1.msra.mxu0 %v4515
    %4853 = vmatprep.subr.mxu0 %v4520
    %4854 = vmatpush1.msra.mxu0 %v4519
    %4855 = vmatprep.subr.mxu0 %v4524
    %4856 = vmatpush1.msra.mxu0 %v4523
    %4857 = vmatprep.subr.mxu0 %v4528
    %4858 = vmatpush1.msra.mxu0 %v4527
    %4859 = vmatprep.subr.mxu0 %v4532
    %4860 = vmatpush1.msra.mxu0 %v4531
    %4861 = vmatprep.subr.mxu0 %v4536
    %4862 = vmatpush1.msra.mxu0 %v4535
    %4863 = vmatprep.subr.mxu0 %v4540
    %4864 = vmatpush1.msra.mxu0 %v4539
    %4865 = vmatprep.subr.mxu0 %v4544
    %4866 = vmatpush1.msra.mxu0 %v4543
    %4867 = vmatprep.subr.mxu0 %v4548
    %4868 = vmatpush1.msra.mxu0 %v4547
    %4869 = vmatprep.subr.mxu0 %v4552
    %4870 = vmatpush1.msra.mxu0 %v4551
    %4871 = vmatprep.subr.mxu0 %v4556
    %4872 = vmatpush1.msra.mxu0 %v4555
    %4873 = vmatprep.subr.mxu0 %v4560
    %4874 = vmatpush1.msra.mxu0 %v4559
    %4875 = vmatprep.subr.mxu0 %v4564
    %4876 = vmatpush1.msra.mxu0 %v4563
    %4877 = vmatprep.subr.mxu0 %v4568
    %4878 = vmatpush1.msra.mxu0 %v4567
    %4879 = vmatprep.subr.mxu0 %v4572
    %4880 = vmatpush1.msra.mxu0 %v4571
    %4881 = vmatprep.subr.mxu0 %v4576
    %4882 = vmatpush1.msra.mxu0 %v4575
    %4883 = vmatprep.subr.mxu0 %v4580
    %4884 = vmatpush1.msra.mxu0 %v4579
    %4885 = vmatprep.subr.mxu0 %v4584
    %4886 = vmatpush1.msra.mxu0 %v4583
    %4887 = vmatprep.subr.mxu0 %v4588
    %4888 = vmatpush1.msra.mxu0 %v4587
    %4889 = vmatprep.subr.mxu0 %v4592
    %4890 = vmatpush1.msra.mxu0 %v4591
    %4891 = vmatprep.subr.mxu0 %v4596
    %4892 = vmatpush1.msra.mxu0 %v4595
    %4893 = vmatprep.subr.mxu0 %v4600
    %4894 = vmatpush1.msra.mxu0 %v4599
    %4895 = vmatprep.subr.mxu0 %v4604
    %4896 = vmatpush1.msra.mxu0 %v4603
    %4897 = vmatprep.subr.mxu0 %v4608
    %4898 = vmatpush1.msra.mxu0 %v4607
    %4899 = vmatprep.mubr.f32.mxu0 %v3604
    %4900 = vmatmul.mubr.f32.gmra.mrb[0].mxu0 %v3603
    %v4901 = vpop.f32.mrb[0].mxu0
    %v4902 = vadd.f32 %v4628, %v4901
    %v4903 = vpop.f32.mrb[0].mxu0
    %v4904 = vadd.f32 %v4628, %v4903
    %4905 = vmatprep.mubr.f32.mxu0 %v3607
    %4906 = vmatmul.mubr.f32.gmra.mrb[0].mxu0 %v3606
    %v4907 = vpop.f32.mrb[0].mxu0
    %v4908 = vadd.f32 %v4633, %v4907
    %v4909 = vpop.f32.mrb[0].mxu0
    %v4910 = vadd.f32 %v4633, %v4909
    %4911 = vmatprep.mubr.f32.mxu0 %v3610
    %4912 = vmatmul.mubr.f32.gmra.mrb[0].mxu0 %v3609
    %v4913 = vpop.f32.mrb[0].mxu0
    %v4914 = vadd.f32 %v4638, %v4913
    %v4915 = vpop.f32.mrb[0].mxu0
    %v4916 = vadd.f32 %v4638, %v4915
    %4917 = vmatprep.mubr.f32.mxu0 %v3613
    %4918 = vmatmul.mubr.f32.gmra.mrb[0].mxu0 %v3612
    %v4919 = vpop.f32.mrb[0].mxu0
    %v4920 = vadd.f32 %v4643, %v4919
    %v4921 = vpop.f32.mrb[0].mxu0
    %v4922 = vadd.f32 %v4643, %v4921
    %4923 = vdwg.mxu0
    %4924 = vmatprep.subr.mxu0 %v4612
    %4925 = vmatpush1.msra.mxu0 %v4611
    %4926 = vmatprep.subr.mxu0 %v4616
    %4927 = vmatpush1.msra.mxu0 %v4615
    %4928 = vmatprep.subr.mxu0 %v4620
    %4929 = vmatpush1.msra.mxu0 %v4619
    %4930 = vmatprep.subr.mxu0 %v4624
    %4931 = vmatpush1.msra.mxu0 %v4623
    %4932 = vmatprep.subr.mxu0 0.0
    %4933 = vmatpush1.msra.mxu0 0.0
    %4934 = vmatprep.subr.mxu0 0.0
    %4935 = vmatpush1.msra.mxu0 0.0
    %4936 = vmatprep.subr.mxu0 0.0
    %4937 = vmatpush1.msra.mxu0 0.0
    %4938 = vmatprep.subr.mxu0 0.0
    %4939 = vmatpush1.msra.mxu0 0.0
    %4940 = vmatprep.subr.mxu0 0.0
    %4941 = vmatpush1.msra.mxu0 0.0
    %4942 = vmatprep.subr.mxu0 0.0
    %4943 = vmatpush1.msra.mxu0 0.0
    %4944 = vmatprep.subr.mxu0 0.0
    %4945 = vmatpush1.msra.mxu0 0.0
    %4946 = vmatprep.subr.mxu0 0.0
    %4947 = vmatpush1.msra.mxu0 0.0
    %4948 = vmatprep.subr.mxu0 0.0
    %4949 = vmatpush1.msra.mxu0 0.0
    %4950 = vmatprep.subr.mxu0 0.0
    %4951 = vmatpush1.msra.mxu0 0.0
    %4952 = vmatprep.subr.mxu0 0.0
    %4953 = vmatpush1.msra.mxu0 0.0
    %4954 = vmatprep.subr.mxu0 0.0
    %4955 = vmatpush1.msra.mxu0 0.0
    %4956 = vmatprep.subr.mxu0 0.0
    %4957 = vmatpush1.msra.mxu0 0.0
    %4958 = vmatprep.subr.mxu0 0.0
    %4959 = vmatpush1.msra.mxu0 0.0
    %4960 = vmatprep.subr.mxu0 0.0
    %4961 = vmatpush1.msra.mxu0 0.0
    %4962 = vmatprep.subr.mxu0 0.0
    %4963 = vmatpush1.msra.mxu0 0.0
    %4964 = vmatprep.subr.mxu0 0.0
    %4965 = vmatpush1.msra.mxu0 0.0
    %4966 = vmatprep.subr.mxu0 0.0
    %4967 = vmatpush1.msra.mxu0 0.0
    %4968 = vmatprep.subr.mxu0 0.0
    %4969 = vmatpush1.msra.mxu0 0.0
    %4970 = vmatprep.subr.mxu0 0.0
    %4971 = vmatpush1.msra.mxu0 0.0
    %4972 = vmatprep.subr.mxu0 0.0
    %4973 = vmatpush1.msra.mxu0 0.0
    %4974 = vmatprep.subr.mxu0 0.0
    %4975 = vmatpush1.msra.mxu0 0.0
    %4976 = vmatprep.subr.mxu0 0.0
    %4977 = vmatpush1.msra.mxu0 0.0
    %4978 = vmatprep.subr.mxu0 0.0
    %4979 = vmatpush1.msra.mxu0 0.0
    %4980 = vmatprep.subr.mxu0 0.0
    %4981 = vmatpush1.msra.mxu0 0.0
    %4982 = vmatprep.subr.mxu0 0.0
    %4983 = vmatpush1.msra.mxu0 0.0
    %4984 = vmatprep.subr.mxu0 0.0
    %4985 = vmatpush1.msra.mxu0 0.0
    %4986 = vmatprep.subr.mxu0 0.0
    %4987 = vmatpush1.msra.mxu0 0.0
    %4988 = vmatprep.mubr.f32.mxu0 0.0
    %4989 = vmatmul.mubr.f32.gmra.mrb[0].mxu0 %v4646
    %v4990 = vpop.f32.mrb[0].mxu0
    %v4991 = vadd.f32 %v4902, %v4990
    %v4992 = vpop.f32.mrb[0].mxu0
    %v4993 = vadd.f32 %v4904, %v4992
    %4994 = vmatprep.mubr.f32.mxu0 0.0
    %4995 = vmatmul.mubr.f32.gmra.mrb[0].mxu0 %v4649
    %v4996 = vpop.f32.mrb[0].mxu0
    %v4997 = vadd.f32 %v4908, %v4996
    %v4998 = vpop.f32.mrb[0].mxu0
    %v4999 = vadd.f32 %v4910, %v4998
    %5000 = vmatprep.mubr.f32.mxu0 0.0
    %5001 = vmatmul.mubr.f32.gmra.mrb[0].mxu0 %v4652
    %v5002 = vpop.f32.mrb[0].mxu0
    %v5003 = vadd.f32 %v4914, %v5002
    %v5004 = vpop.f32.mrb[0].mxu0
    %v5005 = vadd.f32 %v4916, %v5004
    %5006 = vmatprep.mubr.f32.mxu0 0.0
    %5007 = vmatmul.mubr.f32.gmra.mrb[0].mxu0 %v4655
    %v5008 = vpop.f32.mrb[0].mxu0
    %v5009 = vadd.f32 %v4920, %v5008
    %v5010 = vpop.f32.mrb[0].mxu0
    %v5011 = vadd.f32 %v4922, %v5010
    %5012 = vdwg.mxu0
    %v5013 = vmax.f32 %v4813, 0.0
    %v5014 = vmax.f32 %v4815, 0.0
    %v5015 = vmax.f32 %v4991, 0.0
    %v5016 = vmax.f32 %v4993, 0.0
    %v5017 = vmax.f32 %v4819, 0.0
    %v5018 = vmax.f32 %v4821, 0.0
    %v5019 = vmax.f32 %v4997, 0.0
    %v5020 = vmax.f32 %v4999, 0.0
    %v5021 = vmax.f32 %v4825, 0.0
    %v5022 = vmax.f32 %v4827, 0.0
    %v5023 = vmax.f32 %v5003, 0.0
    %v5024 = vmax.f32 %v5005, 0.0
    %v5025 = vmax.f32 %v4831, 0.0
    %v5026 = vmax.f32 %v4833, 0.0
    %v5027 = vmax.f32 %v5009, 0.0
    %v5028 = vmax.f32 %v5011, 0.0
    %s5029 = scalar_lea.vmem [#allocation8], 128
    %v5030 = vld [vmem:[%s5029] sm:$0xff]
    %v5031 = vld [vmem:[%s5029 + $0x8] sm:$0xff]
    %v5032 = vld [vmem:[%s5029 + $0x10] sm:$0xff]
    %v5033 = vld [vmem:[%s5029 + $0x18] sm:$0xff]
    %5034 = vrot.lane.b32.xlu0 %v5013, 17
    %v5035 = vpop.permute.xlu0 %5034
    %5036 = vrot.lane.b32.xlu0 %v5017, 17
    %v5037 = vpop.permute.xlu0 %5036
    %5038 = vrot.lane.b32.xlu0 %v5021, 17
    %v5039 = vpop.permute.xlu0 %5038
    %5040 = vrot.lane.b32.xlu0 %v5025, 17
    %v5041 = vpop.permute.xlu0 %5040
    %5042 = vrot.lane.b32.xlu0 %v5014, 17
    %v5043 = vpop.permute.xlu0 %5042
    %5044 = vrot.lane.b32.xlu0 %v5018, 17
    %v5045 = vpop.permute.xlu0 %5044
    %5046 = vrot.lane.b32.xlu0 %v5022, 17
    %v5047 = vpop.permute.xlu0 %5046
    %5048 = vrot.lane.b32.xlu0 %v5026, 17
    %v5049 = vpop.permute.xlu0 %5048
    %5050 = vrot.lane.b32.xlu0 %v5015, 17
    %v5051 = vpop.permute.xlu0 %5050
    %5052 = vrot.lane.b32.xlu0 %v5019, 17
    %v5053 = vpop.permute.xlu0 %5052
    %5054 = vrot.lane.b32.xlu0 %v5023, 17
    %v5055 = vpop.permute.xlu0 %5054
    %5056 = vrot.lane.b32.xlu0 %v5027, 17
    %v5057 = vpop.permute.xlu0 %5056
    %5058 = vrot.lane.b32.xlu0 %v5016, 17
    %v5059 = vpop.permute.xlu0 %5058
    %5060 = vrot.lane.b32.xlu0 %v5020, 17
    %v5061 = vpop.permute.xlu0 %5060
    %5062 = vrot.lane.b32.xlu0 %v5024, 17
    %v5063 = vpop.permute.xlu0 %5062
    %5064 = vrot.lane.b32.xlu0 %v5028, 17
    %v5065 = vpop.permute.xlu0 %5064
    %v5066 = vsel %vm84, %v5051, %v5059
    %v5067 = vsel %vm84, %v5053, %v5061
    %v5068 = vsel %vm84, %v5055, %v5063
    %v5069 = vsel %vm84, %v5057, %v5065
    %v5070 = vsel %vm84, %v5043, %v5051
    %v5071 = vsel %vm84, %v5045, %v5053
    %v5072 = vsel %vm84, %v5047, %v5055
    %v5073 = vsel %vm84, %v5049, %v5057
    %v5074 = vsel %vm84, %v5035, %v5043
    %v5075 = vsel %vm84, %v5037, %v5045
    %v5076 = vsel %vm84, %v5039, %v5047
    %v5077 = vsel %vm84, %v5041, %v5049
    %v5078 = vsel %vm84, %v5059, %v5035
    %v5079 = vsel %vm84, %v5061, %v5037
    %v5080 = vsel %vm84, %v5063, %v5039
    %v5081 = vsel %vm84, %v5065, %v5041
    %v5082 = vld [vmem:[%s1] ss:$8 sm:$0xf]
    %v5084 = vlaneseq
    %v5085 = vshrl.u32 %v5084, 7
    %v5086 = vsub.s32 0, %v5085
    %v5087 = vrot.slane %v5082, %v5086
    %v5088 = vlaneseq
    %v5089 = vshrl.u32 %v5088, 7
    %v5090 = vsub.s32 1, %v5089
    %v5091 = vrot.slane %v5082, %v5090
    %v5092 = vlaneseq
    %v5093 = vshrl.u32 %v5092, 7
    %v5094 = vsub.s32 2, %v5093
    %v5095 = vrot.slane %v5082, %v5094
    %v5096 = vlaneseq
    %v5097 = vshrl.u32 %v5096, 7
    %v5098 = vsub.s32 3, %v5097
    %v5099 = vrot.slane %v5082, %v5098
    %v5104 = vmul.f32 %v5078, %v5087
    %v5105 = vmul.f32 %v5074, %v5091
    %v5106 = vmul.f32 %v5070, %v5095
    %v5107 = vmul.f32 %v5066, %v5099
    %v5108 = vmul.f32 %v5079, %v5087
    %v5109 = vmul.f32 %v5075, %v5091
    %v5110 = vmul.f32 %v5071, %v5095
    %v5111 = vmul.f32 %v5067, %v5099
    %v5112 = vmul.f32 %v5080, %v5087
    %v5113 = vmul.f32 %v5076, %v5091
    %v5114 = vmul.f32 %v5072, %v5095
    %v5115 = vmul.f32 %v5068, %v5099
    %v5116 = vmul.f32 %v5081, %v5087
    %v5117 = vmul.f32 %v5077, %v5091
    %v5118 = vmul.f32 %v5073, %v5095
    %v5119 = vmul.f32 %v5069, %v5099
    %5120 = vst [vmem:[#allocation2] sm:$0xff] %v5104
    %5121 = vst [vmem:[#allocation2 + $0x8] sm:$0xff] %v5105
    %5122 = vst [vmem:[#allocation2 + $0x10] sm:$0xff] %v5106
    %5123 = vst [vmem:[#allocation2 + $0x18] sm:$0xff] %v5107
    %5124 = vst [vmem:[#allocation2 + $0x20] sm:$0xff] %v5108
    %5125 = vst [vmem:[#allocation2 + $0x28] sm:$0xff] %v5109
    %5126 = vst [vmem:[#allocation2 + $0x30] sm:$0xff] %v5110
    %5127 = vst [vmem:[#allocation2 + $0x38] sm:$0xff] %v5111
    %5128 = vst [vmem:[#allocation2 + $0x40] sm:$0xff] %v5112
    %5129 = vst [vmem:[#allocation2 + $0x48] sm:$0xff] %v5113
    %5130 = vst [vmem:[#allocation2 + $0x50] sm:$0xff] %v5114
    %5131 = vst [vmem:[#allocation2 + $0x58] sm:$0xff] %v5115
    %5132 = vst [vmem:[#allocation2 + $0x60] sm:$0xff] %v5116
    %5133 = vst [vmem:[#allocation2 + $0x68] sm:$0xff] %v5117
    %5134 = vst [vmem:[#allocation2 + $0x70] sm:$0xff] %v5118
    %5135 = vst [vmem:[#allocation2 + $0x78] sm:$0xff] %v5119
    %5136 = vrot.lane.b32.xlu0 %v5013, 16
    %v5137 = vpop.permute.xlu0 %5136
    %5138 = vrot.lane.b32.xlu0 %v5017, 16
    %v5139 = vpop.permute.xlu0 %5138
    %5140 = vrot.lane.b32.xlu0 %v5021, 16
    %v5141 = vpop.permute.xlu0 %5140
    %5142 = vrot.lane.b32.xlu0 %v5025, 16
    %v5143 = vpop.permute.xlu0 %5142
    %5144 = vrot.lane.b32.xlu0 %v5014, 16
    %v5145 = vpop.permute.xlu0 %5144
    %5146 = vrot.lane.b32.xlu0 %v5018, 16
    %v5147 = vpop.permute.xlu0 %5146
    %5148 = vrot.lane.b32.xlu0 %v5022, 16
    %v5149 = vpop.permute.xlu0 %5148
    %5150 = vrot.lane.b32.xlu0 %v5026, 16
    %v5151 = vpop.permute.xlu0 %5150
    %5152 = vrot.lane.b32.xlu0 %v5015, 16
    %v5153 = vpop.permute.xlu0 %5152
    %5154 = vrot.lane.b32.xlu0 %v5019, 16
    %v5155 = vpop.permute.xlu0 %5154
    %5156 = vrot.lane.b32.xlu0 %v5023, 16
    %v5157 = vpop.permute.xlu0 %5156
    %5158 = vrot.lane.b32.xlu0 %v5027, 16
    %v5159 = vpop.permute.xlu0 %5158
    %5160 = vrot.lane.b32.xlu0 %v5016, 16
    %v5161 = vpop.permute.xlu0 %5160
    %5162 = vrot.lane.b32.xlu0 %v5020, 16
    %v5163 = vpop.permute.xlu0 %5162
    %5164 = vrot.lane.b32.xlu0 %v5024, 16
    %v5165 = vpop.permute.xlu0 %5164
    %5166 = vrot.lane.b32.xlu0 %v5028, 16
    %v5167 = vpop.permute.xlu0 %5166
    %v5168 = vsel %vm127, %v5153, %v5161
    %v5169 = vsel %vm127, %v5155, %v5163
    %v5170 = vsel %vm127, %v5157, %v5165
    %v5171 = vsel %vm127, %v5159, %v5167
    %v5172 = vsel %vm127, %v5145, %v5153
    %v5173 = vsel %vm127, %v5147, %v5155
    %v5174 = vsel %vm127, %v5149, %v5157
    %v5175 = vsel %vm127, %v5151, %v5159
    %v5176 = vsel %vm127, %v5137, %v5145
    %v5177 = vsel %vm127, %v5139, %v5147
    %v5178 = vsel %vm127, %v5141, %v5149
    %v5179 = vsel %vm127, %v5143, %v5151
    %v5180 = vsel %vm127, %v5161, %v5137
    %v5181 = vsel %vm127, %v5163, %v5139
    %v5182 = vsel %vm127, %v5165, %v5141
    %v5183 = vsel %vm127, %v5167, %v5143
    %v5184 = vld [vmem:[%s132] ss:$8 sm:$0xf]
    %v5186 = vlaneseq
    %v5187 = vshrl.u32 %v5186, 7
    %v5188 = vsub.s32 0, %v5187
    %v5189 = vrot.slane %v5184, %v5188
    %v5190 = vlaneseq
    %v5191 = vshrl.u32 %v5190, 7
    %v5192 = vsub.s32 1, %v5191
    %v5193 = vrot.slane %v5184, %v5192
    %v5194 = vlaneseq
    %v5195 = vshrl.u32 %v5194, 7
    %v5196 = vsub.s32 2, %v5195
    %v5197 = vrot.slane %v5184, %v5196
    %v5198 = vlaneseq
    %v5199 = vshrl.u32 %v5198, 7
    %v5200 = vsub.s32 3, %v5199
    %v5201 = vrot.slane %v5184, %v5200
    %v5206 = vmul.f32 %v5180, %v5189
    %v5207 = vmul.f32 %v5176, %v5193
    %v5208 = vmul.f32 %v5172, %v5197
    %v5209 = vmul.f32 %v5168, %v5201
    %v5210 = vmul.f32 %v5181, %v5189
    %v5211 = vmul.f32 %v5177, %v5193
    %v5212 = vmul.f32 %v5173, %v5197
    %v5213 = vmul.f32 %v5169, %v5201
    %v5214 = vmul.f32 %v5182, %v5189
    %v5215 = vmul.f32 %v5178, %v5193
    %v5216 = vmul.f32 %v5174, %v5197
    %v5217 = vmul.f32 %v5170, %v5201
    %v5218 = vmul.f32 %v5183, %v5189
    %v5219 = vmul.f32 %v5179, %v5193
    %v5220 = vmul.f32 %v5175, %v5197
    %v5221 = vmul.f32 %v5171, %v5201
    %5222 = vst [vmem:[#allocation2 + $0x80] sm:$0xff] %v5206
    %5223 = vst [vmem:[#allocation2 + $0x88] sm:$0xff] %v5207
    %5224 = vst [vmem:[#allocation2 + $0x90] sm:$0xff] %v5208
    %5225 = vst [vmem:[#allocation2 + $0x98] sm:$0xff] %v5209
    %5226 = vst [vmem:[#allocation2 + $0xa0] sm:$0xff] %v5210
    %5227 = vst [vmem:[#allocation2 + $0xa8] sm:$0xff] %v5211
    %5228 = vst [vmem:[#allocation2 + $0xb0] sm:$0xff] %v5212
    %5229 = vst [vmem:[#allocation2 + $0xb8] sm:$0xff] %v5213
    %5230 = vst [vmem:[#allocation2 + $0xc0] sm:$0xff] %v5214
    %5231 = vst [vmem:[#allocation2 + $0xc8] sm:$0xff] %v5215
    %5232 = vst [vmem:[#allocation2 + $0xd0] sm:$0xff] %v5216
    %5233 = vst [vmem:[#allocation2 + $0xd8] sm:$0xff] %v5217
    %5234 = vst [vmem:[#allocation2 + $0xe0] sm:$0xff] %v5218
    %5235 = vst [vmem:[#allocation2 + $0xe8] sm:$0xff] %v5219
    %5236 = vst [vmem:[#allocation2 + $0xf0] sm:$0xff] %v5220
    %5237 = vst [vmem:[#allocation2 + $0xf8] sm:$0xff] %v5221
    %5238 = vrot.lane.b32.xlu0 %v5013, 15
    %v5239 = vpop.permute.xlu0 %5238
    %5240 = vrot.lane.b32.xlu0 %v5017, 15
    %v5241 = vpop.permute.xlu0 %5240
    %5242 = vrot.lane.b32.xlu0 %v5021, 15
    %v5243 = vpop.permute.xlu0 %5242
    %5244 = vrot.lane.b32.xlu0 %v5025, 15
    %v5245 = vpop.permute.xlu0 %5244
    %5246 = vrot.lane.b32.xlu0 %v5014, 15
    %v5247 = vpop.permute.xlu0 %5246
    %5248 = vrot.lane.b32.xlu0 %v5018, 15
    %v5249 = vpop.permute.xlu0 %5248
    %5250 = vrot.lane.b32.xlu0 %v5022, 15
    %v5251 = vpop.permute.xlu0 %5250
    %5252 = vrot.lane.b32.xlu0 %v5026, 15
    %v5253 = vpop.permute.xlu0 %5252
    %5254 = vrot.lane.b32.xlu0 %v5015, 15
    %v5255 = vpop.permute.xlu0 %5254
    %5256 = vrot.lane.b32.xlu0 %v5019, 15
    %v5257 = vpop.permute.xlu0 %5256
    %5258 = vrot.lane.b32.xlu0 %v5023, 15
    %v5259 = vpop.permute.xlu0 %5258
    %5260 = vrot.lane.b32.xlu0 %v5027, 15
    %v5261 = vpop.permute.xlu0 %5260
    %5262 = vrot.lane.b32.xlu0 %v5016, 15
    %v5263 = vpop.permute.xlu0 %5262
    %5264 = vrot.lane.b32.xlu0 %v5020, 15
    %v5265 = vpop.permute.xlu0 %5264
    %5266 = vrot.lane.b32.xlu0 %v5024, 15
    %v5267 = vpop.permute.xlu0 %5266
    %5268 = vrot.lane.b32.xlu0 %v5028, 15
    %v5269 = vpop.permute.xlu0 %5268
    %v5270 = vsel %vm171, %v5255, %v5263
    %v5271 = vsel %vm171, %v5257, %v5265
    %v5272 = vsel %vm171, %v5259, %v5267
    %v5273 = vsel %vm171, %v5261, %v5269
    %v5274 = vsel %vm171, %v5247, %v5255
    %v5275 = vsel %vm171, %v5249, %v5257
    %v5276 = vsel %vm171, %v5251, %v5259
    %v5277 = vsel %vm171, %v5253, %v5261
    %v5278 = vsel %vm171, %v5239, %v5247
    %v5279 = vsel %vm171, %v5241, %v5249
    %v5280 = vsel %vm171, %v5243, %v5251
    %v5281 = vsel %vm171, %v5245, %v5253
    %v5282 = vsel %vm171, %v5263, %v5239
    %v5283 = vsel %vm171, %v5265, %v5241
    %v5284 = vsel %vm171, %v5267, %v5243
    %v5285 = vsel %vm171, %v5269, %v5245
    %v5286 = vld [vmem:[%s176] ss:$8 sm:$0xf]
    %v5288 = vlaneseq
    %v5289 = vshrl.u32 %v5288, 7
    %v5290 = vsub.s32 0, %v5289
    %v5291 = vrot.slane %v5286, %v5290
    %v5292 = vlaneseq
    %v5293 = vshrl.u32 %v5292, 7
    %v5294 = vsub.s32 1, %v5293
    %v5295 = vrot.slane %v5286, %v5294
    %v5296 = vlaneseq
    %v5297 = vshrl.u32 %v5296, 7
    %v5298 = vsub.s32 2, %v5297
    %v5299 = vrot.slane %v5286, %v5298
    %v5300 = vlaneseq
    %v5301 = vshrl.u32 %v5300, 7
    %v5302 = vsub.s32 3, %v5301
    %v5303 = vrot.slane %v5286, %v5302
    %v5308 = vmul.f32 %v5282, %v5291
    %v5309 = vmul.f32 %v5278, %v5295
    %v5310 = vmul.f32 %v5274, %v5299
    %v5311 = vmul.f32 %v5270, %v5303
    %v5312 = vmul.f32 %v5283, %v5291
    %v5313 = vmul.f32 %v5279, %v5295
    %v5314 = vmul.f32 %v5275, %v5299
    %v5315 = vmul.f32 %v5271, %v5303
    %v5316 = vmul.f32 %v5284, %v5291
    %v5317 = vmul.f32 %v5280, %v5295
    %v5318 = vmul.f32 %v5276, %v5299
    %v5319 = vmul.f32 %v5272, %v5303
    %v5320 = vmul.f32 %v5285, %v5291
    %v5321 = vmul.f32 %v5281, %v5295
    %v5322 = vmul.f32 %v5277, %v5299
    %v5323 = vmul.f32 %v5273, %v5303
    %5324 = vst [vmem:[#allocation2 + $0x100] sm:$0xff] %v5308
    %5325 = vst [vmem:[#allocation2 + $0x108] sm:$0xff] %v5309
    %5326 = vst [vmem:[#allocation2 + $0x110] sm:$0xff] %v5310
    %5327 = vst [vmem:[#allocation2 + $0x118] sm:$0xff] %v5311
    %5328 = vst [vmem:[#allocation2 + $0x120] sm:$0xff] %v5312
    %5329 = vst [vmem:[#allocation2 + $0x128] sm:$0xff] %v5313
    %5330 = vst [vmem:[#allocation2 + $0x130] sm:$0xff] %v5314
    %5331 = vst [vmem:[#allocation2 + $0x138] sm:$0xff] %v5315
    %5332 = vst [vmem:[#allocation2 + $0x140] sm:$0xff] %v5316
    %5333 = vst [vmem:[#allocation2 + $0x148] sm:$0xff] %v5317
    %5334 = vst [vmem:[#allocation2 + $0x150] sm:$0xff] %v5318
    %5335 = vst [vmem:[#allocation2 + $0x158] sm:$0xff] %v5319
    %5336 = vst [vmem:[#allocation2 + $0x160] sm:$0xff] %v5320
    %5337 = vst [vmem:[#allocation2 + $0x168] sm:$0xff] %v5321
    %5338 = vst [vmem:[#allocation2 + $0x170] sm:$0xff] %v5322
    %5339 = vst [vmem:[#allocation2 + $0x178] sm:$0xff] %v5323
    %5340 = vrot.lane.b32.xlu0 %v5013, 1
    %v5341 = vpop.permute.xlu0 %5340
    %5342 = vrot.lane.b32.xlu0 %v5017, 1
    %v5343 = vpop.permute.xlu0 %5342
    %5344 = vrot.lane.b32.xlu0 %v5021, 1
    %v5345 = vpop.permute.xlu0 %5344
    %5346 = vrot.lane.b32.xlu0 %v5025, 1
    %v5347 = vpop.permute.xlu0 %5346
    %5348 = vrot.lane.b32.xlu0 %v5014, 1
    %v5349 = vpop.permute.xlu0 %5348
    %5350 = vrot.lane.b32.xlu0 %v5018, 1
    %v5351 = vpop.permute.xlu0 %5350
    %5352 = vrot.lane.b32.xlu0 %v5022, 1
    %v5353 = vpop.permute.xlu0 %5352
    %5354 = vrot.lane.b32.xlu0 %v5026, 1
    %v5355 = vpop.permute.xlu0 %5354
    %5356 = vrot.lane.b32.xlu0 %v5015, 1
    %v5357 = vpop.permute.xlu0 %5356
    %5358 = vrot.lane.b32.xlu0 %v5019, 1
    %v5359 = vpop.permute.xlu0 %5358
    %5360 = vrot.lane.b32.xlu0 %v5023, 1
    %v5361 = vpop.permute.xlu0 %5360
    %5362 = vrot.lane.b32.xlu0 %v5027, 1
    %v5363 = vpop.permute.xlu0 %5362
    %5364 = vrot.lane.b32.xlu0 %v5016, 1
    %v5365 = vpop.permute.xlu0 %5364
    %5366 = vrot.lane.b32.xlu0 %v5020, 1
    %v5367 = vpop.permute.xlu0 %5366
    %5368 = vrot.lane.b32.xlu0 %v5024, 1
    %v5369 = vpop.permute.xlu0 %5368
    %5370 = vrot.lane.b32.xlu0 %v5028, 1
    %v5371 = vpop.permute.xlu0 %5370
    %v5372 = vsel %vm215, %v5357, %v5365
    %v5373 = vsel %vm215, %v5359, %v5367
    %v5374 = vsel %vm215, %v5361, %v5369
    %v5375 = vsel %vm215, %v5363, %v5371
    %v5376 = vsel %vm215, %v5349, %v5357
    %v5377 = vsel %vm215, %v5351, %v5359
    %v5378 = vsel %vm215, %v5353, %v5361
    %v5379 = vsel %vm215, %v5355, %v5363
    %v5380 = vsel %vm215, %v5341, %v5349
    %v5381 = vsel %vm215, %v5343, %v5351
    %v5382 = vsel %vm215, %v5345, %v5353
    %v5383 = vsel %vm215, %v5347, %v5355
    %v5384 = vsel %vm215, %v5365, %v5341
    %v5385 = vsel %vm215, %v5367, %v5343
    %v5386 = vsel %vm215, %v5369, %v5345
    %v5387 = vsel %vm215, %v5371, %v5347
    %v5388 = vld [vmem:[%s220] ss:$8 sm:$0xf]
    %v5390 = vlaneseq
    %v5391 = vshrl.u32 %v5390, 7
    %v5392 = vsub.s32 0, %v5391
    %v5393 = vrot.slane %v5388, %v5392
    %v5394 = vlaneseq
    %v5395 = vshrl.u32 %v5394, 7
    %v5396 = vsub.s32 1, %v5395
    %v5397 = vrot.slane %v5388, %v5396
    %v5398 = vlaneseq
    %v5399 = vshrl.u32 %v5398, 7
    %v5400 = vsub.s32 2, %v5399
    %v5401 = vrot.slane %v5388, %v5400
    %v5402 = vlaneseq
    %v5403 = vshrl.u32 %v5402, 7
    %v5404 = vsub.s32 3, %v5403
    %v5405 = vrot.slane %v5388, %v5404
    %v5410 = vmul.f32 %v5384, %v5393
    %v5411 = vmul.f32 %v5380, %v5397
    %v5412 = vmul.f32 %v5376, %v5401
    %v5413 = vmul.f32 %v5372, %v5405
    %v5414 = vmul.f32 %v5385, %v5393
    %v5415 = vmul.f32 %v5381, %v5397
    %v5416 = vmul.f32 %v5377, %v5401
    %v5417 = vmul.f32 %v5373, %v5405
    %v5418 = vmul.f32 %v5386, %v5393
    %v5419 = vmul.f32 %v5382, %v5397
    %v5420 = vmul.f32 %v5378, %v5401
    %v5421 = vmul.f32 %v5374, %v5405
    %v5422 = vmul.f32 %v5387, %v5393
    %v5423 = vmul.f32 %v5383, %v5397
    %v5424 = vmul.f32 %v5379, %v5401
    %v5425 = vmul.f32 %v5375, %v5405
    %5426 = vst [vmem:[#allocation2 + $0x180] sm:$0xff] %v5410
    %5427 = vst [vmem:[#allocation2 + $0x188] sm:$0xff] %v5411
    %5428 = vst [vmem:[#allocation2 + $0x190] sm:$0xff] %v5412
    %5429 = vst [vmem:[#allocation2 + $0x198] sm:$0xff] %v5413
    %5430 = vst [vmem:[#allocation2 + $0x1a0] sm:$0xff] %v5414
    %5431 = vst [vmem:[#allocation2 + $0x1a8] sm:$0xff] %v5415
    %5432 = vst [vmem:[#allocation2 + $0x1b0] sm:$0xff] %v5416
    %5433 = vst [vmem:[#allocation2 + $0x1b8] sm:$0xff] %v5417
    %5434 = vst [vmem:[#allocation2 + $0x1c0] sm:$0xff] %v5418
    %5435 = vst [vmem:[#allocation2 + $0x1c8] sm:$0xff] %v5419
    %5436 = vst [vmem:[#allocation2 + $0x1d0] sm:$0xff] %v5420
    %5437 = vst [vmem:[#allocation2 + $0x1d8] sm:$0xff] %v5421
    %5438 = vst [vmem:[#allocation2 + $0x1e0] sm:$0xff] %v5422
    %5439 = vst [vmem:[#allocation2 + $0x1e8] sm:$0xff] %v5423
    %5440 = vst [vmem:[#allocation2 + $0x1f0] sm:$0xff] %v5424
    %5441 = vst [vmem:[#allocation2 + $0x1f8] sm:$0xff] %v5425
    %5442 = vst [vmem:[#allocation2 + $0x200] sm:$0xff] %v5013
    %5443 = vst [vmem:[#allocation2 + $0x208] sm:$0xff] %v5014
    %5444 = vst [vmem:[#allocation2 + $0x210] sm:$0xff] %v5015
    %5445 = vst [vmem:[#allocation2 + $0x218] sm:$0xff] %v5016
    %5446 = vst [vmem:[#allocation2 + $0x220] sm:$0xff] %v5017
    %5447 = vst [vmem:[#allocation2 + $0x228] sm:$0xff] %v5018
    %5448 = vst [vmem:[#allocation2 + $0x230] sm:$0xff] %v5019
    %5449 = vst [vmem:[#allocation2 + $0x238] sm:$0xff] %v5020
    %5450 = vst [vmem:[#allocation2 + $0x240] sm:$0xff] %v5021
    %5451 = vst [vmem:[#allocation2 + $0x248] sm:$0xff] %v5022
    %5452 = vst [vmem:[#allocation2 + $0x250] sm:$0xff] %v5023
    %5453 = vst [vmem:[#allocation2 + $0x258] sm:$0xff] %v5024
    %5454 = vst [vmem:[#allocation2 + $0x260] sm:$0xff] %v5025
    %5455 = vst [vmem:[#allocation2 + $0x268] sm:$0xff] %v5026
    %5456 = vst [vmem:[#allocation2 + $0x270] sm:$0xff] %v5027
    %5457 = vst [vmem:[#allocation2 + $0x278] sm:$0xff] %v5028
    %5458 = vrot.lane.b32.xlu0 %v5013, 127
    %v5459 = vpop.permute.xlu0 %5458
    %5460 = vrot.lane.b32.xlu0 %v5017, 127
    %v5461 = vpop.permute.xlu0 %5460
    %5462 = vrot.lane.b32.xlu0 %v5021, 127
    %v5463 = vpop.permute.xlu0 %5462
    %5464 = vrot.lane.b32.xlu0 %v5025, 127
    %v5465 = vpop.permute.xlu0 %5464
    %5466 = vrot.lane.b32.xlu0 %v5014, 127
    %v5467 = vpop.permute.xlu0 %5466
    %5468 = vrot.lane.b32.xlu0 %v5018, 127
    %v5469 = vpop.permute.xlu0 %5468
    %5470 = vrot.lane.b32.xlu0 %v5022, 127
    %v5471 = vpop.permute.xlu0 %5470
    %5472 = vrot.lane.b32.xlu0 %v5026, 127
    %v5473 = vpop.permute.xlu0 %5472
    %5474 = vrot.lane.b32.xlu0 %v5015, 127
    %v5475 = vpop.permute.xlu0 %5474
    %5476 = vrot.lane.b32.xlu0 %v5019, 127
    %v5477 = vpop.permute.xlu0 %5476
    %5478 = vrot.lane.b32.xlu0 %v5023, 127
    %v5479 = vpop.permute.xlu0 %5478
    %5480 = vrot.lane.b32.xlu0 %v5027, 127
    %v5481 = vpop.permute.xlu0 %5480
    %5482 = vrot.lane.b32.xlu0 %v5016, 127
    %v5483 = vpop.permute.xlu0 %5482
    %5484 = vrot.lane.b32.xlu0 %v5020, 127
    %v5485 = vpop.permute.xlu0 %5484
    %5486 = vrot.lane.b32.xlu0 %v5024, 127
    %v5487 = vpop.permute.xlu0 %5486
    %5488 = vrot.lane.b32.xlu0 %v5028, 127
    %v5489 = vpop.permute.xlu0 %5488
    %v5490 = vsel %vm263, %v5475, %v5483
    %v5491 = vsel %vm263, %v5477, %v5485
    %v5492 = vsel %vm263, %v5479, %v5487
    %v5493 = vsel %vm263, %v5481, %v5489
    %v5494 = vsel %vm263, %v5467, %v5475
    %v5495 = vsel %vm263, %v5469, %v5477
    %v5496 = vsel %vm263, %v5471, %v5479
    %v5497 = vsel %vm263, %v5473, %v5481
    %v5498 = vsel %vm263, %v5459, %v5467
    %v5499 = vsel %vm263, %v5461, %v5469
    %v5500 = vsel %vm263, %v5463, %v5471
    %v5501 = vsel %vm263, %v5465, %v5473
    %v5502 = vsel %vm263, %v5483, %v5459
    %v5503 = vsel %vm263, %v5485, %v5461
    %v5504 = vsel %vm263, %v5487, %v5463
    %v5505 = vsel %vm263, %v5489, %v5465
    %v5506 = vld [vmem:[%s268] ss:$8 sm:$0xf]
    %v5508 = vlaneseq
    %v5509 = vshrl.u32 %v5508, 7
    %v5510 = vsub.s32 0, %v5509
    %v5511 = vrot.slane %v5506, %v5510
    %v5512 = vlaneseq
    %v5513 = vshrl.u32 %v5512, 7
    %v5514 = vsub.s32 1, %v5513
    %v5515 = vrot.slane %v5506, %v5514
    %v5516 = vlaneseq
    %v5517 = vshrl.u32 %v5516, 7
    %v5518 = vsub.s32 2, %v5517
    %v5519 = vrot.slane %v5506, %v5518
    %v5520 = vlaneseq
    %v5521 = vshrl.u32 %v5520, 7
    %v5522 = vsub.s32 3, %v5521
    %v5523 = vrot.slane %v5506, %v5522
    %v5528 = vmul.f32 %v5498, %v5511
    %v5529 = vmul.f32 %v5494, %v5515
    %v5530 = vmul.f32 %v5490, %v5519
    %v5531 = vmul.f32 %v5502, %v5523
    %v5532 = vmul.f32 %v5499, %v5511
    %v5533 = vmul.f32 %v5495, %v5515
    %v5534 = vmul.f32 %v5491, %v5519
    %v5535 = vmul.f32 %v5503, %v5523
    %v5536 = vmul.f32 %v5500, %v5511
    %v5537 = vmul.f32 %v5496, %v5515
    %v5538 = vmul.f32 %v5492, %v5519
    %v5539 = vmul.f32 %v5504, %v5523
    %v5540 = vmul.f32 %v5501, %v5511
    %v5541 = vmul.f32 %v5497, %v5515
    %v5542 = vmul.f32 %v5493, %v5519
    %v5543 = vmul.f32 %v5505, %v5523
    %5544 = vst [vmem:[#allocation2 + $0x280] sm:$0xff] %v5528
    %5545 = vst [vmem:[#allocation2 + $0x288] sm:$0xff] %v5529
    %5546 = vst [vmem:[#allocation2 + $0x290] sm:$0xff] %v5530
    %5547 = vst [vmem:[#allocation2 + $0x298] sm:$0xff] %v5531
    %5548 = vst [vmem:[#allocation2 + $0x2a0] sm:$0xff] %v5532
    %5549 = vst [vmem:[#allocation2 + $0x2a8] sm:$0xff] %v5533
    %5550 = vst [vmem:[#allocation2 + $0x2b0] sm:$0xff] %v5534
    %5551 = vst [vmem:[#allocation2 + $0x2b8] sm:$0xff] %v5535
    %5552 = vst [vmem:[#allocation2 + $0x2c0] sm:$0xff] %v5536
    %5553 = vst [vmem:[#allocation2 + $0x2c8] sm:$0xff] %v5537
    %5554 = vst [vmem:[#allocation2 + $0x2d0] sm:$0xff] %v5538
    %5555 = vst [vmem:[#allocation2 + $0x2d8] sm:$0xff] %v5539
    %5556 = vst [vmem:[#allocation2 + $0x2e0] sm:$0xff] %v5540
    %5557 = vst [vmem:[#allocation2 + $0x2e8] sm:$0xff] %v5541
    %5558 = vst [vmem:[#allocation2 + $0x2f0] sm:$0xff] %v5542
    %5559 = vst [vmem:[#allocation2 + $0x2f8] sm:$0xff] %v5543
    %5560 = vrot.lane.b32.xlu0 %v5013, 113
    %v5561 = vpop.permute.xlu0 %5560
    %5562 = vrot.lane.b32.xlu0 %v5017, 113
    %v5563 = vpop.permute.xlu0 %5562
    %5564 = vrot.lane.b32.xlu0 %v5021, 113
    %v5565 = vpop.permute.xlu0 %5564
    %5566 = vrot.lane.b32.xlu0 %v5025, 113
    %v5567 = vpop.permute.xlu0 %5566
    %5568 = vrot.lane.b32.xlu0 %v5014, 113
    %v5569 = vpop.permute.xlu0 %5568
    %5570 = vrot.lane.b32.xlu0 %v5018, 113
    %v5571 = vpop.permute.xlu0 %5570
    %5572 = vrot.lane.b32.xlu0 %v5022, 113
    %v5573 = vpop.permute.xlu0 %5572
    %5574 = vrot.lane.b32.xlu0 %v5026, 113
    %v5575 = vpop.permute.xlu0 %5574
    %5576 = vrot.lane.b32.xlu0 %v5015, 113
    %v5577 = vpop.permute.xlu0 %5576
    %5578 = vrot.lane.b32.xlu0 %v5019, 113
    %v5579 = vpop.permute.xlu0 %5578
    %5580 = vrot.lane.b32.xlu0 %v5023, 113
    %v5581 = vpop.permute.xlu0 %5580
    %5582 = vrot.lane.b32.xlu0 %v5027, 113
    %v5583 = vpop.permute.xlu0 %5582
    %5584 = vrot.lane.b32.xlu0 %v5016, 113
    %v5585 = vpop.permute.xlu0 %5584
    %5586 = vrot.lane.b32.xlu0 %v5020, 113
    %v5587 = vpop.permute.xlu0 %5586
    %5588 = vrot.lane.b32.xlu0 %v5024, 113
    %v5589 = vpop.permute.xlu0 %5588
    %5590 = vrot.lane.b32.xlu0 %v5028, 113
    %v5591 = vpop.permute.xlu0 %5590
    %v5592 = vsel %vm307, %v5577, %v5585
    %v5593 = vsel %vm307, %v5579, %v5587
    %v5594 = vsel %vm307, %v5581, %v5589
    %v5595 = vsel %vm307, %v5583, %v5591
    %v5596 = vsel %vm307, %v5569, %v5577
    %v5597 = vsel %vm307, %v5571, %v5579
    %v5598 = vsel %vm307, %v5573, %v5581
    %v5599 = vsel %vm307, %v5575, %v5583
    %v5600 = vsel %vm307, %v5561, %v5569
    %v5601 = vsel %vm307, %v5563, %v5571
    %v5602 = vsel %vm307, %v5565, %v5573
    %v5603 = vsel %vm307, %v5567, %v5575
    %v5604 = vsel %vm307, %v5585, %v5561
    %v5605 = vsel %vm307, %v5587, %v5563
    %v5606 = vsel %vm307, %v5589, %v5565
    %v5607 = vsel %vm307, %v5591, %v5567
    %v5608 = vld [vmem:[%s312] ss:$8 sm:$0xf]
    %v5610 = vlaneseq
    %v5611 = vshrl.u32 %v5610, 7
    %v5612 = vsub.s32 0, %v5611
    %v5613 = vrot.slane %v5608, %v5612
    %v5614 = vlaneseq
    %v5615 = vshrl.u32 %v5614, 7
    %v5616 = vsub.s32 1, %v5615
    %v5617 = vrot.slane %v5608, %v5616
    %v5618 = vlaneseq
    %v5619 = vshrl.u32 %v5618, 7
    %v5620 = vsub.s32 2, %v5619
    %v5621 = vrot.slane %v5608, %v5620
    %v5622 = vlaneseq
    %v5623 = vshrl.u32 %v5622, 7
    %v5624 = vsub.s32 3, %v5623
    %v5625 = vrot.slane %v5608, %v5624
    %v5630 = vmul.f32 %v5600, %v5613
    %v5631 = vmul.f32 %v5596, %v5617
    %v5632 = vmul.f32 %v5592, %v5621
    %v5633 = vmul.f32 %v5604, %v5625
    %v5634 = vmul.f32 %v5601, %v5613
    %v5635 = vmul.f32 %v5597, %v5617
    %v5636 = vmul.f32 %v5593, %v5621
    %v5637 = vmul.f32 %v5605, %v5625
    %v5638 = vmul.f32 %v5602, %v5613
    %v5639 = vmul.f32 %v5598, %v5617
    %v5640 = vmul.f32 %v5594, %v5621
    %v5641 = vmul.f32 %v5606, %v5625
    %v5642 = vmul.f32 %v5603, %v5613
    %v5643 = vmul.f32 %v5599, %v5617
    %v5644 = vmul.f32 %v5595, %v5621
    %v5645 = vmul.f32 %v5607, %v5625
    %5646 = vst [vmem:[#allocation2 + $0x300] sm:$0xff] %v5630
    %5647 = vst [vmem:[#allocation2 + $0x308] sm:$0xff] %v5631
    %5648 = vst [vmem:[#allocation2 + $0x310] sm:$0xff] %v5632
    %5649 = vst [vmem:[#allocation2 + $0x318] sm:$0xff] %v5633
    %5650 = vst [vmem:[#allocation2 + $0x320] sm:$0xff] %v5634
    %5651 = vst [vmem:[#allocation2 + $0x328] sm:$0xff] %v5635
    %5652 = vst [vmem:[#allocation2 + $0x330] sm:$0xff] %v5636
    %5653 = vst [vmem:[#allocation2 + $0x338] sm:$0xff] %v5637
    %5654 = vst [vmem:[#allocation2 + $0x340] sm:$0xff] %v5638
    %5655 = vst [vmem:[#allocation2 + $0x348] sm:$0xff] %v5639
    %5656 = vst [vmem:[#allocation2 + $0x350] sm:$0xff] %v5640
    %5657 = vst [vmem:[#allocation2 + $0x358] sm:$0xff] %v5641
    %5658 = vst [vmem:[#allocation2 + $0x360] sm:$0xff] %v5642
    %5659 = vst [vmem:[#allocation2 + $0x368] sm:$0xff] %v5643
    %5660 = vst [vmem:[#allocation2 + $0x370] sm:$0xff] %v5644
    %5661 = vst [vmem:[#allocation2 + $0x378] sm:$0xff] %v5645
    %5662 = vrot.lane.b32.xlu0 %v5013, 112
    %v5663 = vpop.permute.xlu0 %5662
    %5664 = vrot.lane.b32.xlu0 %v5017, 112
    %v5665 = vpop.permute.xlu0 %5664
    %5666 = vrot.lane.b32.xlu0 %v5021, 112
    %v5667 = vpop.permute.xlu0 %5666
    %5668 = vrot.lane.b32.xlu0 %v5025, 112
    %v5669 = vpop.permute.xlu0 %5668
    %5670 = vrot.lane.b32.xlu0 %v5014, 112
    %v5671 = vpop.permute.xlu0 %5670
    %5672 = vrot.lane.b32.xlu0 %v5018, 112
    %v5673 = vpop.permute.xlu0 %5672
    %5674 = vrot.lane.b32.xlu0 %v5022, 112
    %v5675 = vpop.permute.xlu0 %5674
    %5676 = vrot.lane.b32.xlu0 %v5026, 112
    %v5677 = vpop.permute.xlu0 %5676
    %5678 = vrot.lane.b32.xlu0 %v5015, 112
    %v5679 = vpop.permute.xlu0 %5678
    %5680 = vrot.lane.b32.xlu0 %v5019, 112
    %v5681 = vpop.permute.xlu0 %5680
    %5682 = vrot.lane.b32.xlu0 %v5023, 112
    %v5683 = vpop.permute.xlu0 %5682
    %5684 = vrot.lane.b32.xlu0 %v5027, 112
    %v5685 = vpop.permute.xlu0 %5684
    %5686 = vrot.lane.b32.xlu0 %v5016, 112
    %v5687 = vpop.permute.xlu0 %5686
    %5688 = vrot.lane.b32.xlu0 %v5020, 112
    %v5689 = vpop.permute.xlu0 %5688
    %5690 = vrot.lane.b32.xlu0 %v5024, 112
    %v5691 = vpop.permute.xlu0 %5690
    %5692 = vrot.lane.b32.xlu0 %v5028, 112
    %v5693 = vpop.permute.xlu0 %5692
    %v5694 = vsel %vm351, %v5679, %v5687
    %v5695 = vsel %vm351, %v5681, %v5689
    %v5696 = vsel %vm351, %v5683, %v5691
    %v5697 = vsel %vm351, %v5685, %v5693
    %v5698 = vsel %vm351, %v5671, %v5679
    %v5699 = vsel %vm351, %v5673, %v5681
    %v5700 = vsel %vm351, %v5675, %v5683
    %v5701 = vsel %vm351, %v5677, %v5685
    %v5702 = vsel %vm351, %v5663, %v5671
    %v5703 = vsel %vm351, %v5665, %v5673
    %v5704 = vsel %vm351, %v5667, %v5675
    %v5705 = vsel %vm351, %v5669, %v5677
    %v5706 = vsel %vm351, %v5687, %v5663
    %v5707 = vsel %vm351, %v5689, %v5665
    %v5708 = vsel %vm351, %v5691, %v5667
    %v5709 = vsel %vm351, %v5693, %v5669
    %v5710 = vld [vmem:[%s356] ss:$8 sm:$0xf]
    %v5712 = vlaneseq
    %v5713 = vshrl.u32 %v5712, 7
    %v5714 = vsub.s32 0, %v5713
    %v5715 = vrot.slane %v5710, %v5714
    %v5716 = vlaneseq
    %v5717 = vshrl.u32 %v5716, 7
    %v5718 = vsub.s32 1, %v5717
    %v5719 = vrot.slane %v5710, %v5718
    %v5720 = vlaneseq
    %v5721 = vshrl.u32 %v5720, 7
    %v5722 = vsub.s32 2, %v5721
    %v5723 = vrot.slane %v5710, %v5722
    %v5724 = vlaneseq
    %v5725 = vshrl.u32 %v5724, 7
    %v5726 = vsub.s32 3, %v5725
    %v5727 = vrot.slane %v5710, %v5726
    %v5732 = vmul.f32 %v5702, %v5715
    %v5733 = vmul.f32 %v5698, %v5719
    %v5734 = vmul.f32 %v5694, %v5723
    %v5735 = vmul.f32 %v5706, %v5727
    %v5736 = vmul.f32 %v5703, %v5715
    %v5737 = vmul.f32 %v5699, %v5719
    %v5738 = vmul.f32 %v5695, %v5723
    %v5739 = vmul.f32 %v5707, %v5727
    %v5740 = vmul.f32 %v5704, %v5715
    %v5741 = vmul.f32 %v5700, %v5719
    %v5742 = vmul.f32 %v5696, %v5723
    %v5743 = vmul.f32 %v5708, %v5727
    %v5744 = vmul.f32 %v5705, %v5715
    %v5745 = vmul.f32 %v5701, %v5719
    %v5746 = vmul.f32 %v5697, %v5723
    %v5747 = vmul.f32 %v5709, %v5727
    %5748 = vst [vmem:[#allocation2 + $0x380] sm:$0xff] %v5732
    %5749 = vst [vmem:[#allocation2 + $0x388] sm:$0xff] %v5733
    %5750 = vst [vmem:[#allocation2 + $0x390] sm:$0xff] %v5734
    %5751 = vst [vmem:[#allocation2 + $0x398] sm:$0xff] %v5735
    %5752 = vst [vmem:[#allocation2 + $0x3a0] sm:$0xff] %v5736
    %5753 = vst [vmem:[#allocation2 + $0x3a8] sm:$0xff] %v5737
    %5754 = vst [vmem:[#allocation2 + $0x3b0] sm:$0xff] %v5738
    %5755 = vst [vmem:[#allocation2 + $0x3b8] sm:$0xff] %v5739
    %5756 = vst [vmem:[#allocation2 + $0x3c0] sm:$0xff] %v5740
    %5757 = vst [vmem:[#allocation2 + $0x3c8] sm:$0xff] %v5741
    %5758 = vst [vmem:[#allocation2 + $0x3d0] sm:$0xff] %v5742
    %5759 = vst [vmem:[#allocation2 + $0x3d8] sm:$0xff] %v5743
    %5760 = vst [vmem:[#allocation2 + $0x3e0] sm:$0xff] %v5744
    %5761 = vst [vmem:[#allocation2 + $0x3e8] sm:$0xff] %v5745
    %5762 = vst [vmem:[#allocation2 + $0x3f0] sm:$0xff] %v5746
    %5763 = vst [vmem:[#allocation2 + $0x3f8] sm:$0xff] %v5747
    %5764 = vrot.lane.b32.xlu0 %v5013, 111
    %v5765 = vpop.permute.xlu0 %5764
    %5766 = vrot.lane.b32.xlu0 %v5017, 111
    %v5767 = vpop.permute.xlu0 %5766
    %5768 = vrot.lane.b32.xlu0 %v5021, 111
    %v5769 = vpop.permute.xlu0 %5768
    %5770 = vrot.lane.b32.xlu0 %v5025, 111
    %v5771 = vpop.permute.xlu0 %5770
    %5772 = vrot.lane.b32.xlu0 %v5014, 111
    %v5773 = vpop.permute.xlu0 %5772
    %5774 = vrot.lane.b32.xlu0 %v5018, 111
    %v5775 = vpop.permute.xlu0 %5774
    %5776 = vrot.lane.b32.xlu0 %v5022, 111
    %v5777 = vpop.permute.xlu0 %5776
    %5778 = vrot.lane.b32.xlu0 %v5026, 111
    %v5779 = vpop.permute.xlu0 %5778
    %5780 = vrot.lane.b32.xlu0 %v5015, 111
    %v5781 = vpop.permute.xlu0 %5780
    %5782 = vrot.lane.b32.xlu0 %v5019, 111
    %v5783 = vpop.permute.xlu0 %5782
    %5784 = vrot.lane.b32.xlu0 %v5023, 111
    %v5785 = vpop.permute.xlu0 %5784
    %5786 = vrot.lane.b32.xlu0 %v5027, 111
    %v5787 = vpop.permute.xlu0 %5786
    %5788 = vrot.lane.b32.xlu0 %v5016, 111
    %v5789 = vpop.permute.xlu0 %5788
    %5790 = vrot.lane.b32.xlu0 %v5020, 111
    %v5791 = vpop.permute.xlu0 %5790
    %5792 = vrot.lane.b32.xlu0 %v5024, 111
    %v5793 = vpop.permute.xlu0 %5792
    %5794 = vrot.lane.b32.xlu0 %v5028, 111
    %v5795 = vpop.permute.xlu0 %5794
    %v5796 = vsel %vm395, %v5781, %v5789
    %v5797 = vsel %vm395, %v5783, %v5791
    %v5798 = vsel %vm395, %v5785, %v5793
    %v5799 = vsel %vm395, %v5787, %v5795
    %v5800 = vsel %vm395, %v5773, %v5781
    %v5801 = vsel %vm395, %v5775, %v5783
    %v5802 = vsel %vm395, %v5777, %v5785
    %v5803 = vsel %vm395, %v5779, %v5787
    %v5804 = vsel %vm395, %v5765, %v5773
    %v5805 = vsel %vm395, %v5767, %v5775
    %v5806 = vsel %vm395, %v5769, %v5777
    %v5807 = vsel %vm395, %v5771, %v5779
    %v5808 = vsel %vm395, %v5789, %v5765
    %v5809 = vsel %vm395, %v5791, %v5767
    %v5810 = vsel %vm395, %v5793, %v5769
    %v5811 = vsel %vm395, %v5795, %v5771
    %v5812 = vld [vmem:[%s400] ss:$8 sm:$0xf]
    %v5814 = vlaneseq
    %v5815 = vshrl.u32 %v5814, 7
    %v5816 = vsub.s32 0, %v5815
    %v5817 = vrot.slane %v5812, %v5816
    %v5818 = vlaneseq
    %v5819 = vshrl.u32 %v5818, 7
    %v5820 = vsub.s32 1, %v5819
    %v5821 = vrot.slane %v5812, %v5820
    %v5822 = vlaneseq
    %v5823 = vshrl.u32 %v5822, 7
    %v5824 = vsub.s32 2, %v5823
    %v5825 = vrot.slane %v5812, %v5824
    %v5826 = vlaneseq
    %v5827 = vshrl.u32 %v5826, 7
    %v5828 = vsub.s32 3, %v5827
    %v5829 = vrot.slane %v5812, %v5828
    %v5834 = vmul.f32 %v5804, %v5817
    %v5835 = vmul.f32 %v5800, %v5821
    %v5836 = vmul.f32 %v5796, %v5825
    %v5837 = vmul.f32 %v5808, %v5829
    %v5838 = vmul.f32 %v5805, %v5817
    %v5839 = vmul.f32 %v5801, %v5821
    %v5840 = vmul.f32 %v5797, %v5825
    %v5841 = vmul.f32 %v5809, %v5829
    %v5842 = vmul.f32 %v5806, %v5817
    %v5843 = vmul.f32 %v5802, %v5821
    %v5844 = vmul.f32 %v5798, %v5825
    %v5845 = vmul.f32 %v5810, %v5829
    %v5846 = vmul.f32 %v5807, %v5817
    %v5847 = vmul.f32 %v5803, %v5821
    %v5848 = vmul.f32 %v5799, %v5825
    %v5849 = vmul.f32 %v5811, %v5829
    %5850 = vst [vmem:[#allocation2 + $0x400] sm:$0xff] %v5834
    %5851 = vst [vmem:[#allocation2 + $0x408] sm:$0xff] %v5835
    %5852 = vst [vmem:[#allocation2 + $0x410] sm:$0xff] %v5836
    %5853 = vst [vmem:[#allocation2 + $0x418] sm:$0xff] %v5837
    %5854 = vst [vmem:[#allocation2 + $0x420] sm:$0xff] %v5838
    %5855 = vst [vmem:[#allocation2 + $0x428] sm:$0xff] %v5839
    %5856 = vst [vmem:[#allocation2 + $0x430] sm:$0xff] %v5840
    %5857 = vst [vmem:[#allocation2 + $0x438] sm:$0xff] %v5841
    %5858 = vst [vmem:[#allocation2 + $0x440] sm:$0xff] %v5842
    %5859 = vst [vmem:[#allocation2 + $0x448] sm:$0xff] %v5843
    %5860 = vst [vmem:[#allocation2 + $0x450] sm:$0xff] %v5844
    %5861 = vst [vmem:[#allocation2 + $0x458] sm:$0xff] %v5845
    %5862 = vst [vmem:[#allocation2 + $0x460] sm:$0xff] %v5846
    %5863 = vst [vmem:[#allocation2 + $0x468] sm:$0xff] %v5847
    %5864 = vst [vmem:[#allocation2 + $0x470] sm:$0xff] %v5848
    %5865 = vst [vmem:[#allocation2 + $0x478] sm:$0xff] %v5849
    %v5866 = vld [vmem:[#allocation2] sm:$0xff]
    %v5867 = vld [vmem:[#allocation2 + $0x8] sm:$0xff]
    %v5868 = vld [vmem:[#allocation2 + $0x10] sm:$0xff]
    %v5869 = vld [vmem:[#allocation2 + $0x18] sm:$0xff]
    %v5870 = vld [vmem:[#allocation2 + $0x20] sm:$0xff]
    %v5871 = vld [vmem:[#allocation2 + $0x28] sm:$0xff]
    %v5872 = vld [vmem:[#allocation2 + $0x30] sm:$0xff]
    %v5873 = vld [vmem:[#allocation2 + $0x38] sm:$0xff]
    %v5874 = vld [vmem:[#allocation2 + $0x40] sm:$0xff]
    %v5875 = vld [vmem:[#allocation2 + $0x48] sm:$0xff]
    %v5876 = vld [vmem:[#allocation2 + $0x50] sm:$0xff]
    %v5877 = vld [vmem:[#allocation2 + $0x58] sm:$0xff]
    %v5878 = vld [vmem:[#allocation2 + $0x60] sm:$0xff]
    %v5879 = vld [vmem:[#allocation2 + $0x68] sm:$0xff]
    %v5880 = vld [vmem:[#allocation2 + $0x70] sm:$0xff]
    %v5881 = vld [vmem:[#allocation2 + $0x78] sm:$0xff]
    %v5882 = vld [vmem:[#allocation2 + $0x80] sm:$0xff]
    %v5883 = vld [vmem:[#allocation2 + $0x88] sm:$0xff]
    %v5884 = vld [vmem:[#allocation2 + $0x90] sm:$0xff]
    %v5885 = vld [vmem:[#allocation2 + $0x98] sm:$0xff]
    %v5886 = vld [vmem:[#allocation2 + $0xa0] sm:$0xff]
    %v5887 = vld [vmem:[#allocation2 + $0xa8] sm:$0xff]
    %v5888 = vld [vmem:[#allocation2 + $0xb0] sm:$0xff]
    %v5889 = vld [vmem:[#allocation2 + $0xb8] sm:$0xff]
    %v5890 = vld [vmem:[#allocation2 + $0xc0] sm:$0xff]
    %v5891 = vld [vmem:[#allocation2 + $0xc8] sm:$0xff]
    %v5892 = vld [vmem:[#allocation2 + $0xd0] sm:$0xff]
    %v5893 = vld [vmem:[#allocation2 + $0xd8] sm:$0xff]
    %v5894 = vld [vmem:[#allocation2 + $0xe0] sm:$0xff]
    %v5895 = vld [vmem:[#allocation2 + $0xe8] sm:$0xff]
    %v5896 = vld [vmem:[#allocation2 + $0xf0] sm:$0xff]
    %v5897 = vld [vmem:[#allocation2 + $0xf8] sm:$0xff]
    %v5898 = vld [vmem:[#allocation2 + $0x100] sm:$0xff]
    %v5899 = vld [vmem:[#allocation2 + $0x108] sm:$0xff]
    %v5900 = vld [vmem:[#allocation2 + $0x110] sm:$0xff]
    %v5901 = vld [vmem:[#allocation2 + $0x118] sm:$0xff]
    %v5902 = vld [vmem:[#allocation2 + $0x120] sm:$0xff]
    %v5903 = vld [vmem:[#allocation2 + $0x128] sm:$0xff]
    %v5904 = vld [vmem:[#allocation2 + $0x130] sm:$0xff]
    %v5905 = vld [vmem:[#allocation2 + $0x138] sm:$0xff]
    %v5906 = vld [vmem:[#allocation2 + $0x140] sm:$0xff]
    %v5907 = vld [vmem:[#allocation2 + $0x148] sm:$0xff]
    %v5908 = vld [vmem:[#allocation2 + $0x150] sm:$0xff]
    %v5909 = vld [vmem:[#allocation2 + $0x158] sm:$0xff]
    %v5910 = vld [vmem:[#allocation2 + $0x160] sm:$0xff]
    %v5911 = vld [vmem:[#allocation2 + $0x168] sm:$0xff]
    %v5912 = vld [vmem:[#allocation2 + $0x170] sm:$0xff]
    %v5913 = vld [vmem:[#allocation2 + $0x178] sm:$0xff]
    %v5914 = vld [vmem:[#allocation2 + $0x180] sm:$0xff]
    %v5915 = vld [vmem:[#allocation2 + $0x188] sm:$0xff]
    %v5916 = vld [vmem:[#allocation2 + $0x190] sm:$0xff]
    %v5917 = vld [vmem:[#allocation2 + $0x198] sm:$0xff]
    %v5918 = vld [vmem:[#allocation2 + $0x1a0] sm:$0xff]
    %v5919 = vld [vmem:[#allocation2 + $0x1a8] sm:$0xff]
    %v5920 = vld [vmem:[#allocation2 + $0x1b0] sm:$0xff]
    %v5921 = vld [vmem:[#allocation2 + $0x1b8] sm:$0xff]
    %v5922 = vld [vmem:[#allocation2 + $0x1c0] sm:$0xff]
    %v5923 = vld [vmem:[#allocation2 + $0x1c8] sm:$0xff]
    %v5924 = vld [vmem:[#allocation2 + $0x1d0] sm:$0xff]
    %v5925 = vld [vmem:[#allocation2 + $0x1d8] sm:$0xff]
    %v5926 = vld [vmem:[#allocation2 + $0x1e0] sm:$0xff]
    %v5927 = vld [vmem:[#allocation2 + $0x1e8] sm:$0xff]
    %v5928 = vld [vmem:[#allocation2 + $0x1f0] sm:$0xff]
    %v5929 = vld [vmem:[#allocation2 + $0x1f8] sm:$0xff]
    %v5930 = vld [vmem:[#allocation2 + $0x200] sm:$0xff]
    %v5931 = vld [vmem:[#allocation2 + $0x208] sm:$0xff]
    %v5932 = vld [vmem:[#allocation2 + $0x210] sm:$0xff]
    %v5933 = vld [vmem:[#allocation2 + $0x218] sm:$0xff]
    %v5934 = vld [vmem:[#allocation2 + $0x220] sm:$0xff]
    %v5935 = vld [vmem:[#allocation2 + $0x228] sm:$0xff]
    %v5936 = vld [vmem:[#allocation2 + $0x230] sm:$0xff]
    %v5937 = vld [vmem:[#allocation2 + $0x238] sm:$0xff]
    %v5938 = vld [vmem:[#allocation2 + $0x240] sm:$0xff]
    %v5939 = vld [vmem:[#allocation2 + $0x248] sm:$0xff]
    %v5940 = vld [vmem:[#allocation2 + $0x250] sm:$0xff]
    %v5941 = vld [vmem:[#allocation2 + $0x258] sm:$0xff]
    %v5942 = vld [vmem:[#allocation2 + $0x260] sm:$0xff]
    %v5943 = vld [vmem:[#allocation2 + $0x268] sm:$0xff]
    %v5944 = vld [vmem:[#allocation2 + $0x270] sm:$0xff]
    %v5945 = vld [vmem:[#allocation2 + $0x278] sm:$0xff]
    %v5946 = vld [vmem:[#allocation2 + $0x280] sm:$0xff]
    %v5947 = vld [vmem:[#allocation2 + $0x288] sm:$0xff]
    %v5948 = vld [vmem:[#allocation2 + $0x290] sm:$0xff]
    %v5949 = vld [vmem:[#allocation2 + $0x298] sm:$0xff]
    %v5950 = vld [vmem:[#allocation2 + $0x2a0] sm:$0xff]
    %v5951 = vld [vmem:[#allocation2 + $0x2a8] sm:$0xff]
    %v5952 = vld [vmem:[#allocation2 + $0x2b0] sm:$0xff]
    %v5953 = vld [vmem:[#allocation2 + $0x2b8] sm:$0xff]
    %v5954 = vld [vmem:[#allocation2 + $0x2c0] sm:$0xff]
    %v5955 = vld [vmem:[#allocation2 + $0x2c8] sm:$0xff]
    %v5956 = vld [vmem:[#allocation2 + $0x2d0] sm:$0xff]
    %v5957 = vld [vmem:[#allocation2 + $0x2d8] sm:$0xff]
    %v5958 = vld [vmem:[#allocation2 + $0x2e0] sm:$0xff]
    %v5959 = vld [vmem:[#allocation2 + $0x2e8] sm:$0xff]
    %v5960 = vld [vmem:[#allocation2 + $0x2f0] sm:$0xff]
    %v5961 = vld [vmem:[#allocation2 + $0x2f8] sm:$0xff]
    %v5962 = vld [vmem:[#allocation2 + $0x300] sm:$0xff]
    %v5963 = vld [vmem:[#allocation2 + $0x308] sm:$0xff]
    %v5964 = vld [vmem:[#allocation2 + $0x310] sm:$0xff]
    %v5965 = vld [vmem:[#allocation2 + $0x318] sm:$0xff]
    %v5966 = vld [vmem:[#allocation2 + $0x320] sm:$0xff]
    %v5967 = vld [vmem:[#allocation2 + $0x328] sm:$0xff]
    %v5968 = vld [vmem:[#allocation2 + $0x330] sm:$0xff]
    %v5969 = vld [vmem:[#allocation2 + $0x338] sm:$0xff]
    %v5970 = vld [vmem:[#allocation2 + $0x340] sm:$0xff]
    %v5971 = vld [vmem:[#allocation2 + $0x348] sm:$0xff]
    %v5972 = vld [vmem:[#allocation2 + $0x350] sm:$0xff]
    %v5973 = vld [vmem:[#allocation2 + $0x358] sm:$0xff]
    %v5974 = vld [vmem:[#allocation2 + $0x360] sm:$0xff]
    %v5975 = vld [vmem:[#allocation2 + $0x368] sm:$0xff]
    %v5976 = vld [vmem:[#allocation2 + $0x370] sm:$0xff]
    %v5977 = vld [vmem:[#allocation2 + $0x378] sm:$0xff]
    %v5978 = vld [vmem:[#allocation2 + $0x380] sm:$0xff]
    %v5979 = vld [vmem:[#allocation2 + $0x388] sm:$0xff]
    %v5980 = vld [vmem:[#allocation2 + $0x390] sm:$0xff]
    %v5981 = vld [vmem:[#allocation2 + $0x398] sm:$0xff]
    %v5982 = vld [vmem:[#allocation2 + $0x3a0] sm:$0xff]
    %v5983 = vld [vmem:[#allocation2 + $0x3a8] sm:$0xff]
    %v5984 = vld [vmem:[#allocation2 + $0x3b0] sm:$0xff]
    %v5985 = vld [vmem:[#allocation2 + $0x3b8] sm:$0xff]
    %v5986 = vld [vmem:[#allocation2 + $0x3c0] sm:$0xff]
    %v5987 = vld [vmem:[#allocation2 + $0x3c8] sm:$0xff]
    %v5988 = vld [vmem:[#allocation2 + $0x3d0] sm:$0xff]
    %v5989 = vld [vmem:[#allocation2 + $0x3d8] sm:$0xff]
    %v5990 = vld [vmem:[#allocation2 + $0x3e0] sm:$0xff]
    %v5991 = vld [vmem:[#allocation2 + $0x3e8] sm:$0xff]
    %v5992 = vld [vmem:[#allocation2 + $0x3f0] sm:$0xff]
    %v5993 = vld [vmem:[#allocation2 + $0x3f8] sm:$0xff]
    %v5994 = vld [vmem:[#allocation2 + $0x400] sm:$0xff]
    %v5995 = vld [vmem:[#allocation2 + $0x408] sm:$0xff]
    %v5996 = vld [vmem:[#allocation2 + $0x410] sm:$0xff]
    %v5997 = vld [vmem:[#allocation2 + $0x418] sm:$0xff]
    %v5998 = vld [vmem:[#allocation2 + $0x420] sm:$0xff]
    %v5999 = vld [vmem:[#allocation2 + $0x428] sm:$0xff]
    %v6000 = vld [vmem:[#allocation2 + $0x430] sm:$0xff]
    %v6001 = vld [vmem:[#allocation2 + $0x438] sm:$0xff]
    %v6002 = vld [vmem:[#allocation2 + $0x440] sm:$0xff]
    %v6003 = vld [vmem:[#allocation2 + $0x448] sm:$0xff]
    %v6004 = vld [vmem:[#allocation2 + $0x450] sm:$0xff]
    %v6005 = vld [vmem:[#allocation2 + $0x458] sm:$0xff]
    %v6006 = vld [vmem:[#allocation2 + $0x460] sm:$0xff]
    %v6007 = vld [vmem:[#allocation2 + $0x468] sm:$0xff]
    %v6008 = vld [vmem:[#allocation2 + $0x470] sm:$0xff]
    %v6009 = vld [vmem:[#allocation2 + $0x478] sm:$0xff]
    %6011 = vset.pattern.permute.xlu0 0
    %6012 = vperm.xlu0 %6011, %v5030
    %v6013 = vpop.permute.xlu0 %6012
    %6016 = vset.pattern.permute.xlu0 0
    %6017 = vperm.xlu0 %6016, %v5031
    %v6018 = vpop.permute.xlu0 %6017
    %6021 = vset.pattern.permute.xlu0 0
    %6022 = vperm.xlu0 %6021, %v5032
    %v6023 = vpop.permute.xlu0 %6022
    %6026 = vset.pattern.permute.xlu0 0
    %6027 = vperm.xlu0 %6026, %v5033
    %v6028 = vpop.permute.xlu0 %6027
    %v6031 = vsel %vm1784, %v3618, 0
    %v6034 = vsel %vm1784, %v3621, 0
    %v6037 = vsel %vm1784, %v3624, 0
    %v6040 = vsel %vm1784, %v3627, 0
    %6042 = vmatprep.subr.mxu0 %v5867
    %6043 = vmatpush1.msra.mxu0 %v5866
    %6044 = vmatprep.subr.mxu0 %v5871
    %6045 = vmatpush1.msra.mxu0 %v5870
    %6046 = vmatprep.subr.mxu0 %v5875
    %6047 = vmatpush1.msra.mxu0 %v5874
    %6048 = vmatprep.subr.mxu0 %v5879
    %6049 = vmatpush1.msra.mxu0 %v5878
    %6050 = vmatprep.subr.mxu0 %v5883
    %6051 = vmatpush1.msra.mxu0 %v5882
    %6052 = vmatprep.subr.mxu0 %v5887
    %6053 = vmatpush1.msra.mxu0 %v5886
    %6054 = vmatprep.subr.mxu0 %v5891
    %6055 = vmatpush1.msra.mxu0 %v5890
    %6056 = vmatprep.subr.mxu0 %v5895
    %6057 = vmatpush1.msra.mxu0 %v5894
    %6058 = vmatprep.subr.mxu0 %v5899
    %6059 = vmatpush1.msra.mxu0 %v5898
    %6060 = vmatprep.subr.mxu0 %v5903
    %6061 = vmatpush1.msra.mxu0 %v5902
    %6062 = vmatprep.subr.mxu0 %v5907
    %6063 = vmatpush1.msra.mxu0 %v5906
    %6064 = vmatprep.subr.mxu0 %v5911
    %6065 = vmatpush1.msra.mxu0 %v5910
    %6066 = vmatprep.subr.mxu0 %v5915
    %6067 = vmatpush1.msra.mxu0 %v5914
    %6068 = vmatprep.subr.mxu0 %v5919
    %6069 = vmatpush1.msra.mxu0 %v5918
    %6070 = vmatprep.subr.mxu0 %v5923
    %6071 = vmatpush1.msra.mxu0 %v5922
    %6072 = vmatprep.subr.mxu0 %v5927
    %6073 = vmatpush1.msra.mxu0 %v5926
    %6074 = vmatprep.subr.mxu0 %v5931
    %6075 = vmatpush1.msra.mxu0 %v5930
    %6076 = vmatprep.subr.mxu0 %v5935
    %6077 = vmatpush1.msra.mxu0 %v5934
    %6078 = vmatprep.subr.mxu0 %v5939
    %6079 = vmatpush1.msra.mxu0 %v5938
    %6080 = vmatprep.subr.mxu0 %v5943
    %6081 = vmatpush1.msra.mxu0 %v5942
    %6082 = vmatprep.subr.mxu0 %v5947
    %6083 = vmatpush1.msra.mxu0 %v5946
    %6084 = vmatprep.subr.mxu0 %v5951
    %6085 = vmatpush1.msra.mxu0 %v5950
    %6086 = vmatprep.subr.mxu0 %v5955
    %6087 = vmatpush1.msra.mxu0 %v5954
    %6088 = vmatprep.subr.mxu0 %v5959
    %6089 = vmatpush1.msra.mxu0 %v5958
    %6090 = vmatprep.subr.mxu0 %v5963
    %6091 = vmatpush1.msra.mxu0 %v5962
    %6092 = vmatprep.subr.mxu0 %v5967
    %6093 = vmatpush1.msra.mxu0 %v5966
    %6094 = vmatprep.subr.mxu0 %v5971
    %6095 = vmatpush1.msra.mxu0 %v5970
    %6096 = vmatprep.subr.mxu0 %v5975
    %6097 = vmatpush1.msra.mxu0 %v5974
    %6098 = vmatprep.subr.mxu0 %v5979
    %6099 = vmatpush1.msra.mxu0 %v5978
    %6100 = vmatprep.subr.mxu0 %v5983
    %6101 = vmatpush1.msra.mxu0 %v5982
    %6102 = vmatprep.subr.mxu0 %v5987
    %6103 = vmatpush1.msra.mxu0 %v5986
    %6104 = vmatprep.subr.mxu0 %v5991
    %6105 = vmatpush1.msra.mxu0 %v5990
    %6106 = vmatprep.mubr.f32.mxu0 %v3617
    %6107 = vmatmul.mubr.f32.gmra.mrb[0].mxu0 %v3616
    %v6108 = vpop.f32.mrb[0].mxu0
    %v6109 = vadd.f32 %v6013, %v6108
    %v6110 = vpop.f32.mrb[0].mxu0
    %v6111 = vadd.f32 %v6013, %v6110
    %6112 = vmatprep.mubr.f32.mxu0 %v3620
    %6113 = vmatmul.mubr.f32.gmra.mrb[0].mxu0 %v3619
    %v6114 = vpop.f32.mrb[0].mxu0
    %v6115 = vadd.f32 %v6018, %v6114
    %v6116 = vpop.f32.mrb[0].mxu0
    %v6117 = vadd.f32 %v6018, %v6116
    %6118 = vmatprep.mubr.f32.mxu0 %v3623
    %6119 = vmatmul.mubr.f32.gmra.mrb[0].mxu0 %v3622
    %v6120 = vpop.f32.mrb[0].mxu0
    %v6121 = vadd.f32 %v6023, %v6120
    %v6122 = vpop.f32.mrb[0].mxu0
    %v6123 = vadd.f32 %v6023, %v6122
    %6124 = vmatprep.mubr.f32.mxu0 %v3626
    %6125 = vmatmul.mubr.f32.gmra.mrb[0].mxu0 %v3625
    %v6126 = vpop.f32.mrb[0].mxu0
    %v6127 = vadd.f32 %v6028, %v6126
    %v6128 = vpop.f32.mrb[0].mxu0
    %v6129 = vadd.f32 %v6028, %v6128
    %6130 = vdwg.mxu0
    %6131 = vmatprep.subr.mxu0 %v5995
    %6132 = vmatpush1.msra.mxu0 %v5994
    %6133 = vmatprep.subr.mxu0 %v5999
    %6134 = vmatpush1.msra.mxu0 %v5998
    %6135 = vmatprep.subr.mxu0 %v6003
    %6136 = vmatpush1.msra.mxu0 %v6002
    %6137 = vmatprep.subr.mxu0 %v6007
    %6138 = vmatpush1.msra.mxu0 %v6006
    %6139 = vmatprep.subr.mxu0 0.0
    %6140 = vmatpush1.msra.mxu0 0.0
    %6141 = vmatprep.subr.mxu0 0.0
    %6142 = vmatpush1.msra.mxu0 0.0
    %6143 = vmatprep.subr.mxu0 0.0
    %6144 = vmatpush1.msra.mxu0 0.0
    %6145 = vmatprep.subr.mxu0 0.0
    %6146 = vmatpush1.msra.mxu0 0.0
    %6147 = vmatprep.subr.mxu0 0.0
    %6148 = vmatpush1.msra.mxu0 0.0
    %6149 = vmatprep.subr.mxu0 0.0
    %6150 = vmatpush1.msra.mxu0 0.0
    %6151 = vmatprep.subr.mxu0 0.0
    %6152 = vmatpush1.msra.mxu0 0.0
    %6153 = vmatprep.subr.mxu0 0.0
    %6154 = vmatpush1.msra.mxu0 0.0
    %6155 = vmatprep.subr.mxu0 0.0
    %6156 = vmatpush1.msra.mxu0 0.0
    %6157 = vmatprep.subr.mxu0 0.0
    %6158 = vmatpush1.msra.mxu0 0.0
    %6159 = vmatprep.subr.mxu0 0.0
    %6160 = vmatpush1.msra.mxu0 0.0
    %6161 = vmatprep.subr.mxu0 0.0
    %6162 = vmatpush1.msra.mxu0 0.0
    %6163 = vmatprep.subr.mxu0 0.0
    %6164 = vmatpush1.msra.mxu0 0.0
    %6165 = vmatprep.subr.mxu0 0.0
    %6166 = vmatpush1.msra.mxu0 0.0
    %6167 = vmatprep.subr.mxu0 0.0
    %6168 = vmatpush1.msra.mxu0 0.0
    %6169 = vmatprep.subr.mxu0 0.0
    %6170 = vmatpush1.msra.mxu0 0.0
    %6171 = vmatprep.subr.mxu0 0.0
    %6172 = vmatpush1.msra.mxu0 0.0
    %6173 = vmatprep.subr.mxu0 0.0
    %6174 = vmatpush1.msra.mxu0 0.0
    %6175 = vmatprep.subr.mxu0 0.0
    %6176 = vmatpush1.msra.mxu0 0.0
    %6177 = vmatprep.subr.mxu0 0.0
    %6178 = vmatpush1.msra.mxu0 0.0
    %6179 = vmatprep.subr.mxu0 0.0
    %6180 = vmatpush1.msra.mxu0 0.0
    %6181 = vmatprep.subr.mxu0 0.0
    %6182 = vmatpush1.msra.mxu0 0.0
    %6183 = vmatprep.subr.mxu0 0.0
    %6184 = vmatpush1.msra.mxu0 0.0
    %6185 = vmatprep.subr.mxu0 0.0
    %6186 = vmatpush1.msra.mxu0 0.0
    %6187 = vmatprep.subr.mxu0 0.0
    %6188 = vmatpush1.msra.mxu0 0.0
    %6189 = vmatprep.subr.mxu0 0.0
    %6190 = vmatpush1.msra.mxu0 0.0
    %6191 = vmatprep.subr.mxu0 0.0
    %6192 = vmatpush1.msra.mxu0 0.0
    %6193 = vmatprep.subr.mxu0 0.0
    %6194 = vmatpush1.msra.mxu0 0.0
    %6195 = vmatprep.mubr.f32.mxu0 0.0
    %6196 = vmatmul.mubr.f32.gmra.mrb[0].mxu0 %v6031
    %v6197 = vpop.f32.mrb[0].mxu0
    %v6198 = vadd.f32 %v6109, %v6197
    %v6199 = vpop.f32.mrb[0].mxu0
    %v6200 = vadd.f32 %v6111, %v6199
    %6201 = vmatprep.mubr.f32.mxu0 0.0
    %6202 = vmatmul.mubr.f32.gmra.mrb[0].mxu0 %v6034
    %v6203 = vpop.f32.mrb[0].mxu0
    %v6204 = vadd.f32 %v6115, %v6203
    %v6205 = vpop.f32.mrb[0].mxu0
    %v6206 = vadd.f32 %v6117, %v6205
    %6207 = vmatprep.mubr.f32.mxu0 0.0
    %6208 = vmatmul.mubr.f32.gmra.mrb[0].mxu0 %v6037
    %v6209 = vpop.f32.mrb[0].mxu0
    %v6210 = vadd.f32 %v6121, %v6209
    %v6211 = vpop.f32.mrb[0].mxu0
    %v6212 = vadd.f32 %v6123, %v6211
    %6213 = vmatprep.mubr.f32.mxu0 0.0
    %6214 = vmatmul.mubr.f32.gmra.mrb[0].mxu0 %v6040
    %v6215 = vpop.f32.mrb[0].mxu0
    %v6216 = vadd.f32 %v6127, %v6215
    %v6217 = vpop.f32.mrb[0].mxu0
    %v6218 = vadd.f32 %v6129, %v6217
    %6219 = vdwg.mxu0
    %6220 = vmatprep.subr.mxu0 %v5869
    %6221 = vmatpush1.msra.mxu0 %v5868
    %6222 = vmatprep.subr.mxu0 %v5873
    %6223 = vmatpush1.msra.mxu0 %v5872
    %6224 = vmatprep.subr.mxu0 %v5877
    %6225 = vmatpush1.msra.mxu0 %v5876
    %6226 = vmatprep.subr.mxu0 %v5881
    %6227 = vmatpush1.msra.mxu0 %v5880
    %6228 = vmatprep.subr.mxu0 %v5885
    %6229 = vmatpush1.msra.mxu0 %v5884
    %6230 = vmatprep.subr.mxu0 %v5889
    %6231 = vmatpush1.msra.mxu0 %v5888
    %6232 = vmatprep.subr.mxu0 %v5893
    %6233 = vmatpush1.msra.mxu0 %v5892
    %6234 = vmatprep.subr.mxu0 %v5897
    %6235 = vmatpush1.msra.mxu0 %v5896
    %6236 = vmatprep.subr.mxu0 %v5901
    %6237 = vmatpush1.msra.mxu0 %v5900
    %6238 = vmatprep.subr.mxu0 %v5905
    %6239 = vmatpush1.msra.mxu0 %v5904
    %6240 = vmatprep.subr.mxu0 %v5909
    %6241 = vmatpush1.msra.mxu0 %v5908
    %6242 = vmatprep.subr.mxu0 %v5913
    %6243 = vmatpush1.msra.mxu0 %v5912
    %6244 = vmatprep.subr.mxu0 %v5917
    %6245 = vmatpush1.msra.mxu0 %v5916
    %6246 = vmatprep.subr.mxu0 %v5921
    %6247 = vmatpush1.msra.mxu0 %v5920
    %6248 = vmatprep.subr.mxu0 %v5925
    %6249 = vmatpush1.msra.mxu0 %v5924
    %6250 = vmatprep.subr.mxu0 %v5929
    %6251 = vmatpush1.msra.mxu0 %v5928
    %6252 = vmatprep.subr.mxu0 %v5933
    %6253 = vmatpush1.msra.mxu0 %v5932
    %6254 = vmatprep.subr.mxu0 %v5937
    %6255 = vmatpush1.msra.mxu0 %v5936
    %6256 = vmatprep.subr.mxu0 %v5941
    %6257 = vmatpush1.msra.mxu0 %v5940
    %6258 = vmatprep.subr.mxu0 %v5945
    %6259 = vmatpush1.msra.mxu0 %v5944
    %6260 = vmatprep.subr.mxu0 %v5949
    %6261 = vmatpush1.msra.mxu0 %v5948
    %6262 = vmatprep.subr.mxu0 %v5953
    %6263 = vmatpush1.msra.mxu0 %v5952
    %6264 = vmatprep.subr.mxu0 %v5957
    %6265 = vmatpush1.msra.mxu0 %v5956
    %6266 = vmatprep.subr.mxu0 %v5961
    %6267 = vmatpush1.msra.mxu0 %v5960
    %6268 = vmatprep.subr.mxu0 %v5965
    %6269 = vmatpush1.msra.mxu0 %v5964
    %6270 = vmatprep.subr.mxu0 %v5969
    %6271 = vmatpush1.msra.mxu0 %v5968
    %6272 = vmatprep.subr.mxu0 %v5973
    %6273 = vmatpush1.msra.mxu0 %v5972
    %6274 = vmatprep.subr.mxu0 %v5977
    %6275 = vmatpush1.msra.mxu0 %v5976
    %6276 = vmatprep.subr.mxu0 %v5981
    %6277 = vmatpush1.msra.mxu0 %v5980
    %6278 = vmatprep.subr.mxu0 %v5985
    %6279 = vmatpush1.msra.mxu0 %v5984
    %6280 = vmatprep.subr.mxu0 %v5989
    %6281 = vmatpush1.msra.mxu0 %v5988
    %6282 = vmatprep.subr.mxu0 %v5993
    %6283 = vmatpush1.msra.mxu0 %v5992
    %6284 = vmatprep.mubr.f32.mxu0 %v3617
    %6285 = vmatmul.mubr.f32.gmra.mrb[0].mxu0 %v3616
    %v6286 = vpop.f32.mrb[0].mxu0
    %v6287 = vadd.f32 %v6013, %v6286
    %v6288 = vpop.f32.mrb[0].mxu0
    %v6289 = vadd.f32 %v6013, %v6288
    %6290 = vmatprep.mubr.f32.mxu0 %v3620
    %6291 = vmatmul.mubr.f32.gmra.mrb[0].mxu0 %v3619
    %v6292 = vpop.f32.mrb[0].mxu0
    %v6293 = vadd.f32 %v6018, %v6292
    %v6294 = vpop.f32.mrb[0].mxu0
    %v6295 = vadd.f32 %v6018, %v6294
    %6296 = vmatprep.mubr.f32.mxu0 %v3623
    %6297 = vmatmul.mubr.f32.gmra.mrb[0].mxu0 %v3622
    %v6298 = vpop.f32.mrb[0].mxu0
    %v6299 = vadd.f32 %v6023, %v6298
    %v6300 = vpop.f32.mrb[0].mxu0
    %v6301 = vadd.f32 %v6023, %v6300
    %6302 = vmatprep.mubr.f32.mxu0 %v3626
    %6303 = vmatmul.mubr.f32.gmra.mrb[0].mxu0 %v3625
    %v6304 = vpop.f32.mrb[0].mxu0
    %v6305 = vadd.f32 %v6028, %v6304
    %v6306 = vpop.f32.mrb[0].mxu0
    %v6307 = vadd.f32 %v6028, %v6306
    %6308 = vdwg.mxu0
    %6309 = vmatprep.subr.mxu0 %v5997
    %6310 = vmatpush1.msra.mxu0 %v5996
    %6311 = vmatprep.subr.mxu0 %v6001
    %6312 = vmatpush1.msra.mxu0 %v6000
    %6313 = vmatprep.subr.mxu0 %v6005
    %6314 = vmatpush1.msra.mxu0 %v6004
    %6315 = vmatprep.subr.mxu0 %v6009
    %6316 = vmatpush1.msra.mxu0 %v6008
    %6317 = vmatprep.subr.mxu0 0.0
    %6318 = vmatpush1.msra.mxu0 0.0
    %6319 = vmatprep.subr.mxu0 0.0
    %6320 = vmatpush1.msra.mxu0 0.0
    %6321 = vmatprep.subr.mxu0 0.0
    %6322 = vmatpush1.msra.mxu0 0.0
    %6323 = vmatprep.subr.mxu0 0.0
    %6324 = vmatpush1.msra.mxu0 0.0
    %6325 = vmatprep.subr.mxu0 0.0
    %6326 = vmatpush1.msra.mxu0 0.0
    %6327 = vmatprep.subr.mxu0 0.0
    %6328 = vmatpush1.msra.mxu0 0.0
    %6329 = vmatprep.subr.mxu0 0.0
    %6330 = vmatpush1.msra.mxu0 0.0
    %6331 = vmatprep.subr.mxu0 0.0
    %6332 = vmatpush1.msra.mxu0 0.0
    %6333 = vmatprep.subr.mxu0 0.0
    %6334 = vmatpush1.msra.mxu0 0.0
    %6335 = vmatprep.subr.mxu0 0.0
    %6336 = vmatpush1.msra.mxu0 0.0
    %6337 = vmatprep.subr.mxu0 0.0
    %6338 = vmatpush1.msra.mxu0 0.0
    %6339 = vmatprep.subr.mxu0 0.0
    %6340 = vmatpush1.msra.mxu0 0.0
    %6341 = vmatprep.subr.mxu0 0.0
    %6342 = vmatpush1.msra.mxu0 0.0
    %6343 = vmatprep.subr.mxu0 0.0
    %6344 = vmatpush1.msra.mxu0 0.0
    %6345 = vmatprep.subr.mxu0 0.0
    %6346 = vmatpush1.msra.mxu0 0.0
    %6347 = vmatprep.subr.mxu0 0.0
    %6348 = vmatpush1.msra.mxu0 0.0
    %6349 = vmatprep.subr.mxu0 0.0
    %6350 = vmatpush1.msra.mxu0 0.0
    %6351 = vmatprep.subr.mxu0 0.0
    %6352 = vmatpush1.msra.mxu0 0.0
    %6353 = vmatprep.subr.mxu0 0.0
    %6354 = vmatpush1.msra.mxu0 0.0
    %6355 = vmatprep.subr.mxu0 0.0
    %6356 = vmatpush1.msra.mxu0 0.0
    %6357 = vmatprep.subr.mxu0 0.0
    %6358 = vmatpush1.msra.mxu0 0.0
    %6359 = vmatprep.subr.mxu0 0.0
    %6360 = vmatpush1.msra.mxu0 0.0
    %6361 = vmatprep.subr.mxu0 0.0
    %6362 = vmatpush1.msra.mxu0 0.0
    %6363 = vmatprep.subr.mxu0 0.0
    %6364 = vmatpush1.msra.mxu0 0.0
    %6365 = vmatprep.subr.mxu0 0.0
    %6366 = vmatpush1.msra.mxu0 0.0
    %6367 = vmatprep.subr.mxu0 0.0
    %6368 = vmatpush1.msra.mxu0 0.0
    %6369 = vmatprep.subr.mxu0 0.0
    %6370 = vmatpush1.msra.mxu0 0.0
    %6371 = vmatprep.subr.mxu0 0.0
    %6372 = vmatpush1.msra.mxu0 0.0
    %6373 = vmatprep.mubr.f32.mxu0 0.0
    %6374 = vmatmul.mubr.f32.gmra.mrb[0].mxu0 %v6031
    %v6375 = vpop.f32.mrb[0].mxu0
    %v6376 = vadd.f32 %v6287, %v6375
    %v6377 = vpop.f32.mrb[0].mxu0
    %v6378 = vadd.f32 %v6289, %v6377
    %6379 = vmatprep.mubr.f32.mxu0 0.0
    %6380 = vmatmul.mubr.f32.gmra.mrb[0].mxu0 %v6034
    %v6381 = vpop.f32.mrb[0].mxu0
    %v6382 = vadd.f32 %v6293, %v6381
    %v6383 = vpop.f32.mrb[0].mxu0
    %v6384 = vadd.f32 %v6295, %v6383
    %6385 = vmatprep.mubr.f32.mxu0 0.0
    %6386 = vmatmul.mubr.f32.gmra.mrb[0].mxu0 %v6037
    %v6387 = vpop.f32.mrb[0].mxu0
    %v6388 = vadd.f32 %v6299, %v6387
    %v6389 = vpop.f32.mrb[0].mxu0
    %v6390 = vadd.f32 %v6301, %v6389
    %6391 = vmatprep.mubr.f32.mxu0 0.0
    %6392 = vmatmul.mubr.f32.gmra.mrb[0].mxu0 %v6040
    %v6393 = vpop.f32.mrb[0].mxu0
    %v6394 = vadd.f32 %v6305, %v6393
    %v6395 = vpop.f32.mrb[0].mxu0
    %v6396 = vadd.f32 %v6307, %v6395
    %6397 = vdwg.mxu0
    %v6398 = vld [vmem:[#allocation3] sm:$0xff]
    %v6399 = vld [vmem:[#allocation3 + $0x8] sm:$0xff]
    %v6400 = vld [vmem:[#allocation3 + $0x10] sm:$0xff]
    %v6401 = vld [vmem:[#allocation3 + $0x18] sm:$0xff]
    %v6402 = vld [vmem:[#allocation3 + $0x20] sm:$0xff]
    %v6403 = vld [vmem:[#allocation3 + $0x28] sm:$0xff]
    %v6404 = vld [vmem:[#allocation3 + $0x30] sm:$0xff]
    %v6405 = vld [vmem:[#allocation3 + $0x38] sm:$0xff]
    %v6406 = vld [vmem:[#allocation3 + $0x40] sm:$0xff]
    %v6407 = vld [vmem:[#allocation3 + $0x48] sm:$0xff]
    %v6408 = vld [vmem:[#allocation3 + $0x50] sm:$0xff]
    %v6409 = vld [vmem:[#allocation3 + $0x58] sm:$0xff]
    %v6410 = vld [vmem:[#allocation3 + $0x60] sm:$0xff]
    %v6411 = vld [vmem:[#allocation3 + $0x68] sm:$0xff]
    %v6412 = vld [vmem:[#allocation3 + $0x70] sm:$0xff]
    %v6413 = vld [vmem:[#allocation3 + $0x78] sm:$0xff]
    %v6414 = vadd.f32 %v6198, %v6398
    %v6415 = vadd.f32 %v6200, %v6399
    %v6416 = vadd.f32 %v6376, %v6400
    %v6417 = vadd.f32 %v6378, %v6401
    %v6418 = vadd.f32 %v6204, %v6402
    %v6419 = vadd.f32 %v6206, %v6403
    %v6420 = vadd.f32 %v6382, %v6404
    %v6421 = vadd.f32 %v6384, %v6405
    %v6422 = vadd.f32 %v6210, %v6406
    %v6423 = vadd.f32 %v6212, %v6407
    %v6424 = vadd.f32 %v6388, %v6408
    %v6425 = vadd.f32 %v6390, %v6409
    %v6426 = vadd.f32 %v6216, %v6410
    %v6427 = vadd.f32 %v6218, %v6411
    %v6428 = vadd.f32 %v6394, %v6412
    %v6429 = vadd.f32 %v6396, %v6413
    %v6430 = vmax.f32 %v6414, 0.0
    %v6431 = vmax.f32 %v6415, 0.0
    %v6432 = vmax.f32 %v6416, 0.0
    %v6433 = vmax.f32 %v6417, 0.0
    %v6434 = vmax.f32 %v6418, 0.0
    %v6435 = vmax.f32 %v6419, 0.0
    %v6436 = vmax.f32 %v6420, 0.0
    %v6437 = vmax.f32 %v6421, 0.0
    %v6438 = vmax.f32 %v6422, 0.0
    %v6439 = vmax.f32 %v6423, 0.0
    %v6440 = vmax.f32 %v6424, 0.0
    %v6441 = vmax.f32 %v6425, 0.0
    %v6442 = vmax.f32 %v6426, 0.0
    %v6443 = vmax.f32 %v6427, 0.0
    %v6444 = vmax.f32 %v6428, 0.0
    %v6445 = vmax.f32 %v6429, 0.0
    %6446 = vst [vmem:[#allocation3] sm:$0xff] %v6430
    %6447 = vst [vmem:[#allocation3 + $0x8] sm:$0xff] %v6431
    %6448 = vst [vmem:[#allocation3 + $0x10] sm:$0xff] %v6432
    %6449 = vst [vmem:[#allocation3 + $0x18] sm:$0xff] %v6433
    %6450 = vst [vmem:[#allocation3 + $0x20] sm:$0xff] %v6434
    %6451 = vst [vmem:[#allocation3 + $0x28] sm:$0xff] %v6435
    %6452 = vst [vmem:[#allocation3 + $0x30] sm:$0xff] %v6436
    %6453 = vst [vmem:[#allocation3 + $0x38] sm:$0xff] %v6437
    %6454 = vst [vmem:[#allocation3 + $0x40] sm:$0xff] %v6438
    %6455 = vst [vmem:[#allocation3 + $0x48] sm:$0xff] %v6439
    %6456 = vst [vmem:[#allocation3 + $0x50] sm:$0xff] %v6440
    %6457 = vst [vmem:[#allocation3 + $0x58] sm:$0xff] %v6441
    %6458 = vst [vmem:[#allocation3 + $0x60] sm:$0xff] %v6442
    %6459 = vst [vmem:[#allocation3 + $0x68] sm:$0xff] %v6443
    %6460 = vst [vmem:[#allocation3 + $0x70] sm:$0xff] %v6444
    %6461 = vst [vmem:[#allocation3 + $0x78] sm:$0xff] %v6445
    %s6462 = scalar_lea.vmem [#allocation8], 160
    %v6463 = vld [vmem:[%s6462] sm:$0xff]
    %v6464 = vld [vmem:[#allocation3] sm:$0xff]
    %v6465 = vld [vmem:[#allocation3 + $0x8] sm:$0xff]
    %v6466 = vld [vmem:[#allocation3 + $0x10] sm:$0xff]
    %v6467 = vld [vmem:[#allocation3 + $0x18] sm:$0xff]
    %v6468 = vld [vmem:[#allocation3 + $0x20] sm:$0xff]
    %v6469 = vld [vmem:[#allocation3 + $0x28] sm:$0xff]
    %v6470 = vld [vmem:[#allocation3 + $0x30] sm:$0xff]
    %v6471 = vld [vmem:[#allocation3 + $0x38] sm:$0xff]
    %v6472 = vld [vmem:[#allocation3 + $0x40] sm:$0xff]
    %v6473 = vld [vmem:[#allocation3 + $0x48] sm:$0xff]
    %v6474 = vld [vmem:[#allocation3 + $0x50] sm:$0xff]
    %v6475 = vld [vmem:[#allocation3 + $0x58] sm:$0xff]
    %v6476 = vld [vmem:[#allocation3 + $0x60] sm:$0xff]
    %v6477 = vld [vmem:[#allocation3 + $0x68] sm:$0xff]
    %v6478 = vld [vmem:[#allocation3 + $0x70] sm:$0xff]
    %v6479 = vld [vmem:[#allocation3 + $0x78] sm:$0xff]
    %v6480 = vld [vmem:[#allocation6] sm:$0xff]
    %v6481 = vld [vmem:[#allocation6 + $0x8] sm:$0xff]
    %v6482 = vld [vmem:[#allocation6 + $0x10] sm:$0xff]
    %6483 = vrot.lane.b32.xlu0 %v6464, 17
    %v6484 = vpop.permute.xlu0 %6483
    %6485 = vrot.lane.b32.xlu0 %v6468, 17
    %v6486 = vpop.permute.xlu0 %6485
    %6487 = vrot.lane.b32.xlu0 %v6472, 17
    %v6488 = vpop.permute.xlu0 %6487
    %6489 = vrot.lane.b32.xlu0 %v6476, 17
    %v6490 = vpop.permute.xlu0 %6489
    %6491 = vrot.lane.b32.xlu0 %v6465, 17
    %v6492 = vpop.permute.xlu0 %6491
    %6493 = vrot.lane.b32.xlu0 %v6469, 17
    %v6494 = vpop.permute.xlu0 %6493
    %6495 = vrot.lane.b32.xlu0 %v6473, 17
    %v6496 = vpop.permute.xlu0 %6495
    %6497 = vrot.lane.b32.xlu0 %v6477, 17
    %v6498 = vpop.permute.xlu0 %6497
    %6499 = vrot.lane.b32.xlu0 %v6466, 17
    %v6500 = vpop.permute.xlu0 %6499
    %6501 = vrot.lane.b32.xlu0 %v6470, 17
    %v6502 = vpop.permute.xlu0 %6501
    %6503 = vrot.lane.b32.xlu0 %v6474, 17
    %v6504 = vpop.permute.xlu0 %6503
    %6505 = vrot.lane.b32.xlu0 %v6478, 17
    %v6506 = vpop.permute.xlu0 %6505
    %6507 = vrot.lane.b32.xlu0 %v6467, 17
    %v6508 = vpop.permute.xlu0 %6507
    %6509 = vrot.lane.b32.xlu0 %v6471, 17
    %v6510 = vpop.permute.xlu0 %6509
    %6511 = vrot.lane.b32.xlu0 %v6475, 17
    %v6512 = vpop.permute.xlu0 %6511
    %6513 = vrot.lane.b32.xlu0 %v6479, 17
    %v6514 = vpop.permute.xlu0 %6513
    %v6515 = vsel %vm84, %v6500, %v6508
    %v6516 = vsel %vm84, %v6502, %v6510
    %v6517 = vsel %vm84, %v6504, %v6512
    %v6518 = vsel %vm84, %v6506, %v6514
    %v6519 = vsel %vm84, %v6492, %v6500
    %v6520 = vsel %vm84, %v6494, %v6502
    %v6521 = vsel %vm84, %v6496, %v6504
    %v6522 = vsel %vm84, %v6498, %v6506
    %v6523 = vsel %vm84, %v6484, %v6492
    %v6524 = vsel %vm84, %v6486, %v6494
    %v6525 = vsel %vm84, %v6488, %v6496
    %v6526 = vsel %vm84, %v6490, %v6498
    %v6527 = vsel %vm84, %v6508, %v6484
    %v6528 = vsel %vm84, %v6510, %v6486
    %v6529 = vsel %vm84, %v6512, %v6488
    %v6530 = vsel %vm84, %v6514, %v6490
    %v6531 = vld [vmem:[%s1] ss:$8 sm:$0xf]
    %v6533 = vlaneseq
    %v6534 = vshrl.u32 %v6533, 7
    %v6535 = vsub.s32 0, %v6534
    %v6536 = vrot.slane %v6531, %v6535
    %v6537 = vlaneseq
    %v6538 = vshrl.u32 %v6537, 7
    %v6539 = vsub.s32 1, %v6538
    %v6540 = vrot.slane %v6531, %v6539
    %v6541 = vlaneseq
    %v6542 = vshrl.u32 %v6541, 7
    %v6543 = vsub.s32 2, %v6542
    %v6544 = vrot.slane %v6531, %v6543
    %v6545 = vlaneseq
    %v6546 = vshrl.u32 %v6545, 7
    %v6547 = vsub.s32 3, %v6546
    %v6548 = vrot.slane %v6531, %v6547
    %v6553 = vmul.f32 %v6527, %v6536
    %v6554 = vmul.f32 %v6523, %v6540
    %v6555 = vmul.f32 %v6519, %v6544
    %v6556 = vmul.f32 %v6515, %v6548
    %v6557 = vmul.f32 %v6528, %v6536
    %v6558 = vmul.f32 %v6524, %v6540
    %v6559 = vmul.f32 %v6520, %v6544
    %v6560 = vmul.f32 %v6516, %v6548
    %v6561 = vmul.f32 %v6529, %v6536
    %v6562 = vmul.f32 %v6525, %v6540
    %v6563 = vmul.f32 %v6521, %v6544
    %v6564 = vmul.f32 %v6517, %v6548
    %v6565 = vmul.f32 %v6530, %v6536
    %v6566 = vmul.f32 %v6526, %v6540
    %v6567 = vmul.f32 %v6522, %v6544
    %v6568 = vmul.f32 %v6518, %v6548
    %6569 = vst [vmem:[#allocation2] sm:$0xff] %v6553
    %6570 = vst [vmem:[#allocation2 + $0x8] sm:$0xff] %v6554
    %6571 = vst [vmem:[#allocation2 + $0x10] sm:$0xff] %v6555
    %6572 = vst [vmem:[#allocation2 + $0x18] sm:$0xff] %v6556
    %6573 = vst [vmem:[#allocation2 + $0x20] sm:$0xff] %v6557
    %6574 = vst [vmem:[#allocation2 + $0x28] sm:$0xff] %v6558
    %6575 = vst [vmem:[#allocation2 + $0x30] sm:$0xff] %v6559
    %6576 = vst [vmem:[#allocation2 + $0x38] sm:$0xff] %v6560
    %6577 = vst [vmem:[#allocation2 + $0x40] sm:$0xff] %v6561
    %6578 = vst [vmem:[#allocation2 + $0x48] sm:$0xff] %v6562
    %6579 = vst [vmem:[#allocation2 + $0x50] sm:$0xff] %v6563
    %6580 = vst [vmem:[#allocation2 + $0x58] sm:$0xff] %v6564
    %6581 = vst [vmem:[#allocation2 + $0x60] sm:$0xff] %v6565
    %6582 = vst [vmem:[#allocation2 + $0x68] sm:$0xff] %v6566
    %6583 = vst [vmem:[#allocation2 + $0x70] sm:$0xff] %v6567
    %6584 = vst [vmem:[#allocation2 + $0x78] sm:$0xff] %v6568
    %6585 = vrot.lane.b32.xlu0 %v6464, 16
    %v6586 = vpop.permute.xlu0 %6585
    %6587 = vrot.lane.b32.xlu0 %v6468, 16
    %v6588 = vpop.permute.xlu0 %6587
    %6589 = vrot.lane.b32.xlu0 %v6472, 16
    %v6590 = vpop.permute.xlu0 %6589
    %6591 = vrot.lane.b32.xlu0 %v6476, 16
    %v6592 = vpop.permute.xlu0 %6591
    %6593 = vrot.lane.b32.xlu0 %v6465, 16
    %v6594 = vpop.permute.xlu0 %6593
    %6595 = vrot.lane.b32.xlu0 %v6469, 16
    %v6596 = vpop.permute.xlu0 %6595
    %6597 = vrot.lane.b32.xlu0 %v6473, 16
    %v6598 = vpop.permute.xlu0 %6597
    %6599 = vrot.lane.b32.xlu0 %v6477, 16
    %v6600 = vpop.permute.xlu0 %6599
    %6601 = vrot.lane.b32.xlu0 %v6466, 16
    %v6602 = vpop.permute.xlu0 %6601
    %6603 = vrot.lane.b32.xlu0 %v6470, 16
    %v6604 = vpop.permute.xlu0 %6603
    %6605 = vrot.lane.b32.xlu0 %v6474, 16
    %v6606 = vpop.permute.xlu0 %6605
    %6607 = vrot.lane.b32.xlu0 %v6478, 16
    %v6608 = vpop.permute.xlu0 %6607
    %6609 = vrot.lane.b32.xlu0 %v6467, 16
    %v6610 = vpop.permute.xlu0 %6609
    %6611 = vrot.lane.b32.xlu0 %v6471, 16
    %v6612 = vpop.permute.xlu0 %6611
    %6613 = vrot.lane.b32.xlu0 %v6475, 16
    %v6614 = vpop.permute.xlu0 %6613
    %6615 = vrot.lane.b32.xlu0 %v6479, 16
    %v6616 = vpop.permute.xlu0 %6615
    %v6617 = vsel %vm127, %v6602, %v6610
    %v6618 = vsel %vm127, %v6604, %v6612
    %v6619 = vsel %vm127, %v6606, %v6614
    %v6620 = vsel %vm127, %v6608, %v6616
    %v6621 = vsel %vm127, %v6594, %v6602
    %v6622 = vsel %vm127, %v6596, %v6604
    %v6623 = vsel %vm127, %v6598, %v6606
    %v6624 = vsel %vm127, %v6600, %v6608
    %v6625 = vsel %vm127, %v6586, %v6594
    %v6626 = vsel %vm127, %v6588, %v6596
    %v6627 = vsel %vm127, %v6590, %v6598
    %v6628 = vsel %vm127, %v6592, %v6600
    %v6629 = vsel %vm127, %v6610, %v6586
    %v6630 = vsel %vm127, %v6612, %v6588
    %v6631 = vsel %vm127, %v6614, %v6590
    %v6632 = vsel %vm127, %v6616, %v6592
    %v6633 = vld [vmem:[%s132] ss:$8 sm:$0xf]
    %v6635 = vlaneseq
    %v6636 = vshrl.u32 %v6635, 7
    %v6637 = vsub.s32 0, %v6636
    %v6638 = vrot.slane %v6633, %v6637
    %v6639 = vlaneseq
    %v6640 = vshrl.u32 %v6639, 7
    %v6641 = vsub.s32 1, %v6640
    %v6642 = vrot.slane %v6633, %v6641
    %v6643 = vlaneseq
    %v6644 = vshrl.u32 %v6643, 7
    %v6645 = vsub.s32 2, %v6644
    %v6646 = vrot.slane %v6633, %v6645
    %v6647 = vlaneseq
    %v6648 = vshrl.u32 %v6647, 7
    %v6649 = vsub.s32 3, %v6648
    %v6650 = vrot.slane %v6633, %v6649
    %v6655 = vmul.f32 %v6629, %v6638
    %v6656 = vmul.f32 %v6625, %v6642
    %v6657 = vmul.f32 %v6621, %v6646
    %v6658 = vmul.f32 %v6617, %v6650
    %v6659 = vmul.f32 %v6630, %v6638
    %v6660 = vmul.f32 %v6626, %v6642
    %v6661 = vmul.f32 %v6622, %v6646
    %v6662 = vmul.f32 %v6618, %v6650
    %v6663 = vmul.f32 %v6631, %v6638
    %v6664 = vmul.f32 %v6627, %v6642
    %v6665 = vmul.f32 %v6623, %v6646
    %v6666 = vmul.f32 %v6619, %v6650
    %v6667 = vmul.f32 %v6632, %v6638
    %v6668 = vmul.f32 %v6628, %v6642
    %v6669 = vmul.f32 %v6624, %v6646
    %v6670 = vmul.f32 %v6620, %v6650
    %6671 = vst [vmem:[#allocation2 + $0x80] sm:$0xff] %v6655
    %6672 = vst [vmem:[#allocation2 + $0x88] sm:$0xff] %v6656
    %6673 = vst [vmem:[#allocation2 + $0x90] sm:$0xff] %v6657
    %6674 = vst [vmem:[#allocation2 + $0x98] sm:$0xff] %v6658
    %6675 = vst [vmem:[#allocation2 + $0xa0] sm:$0xff] %v6659
    %6676 = vst [vmem:[#allocation2 + $0xa8] sm:$0xff] %v6660
    %6677 = vst [vmem:[#allocation2 + $0xb0] sm:$0xff] %v6661
    %6678 = vst [vmem:[#allocation2 + $0xb8] sm:$0xff] %v6662
    %6679 = vst [vmem:[#allocation2 + $0xc0] sm:$0xff] %v6663
    %6680 = vst [vmem:[#allocation2 + $0xc8] sm:$0xff] %v6664
    %6681 = vst [vmem:[#allocation2 + $0xd0] sm:$0xff] %v6665
    %6682 = vst [vmem:[#allocation2 + $0xd8] sm:$0xff] %v6666
    %6683 = vst [vmem:[#allocation2 + $0xe0] sm:$0xff] %v6667
    %6684 = vst [vmem:[#allocation2 + $0xe8] sm:$0xff] %v6668
    %6685 = vst [vmem:[#allocation2 + $0xf0] sm:$0xff] %v6669
    %6686 = vst [vmem:[#allocation2 + $0xf8] sm:$0xff] %v6670
    %6687 = vrot.lane.b32.xlu0 %v6464, 15
    %v6688 = vpop.permute.xlu0 %6687
    %6689 = vrot.lane.b32.xlu0 %v6468, 15
    %v6690 = vpop.permute.xlu0 %6689
    %6691 = vrot.lane.b32.xlu0 %v6472, 15
    %v6692 = vpop.permute.xlu0 %6691
    %6693 = vrot.lane.b32.xlu0 %v6476, 15
    %v6694 = vpop.permute.xlu0 %6693
    %6695 = vrot.lane.b32.xlu0 %v6465, 15
    %v6696 = vpop.permute.xlu0 %6695
    %6697 = vrot.lane.b32.xlu0 %v6469, 15
    %v6698 = vpop.permute.xlu0 %6697
    %6699 = vrot.lane.b32.xlu0 %v6473, 15
    %v6700 = vpop.permute.xlu0 %6699
    %6701 = vrot.lane.b32.xlu0 %v6477, 15
    %v6702 = vpop.permute.xlu0 %6701
    %6703 = vrot.lane.b32.xlu0 %v6466, 15
    %v6704 = vpop.permute.xlu0 %6703
    %6705 = vrot.lane.b32.xlu0 %v6470, 15
    %v6706 = vpop.permute.xlu0 %6705
    %6707 = vrot.lane.b32.xlu0 %v6474, 15
    %v6708 = vpop.permute.xlu0 %6707
    %6709 = vrot.lane.b32.xlu0 %v6478, 15
    %v6710 = vpop.permute.xlu0 %6709
    %6711 = vrot.lane.b32.xlu0 %v6467, 15
    %v6712 = vpop.permute.xlu0 %6711
    %6713 = vrot.lane.b32.xlu0 %v6471, 15
    %v6714 = vpop.permute.xlu0 %6713
    %6715 = vrot.lane.b32.xlu0 %v6475, 15
    %v6716 = vpop.permute.xlu0 %6715
    %6717 = vrot.lane.b32.xlu0 %v6479, 15
    %v6718 = vpop.permute.xlu0 %6717
    %v6719 = vsel %vm171, %v6704, %v6712
    %v6720 = vsel %vm171, %v6706, %v6714
    %v6721 = vsel %vm171, %v6708, %v6716
    %v6722 = vsel %vm171, %v6710, %v6718
    %v6723 = vsel %vm171, %v6696, %v6704
    %v6724 = vsel %vm171, %v6698, %v6706
    %v6725 = vsel %vm171, %v6700, %v6708
    %v6726 = vsel %vm171, %v6702, %v6710
    %v6727 = vsel %vm171, %v6688, %v6696
    %v6728 = vsel %vm171, %v6690, %v6698
    %v6729 = vsel %vm171, %v6692, %v6700
    %v6730 = vsel %vm171, %v6694, %v6702
    %v6731 = vsel %vm171, %v6712, %v6688
    %v6732 = vsel %vm171, %v6714, %v6690
    %v6733 = vsel %vm171, %v6716, %v6692
    %v6734 = vsel %vm171, %v6718, %v6694
    %v6735 = vld [vmem:[%s176] ss:$8 sm:$0xf]
    %v6737 = vlaneseq
    %v6738 = vshrl.u32 %v6737, 7
    %v6739 = vsub.s32 0, %v6738
    %v6740 = vrot.slane %v6735, %v6739
    %v6741 = vlaneseq
    %v6742 = vshrl.u32 %v6741, 7
    %v6743 = vsub.s32 1, %v6742
    %v6744 = vrot.slane %v6735, %v6743
    %v6745 = vlaneseq
    %v6746 = vshrl.u32 %v6745, 7
    %v6747 = vsub.s32 2, %v6746
    %v6748 = vrot.slane %v6735, %v6747
    %v6749 = vlaneseq
    %v6750 = vshrl.u32 %v6749, 7
    %v6751 = vsub.s32 3, %v6750
    %v6752 = vrot.slane %v6735, %v6751
    %v6757 = vmul.f32 %v6731, %v6740
    %v6758 = vmul.f32 %v6727, %v6744
    %v6759 = vmul.f32 %v6723, %v6748
    %v6760 = vmul.f32 %v6719, %v6752
    %v6761 = vmul.f32 %v6732, %v6740
    %v6762 = vmul.f32 %v6728, %v6744
    %v6763 = vmul.f32 %v6724, %v6748
    %v6764 = vmul.f32 %v6720, %v6752
    %v6765 = vmul.f32 %v6733, %v6740
    %v6766 = vmul.f32 %v6729, %v6744
    %v6767 = vmul.f32 %v6725, %v6748
    %v6768 = vmul.f32 %v6721, %v6752
    %v6769 = vmul.f32 %v6734, %v6740
    %v6770 = vmul.f32 %v6730, %v6744
    %v6771 = vmul.f32 %v6726, %v6748
    %v6772 = vmul.f32 %v6722, %v6752
    %6773 = vst [vmem:[#allocation2 + $0x100] sm:$0xff] %v6757
    %6774 = vst [vmem:[#allocation2 + $0x108] sm:$0xff] %v6758
    %6775 = vst [vmem:[#allocation2 + $0x110] sm:$0xff] %v6759
    %6776 = vst [vmem:[#allocation2 + $0x118] sm:$0xff] %v6760
    %6777 = vst [vmem:[#allocation2 + $0x120] sm:$0xff] %v6761
    %6778 = vst [vmem:[#allocation2 + $0x128] sm:$0xff] %v6762
    %6779 = vst [vmem:[#allocation2 + $0x130] sm:$0xff] %v6763
    %6780 = vst [vmem:[#allocation2 + $0x138] sm:$0xff] %v6764
    %6781 = vst [vmem:[#allocation2 + $0x140] sm:$0xff] %v6765
    %6782 = vst [vmem:[#allocation2 + $0x148] sm:$0xff] %v6766
    %6783 = vst [vmem:[#allocation2 + $0x150] sm:$0xff] %v6767
    %6784 = vst [vmem:[#allocation2 + $0x158] sm:$0xff] %v6768
    %6785 = vst [vmem:[#allocation2 + $0x160] sm:$0xff] %v6769
    %6786 = vst [vmem:[#allocation2 + $0x168] sm:$0xff] %v6770
    %6787 = vst [vmem:[#allocation2 + $0x170] sm:$0xff] %v6771
    %6788 = vst [vmem:[#allocation2 + $0x178] sm:$0xff] %v6772
    %6789 = vrot.lane.b32.xlu0 %v6464, 1
    %v6790 = vpop.permute.xlu0 %6789
    %6791 = vrot.lane.b32.xlu0 %v6468, 1
    %v6792 = vpop.permute.xlu0 %6791
    %6793 = vrot.lane.b32.xlu0 %v6472, 1
    %v6794 = vpop.permute.xlu0 %6793
    %6795 = vrot.lane.b32.xlu0 %v6476, 1
    %v6796 = vpop.permute.xlu0 %6795
    %6797 = vrot.lane.b32.xlu0 %v6465, 1
    %v6798 = vpop.permute.xlu0 %6797
    %6799 = vrot.lane.b32.xlu0 %v6469, 1
    %v6800 = vpop.permute.xlu0 %6799
    %6801 = vrot.lane.b32.xlu0 %v6473, 1
    %v6802 = vpop.permute.xlu0 %6801
    %6803 = vrot.lane.b32.xlu0 %v6477, 1
    %v6804 = vpop.permute.xlu0 %6803
    %6805 = vrot.lane.b32.xlu0 %v6466, 1
    %v6806 = vpop.permute.xlu0 %6805
    %6807 = vrot.lane.b32.xlu0 %v6470, 1
    %v6808 = vpop.permute.xlu0 %6807
    %6809 = vrot.lane.b32.xlu0 %v6474, 1
    %v6810 = vpop.permute.xlu0 %6809
    %6811 = vrot.lane.b32.xlu0 %v6478, 1
    %v6812 = vpop.permute.xlu0 %6811
    %6813 = vrot.lane.b32.xlu0 %v6467, 1
    %v6814 = vpop.permute.xlu0 %6813
    %6815 = vrot.lane.b32.xlu0 %v6471, 1
    %v6816 = vpop.permute.xlu0 %6815
    %6817 = vrot.lane.b32.xlu0 %v6475, 1
    %v6818 = vpop.permute.xlu0 %6817
    %6819 = vrot.lane.b32.xlu0 %v6479, 1
    %v6820 = vpop.permute.xlu0 %6819
    %v6821 = vsel %vm215, %v6806, %v6814
    %v6822 = vsel %vm215, %v6808, %v6816
    %v6823 = vsel %vm215, %v6810, %v6818
    %v6824 = vsel %vm215, %v6812, %v6820
    %v6825 = vsel %vm215, %v6798, %v6806
    %v6826 = vsel %vm215, %v6800, %v6808
    %v6827 = vsel %vm215, %v6802, %v6810
    %v6828 = vsel %vm215, %v6804, %v6812
    %v6829 = vsel %vm215, %v6790, %v6798
    %v6830 = vsel %vm215, %v6792, %v6800
    %v6831 = vsel %vm215, %v6794, %v6802
    %v6832 = vsel %vm215, %v6796, %v6804
    %v6833 = vsel %vm215, %v6814, %v6790
    %v6834 = vsel %vm215, %v6816, %v6792
    %v6835 = vsel %vm215, %v6818, %v6794
    %v6836 = vsel %vm215, %v6820, %v6796
    %v6837 = vld [vmem:[%s220] ss:$8 sm:$0xf]
    %v6839 = vlaneseq
    %v6840 = vshrl.u32 %v6839, 7
    %v6841 = vsub.s32 0, %v6840
    %v6842 = vrot.slane %v6837, %v6841
    %v6843 = vlaneseq
    %v6844 = vshrl.u32 %v6843, 7
    %v6845 = vsub.s32 1, %v6844
    %v6846 = vrot.slane %v6837, %v6845
    %v6847 = vlaneseq
    %v6848 = vshrl.u32 %v6847, 7
    %v6849 = vsub.s32 2, %v6848
    %v6850 = vrot.slane %v6837, %v6849
    %v6851 = vlaneseq
    %v6852 = vshrl.u32 %v6851, 7
    %v6853 = vsub.s32 3, %v6852
    %v6854 = vrot.slane %v6837, %v6853
    %v6859 = vmul.f32 %v6833, %v6842
    %v6860 = vmul.f32 %v6829, %v6846
    %v6861 = vmul.f32 %v6825, %v6850
    %v6862 = vmul.f32 %v6821, %v6854
    %v6863 = vmul.f32 %v6834, %v6842
    %v6864 = vmul.f32 %v6830, %v6846
    %v6865 = vmul.f32 %v6826, %v6850
    %v6866 = vmul.f32 %v6822, %v6854
    %v6867 = vmul.f32 %v6835, %v6842
    %v6868 = vmul.f32 %v6831, %v6846
    %v6869 = vmul.f32 %v6827, %v6850
    %v6870 = vmul.f32 %v6823, %v6854
    %v6871 = vmul.f32 %v6836, %v6842
    %v6872 = vmul.f32 %v6832, %v6846
    %v6873 = vmul.f32 %v6828, %v6850
    %v6874 = vmul.f32 %v6824, %v6854
    %6875 = vst [vmem:[#allocation2 + $0x180] sm:$0xff] %v6859
    %6876 = vst [vmem:[#allocation2 + $0x188] sm:$0xff] %v6860
    %6877 = vst [vmem:[#allocation2 + $0x190] sm:$0xff] %v6861
    %6878 = vst [vmem:[#allocation2 + $0x198] sm:$0xff] %v6862
    %6879 = vst [vmem:[#allocation2 + $0x1a0] sm:$0xff] %v6863
    %6880 = vst [vmem:[#allocation2 + $0x1a8] sm:$0xff] %v6864
    %6881 = vst [vmem:[#allocation2 + $0x1b0] sm:$0xff] %v6865
    %6882 = vst [vmem:[#allocation2 + $0x1b8] sm:$0xff] %v6866
    %6883 = vst [vmem:[#allocation2 + $0x1c0] sm:$0xff] %v6867
    %6884 = vst [vmem:[#allocation2 + $0x1c8] sm:$0xff] %v6868
    %6885 = vst [vmem:[#allocation2 + $0x1d0] sm:$0xff] %v6869
    %6886 = vst [vmem:[#allocation2 + $0x1d8] sm:$0xff] %v6870
    %6887 = vst [vmem:[#allocation2 + $0x1e0] sm:$0xff] %v6871
    %6888 = vst [vmem:[#allocation2 + $0x1e8] sm:$0xff] %v6872
    %6889 = vst [vmem:[#allocation2 + $0x1f0] sm:$0xff] %v6873
    %6890 = vst [vmem:[#allocation2 + $0x1f8] sm:$0xff] %v6874
    %6891 = vst [vmem:[#allocation2 + $0x200] sm:$0xff] %v6464
    %6892 = vst [vmem:[#allocation2 + $0x208] sm:$0xff] %v6465
    %6893 = vst [vmem:[#allocation2 + $0x210] sm:$0xff] %v6466
    %6894 = vst [vmem:[#allocation2 + $0x218] sm:$0xff] %v6467
    %6895 = vst [vmem:[#allocation2 + $0x220] sm:$0xff] %v6468
    %6896 = vst [vmem:[#allocation2 + $0x228] sm:$0xff] %v6469
    %6897 = vst [vmem:[#allocation2 + $0x230] sm:$0xff] %v6470
    %6898 = vst [vmem:[#allocation2 + $0x238] sm:$0xff] %v6471
    %6899 = vst [vmem:[#allocation2 + $0x240] sm:$0xff] %v6472
    %6900 = vst [vmem:[#allocation2 + $0x248] sm:$0xff] %v6473
    %6901 = vst [vmem:[#allocation2 + $0x250] sm:$0xff] %v6474
    %6902 = vst [vmem:[#allocation2 + $0x258] sm:$0xff] %v6475
    %6903 = vst [vmem:[#allocation2 + $0x260] sm:$0xff] %v6476
    %6904 = vst [vmem:[#allocation2 + $0x268] sm:$0xff] %v6477
    %6905 = vst [vmem:[#allocation2 + $0x270] sm:$0xff] %v6478
    %6906 = vst [vmem:[#allocation2 + $0x278] sm:$0xff] %v6479
    %6907 = vrot.lane.b32.xlu0 %v6464, 127
    %v6908 = vpop.permute.xlu0 %6907
    %6909 = vrot.lane.b32.xlu0 %v6468, 127
    %v6910 = vpop.permute.xlu0 %6909
    %6911 = vrot.lane.b32.xlu0 %v6472, 127
    %v6912 = vpop.permute.xlu0 %6911
    %6913 = vrot.lane.b32.xlu0 %v6476, 127
    %v6914 = vpop.permute.xlu0 %6913
    %6915 = vrot.lane.b32.xlu0 %v6465, 127
    %v6916 = vpop.permute.xlu0 %6915
    %6917 = vrot.lane.b32.xlu0 %v6469, 127
    %v6918 = vpop.permute.xlu0 %6917
    %6919 = vrot.lane.b32.xlu0 %v6473, 127
    %v6920 = vpop.permute.xlu0 %6919
    %6921 = vrot.lane.b32.xlu0 %v6477, 127
    %v6922 = vpop.permute.xlu0 %6921
    %6923 = vrot.lane.b32.xlu0 %v6466, 127
    %v6924 = vpop.permute.xlu0 %6923
    %6925 = vrot.lane.b32.xlu0 %v6470, 127
    %v6926 = vpop.permute.xlu0 %6925
    %6927 = vrot.lane.b32.xlu0 %v6474, 127
    %v6928 = vpop.permute.xlu0 %6927
    %6929 = vrot.lane.b32.xlu0 %v6478, 127
    %v6930 = vpop.permute.xlu0 %6929
    %6931 = vrot.lane.b32.xlu0 %v6467, 127
    %v6932 = vpop.permute.xlu0 %6931
    %6933 = vrot.lane.b32.xlu0 %v6471, 127
    %v6934 = vpop.permute.xlu0 %6933
    %6935 = vrot.lane.b32.xlu0 %v6475, 127
    %v6936 = vpop.permute.xlu0 %6935
    %6937 = vrot.lane.b32.xlu0 %v6479, 127
    %v6938 = vpop.permute.xlu0 %6937
    %v6939 = vsel %vm263, %v6924, %v6932
    %v6940 = vsel %vm263, %v6926, %v6934
    %v6941 = vsel %vm263, %v6928, %v6936
    %v6942 = vsel %vm263, %v6930, %v6938
    %v6943 = vsel %vm263, %v6916, %v6924
    %v6944 = vsel %vm263, %v6918, %v6926
    %v6945 = vsel %vm263, %v6920, %v6928
    %v6946 = vsel %vm263, %v6922, %v6930
    %v6947 = vsel %vm263, %v6908, %v6916
    %v6948 = vsel %vm263, %v6910, %v6918
    %v6949 = vsel %vm263, %v6912, %v6920
    %v6950 = vsel %vm263, %v6914, %v6922
    %v6951 = vsel %vm263, %v6932, %v6908
    %v6952 = vsel %vm263, %v6934, %v6910
    %v6953 = vsel %vm263, %v6936, %v6912
    %v6954 = vsel %vm263, %v6938, %v6914
    %v6955 = vld [vmem:[%s268] ss:$8 sm:$0xf]
    %v6957 = vlaneseq
    %v6958 = vshrl.u32 %v6957, 7
    %v6959 = vsub.s32 0, %v6958
    %v6960 = vrot.slane %v6955, %v6959
    %v6961 = vlaneseq
    %v6962 = vshrl.u32 %v6961, 7
    %v6963 = vsub.s32 1, %v6962
    %v6964 = vrot.slane %v6955, %v6963
    %v6965 = vlaneseq
    %v6966 = vshrl.u32 %v6965, 7
    %v6967 = vsub.s32 2, %v6966
    %v6968 = vrot.slane %v6955, %v6967
    %v6969 = vlaneseq
    %v6970 = vshrl.u32 %v6969, 7
    %v6971 = vsub.s32 3, %v6970
    %v6972 = vrot.slane %v6955, %v6971
    %v6977 = vmul.f32 %v6947, %v6960
    %v6978 = vmul.f32 %v6943, %v6964
    %v6979 = vmul.f32 %v6939, %v6968
    %v6980 = vmul.f32 %v6951, %v6972
    %v6981 = vmul.f32 %v6948, %v6960
    %v6982 = vmul.f32 %v6944, %v6964
    %v6983 = vmul.f32 %v6940, %v6968
    %v6984 = vmul.f32 %v6952, %v6972
    %v6985 = vmul.f32 %v6949, %v6960
    %v6986 = vmul.f32 %v6945, %v6964
    %v6987 = vmul.f32 %v6941, %v6968
    %v6988 = vmul.f32 %v6953, %v6972
    %v6989 = vmul.f32 %v6950, %v6960
    %v6990 = vmul.f32 %v6946, %v6964
    %v6991 = vmul.f32 %v6942, %v6968
    %v6992 = vmul.f32 %v6954, %v6972
    %6993 = vst [vmem:[#allocation2 + $0x280] sm:$0xff] %v6977
    %6994 = vst [vmem:[#allocation2 + $0x288] sm:$0xff] %v6978
    %6995 = vst [vmem:[#allocation2 + $0x290] sm:$0xff] %v6979
    %6996 = vst [vmem:[#allocation2 + $0x298] sm:$0xff] %v6980
    %6997 = vst [vmem:[#allocation2 + $0x2a0] sm:$0xff] %v6981
    %6998 = vst [vmem:[#allocation2 + $0x2a8] sm:$0xff] %v6982
    %6999 = vst [vmem:[#allocation2 + $0x2b0] sm:$0xff] %v6983
    %7000 = vst [vmem:[#allocation2 + $0x2b8] sm:$0xff] %v6984
    %7001 = vst [vmem:[#allocation2 + $0x2c0] sm:$0xff] %v6985
    %7002 = vst [vmem:[#allocation2 + $0x2c8] sm:$0xff] %v6986
    %7003 = vst [vmem:[#allocation2 + $0x2d0] sm:$0xff] %v6987
    %7004 = vst [vmem:[#allocation2 + $0x2d8] sm:$0xff] %v6988
    %7005 = vst [vmem:[#allocation2 + $0x2e0] sm:$0xff] %v6989
    %7006 = vst [vmem:[#allocation2 + $0x2e8] sm:$0xff] %v6990
    %7007 = vst [vmem:[#allocation2 + $0x2f0] sm:$0xff] %v6991
    %7008 = vst [vmem:[#allocation2 + $0x2f8] sm:$0xff] %v6992
    %7009 = vrot.lane.b32.xlu0 %v6464, 113
    %v7010 = vpop.permute.xlu0 %7009
    %7011 = vrot.lane.b32.xlu0 %v6468, 113
    %v7012 = vpop.permute.xlu0 %7011
    %7013 = vrot.lane.b32.xlu0 %v6472, 113
    %v7014 = vpop.permute.xlu0 %7013
    %7015 = vrot.lane.b32.xlu0 %v6476, 113
    %v7016 = vpop.permute.xlu0 %7015
    %7017 = vrot.lane.b32.xlu0 %v6465, 113
    %v7018 = vpop.permute.xlu0 %7017
    %7019 = vrot.lane.b32.xlu0 %v6469, 113
    %v7020 = vpop.permute.xlu0 %7019
    %7021 = vrot.lane.b32.xlu0 %v6473, 113
    %v7022 = vpop.permute.xlu0 %7021
    %7023 = vrot.lane.b32.xlu0 %v6477, 113
    %v7024 = vpop.permute.xlu0 %7023
    %7025 = vrot.lane.b32.xlu0 %v6466, 113
    %v7026 = vpop.permute.xlu0 %7025
    %7027 = vrot.lane.b32.xlu0 %v6470, 113
    %v7028 = vpop.permute.xlu0 %7027
    %7029 = vrot.lane.b32.xlu0 %v6474, 113
    %v7030 = vpop.permute.xlu0 %7029
    %7031 = vrot.lane.b32.xlu0 %v6478, 113
    %v7032 = vpop.permute.xlu0 %7031
    %7033 = vrot.lane.b32.xlu0 %v6467, 113
    %v7034 = vpop.permute.xlu0 %7033
    %7035 = vrot.lane.b32.xlu0 %v6471, 113
    %v7036 = vpop.permute.xlu0 %7035
    %7037 = vrot.lane.b32.xlu0 %v6475, 113
    %v7038 = vpop.permute.xlu0 %7037
    %7039 = vrot.lane.b32.xlu0 %v6479, 113
    %v7040 = vpop.permute.xlu0 %7039
    %v7041 = vsel %vm307, %v7026, %v7034
    %v7042 = vsel %vm307, %v7028, %v7036
    %v7043 = vsel %vm307, %v7030, %v7038
    %v7044 = vsel %vm307, %v7032, %v7040
    %v7045 = vsel %vm307, %v7018, %v7026
    %v7046 = vsel %vm307, %v7020, %v7028
    %v7047 = vsel %vm307, %v7022, %v7030
    %v7048 = vsel %vm307, %v7024, %v7032
    %v7049 = vsel %vm307, %v7010, %v7018
    %v7050 = vsel %vm307, %v7012, %v7020
    %v7051 = vsel %vm307, %v7014, %v7022
    %v7052 = vsel %vm307, %v7016, %v7024
    %v7053 = vsel %vm307, %v7034, %v7010
    %v7054 = vsel %vm307, %v7036, %v7012
    %v7055 = vsel %vm307, %v7038, %v7014
    %v7056 = vsel %vm307, %v7040, %v7016
    %v7057 = vld [vmem:[%s312] ss:$8 sm:$0xf]
    %v7059 = vlaneseq
    %v7060 = vshrl.u32 %v7059, 7
    %v7061 = vsub.s32 0, %v7060
    %v7062 = vrot.slane %v7057, %v7061
    %v7063 = vlaneseq
    %v7064 = vshrl.u32 %v7063, 7
    %v7065 = vsub.s32 1, %v7064
    %v7066 = vrot.slane %v7057, %v7065
    %v7067 = vlaneseq
    %v7068 = vshrl.u32 %v7067, 7
    %v7069 = vsub.s32 2, %v7068
    %v7070 = vrot.slane %v7057, %v7069
    %v7071 = vlaneseq
    %v7072 = vshrl.u32 %v7071, 7
    %v7073 = vsub.s32 3, %v7072
    %v7074 = vrot.slane %v7057, %v7073
    %v7079 = vmul.f32 %v7049, %v7062
    %v7080 = vmul.f32 %v7045, %v7066
    %v7081 = vmul.f32 %v7041, %v7070
    %v7082 = vmul.f32 %v7053, %v7074
    %v7083 = vmul.f32 %v7050, %v7062
    %v7084 = vmul.f32 %v7046, %v7066
    %v7085 = vmul.f32 %v7042, %v7070
    %v7086 = vmul.f32 %v7054, %v7074
    %v7087 = vmul.f32 %v7051, %v7062
    %v7088 = vmul.f32 %v7047, %v7066
    %v7089 = vmul.f32 %v7043, %v7070
    %v7090 = vmul.f32 %v7055, %v7074
    %v7091 = vmul.f32 %v7052, %v7062
    %v7092 = vmul.f32 %v7048, %v7066
    %v7093 = vmul.f32 %v7044, %v7070
    %v7094 = vmul.f32 %v7056, %v7074
    %7095 = vst [vmem:[#allocation2 + $0x300] sm:$0xff] %v7079
    %7096 = vst [vmem:[#allocation2 + $0x308] sm:$0xff] %v7080
    %7097 = vst [vmem:[#allocation2 + $0x310] sm:$0xff] %v7081
    %7098 = vst [vmem:[#allocation2 + $0x318] sm:$0xff] %v7082
    %7099 = vst [vmem:[#allocation2 + $0x320] sm:$0xff] %v7083
    %7100 = vst [vmem:[#allocation2 + $0x328] sm:$0xff] %v7084
    %7101 = vst [vmem:[#allocation2 + $0x330] sm:$0xff] %v7085
    %7102 = vst [vmem:[#allocation2 + $0x338] sm:$0xff] %v7086
    %7103 = vst [vmem:[#allocation2 + $0x340] sm:$0xff] %v7087
    %7104 = vst [vmem:[#allocation2 + $0x348] sm:$0xff] %v7088
    %7105 = vst [vmem:[#allocation2 + $0x350] sm:$0xff] %v7089
    %7106 = vst [vmem:[#allocation2 + $0x358] sm:$0xff] %v7090
    %7107 = vst [vmem:[#allocation2 + $0x360] sm:$0xff] %v7091
    %7108 = vst [vmem:[#allocation2 + $0x368] sm:$0xff] %v7092
    %7109 = vst [vmem:[#allocation2 + $0x370] sm:$0xff] %v7093
    %7110 = vst [vmem:[#allocation2 + $0x378] sm:$0xff] %v7094
    %7111 = vrot.lane.b32.xlu0 %v6464, 112
    %v7112 = vpop.permute.xlu0 %7111
    %7113 = vrot.lane.b32.xlu0 %v6468, 112
    %v7114 = vpop.permute.xlu0 %7113
    %7115 = vrot.lane.b32.xlu0 %v6472, 112
    %v7116 = vpop.permute.xlu0 %7115
    %7117 = vrot.lane.b32.xlu0 %v6476, 112
    %v7118 = vpop.permute.xlu0 %7117
    %7119 = vrot.lane.b32.xlu0 %v6465, 112
    %v7120 = vpop.permute.xlu0 %7119
    %7121 = vrot.lane.b32.xlu0 %v6469, 112
    %v7122 = vpop.permute.xlu0 %7121
    %7123 = vrot.lane.b32.xlu0 %v6473, 112
    %v7124 = vpop.permute.xlu0 %7123
    %7125 = vrot.lane.b32.xlu0 %v6477, 112
    %v7126 = vpop.permute.xlu0 %7125
    %7127 = vrot.lane.b32.xlu0 %v6466, 112
    %v7128 = vpop.permute.xlu0 %7127
    %7129 = vrot.lane.b32.xlu0 %v6470, 112
    %v7130 = vpop.permute.xlu0 %7129
    %7131 = vrot.lane.b32.xlu0 %v6474, 112
    %v7132 = vpop.permute.xlu0 %7131
    %7133 = vrot.lane.b32.xlu0 %v6478, 112
    %v7134 = vpop.permute.xlu0 %7133
    %7135 = vrot.lane.b32.xlu0 %v6467, 112
    %v7136 = vpop.permute.xlu0 %7135
    %7137 = vrot.lane.b32.xlu0 %v6471, 112
    %v7138 = vpop.permute.xlu0 %7137
    %7139 = vrot.lane.b32.xlu0 %v6475, 112
    %v7140 = vpop.permute.xlu0 %7139
    %7141 = vrot.lane.b32.xlu0 %v6479, 112
    %v7142 = vpop.permute.xlu0 %7141
    %v7143 = vsel %vm351, %v7128, %v7136
    %v7144 = vsel %vm351, %v7130, %v7138
    %v7145 = vsel %vm351, %v7132, %v7140
    %v7146 = vsel %vm351, %v7134, %v7142
    %v7147 = vsel %vm351, %v7120, %v7128
    %v7148 = vsel %vm351, %v7122, %v7130
    %v7149 = vsel %vm351, %v7124, %v7132
    %v7150 = vsel %vm351, %v7126, %v7134
    %v7151 = vsel %vm351, %v7112, %v7120
    %v7152 = vsel %vm351, %v7114, %v7122
    %v7153 = vsel %vm351, %v7116, %v7124
    %v7154 = vsel %vm351, %v7118, %v7126
    %v7155 = vsel %vm351, %v7136, %v7112
    %v7156 = vsel %vm351, %v7138, %v7114
    %v7157 = vsel %vm351, %v7140, %v7116
    %v7158 = vsel %vm351, %v7142, %v7118
    %v7159 = vld [vmem:[%s356] ss:$8 sm:$0xf]
    %v7161 = vlaneseq
    %v7162 = vshrl.u32 %v7161, 7
    %v7163 = vsub.s32 0, %v7162
    %v7164 = vrot.slane %v7159, %v7163
    %v7165 = vlaneseq
    %v7166 = vshrl.u32 %v7165, 7
    %v7167 = vsub.s32 1, %v7166
    %v7168 = vrot.slane %v7159, %v7167
    %v7169 = vlaneseq
    %v7170 = vshrl.u32 %v7169, 7
    %v7171 = vsub.s32 2, %v7170
    %v7172 = vrot.slane %v7159, %v7171
    %v7173 = vlaneseq
    %v7174 = vshrl.u32 %v7173, 7
    %v7175 = vsub.s32 3, %v7174
    %v7176 = vrot.slane %v7159, %v7175
    %v7181 = vmul.f32 %v7151, %v7164
    %v7182 = vmul.f32 %v7147, %v7168
    %v7183 = vmul.f32 %v7143, %v7172
    %v7184 = vmul.f32 %v7155, %v7176
    %v7185 = vmul.f32 %v7152, %v7164
    %v7186 = vmul.f32 %v7148, %v7168
    %v7187 = vmul.f32 %v7144, %v7172
    %v7188 = vmul.f32 %v7156, %v7176
    %v7189 = vmul.f32 %v7153, %v7164
    %v7190 = vmul.f32 %v7149, %v7168
    %v7191 = vmul.f32 %v7145, %v7172
    %v7192 = vmul.f32 %v7157, %v7176
    %v7193 = vmul.f32 %v7154, %v7164
    %v7194 = vmul.f32 %v7150, %v7168
    %v7195 = vmul.f32 %v7146, %v7172
    %v7196 = vmul.f32 %v7158, %v7176
    %7197 = vst [vmem:[#allocation2 + $0x380] sm:$0xff] %v7181
    %7198 = vst [vmem:[#allocation2 + $0x388] sm:$0xff] %v7182
    %7199 = vst [vmem:[#allocation2 + $0x390] sm:$0xff] %v7183
    %7200 = vst [vmem:[#allocation2 + $0x398] sm:$0xff] %v7184
    %7201 = vst [vmem:[#allocation2 + $0x3a0] sm:$0xff] %v7185
    %7202 = vst [vmem:[#allocation2 + $0x3a8] sm:$0xff] %v7186
    %7203 = vst [vmem:[#allocation2 + $0x3b0] sm:$0xff] %v7187
    %7204 = vst [vmem:[#allocation2 + $0x3b8] sm:$0xff] %v7188
    %7205 = vst [vmem:[#allocation2 + $0x3c0] sm:$0xff] %v7189
    %7206 = vst [vmem:[#allocation2 + $0x3c8] sm:$0xff] %v7190
    %7207 = vst [vmem:[#allocation2 + $0x3d0] sm:$0xff] %v7191
    %7208 = vst [vmem:[#allocation2 + $0x3d8] sm:$0xff] %v7192
    %7209 = vst [vmem:[#allocation2 + $0x3e0] sm:$0xff] %v7193
    %7210 = vst [vmem:[#allocation2 + $0x3e8] sm:$0xff] %v7194
    %7211 = vst [vmem:[#allocation2 + $0x3f0] sm:$0xff] %v7195
    %7212 = vst [vmem:[#allocation2 + $0x3f8] sm:$0xff] %v7196
    %7213 = vrot.lane.b32.xlu0 %v6464, 111
    %v7214 = vpop.permute.xlu0 %7213
    %7215 = vrot.lane.b32.xlu0 %v6468, 111
    %v7216 = vpop.permute.xlu0 %7215
    %7217 = vrot.lane.b32.xlu0 %v6472, 111
    %v7218 = vpop.permute.xlu0 %7217
    %7219 = vrot.lane.b32.xlu0 %v6476, 111
    %v7220 = vpop.permute.xlu0 %7219
    %7221 = vrot.lane.b32.xlu0 %v6465, 111
    %v7222 = vpop.permute.xlu0 %7221
    %7223 = vrot.lane.b32.xlu0 %v6469, 111
    %v7224 = vpop.permute.xlu0 %7223
    %7225 = vrot.lane.b32.xlu0 %v6473, 111
    %v7226 = vpop.permute.xlu0 %7225
    %7227 = vrot.lane.b32.xlu0 %v6477, 111
    %v7228 = vpop.permute.xlu0 %7227
    %7229 = vrot.lane.b32.xlu0 %v6466, 111
    %v7230 = vpop.permute.xlu0 %7229
    %7231 = vrot.lane.b32.xlu0 %v6470, 111
    %v7232 = vpop.permute.xlu0 %7231
    %7233 = vrot.lane.b32.xlu0 %v6474, 111
    %v7234 = vpop.permute.xlu0 %7233
    %7235 = vrot.lane.b32.xlu0 %v6478, 111
    %v7236 = vpop.permute.xlu0 %7235
    %7237 = vrot.lane.b32.xlu0 %v6467, 111
    %v7238 = vpop.permute.xlu0 %7237
    %7239 = vrot.lane.b32.xlu0 %v6471, 111
    %v7240 = vpop.permute.xlu0 %7239
    %7241 = vrot.lane.b32.xlu0 %v6475, 111
    %v7242 = vpop.permute.xlu0 %7241
    %7243 = vrot.lane.b32.xlu0 %v6479, 111
    %v7244 = vpop.permute.xlu0 %7243
    %v7245 = vsel %vm395, %v7230, %v7238
    %v7246 = vsel %vm395, %v7232, %v7240
    %v7247 = vsel %vm395, %v7234, %v7242
    %v7248 = vsel %vm395, %v7236, %v7244
    %v7249 = vsel %vm395, %v7222, %v7230
    %v7250 = vsel %vm395, %v7224, %v7232
    %v7251 = vsel %vm395, %v7226, %v7234
    %v7252 = vsel %vm395, %v7228, %v7236
    %v7253 = vsel %vm395, %v7214, %v7222
    %v7254 = vsel %vm395, %v7216, %v7224
    %v7255 = vsel %vm395, %v7218, %v7226
    %v7256 = vsel %vm395, %v7220, %v7228
    %v7257 = vsel %vm395, %v7238, %v7214
    %v7258 = vsel %vm395, %v7240, %v7216
    %v7259 = vsel %vm395, %v7242, %v7218
    %v7260 = vsel %vm395, %v7244, %v7220
    %v7261 = vld [vmem:[%s400] ss:$8 sm:$0xf]
    %v7263 = vlaneseq
    %v7264 = vshrl.u32 %v7263, 7
    %v7265 = vsub.s32 0, %v7264
    %v7266 = vrot.slane %v7261, %v7265
    %v7267 = vlaneseq
    %v7268 = vshrl.u32 %v7267, 7
    %v7269 = vsub.s32 1, %v7268
    %v7270 = vrot.slane %v7261, %v7269
    %v7271 = vlaneseq
    %v7272 = vshrl.u32 %v7271, 7
    %v7273 = vsub.s32 2, %v7272
    %v7274 = vrot.slane %v7261, %v7273
    %v7275 = vlaneseq
    %v7276 = vshrl.u32 %v7275, 7
    %v7277 = vsub.s32 3, %v7276
    %v7278 = vrot.slane %v7261, %v7277
    %v7283 = vmul.f32 %v7253, %v7266
    %v7284 = vmul.f32 %v7249, %v7270
    %v7285 = vmul.f32 %v7245, %v7274
    %v7286 = vmul.f32 %v7257, %v7278
    %v7287 = vmul.f32 %v7254, %v7266
    %v7288 = vmul.f32 %v7250, %v7270
    %v7289 = vmul.f32 %v7246, %v7274
    %v7290 = vmul.f32 %v7258, %v7278
    %v7291 = vmul.f32 %v7255, %v7266
    %v7292 = vmul.f32 %v7251, %v7270
    %v7293 = vmul.f32 %v7247, %v7274
    %v7294 = vmul.f32 %v7259, %v7278
    %v7295 = vmul.f32 %v7256, %v7266
    %v7296 = vmul.f32 %v7252, %v7270
    %v7297 = vmul.f32 %v7248, %v7274
    %v7298 = vmul.f32 %v7260, %v7278
    %7299 = vst [vmem:[#allocation2 + $0x400] sm:$0xff] %v7283
    %7300 = vst [vmem:[#allocation2 + $0x408] sm:$0xff] %v7284
    %7301 = vst [vmem:[#allocation2 + $0x410] sm:$0xff] %v7285
    %7302 = vst [vmem:[#allocation2 + $0x418] sm:$0xff] %v7286
    %7303 = vst [vmem:[#allocation2 + $0x420] sm:$0xff] %v7287
    %7304 = vst [vmem:[#allocation2 + $0x428] sm:$0xff] %v7288
    %7305 = vst [vmem:[#allocation2 + $0x430] sm:$0xff] %v7289
    %7306 = vst [vmem:[#allocation2 + $0x438] sm:$0xff] %v7290
    %7307 = vst [vmem:[#allocation2 + $0x440] sm:$0xff] %v7291
    %7308 = vst [vmem:[#allocation2 + $0x448] sm:$0xff] %v7292
    %7309 = vst [vmem:[#allocation2 + $0x450] sm:$0xff] %v7293
    %7310 = vst [vmem:[#allocation2 + $0x458] sm:$0xff] %v7294
    %7311 = vst [vmem:[#allocation2 + $0x460] sm:$0xff] %v7295
    %7312 = vst [vmem:[#allocation2 + $0x468] sm:$0xff] %v7296
    %7313 = vst [vmem:[#allocation2 + $0x470] sm:$0xff] %v7297
    %7314 = vst [vmem:[#allocation2 + $0x478] sm:$0xff] %v7298
    %v7315 = vld [vmem:[#allocation2] sm:$0xff]
    %v7316 = vld [vmem:[#allocation2 + $0x8] sm:$0xff]
    %v7317 = vld [vmem:[#allocation2 + $0x10] sm:$0xff]
    %v7318 = vld [vmem:[#allocation2 + $0x18] sm:$0xff]
    %v7319 = vld [vmem:[#allocation2 + $0x20] sm:$0xff]
    %v7320 = vld [vmem:[#allocation2 + $0x28] sm:$0xff]
    %v7321 = vld [vmem:[#allocation2 + $0x30] sm:$0xff]
    %v7322 = vld [vmem:[#allocation2 + $0x38] sm:$0xff]
    %v7323 = vld [vmem:[#allocation2 + $0x40] sm:$0xff]
    %v7324 = vld [vmem:[#allocation2 + $0x48] sm:$0xff]
    %v7325 = vld [vmem:[#allocation2 + $0x50] sm:$0xff]
    %v7326 = vld [vmem:[#allocation2 + $0x58] sm:$0xff]
    %v7327 = vld [vmem:[#allocation2 + $0x60] sm:$0xff]
    %v7328 = vld [vmem:[#allocation2 + $0x68] sm:$0xff]
    %v7329 = vld [vmem:[#allocation2 + $0x70] sm:$0xff]
    %v7330 = vld [vmem:[#allocation2 + $0x78] sm:$0xff]
    %v7331 = vld [vmem:[#allocation2 + $0x80] sm:$0xff]
    %v7332 = vld [vmem:[#allocation2 + $0x88] sm:$0xff]
    %v7333 = vld [vmem:[#allocation2 + $0x90] sm:$0xff]
    %v7334 = vld [vmem:[#allocation2 + $0x98] sm:$0xff]
    %v7335 = vld [vmem:[#allocation2 + $0xa0] sm:$0xff]
    %v7336 = vld [vmem:[#allocation2 + $0xa8] sm:$0xff]
    %v7337 = vld [vmem:[#allocation2 + $0xb0] sm:$0xff]
    %v7338 = vld [vmem:[#allocation2 + $0xb8] sm:$0xff]
    %v7339 = vld [vmem:[#allocation2 + $0xc0] sm:$0xff]
    %v7340 = vld [vmem:[#allocation2 + $0xc8] sm:$0xff]
    %v7341 = vld [vmem:[#allocation2 + $0xd0] sm:$0xff]
    %v7342 = vld [vmem:[#allocation2 + $0xd8] sm:$0xff]
    %v7343 = vld [vmem:[#allocation2 + $0xe0] sm:$0xff]
    %v7344 = vld [vmem:[#allocation2 + $0xe8] sm:$0xff]
    %v7345 = vld [vmem:[#allocation2 + $0xf0] sm:$0xff]
    %v7346 = vld [vmem:[#allocation2 + $0xf8] sm:$0xff]
    %v7347 = vld [vmem:[#allocation2 + $0x100] sm:$0xff]
    %v7348 = vld [vmem:[#allocation2 + $0x108] sm:$0xff]
    %v7349 = vld [vmem:[#allocation2 + $0x110] sm:$0xff]
    %v7350 = vld [vmem:[#allocation2 + $0x118] sm:$0xff]
    %v7351 = vld [vmem:[#allocation2 + $0x120] sm:$0xff]
    %v7352 = vld [vmem:[#allocation2 + $0x128] sm:$0xff]
    %v7353 = vld [vmem:[#allocation2 + $0x130] sm:$0xff]
    %v7354 = vld [vmem:[#allocation2 + $0x138] sm:$0xff]
    %v7355 = vld [vmem:[#allocation2 + $0x140] sm:$0xff]
    %v7356 = vld [vmem:[#allocation2 + $0x148] sm:$0xff]
    %v7357 = vld [vmem:[#allocation2 + $0x150] sm:$0xff]
    %v7358 = vld [vmem:[#allocation2 + $0x158] sm:$0xff]
    %v7359 = vld [vmem:[#allocation2 + $0x160] sm:$0xff]
    %v7360 = vld [vmem:[#allocation2 + $0x168] sm:$0xff]
    %v7361 = vld [vmem:[#allocation2 + $0x170] sm:$0xff]
    %v7362 = vld [vmem:[#allocation2 + $0x178] sm:$0xff]
    %v7363 = vld [vmem:[#allocation2 + $0x180] sm:$0xff]
    %v7364 = vld [vmem:[#allocation2 + $0x188] sm:$0xff]
    %v7365 = vld [vmem:[#allocation2 + $0x190] sm:$0xff]
    %v7366 = vld [vmem:[#allocation2 + $0x198] sm:$0xff]
    %v7367 = vld [vmem:[#allocation2 + $0x1a0] sm:$0xff]
    %v7368 = vld [vmem:[#allocation2 + $0x1a8] sm:$0xff]
    %v7369 = vld [vmem:[#allocation2 + $0x1b0] sm:$0xff]
    %v7370 = vld [vmem:[#allocation2 + $0x1b8] sm:$0xff]
    %v7371 = vld [vmem:[#allocation2 + $0x1c0] sm:$0xff]
    %v7372 = vld [vmem:[#allocation2 + $0x1c8] sm:$0xff]
    %v7373 = vld [vmem:[#allocation2 + $0x1d0] sm:$0xff]
    %v7374 = vld [vmem:[#allocation2 + $0x1d8] sm:$0xff]
    %v7375 = vld [vmem:[#allocation2 + $0x1e0] sm:$0xff]
    %v7376 = vld [vmem:[#allocation2 + $0x1e8] sm:$0xff]
    %v7377 = vld [vmem:[#allocation2 + $0x1f0] sm:$0xff]
    %v7378 = vld [vmem:[#allocation2 + $0x1f8] sm:$0xff]
    %v7379 = vld [vmem:[#allocation2 + $0x200] sm:$0xff]
    %v7380 = vld [vmem:[#allocation2 + $0x208] sm:$0xff]
    %v7381 = vld [vmem:[#allocation2 + $0x210] sm:$0xff]
    %v7382 = vld [vmem:[#allocation2 + $0x218] sm:$0xff]
    %v7383 = vld [vmem:[#allocation2 + $0x220] sm:$0xff]
    %v7384 = vld [vmem:[#allocation2 + $0x228] sm:$0xff]
    %v7385 = vld [vmem:[#allocation2 + $0x230] sm:$0xff]
    %v7386 = vld [vmem:[#allocation2 + $0x238] sm:$0xff]
    %v7387 = vld [vmem:[#allocation2 + $0x240] sm:$0xff]
    %v7388 = vld [vmem:[#allocation2 + $0x248] sm:$0xff]
    %v7389 = vld [vmem:[#allocation2 + $0x250] sm:$0xff]
    %v7390 = vld [vmem:[#allocation2 + $0x258] sm:$0xff]
    %v7391 = vld [vmem:[#allocation2 + $0x260] sm:$0xff]
    %v7392 = vld [vmem:[#allocation2 + $0x268] sm:$0xff]
    %v7393 = vld [vmem:[#allocation2 + $0x270] sm:$0xff]
    %v7394 = vld [vmem:[#allocation2 + $0x278] sm:$0xff]
    %v7395 = vld [vmem:[#allocation2 + $0x280] sm:$0xff]
    %v7396 = vld [vmem:[#allocation2 + $0x288] sm:$0xff]
    %v7397 = vld [vmem:[#allocation2 + $0x290] sm:$0xff]
    %v7398 = vld [vmem:[#allocation2 + $0x298] sm:$0xff]
    %v7399 = vld [vmem:[#allocation2 + $0x2a0] sm:$0xff]
    %v7400 = vld [vmem:[#allocation2 + $0x2a8] sm:$0xff]
    %v7401 = vld [vmem:[#allocation2 + $0x2b0] sm:$0xff]
    %v7402 = vld [vmem:[#allocation2 + $0x2b8] sm:$0xff]
    %v7403 = vld [vmem:[#allocation2 + $0x2c0] sm:$0xff]
    %v7404 = vld [vmem:[#allocation2 + $0x2c8] sm:$0xff]
    %v7405 = vld [vmem:[#allocation2 + $0x2d0] sm:$0xff]
    %v7406 = vld [vmem:[#allocation2 + $0x2d8] sm:$0xff]
    %v7407 = vld [vmem:[#allocation2 + $0x2e0] sm:$0xff]
    %v7408 = vld [vmem:[#allocation2 + $0x2e8] sm:$0xff]
    %v7409 = vld [vmem:[#allocation2 + $0x2f0] sm:$0xff]
    %v7410 = vld [vmem:[#allocation2 + $0x2f8] sm:$0xff]
    %v7411 = vld [vmem:[#allocation2 + $0x300] sm:$0xff]
    %v7412 = vld [vmem:[#allocation2 + $0x308] sm:$0xff]
    %v7413 = vld [vmem:[#allocation2 + $0x310] sm:$0xff]
    %v7414 = vld [vmem:[#allocation2 + $0x318] sm:$0xff]
    %v7415 = vld [vmem:[#allocation2 + $0x320] sm:$0xff]
    %v7416 = vld [vmem:[#allocation2 + $0x328] sm:$0xff]
    %v7417 = vld [vmem:[#allocation2 + $0x330] sm:$0xff]
    %v7418 = vld [vmem:[#allocation2 + $0x338] sm:$0xff]
    %v7419 = vld [vmem:[#allocation2 + $0x340] sm:$0xff]
    %v7420 = vld [vmem:[#allocation2 + $0x348] sm:$0xff]
    %v7421 = vld [vmem:[#allocation2 + $0x350] sm:$0xff]
    %v7422 = vld [vmem:[#allocation2 + $0x358] sm:$0xff]
    %v7423 = vld [vmem:[#allocation2 + $0x360] sm:$0xff]
    %v7424 = vld [vmem:[#allocation2 + $0x368] sm:$0xff]
    %v7425 = vld [vmem:[#allocation2 + $0x370] sm:$0xff]
    %v7426 = vld [vmem:[#allocation2 + $0x378] sm:$0xff]
    %v7427 = vld [vmem:[#allocation2 + $0x380] sm:$0xff]
    %v7428 = vld [vmem:[#allocation2 + $0x388] sm:$0xff]
    %v7429 = vld [vmem:[#allocation2 + $0x390] sm:$0xff]
    %v7430 = vld [vmem:[#allocation2 + $0x398] sm:$0xff]
    %v7431 = vld [vmem:[#allocation2 + $0x3a0] sm:$0xff]
    %v7432 = vld [vmem:[#allocation2 + $0x3a8] sm:$0xff]
    %v7433 = vld [vmem:[#allocation2 + $0x3b0] sm:$0xff]
    %v7434 = vld [vmem:[#allocation2 + $0x3b8] sm:$0xff]
    %v7435 = vld [vmem:[#allocation2 + $0x3c0] sm:$0xff]
    %v7436 = vld [vmem:[#allocation2 + $0x3c8] sm:$0xff]
    %v7437 = vld [vmem:[#allocation2 + $0x3d0] sm:$0xff]
    %v7438 = vld [vmem:[#allocation2 + $0x3d8] sm:$0xff]
    %v7439 = vld [vmem:[#allocation2 + $0x3e0] sm:$0xff]
    %v7440 = vld [vmem:[#allocation2 + $0x3e8] sm:$0xff]
    %v7441 = vld [vmem:[#allocation2 + $0x3f0] sm:$0xff]
    %v7442 = vld [vmem:[#allocation2 + $0x3f8] sm:$0xff]
    %v7443 = vld [vmem:[#allocation2 + $0x400] sm:$0xff]
    %v7444 = vld [vmem:[#allocation2 + $0x408] sm:$0xff]
    %v7445 = vld [vmem:[#allocation2 + $0x410] sm:$0xff]
    %v7446 = vld [vmem:[#allocation2 + $0x418] sm:$0xff]
    %v7447 = vld [vmem:[#allocation2 + $0x420] sm:$0xff]
    %v7448 = vld [vmem:[#allocation2 + $0x428] sm:$0xff]
    %v7449 = vld [vmem:[#allocation2 + $0x430] sm:$0xff]
    %v7450 = vld [vmem:[#allocation2 + $0x438] sm:$0xff]
    %v7451 = vld [vmem:[#allocation2 + $0x440] sm:$0xff]
    %v7452 = vld [vmem:[#allocation2 + $0x448] sm:$0xff]
    %v7453 = vld [vmem:[#allocation2 + $0x450] sm:$0xff]
    %v7454 = vld [vmem:[#allocation2 + $0x458] sm:$0xff]
    %v7455 = vld [vmem:[#allocation2 + $0x460] sm:$0xff]
    %v7456 = vld [vmem:[#allocation2 + $0x468] sm:$0xff]
    %v7457 = vld [vmem:[#allocation2 + $0x470] sm:$0xff]
    %v7458 = vld [vmem:[#allocation2 + $0x478] sm:$0xff]
    %7460 = vset.pattern.permute.xlu0 0
    %7461 = vperm.xlu0 %7460, %v6463
    %v7462 = vpop.permute.xlu0 %7461
    %v7465 = vsel %vm1784, %v6482, 0
    %7467 = vmatprep.subr.mxu0 %v7316
    %7468 = vmatpush1.msra.mxu0 %v7315
    %7469 = vmatprep.subr.mxu0 %v7320
    %7470 = vmatpush1.msra.mxu0 %v7319
    %7471 = vmatprep.subr.mxu0 %v7324
    %7472 = vmatpush1.msra.mxu0 %v7323
    %7473 = vmatprep.subr.mxu0 %v7328
    %7474 = vmatpush1.msra.mxu0 %v7327
    %7475 = vmatprep.subr.mxu0 %v7332
    %7476 = vmatpush1.msra.mxu0 %v7331
    %7477 = vmatprep.subr.mxu0 %v7336
    %7478 = vmatpush1.msra.mxu0 %v7335
    %7479 = vmatprep.subr.mxu0 %v7340
    %7480 = vmatpush1.msra.mxu0 %v7339
    %7481 = vmatprep.subr.mxu0 %v7344
    %7482 = vmatpush1.msra.mxu0 %v7343
    %7483 = vmatprep.subr.mxu0 %v7348
    %7484 = vmatpush1.msra.mxu0 %v7347
    %7485 = vmatprep.subr.mxu0 %v7352
    %7486 = vmatpush1.msra.mxu0 %v7351
    %7487 = vmatprep.subr.mxu0 %v7356
    %7488 = vmatpush1.msra.mxu0 %v7355
    %7489 = vmatprep.subr.mxu0 %v7360
    %7490 = vmatpush1.msra.mxu0 %v7359
    %7491 = vmatprep.subr.mxu0 %v7364
    %7492 = vmatpush1.msra.mxu0 %v7363
    %7493 = vmatprep.subr.mxu0 %v7368
    %7494 = vmatpush1.msra.mxu0 %v7367
    %7495 = vmatprep.subr.mxu0 %v7372
    %7496 = vmatpush1.msra.mxu0 %v7371
    %7497 = vmatprep.subr.mxu0 %v7376
    %7498 = vmatpush1.msra.mxu0 %v7375
    %7499 = vmatprep.subr.mxu0 %v7380
    %7500 = vmatpush1.msra.mxu0 %v7379
    %7501 = vmatprep.subr.mxu0 %v7384
    %7502 = vmatpush1.msra.mxu0 %v7383
    %7503 = vmatprep.subr.mxu0 %v7388
    %7504 = vmatpush1.msra.mxu0 %v7387
    %7505 = vmatprep.subr.mxu0 %v7392
    %7506 = vmatpush1.msra.mxu0 %v7391
    %7507 = vmatprep.subr.mxu0 %v7396
    %7508 = vmatpush1.msra.mxu0 %v7395
    %7509 = vmatprep.subr.mxu0 %v7400
    %7510 = vmatpush1.msra.mxu0 %v7399
    %7511 = vmatprep.subr.mxu0 %v7404
    %7512 = vmatpush1.msra.mxu0 %v7403
    %7513 = vmatprep.subr.mxu0 %v7408
    %7514 = vmatpush1.msra.mxu0 %v7407
    %7515 = vmatprep.subr.mxu0 %v7412
    %7516 = vmatpush1.msra.mxu0 %v7411
    %7517 = vmatprep.subr.mxu0 %v7416
    %7518 = vmatpush1.msra.mxu0 %v7415
    %7519 = vmatprep.subr.mxu0 %v7420
    %7520 = vmatpush1.msra.mxu0 %v7419
    %7521 = vmatprep.subr.mxu0 %v7424
    %7522 = vmatpush1.msra.mxu0 %v7423
    %7523 = vmatprep.subr.mxu0 %v7428
    %7524 = vmatpush1.msra.mxu0 %v7427
    %7525 = vmatprep.subr.mxu0 %v7432
    %7526 = vmatpush1.msra.mxu0 %v7431
    %7527 = vmatprep.subr.mxu0 %v7436
    %7528 = vmatpush1.msra.mxu0 %v7435
    %7529 = vmatprep.subr.mxu0 %v7440
    %7530 = vmatpush1.msra.mxu0 %v7439
    %7531 = vmatprep.mubr.f32.mxu0 %v6481
    %7532 = vmatmul.mubr.f32.gmra.mrb[0].mxu0 %v6480
    %v7533 = vpop.f32.mrb[0].mxu0
    %v7534 = vadd.f32 %v7462, %v7533
    %v7535 = vpop.f32.mrb[0].mxu0
    %v7536 = vadd.f32 %v7462, %v7535
    %7537 = vdwg.mxu0
    %7538 = vmatprep.subr.mxu0 %v7444
    %7539 = vmatpush1.msra.mxu0 %v7443
    %7540 = vmatprep.subr.mxu0 %v7448
    %7541 = vmatpush1.msra.mxu0 %v7447
    %7542 = vmatprep.subr.mxu0 %v7452
    %7543 = vmatpush1.msra.mxu0 %v7451
    %7544 = vmatprep.subr.mxu0 %v7456
    %7545 = vmatpush1.msra.mxu0 %v7455
    %7546 = vmatprep.subr.mxu0 0.0
    %7547 = vmatpush1.msra.mxu0 0.0
    %7548 = vmatprep.subr.mxu0 0.0
    %7549 = vmatpush1.msra.mxu0 0.0
    %7550 = vmatprep.subr.mxu0 0.0
    %7551 = vmatpush1.msra.mxu0 0.0
    %7552 = vmatprep.subr.mxu0 0.0
    %7553 = vmatpush1.msra.mxu0 0.0
    %7554 = vmatprep.subr.mxu0 0.0
    %7555 = vmatpush1.msra.mxu0 0.0
    %7556 = vmatprep.subr.mxu0 0.0
    %7557 = vmatpush1.msra.mxu0 0.0
    %7558 = vmatprep.subr.mxu0 0.0
    %7559 = vmatpush1.msra.mxu0 0.0
    %7560 = vmatprep.subr.mxu0 0.0
    %7561 = vmatpush1.msra.mxu0 0.0
    %7562 = vmatprep.subr.mxu0 0.0
    %7563 = vmatpush1.msra.mxu0 0.0
    %7564 = vmatprep.subr.mxu0 0.0
    %7565 = vmatpush1.msra.mxu0 0.0
    %7566 = vmatprep.subr.mxu0 0.0
    %7567 = vmatpush1.msra.mxu0 0.0
    %7568 = vmatprep.subr.mxu0 0.0
    %7569 = vmatpush1.msra.mxu0 0.0
    %7570 = vmatprep.subr.mxu0 0.0
    %7571 = vmatpush1.msra.mxu0 0.0
    %7572 = vmatprep.subr.mxu0 0.0
    %7573 = vmatpush1.msra.mxu0 0.0
    %7574 = vmatprep.subr.mxu0 0.0
    %7575 = vmatpush1.msra.mxu0 0.0
    %7576 = vmatprep.subr.mxu0 0.0
    %7577 = vmatpush1.msra.mxu0 0.0
    %7578 = vmatprep.subr.mxu0 0.0
    %7579 = vmatpush1.msra.mxu0 0.0
    %7580 = vmatprep.subr.mxu0 0.0
    %7581 = vmatpush1.msra.mxu0 0.0
    %7582 = vmatprep.subr.mxu0 0.0
    %7583 = vmatpush1.msra.mxu0 0.0
    %7584 = vmatprep.subr.mxu0 0.0
    %7585 = vmatpush1.msra.mxu0 0.0
    %7586 = vmatprep.subr.mxu0 0.0
    %7587 = vmatpush1.msra.mxu0 0.0
    %7588 = vmatprep.subr.mxu0 0.0
    %7589 = vmatpush1.msra.mxu0 0.0
    %7590 = vmatprep.subr.mxu0 0.0
    %7591 = vmatpush1.msra.mxu0 0.0
    %7592 = vmatprep.subr.mxu0 0.0
    %7593 = vmatpush1.msra.mxu0 0.0
    %7594 = vmatprep.subr.mxu0 0.0
    %7595 = vmatpush1.msra.mxu0 0.0
    %7596 = vmatprep.subr.mxu0 0.0
    %7597 = vmatpush1.msra.mxu0 0.0
    %7598 = vmatprep.subr.mxu0 0.0
    %7599 = vmatpush1.msra.mxu0 0.0
    %7600 = vmatprep.subr.mxu0 0.0
    %7601 = vmatpush1.msra.mxu0 0.0
    %7602 = vmatprep.mubr.f32.mxu0 0.0
    %7603 = vmatmul.mubr.f32.gmra.mrb[0].mxu0 %v7465
    %v7604 = vpop.f32.mrb[0].mxu0
    %v7605 = vadd.f32 %v7534, %v7604
    %v7606 = vpop.f32.mrb[0].mxu0
    %v7607 = vadd.f32 %v7536, %v7606
    %7608 = vdwg.mxu0
    %7609 = vmatprep.subr.mxu0 %v7318
    %7610 = vmatpush1.msra.mxu0 %v7317
    %7611 = vmatprep.subr.mxu0 %v7322
    %7612 = vmatpush1.msra.mxu0 %v7321
    %7613 = vmatprep.subr.mxu0 %v7326
    %7614 = vmatpush1.msra.mxu0 %v7325
    %7615 = vmatprep.subr.mxu0 %v7330
    %7616 = vmatpush1.msra.mxu0 %v7329
    %7617 = vmatprep.subr.mxu0 %v7334
    %7618 = vmatpush1.msra.mxu0 %v7333
    %7619 = vmatprep.subr.mxu0 %v7338
    %7620 = vmatpush1.msra.mxu0 %v7337
    %7621 = vmatprep.subr.mxu0 %v7342
    %7622 = vmatpush1.msra.mxu0 %v7341
    %7623 = vmatprep.subr.mxu0 %v7346
    %7624 = vmatpush1.msra.mxu0 %v7345
    %7625 = vmatprep.subr.mxu0 %v7350
    %7626 = vmatpush1.msra.mxu0 %v7349
    %7627 = vmatprep.subr.mxu0 %v7354
    %7628 = vmatpush1.msra.mxu0 %v7353
    %7629 = vmatprep.subr.mxu0 %v7358
    %7630 = vmatpush1.msra.mxu0 %v7357
    %7631 = vmatprep.subr.mxu0 %v7362
    %7632 = vmatpush1.msra.mxu0 %v7361
    %7633 = vmatprep.subr.mxu0 %v7366
    %7634 = vmatpush1.msra.mxu0 %v7365
    %7635 = vmatprep.subr.mxu0 %v7370
    %7636 = vmatpush1.msra.mxu0 %v7369
    %7637 = vmatprep.subr.mxu0 %v7374
    %7638 = vmatpush1.msra.mxu0 %v7373
    %7639 = vmatprep.subr.mxu0 %v7378
    %7640 = vmatpush1.msra.mxu0 %v7377
    %7641 = vmatprep.subr.mxu0 %v7382
    %7642 = vmatpush1.msra.mxu0 %v7381
    %7643 = vmatprep.subr.mxu0 %v7386
    %7644 = vmatpush1.msra.mxu0 %v7385
    %7645 = vmatprep.subr.mxu0 %v7390
    %7646 = vmatpush1.msra.mxu0 %v7389
    %7647 = vmatprep.subr.mxu0 %v7394
    %7648 = vmatpush1.msra.mxu0 %v7393
    %7649 = vmatprep.subr.mxu0 %v7398
    %7650 = vmatpush1.msra.mxu0 %v7397
    %7651 = vmatprep.subr.mxu0 %v7402
    %7652 = vmatpush1.msra.mxu0 %v7401
    %7653 = vmatprep.subr.mxu0 %v7406
    %7654 = vmatpush1.msra.mxu0 %v7405
    %7655 = vmatprep.subr.mxu0 %v7410
    %7656 = vmatpush1.msra.mxu0 %v7409
    %7657 = vmatprep.subr.mxu0 %v7414
    %7658 = vmatpush1.msra.mxu0 %v7413
    %7659 = vmatprep.subr.mxu0 %v7418
    %7660 = vmatpush1.msra.mxu0 %v7417
    %7661 = vmatprep.subr.mxu0 %v7422
    %7662 = vmatpush1.msra.mxu0 %v7421
    %7663 = vmatprep.subr.mxu0 %v7426
    %7664 = vmatpush1.msra.mxu0 %v7425
    %7665 = vmatprep.subr.mxu0 %v7430
    %7666 = vmatpush1.msra.mxu0 %v7429
    %7667 = vmatprep.subr.mxu0 %v7434
    %7668 = vmatpush1.msra.mxu0 %v7433
    %7669 = vmatprep.subr.mxu0 %v7438
    %7670 = vmatpush1.msra.mxu0 %v7437
    %7671 = vmatprep.subr.mxu0 %v7442
    %7672 = vmatpush1.msra.mxu0 %v7441
    %7673 = vmatprep.mubr.f32.mxu0 %v6481
    %7674 = vmatmul.mubr.f32.gmra.mrb[0].mxu0 %v6480
    %v7675 = vpop.f32.mrb[0].mxu0
    %v7676 = vadd.f32 %v7462, %v7675
    %v7677 = vpop.f32.mrb[0].mxu0
    %v7678 = vadd.f32 %v7462, %v7677
    %7679 = vdwg.mxu0
    %7680 = vmatprep.subr.mxu0 %v7446
    %7681 = vmatpush1.msra.mxu0 %v7445
    %7682 = vmatprep.subr.mxu0 %v7450
    %7683 = vmatpush1.msra.mxu0 %v7449
    %7684 = vmatprep.subr.mxu0 %v7454
    %7685 = vmatpush1.msra.mxu0 %v7453
    %7686 = vmatprep.subr.mxu0 %v7458
    %7687 = vmatpush1.msra.mxu0 %v7457
    %7688 = vmatprep.subr.mxu0 0.0
    %7689 = vmatpush1.msra.mxu0 0.0
    %7690 = vmatprep.subr.mxu0 0.0
    %7691 = vmatpush1.msra.mxu0 0.0
    %7692 = vmatprep.subr.mxu0 0.0
    %7693 = vmatpush1.msra.mxu0 0.0
    %7694 = vmatprep.subr.mxu0 0.0
    %7695 = vmatpush1.msra.mxu0 0.0
    %7696 = vmatprep.subr.mxu0 0.0
    %7697 = vmatpush1.msra.mxu0 0.0
    %7698 = vmatprep.subr.mxu0 0.0
    %7699 = vmatpush1.msra.mxu0 0.0
    %7700 = vmatprep.subr.mxu0 0.0
    %7701 = vmatpush1.msra.mxu0 0.0
    %7702 = vmatprep.subr.mxu0 0.0
    %7703 = vmatpush1.msra.mxu0 0.0
    %7704 = vmatprep.subr.mxu0 0.0
    %7705 = vmatpush1.msra.mxu0 0.0
    %7706 = vmatprep.subr.mxu0 0.0
    %7707 = vmatpush1.msra.mxu0 0.0
    %7708 = vmatprep.subr.mxu0 0.0
    %7709 = vmatpush1.msra.mxu0 0.0
    %7710 = vmatprep.subr.mxu0 0.0
    %7711 = vmatpush1.msra.mxu0 0.0
    %7712 = vmatprep.subr.mxu0 0.0
    %7713 = vmatpush1.msra.mxu0 0.0
    %7714 = vmatprep.subr.mxu0 0.0
    %7715 = vmatpush1.msra.mxu0 0.0
    %7716 = vmatprep.subr.mxu0 0.0
    %7717 = vmatpush1.msra.mxu0 0.0
    %7718 = vmatprep.subr.mxu0 0.0
    %7719 = vmatpush1.msra.mxu0 0.0
    %7720 = vmatprep.subr.mxu0 0.0
    %7721 = vmatpush1.msra.mxu0 0.0
    %7722 = vmatprep.subr.mxu0 0.0
    %7723 = vmatpush1.msra.mxu0 0.0
    %7724 = vmatprep.subr.mxu0 0.0
    %7725 = vmatpush1.msra.mxu0 0.0
    %7726 = vmatprep.subr.mxu0 0.0
    %7727 = vmatpush1.msra.mxu0 0.0
    %7728 = vmatprep.subr.mxu0 0.0
    %7729 = vmatpush1.msra.mxu0 0.0
    %7730 = vmatprep.subr.mxu0 0.0
    %7731 = vmatpush1.msra.mxu0 0.0
    %7732 = vmatprep.subr.mxu0 0.0
    %7733 = vmatpush1.msra.mxu0 0.0
    %7734 = vmatprep.subr.mxu0 0.0
    %7735 = vmatpush1.msra.mxu0 0.0
    %7736 = vmatprep.subr.mxu0 0.0
    %7737 = vmatpush1.msra.mxu0 0.0
    %7738 = vmatprep.subr.mxu0 0.0
    %7739 = vmatpush1.msra.mxu0 0.0
    %7740 = vmatprep.subr.mxu0 0.0
    %7741 = vmatpush1.msra.mxu0 0.0
    %7742 = vmatprep.subr.mxu0 0.0
    %7743 = vmatpush1.msra.mxu0 0.0
    %7744 = vmatprep.mubr.f32.mxu0 0.0
    %7745 = vmatmul.mubr.f32.gmra.mrb[0].mxu0 %v7465
    %v7746 = vpop.f32.mrb[0].mxu0
    %v7747 = vadd.f32 %v7676, %v7746
    %v7748 = vpop.f32.mrb[0].mxu0
    %v7749 = vadd.f32 %v7678, %v7748
    %7750 = vdwg.mxu0
    %7751 = vst [vmem:[%s6] sm:$0xff] %v7605
    %7752 = vst [vmem:[%s6 + $0x8] sm:$0xff] %v7607
    %7753 = vst [vmem:[%s6 + $0x10] sm:$0xff] %v7747
    %7754 = vst [vmem:[%s6 + $0x18] sm:$0xff] %v7749
    // Predicated region
    $region38: #{_lambda_.1} parent=1 // pred_check
      _
    $region39: #{_lambda_.1} parent=1 // pred_check_branch
      %7756 = sbr.rel (0) target = $region41
    $region40: #{_lambda_.1} parent=1 // pred_region
      _
    $region41: #{_lambda_.1} parent=1 // pred_fallthru
      _
    // Predicated region
    $region42: #{_lambda_.1} parent=1 // pred_check
      _
    $region43: #{_lambda_.1} parent=1 // pred_check_branch
      %7758 = sbr.rel (0) target = $region45
    $region44: #{_lambda_.1} parent=1 // pred_region
      _
    $region45: #{_lambda_.1} parent=1 // pred_fallthru
      _
    %7759 = vsyncpa [#allocation5], 1
    %7760 = vsyncpa [#allocation7], 1

</llo_original>
